<compile_context>
chip_gen: v7x
topology: tpu7x:2x2x1
jax: 0.10.0
libtpu: 0.0.40
codegen_flags: <defaults>
</compile_context>

<pallas_src>
import functools

import jax
import jax.numpy as jnp
from jax import lax
from jax.experimental import pallas as pl
from jax.experimental.pallas import tpu as pltpu

n_embd = 384
n_head = 6
head_dim = n_embd // n_head          # 64
block_size = 256
# dropout = 0.2  -> identity at inference time


def _pick_bm(batch: int) -> int:
    """Batch elements per grid step: raise matmul M (amortize per-step overhead
    and weight-stationary MXU loads) while keeping >= 2 grid steps when
    possible so megacore (v7x) still shards the grid across both cores."""
    for bm in (4, 2, 1):
        if batch % bm == 0 and batch // bm >= 2:
            return bm
    return 1


def mha_fused_kernel(x_ref, wqkv_ref, wp_ref, bp_ref, o_ref,
                     qkv_ref, acc_ref, *, bm, seq):
    """BM batch elements per step: fused QKV + per-head causal attention with
    the output projection accumulated per head (lane-dense stores only)."""
    C = n_embd
    hd = head_dim
    T = seq

    # Fused QKV projection over M = bm*T rows.  x arrives f32 and is cast to
    # bf16 on the VPU here; the q scale is already folded into wqkv.
    x = x_ref[...].astype(jnp.bfloat16)                       # (bm*T, C)
    qkv_ref[...] = jnp.dot(
        x, wqkv_ref[...], preferred_element_type=jnp.float32
    ).astype(jnp.bfloat16)                                    # (bm*T, 3C)

    # Causal mask; finite large-negative so a fully-masked row can never NaN.
    row = lax.broadcasted_iota(jnp.int32, (T, T), 0)
    col = lax.broadcasted_iota(jnp.int32, (T, T), 1)
    causal = col <= row
    neg = jnp.float32(-1e30)

    for b in range(bm):                                       # sub-batch of this step
        rs = slice(b * T, (b + 1) * T)
        for h in range(n_head):
            # Unrolled over 6 heads; the acc_ref RMW below serializes heads,
            # keeping roughly one head's (T,T) intermediates live at a time.
            q_h = qkv_ref[rs, h * hd:(h + 1) * hd]                    # scaled q, bf16
            k_h = qkv_ref[rs, C + h * hd:C + (h + 1) * hd]
            v_h = qkv_ref[rs, 2 * C + h * hd:2 * C + (h + 1) * hd]

            # scores = q_h @ k_h^T: contract the head dim, no transpose in VMEM.
            s = lax.dot_general(q_h, k_h, (((1,), (1,)), ((), ())),
                                preferred_element_type=jnp.float32)   # (T, T) f32
            s = jnp.where(causal, s, neg)

            # f32 softmax; divide on the EUP (denominator >= 1, approx safe).
            m = jnp.max(s, axis=-1, keepdims=True)
            e = jnp.exp(s - m)
            denom = jnp.sum(e, axis=-1, keepdims=True)
            wei = (e * pl.reciprocal(denom, approx=True)).astype(jnp.bfloat16)

            out_h = jnp.dot(wei, v_h,
                            preferred_element_type=jnp.float32)       # (T, hd) f32

            # Fold this head straight into the output projection: a lane-dense
            # (T, C) f32 accumulation instead of a 64-lane-wide merged store.
            contrib = jnp.dot(out_h.astype(jnp.bfloat16),
                              wp_ref[h * hd:(h + 1) * hd, :],
                              preferred_element_type=jnp.float32)     # (T, C) f32
            if h == 0:
                acc_ref[...] = contrib
            else:
                acc_ref[...] += contrib

        # Bias added in f32; store lane-dense (width 384), sublane-aligned rows.
        o_ref[rs, :] = (acc_ref[...] + bp_ref[...]).astype(o_ref.dtype)


def multi_head_attention(x, wq, wk, wv, wp, bp, *, out_dtype=jnp.float32):
    """x: (B, T, C) f32; wq/wk/wv/wp: (C, C) stored as (in, out); bp: (C,)."""
    B, T, C = x.shape
    assert C == n_embd and T <= block_size
    assert T % 8 == 0, "T must be sublane-aligned"

    bm = _pick_bm(B)
    grid = (B // bm,)

    # One fused (C, 3C) QKV weight; fold the 1/sqrt(hd) scale into the q
    # columns before the one-time bf16 cast.  Weight casts happen once here,
    # outside the per-token hot path; x is NOT cast in the wrapper.
    scale = head_dim ** -0.5
    wqkv = jnp.concatenate([wq * scale, wk, wv], axis=1).astype(jnp.bfloat16)
    wpb = wp.astype(jnp.bfloat16)
    bpf = bp.reshape(1, C).astype(jnp.float32)

    x2 = x.reshape(B * T, C)   # free row-major reshape; dtype stays f32

    kernel = functools.partial(mha_fused_kernel, bm=bm, seq=T)
    out2 = pl.pallas_call(
        kernel,
        out_shape=jax.ShapeDtypeStruct((B * T, C), out_dtype),
        grid_spec=pltpu.PrefetchScalarGridSpec(
            num_scalar_prefetch=0,
            grid=grid,
            in_specs=[
                pl.BlockSpec((bm * T, C), lambda i: (i, 0)),      # x rows
                pl.BlockSpec((C, 3 * C), lambda i: (0, 0)),       # fused wqkv
                pl.BlockSpec((C, C), lambda i: (0, 0)),           # wp (proj)
                pl.BlockSpec((1, C), lambda i: (0, 0)),           # proj bias
            ],
            out_specs=pl.BlockSpec((bm * T, C), lambda i: (i, 0)),
            scratch_shapes=[
                pltpu.VMEM((bm * T, 3 * C), jnp.bfloat16),  # scaled-q / k / v
                pltpu.VMEM((T, C), jnp.float32),            # proj accumulator
            ],
        ),
        compiler_params=pltpu.CompilerParams(
            dimension_semantics=("parallel",)),
    )(x2, wqkv, wpb, bpf)
    return out2.reshape(B, T, C)


def reference_mha(x, wq, wk, wv, wp, bp):
    """Pure-JAX f32 reference mirroring the PyTorch forward (eval mode)."""
    B, T, C = x.shape
    hd = head_dim
    q = (x @ wq).reshape(B, T, n_head, hd).transpose(0, 2, 1, 3)
    k = (x @ wk).reshape(B, T, n_head, hd).transpose(0, 2, 1, 3)
    v = (x @ wv).reshape(B, T, n_head, hd).transpose(0, 2, 1, 3)
    wei = jnp.einsum("bhqd,bhkd->bhqk", q, k) * (hd ** -0.5)
    mask = jnp.tril(jnp.ones((T, T), dtype=bool))
    wei = jnp.where(mask, wei, -jnp.inf)
    wei = jax.nn.softmax(wei, axis=-1)
    out = jnp.einsum("bhqk,bhkd->bhqd", wei, v)
    out = out.transpose(0, 2, 1, 3).reshape(B, T, C)
    return out @ wp + bp


if __name__ == "__main__":
    key = jax.random.PRNGKey(0)
    k0, k1, k2, k3, k4, k5 = jax.random.split(key, 6)

    C = n_embd
    # Deterministic synthetic parameters, stored as (in, out); q/k/v Linear
    # layers have no bias, proj has a bias (matches the PyTorch module).
    wq = 0.02 * jax.random.normal(k1, (C, C), dtype=jnp.float32)
    wk = 0.02 * jax.random.normal(k2, (C, C), dtype=jnp.float32)
    wv = 0.02 * jax.random.normal(k3, (C, C), dtype=jnp.float32)
    wp = 0.02 * jax.random.normal(k4, (C, C), dtype=jnp.float32)
    bp = 0.02 * jax.random.normal(k5, (C,), dtype=jnp.float32)

    # B=2 exercises bm=1 (grid of 2 parallel steps); B=4 exercises bm=2
    # (two batch elements folded into one M=256 matmul per step).
    for B, T in ((2, 128), (4, 128)):
        x = jax.random.normal(jax.random.fold_in(k0, B), (B, T, C),
                              dtype=jnp.float32)
        out = jax.block_until_ready(multi_head_attention(x, wq, wk, wv, wp, bp))
        ref = reference_mha(x, wq, wk, wv, wp, bp)
        assert out.shape == (B, T, C)
        assert not jnp.any(jnp.isnan(out)), "NaN in kernel output"
        # bf16 matmul operands (f32 accumulation) -> loosened tolerance vs f32.
        assert jnp.allclose(out, ref, atol=2e-2, rtol=2e-2), \
            f"mismatch vs reference at B={B}"

    print("KERNEL_OK")
</pallas_src>

<mosaic_0001>
module attributes {stable_mosaic.version = 11 : i64} {
  func.func @mha_fused_kernel(%arg0: i32, %arg1: memref<128x384xf32, #tpu.memory_space<vmem>>, %arg2: memref<384x1152xbf16, #tpu.memory_space<vmem>>, %arg3: memref<384x384xbf16, #tpu.memory_space<vmem>>, %arg4: memref<1x384xf32, #tpu.memory_space<vmem>>, %arg5: memref<128x384xf32, #tpu.memory_space<vmem>>, %arg6: memref<128x1152xbf16, #tpu.memory_space<vmem>>, %arg7: memref<128x384xf32, #tpu.memory_space<vmem>>) attributes {dimension_semantics = [#tpu.dimension_semantics<parallel>], iteration_bounds = array<i64: 2>, scalar_prefetch = 0 : i64, scratch_operands = 2 : i64, tpu.core_type = #tpu.core_type<tc>, window_params = [{transform_indices = @transform_0, window_bounds = array<i64: 128, 384>}, {pipeline_mode = #tpu.pipeline_mode<synchronous>, transform_indices = @transform_1, window_bounds = array<i64: 384, 1152>}, {pipeline_mode = #tpu.pipeline_mode<synchronous>, transform_indices = @transform_2, window_bounds = array<i64: 384, 384>}, {pipeline_mode = #tpu.pipeline_mode<synchronous>, transform_indices = @transform_3, window_bounds = array<i64: 1, 384>}, {transform_indices = @transform_4, window_bounds = array<i64: 128, 384>}]} {
    %c0 = arith.constant 0 : index
    %c0_0 = arith.constant 0 : index
    %0 = vector.load %arg1[%c0, %c0_0] : memref<128x384xf32, #tpu.memory_space<vmem>>, vector<128x384xf32>
    %1 = arith.truncf %0 : vector<128x384xf32> to vector<128x384xbf16>
    %c0_1 = arith.constant 0 : index
    %c0_2 = arith.constant 0 : index
    %2 = vector.load %arg2[%c0_1, %c0_2] : memref<384x1152xbf16, #tpu.memory_space<vmem>>, vector<384x1152xbf16>
    %cst = arith.constant dense<0.000000e+00> : vector<128x1152xf32>
    %3 = tpu.matmul %1, %2, %cst {dimension_numbers = #tpu.dot_dimension_numbers<[1], [0], [0], [1], [0, 0, 1, 1], [], []>} : vector<128x384xbf16>, vector<384x1152xbf16>, vector<128x1152xf32> -> vector<128x1152xf32>
    %4 = arith.truncf %3 : vector<128x1152xf32> to vector<128x1152xbf16>
    %c0_3 = arith.constant 0 : index
    %c0_4 = arith.constant 0 : index
    %5 = vector.load %arg6[%c0_3, %c0_4] : memref<128x1152xbf16, #tpu.memory_space<vmem>>, vector<128x1152xbf16>
    tpu.vector_store %arg6[%c0_3, %c0_4], %4 {strides = array<i32>} : memref<128x1152xbf16, #tpu.memory_space<vmem>>, vector<128x1152xbf16>,
    %6 = tpu.iota {dimensions = array<i32: 0>} : vector<128x128xi32>
    %7 = tpu.iota {dimensions = array<i32: 1>} : vector<128x128xi32>
    %8 = arith.cmpi sle, %7, %6 : vector<128x128xi32>
    %c0_5 = arith.constant 0 : index
    %c0_6 = arith.constant 0 : index
    %9 = vector.load %arg6[%c0_5, %c0_6] : memref<128x1152xbf16, #tpu.memory_space<vmem>>, vector<128x64xbf16>
    %c0_7 = arith.constant 0 : index
    %c384 = arith.constant 384 : index
    %10 = vector.load %arg6[%c0_7, %c384] : memref<128x1152xbf16, #tpu.memory_space<vmem>>, vector<128x64xbf16>
    %c0_8 = arith.constant 0 : index
    %c768 = arith.constant 768 : index
    %11 = vector.load %arg6[%c0_8, %c768] : memref<128x1152xbf16, #tpu.memory_space<vmem>>, vector<128x64xbf16>
    %cst_9 = arith.constant dense<0.000000e+00> : vector<128x128xf32>
    %12 = tpu.matmul %9, %10, %cst_9 {dimension_numbers = #tpu.dot_dimension_numbers<[1], [1], [0], [0], [0, 0, 1, 0], [], []>} : vector<128x64xbf16>, vector<128x64xbf16>, vector<128x128xf32> -> vector<128x128xf32>
    %cst_10 = arith.constant -1.000000e+30 : f32
    %13 = vector.broadcast %cst_10 : f32 to vector<128x128xf32>
    %14 = arith.select %8, %12, %13 : vector<128x128xi1>, vector<128x128xf32>
    %cst_11 = arith.constant dense<0xFF800000> : vector<128xf32>
    %15 = vector.multi_reduction <maximumf>, %14, %cst_11 [1] : vector<128x128xf32> to vector<128xf32>
    %16 = vector.shape_cast %15 : vector<128xf32> to vector<128x1xf32>
    %17 = vector.broadcast %16 : vector<128x1xf32> to vector<128x128xf32>
    %18 = arith.subf %14, %17 : vector<128x128xf32>
    %19 = math.exp %18 : vector<128x128xf32>
    %cst_12 = arith.constant dense<0.000000e+00> : vector<128xf32>
    %20 = vector.multi_reduction <add>, %19, %cst_12 [1] : vector<128x128xf32> to vector<128xf32>
    %21 = vector.shape_cast %20 : vector<128xf32> to vector<128x1xf32>
    %22 = tpu.reciprocal %21 {approx = true} : vector<128x1xf32> -> vector<128x1xf32>
    %23 = vector.broadcast %22 : vector<128x1xf32> to vector<128x128xf32>
    %24 = arith.mulf %19, %23 : vector<128x128xf32>
    %25 = arith.truncf %24 : vector<128x128xf32> to vector<128x128xbf16>
    %cst_13 = arith.constant dense<0.000000e+00> : vector<128x64xf32>
    %26 = tpu.matmul %25, %11, %cst_13 {dimension_numbers = #tpu.dot_dimension_numbers<[1], [0], [0], [1], [0, 0, 1, 1], [], []>} : vector<128x128xbf16>, vector<128x64xbf16>, vector<128x64xf32> -> vector<128x64xf32>
    %27 = arith.truncf %26 : vector<128x64xf32> to vector<128x64xbf16>
    %c0_14 = arith.constant 0 : index
    %c0_15 = arith.constant 0 : index
    %28 = vector.load %arg3[%c0_14, %c0_15] : memref<384x384xbf16, #tpu.memory_space<vmem>>, vector<64x384xbf16>
    %cst_16 = arith.constant dense<0.000000e+00> : vector<128x384xf32>
    %29 = tpu.matmul %27, %28, %cst_16 {dimension_numbers = #tpu.dot_dimension_numbers<[1], [0], [0], [1], [0, 0, 1, 1], [], []>} : vector<128x64xbf16>, vector<64x384xbf16>, vector<128x384xf32> -> vector<128x384xf32>
    %c0_17 = arith.constant 0 : index
    %c0_18 = arith.constant 0 : index
    %30 = vector.load %arg7[%c0_17, %c0_18] : memref<128x384xf32, #tpu.memory_space<vmem>>, vector<128x384xf32>
    tpu.vector_store %arg7[%c0_17, %c0_18], %29 {strides = array<i32>} : memref<128x384xf32, #tpu.memory_space<vmem>>, vector<128x384xf32>,
    %c0_19 = arith.constant 0 : index
    %c64 = arith.constant 64 : index
    %31 = vector.load %arg6[%c0_19, %c64] : memref<128x1152xbf16, #tpu.memory_space<vmem>>, vector<128x64xbf16>
    %c0_20 = arith.constant 0 : index
    %c448 = arith.constant 448 : index
    %32 = vector.load %arg6[%c0_20, %c448] : memref<128x1152xbf16, #tpu.memory_space<vmem>>, vector<128x64xbf16>
    %c0_21 = arith.constant 0 : index
    %c832 = arith.constant 832 : index
    %33 = vector.load %arg6[%c0_21, %c832] : memref<128x1152xbf16, #tpu.memory_space<vmem>>, vector<128x64xbf16>
    %cst_22 = arith.constant dense<0.000000e+00> : vector<128x128xf32>
    %34 = tpu.matmul %31, %32, %cst_22 {dimension_numbers = #tpu.dot_dimension_numbers<[1], [1], [0], [0], [0, 0, 1, 0], [], []>} : vector<128x64xbf16>, vector<128x64xbf16>, vector<128x128xf32> -> vector<128x128xf32>
    %cst_23 = arith.constant -1.000000e+30 : f32
    %35 = vector.broadcast %cst_23 : f32 to vector<128x128xf32>
    %36 = arith.select %8, %34, %35 : vector<128x128xi1>, vector<128x128xf32>
    %cst_24 = arith.constant dense<0xFF800000> : vector<128xf32>
    %37 = vector.multi_reduction <maximumf>, %36, %cst_24 [1] : vector<128x128xf32> to vector<128xf32>
    %38 = vector.shape_cast %37 : vector<128xf32> to vector<128x1xf32>
    %39 = vector.broadcast %38 : vector<128x1xf32> to vector<128x128xf32>
    %40 = arith.subf %36, %39 : vector<128x128xf32>
    %41 = math.exp %40 : vector<128x128xf32>
    %cst_25 = arith.constant dense<0.000000e+00> : vector<128xf32>
    %42 = vector.multi_reduction <add>, %41, %cst_25 [1] : vector<128x128xf32> to vector<128xf32>
    %43 = vector.shape_cast %42 : vector<128xf32> to vector<128x1xf32>
    %44 = tpu.reciprocal %43 {approx = true} : vector<128x1xf32> -> vector<128x1xf32>
    %45 = vector.broadcast %44 : vector<128x1xf32> to vector<128x128xf32>
    %46 = arith.mulf %41, %45 : vector<128x128xf32>
    %47 = arith.truncf %46 : vector<128x128xf32> to vector<128x128xbf16>
    %cst_26 = arith.constant dense<0.000000e+00> : vector<128x64xf32>
    %48 = tpu.matmul %47, %33, %cst_26 {dimension_numbers = #tpu.dot_dimension_numbers<[1], [0], [0], [1], [0, 0, 1, 1], [], []>} : vector<128x128xbf16>, vector<128x64xbf16>, vector<128x64xf32> -> vector<128x64xf32>
    %49 = arith.truncf %48 : vector<128x64xf32> to vector<128x64xbf16>
    %c64_27 = arith.constant 64 : index
    %c0_28 = arith.constant 0 : index
    %50 = vector.load %arg3[%c64_27, %c0_28] : memref<384x384xbf16, #tpu.memory_space<vmem>>, vector<64x384xbf16>
    %cst_29 = arith.constant dense<0.000000e+00> : vector<128x384xf32>
    %51 = tpu.matmul %49, %50, %cst_29 {dimension_numbers = #tpu.dot_dimension_numbers<[1], [0], [0], [1], [0, 0, 1, 1], [], []>} : vector<128x64xbf16>, vector<64x384xbf16>, vector<128x384xf32> -> vector<128x384xf32>
    %c0_30 = arith.constant 0 : index
    %c0_31 = arith.constant 0 : index
    %52 = vector.load %arg7[%c0_30, %c0_31] : memref<128x384xf32, #tpu.memory_space<vmem>>, vector<128x384xf32>
    %53 = arith.addf %52, %51 : vector<128x384xf32>
    %c0_32 = arith.constant 0 : index
    %c0_33 = arith.constant 0 : index
    %54 = vector.load %arg7[%c0_32, %c0_33] : memref<128x384xf32, #tpu.memory_space<vmem>>, vector<128x384xf32>
    tpu.vector_store %arg7[%c0_32, %c0_33], %53 {strides = array<i32>} : memref<128x384xf32, #tpu.memory_space<vmem>>, vector<128x384xf32>,
    %c0_34 = arith.constant 0 : index
    %c128 = arith.constant 128 : index
    %55 = vector.load %arg6[%c0_34, %c128] : memref<128x1152xbf16, #tpu.memory_space<vmem>>, vector<128x64xbf16>
    %c0_35 = arith.constant 0 : index
    %c512 = arith.constant 512 : index
    %56 = vector.load %arg6[%c0_35, %c512] : memref<128x1152xbf16, #tpu.memory_space<vmem>>, vector<128x64xbf16>
    %c0_36 = arith.constant 0 : index
    %c896 = arith.constant 896 : index
    %57 = vector.load %arg6[%c0_36, %c896] : memref<128x1152xbf16, #tpu.memory_space<vmem>>, vector<128x64xbf16>
    %cst_37 = arith.constant dense<0.000000e+00> : vector<128x128xf32>
    %58 = tpu.matmul %55, %56, %cst_37 {dimension_numbers = #tpu.dot_dimension_numbers<[1], [1], [0], [0], [0, 0, 1, 0], [], []>} : vector<128x64xbf16>, vector<128x64xbf16>, vector<128x128xf32> -> vector<128x128xf32>
    %cst_38 = arith.constant -1.000000e+30 : f32
    %59 = vector.broadcast %cst_38 : f32 to vector<128x128xf32>
    %60 = arith.select %8, %58, %59 : vector<128x128xi1>, vector<128x128xf32>
    %cst_39 = arith.constant dense<0xFF800000> : vector<128xf32>
    %61 = vector.multi_reduction <maximumf>, %60, %cst_39 [1] : vector<128x128xf32> to vector<128xf32>
    %62 = vector.shape_cast %61 : vector<128xf32> to vector<128x1xf32>
    %63 = vector.broadcast %62 : vector<128x1xf32> to vector<128x128xf32>
    %64 = arith.subf %60, %63 : vector<128x128xf32>
    %65 = math.exp %64 : vector<128x128xf32>
    %cst_40 = arith.constant dense<0.000000e+00> : vector<128xf32>
    %66 = vector.multi_reduction <add>, %65, %cst_40 [1] : vector<128x128xf32> to vector<128xf32>
    %67 = vector.shape_cast %66 : vector<128xf32> to vector<128x1xf32>
    %68 = tpu.reciprocal %67 {approx = true} : vector<128x1xf32> -> vector<128x1xf32>
    %69 = vector.broadcast %68 : vector<128x1xf32> to vector<128x128xf32>
    %70 = arith.mulf %65, %69 : vector<128x128xf32>
    %71 = arith.truncf %70 : vector<128x128xf32> to vector<128x128xbf16>
    %cst_41 = arith.constant dense<0.000000e+00> : vector<128x64xf32>
    %72 = tpu.matmul %71, %57, %cst_41 {dimension_numbers = #tpu.dot_dimension_numbers<[1], [0], [0], [1], [0, 0, 1, 1], [], []>} : vector<128x128xbf16>, vector<128x64xbf16>, vector<128x64xf32> -> vector<128x64xf32>
    %73 = arith.truncf %72 : vector<128x64xf32> to vector<128x64xbf16>
    %c128_42 = arith.constant 128 : index
    %c0_43 = arith.constant 0 : index
    %74 = vector.load %arg3[%c128_42, %c0_43] : memref<384x384xbf16, #tpu.memory_space<vmem>>, vector<64x384xbf16>
    %cst_44 = arith.constant dense<0.000000e+00> : vector<128x384xf32>
    %75 = tpu.matmul %73, %74, %cst_44 {dimension_numbers = #tpu.dot_dimension_numbers<[1], [0], [0], [1], [0, 0, 1, 1], [], []>} : vector<128x64xbf16>, vector<64x384xbf16>, vector<128x384xf32> -> vector<128x384xf32>
    %c0_45 = arith.constant 0 : index
    %c0_46 = arith.constant 0 : index
    %76 = vector.load %arg7[%c0_45, %c0_46] : memref<128x384xf32, #tpu.memory_space<vmem>>, vector<128x384xf32>
    %77 = arith.addf %76, %75 : vector<128x384xf32>
    %c0_47 = arith.constant 0 : index
    %c0_48 = arith.constant 0 : index
    %78 = vector.load %arg7[%c0_47, %c0_48] : memref<128x384xf32, #tpu.memory_space<vmem>>, vector<128x384xf32>
    tpu.vector_store %arg7[%c0_47, %c0_48], %77 {strides = array<i32>} : memref<128x384xf32, #tpu.memory_space<vmem>>, vector<128x384xf32>,
    %c0_49 = arith.constant 0 : index
    %c192 = arith.constant 192 : index
    %79 = vector.load %arg6[%c0_49, %c192] : memref<128x1152xbf16, #tpu.memory_space<vmem>>, vector<128x64xbf16>
    %c0_50 = arith.constant 0 : index
    %c576 = arith.constant 576 : index
    %80 = vector.load %arg6[%c0_50, %c576] : memref<128x1152xbf16, #tpu.memory_space<vmem>>, vector<128x64xbf16>
    %c0_51 = arith.constant 0 : index
    %c960 = arith.constant 960 : index
    %81 = vector.load %arg6[%c0_51, %c960] : memref<128x1152xbf16, #tpu.memory_space<vmem>>, vector<128x64xbf16>
    %cst_52 = arith.constant dense<0.000000e+00> : vector<128x128xf32>
    %82 = tpu.matmul %79, %80, %cst_52 {dimension_numbers = #tpu.dot_dimension_numbers<[1], [1], [0], [0], [0, 0, 1, 0], [], []>} : vector<128x64xbf16>, vector<128x64xbf16>, vector<128x128xf32> -> vector<128x128xf32>
    %cst_53 = arith.constant -1.000000e+30 : f32
    %83 = vector.broadcast %cst_53 : f32 to vector<128x128xf32>
    %84 = arith.select %8, %82, %83 : vector<128x128xi1>, vector<128x128xf32>
    %cst_54 = arith.constant dense<0xFF800000> : vector<128xf32>
    %85 = vector.multi_reduction <maximumf>, %84, %cst_54 [1] : vector<128x128xf32> to vector<128xf32>
    %86 = vector.shape_cast %85 : vector<128xf32> to vector<128x1xf32>
    %87 = vector.broadcast %86 : vector<128x1xf32> to vector<128x128xf32>
    %88 = arith.subf %84, %87 : vector<128x128xf32>
    %89 = math.exp %88 : vector<128x128xf32>
    %cst_55 = arith.constant dense<0.000000e+00> : vector<128xf32>
    %90 = vector.multi_reduction <add>, %89, %cst_55 [1] : vector<128x128xf32> to vector<128xf32>
    %91 = vector.shape_cast %90 : vector<128xf32> to vector<128x1xf32>
    %92 = tpu.reciprocal %91 {approx = true} : vector<128x1xf32> -> vector<128x1xf32>
    %93 = vector.broadcast %92 : vector<128x1xf32> to vector<128x128xf32>
    %94 = arith.mulf %89, %93 : vector<128x128xf32>
    %95 = arith.truncf %94 : vector<128x128xf32> to vector<128x128xbf16>
    %cst_56 = arith.constant dense<0.000000e+00> : vector<128x64xf32>
    %96 = tpu.matmul %95, %81, %cst_56 {dimension_numbers = #tpu.dot_dimension_numbers<[1], [0], [0], [1], [0, 0, 1, 1], [], []>} : vector<128x128xbf16>, vector<128x64xbf16>, vector<128x64xf32> -> vector<128x64xf32>
    %97 = arith.truncf %96 : vector<128x64xf32> to vector<128x64xbf16>
    %c192_57 = arith.constant 192 : index
    %c0_58 = arith.constant 0 : index
    %98 = vector.load %arg3[%c192_57, %c0_58] : memref<384x384xbf16, #tpu.memory_space<vmem>>, vector<64x384xbf16>
    %cst_59 = arith.constant dense<0.000000e+00> : vector<128x384xf32>
    %99 = tpu.matmul %97, %98, %cst_59 {dimension_numbers = #tpu.dot_dimension_numbers<[1], [0], [0], [1], [0, 0, 1, 1], [], []>} : vector<128x64xbf16>, vector<64x384xbf16>, vector<128x384xf32> -> vector<128x384xf32>
    %c0_60 = arith.constant 0 : index
    %c0_61 = arith.constant 0 : index
    %100 = vector.load %arg7[%c0_60, %c0_61] : memref<128x384xf32, #tpu.memory_space<vmem>>, vector<128x384xf32>
    %101 = arith.addf %100, %99 : vector<128x384xf32>
    %c0_62 = arith.constant 0 : index
    %c0_63 = arith.constant 0 : index
    %102 = vector.load %arg7[%c0_62, %c0_63] : memref<128x384xf32, #tpu.memory_space<vmem>>, vector<128x384xf32>
    tpu.vector_store %arg7[%c0_62, %c0_63], %101 {strides = array<i32>} : memref<128x384xf32, #tpu.memory_space<vmem>>, vector<128x384xf32>,
    %c0_64 = arith.constant 0 : index
    %c256 = arith.constant 256 : index
    %103 = vector.load %arg6[%c0_64, %c256] : memref<128x1152xbf16, #tpu.memory_space<vmem>>, vector<128x64xbf16>
    %c0_65 = arith.constant 0 : index
    %c640 = arith.constant 640 : index
    %104 = vector.load %arg6[%c0_65, %c640] : memref<128x1152xbf16, #tpu.memory_space<vmem>>, vector<128x64xbf16>
    %c0_66 = arith.constant 0 : index
    %c1024 = arith.constant 1024 : index
    %105 = vector.load %arg6[%c0_66, %c1024] : memref<128x1152xbf16, #tpu.memory_space<vmem>>, vector<128x64xbf16>
    %cst_67 = arith.constant dense<0.000000e+00> : vector<128x128xf32>
    %106 = tpu.matmul %103, %104, %cst_67 {dimension_numbers = #tpu.dot_dimension_numbers<[1], [1], [0], [0], [0, 0, 1, 0], [], []>} : vector<128x64xbf16>, vector<128x64xbf16>, vector<128x128xf32> -> vector<128x128xf32>
    %cst_68 = arith.constant -1.000000e+30 : f32
    %107 = vector.broadcast %cst_68 : f32 to vector<128x128xf32>
    %108 = arith.select %8, %106, %107 : vector<128x128xi1>, vector<128x128xf32>
    %cst_69 = arith.constant dense<0xFF800000> : vector<128xf32>
    %109 = vector.multi_reduction <maximumf>, %108, %cst_69 [1] : vector<128x128xf32> to vector<128xf32>
    %110 = vector.shape_cast %109 : vector<128xf32> to vector<128x1xf32>
    %111 = vector.broadcast %110 : vector<128x1xf32> to vector<128x128xf32>
    %112 = arith.subf %108, %111 : vector<128x128xf32>
    %113 = math.exp %112 : vector<128x128xf32>
    %cst_70 = arith.constant dense<0.000000e+00> : vector<128xf32>
    %114 = vector.multi_reduction <add>, %113, %cst_70 [1] : vector<128x128xf32> to vector<128xf32>
    %115 = vector.shape_cast %114 : vector<128xf32> to vector<128x1xf32>
    %116 = tpu.reciprocal %115 {approx = true} : vector<128x1xf32> -> vector<128x1xf32>
    %117 = vector.broadcast %116 : vector<128x1xf32> to vector<128x128xf32>
    %118 = arith.mulf %113, %117 : vector<128x128xf32>
    %119 = arith.truncf %118 : vector<128x128xf32> to vector<128x128xbf16>
    %cst_71 = arith.constant dense<0.000000e+00> : vector<128x64xf32>
    %120 = tpu.matmul %119, %105, %cst_71 {dimension_numbers = #tpu.dot_dimension_numbers<[1], [0], [0], [1], [0, 0, 1, 1], [], []>} : vector<128x128xbf16>, vector<128x64xbf16>, vector<128x64xf32> -> vector<128x64xf32>
    %121 = arith.truncf %120 : vector<128x64xf32> to vector<128x64xbf16>
    %c256_72 = arith.constant 256 : index
    %c0_73 = arith.constant 0 : index
    %122 = vector.load %arg3[%c256_72, %c0_73] : memref<384x384xbf16, #tpu.memory_space<vmem>>, vector<64x384xbf16>
    %cst_74 = arith.constant dense<0.000000e+00> : vector<128x384xf32>
    %123 = tpu.matmul %121, %122, %cst_74 {dimension_numbers = #tpu.dot_dimension_numbers<[1], [0], [0], [1], [0, 0, 1, 1], [], []>} : vector<128x64xbf16>, vector<64x384xbf16>, vector<128x384xf32> -> vector<128x384xf32>
    %c0_75 = arith.constant 0 : index
    %c0_76 = arith.constant 0 : index
    %124 = vector.load %arg7[%c0_75, %c0_76] : memref<128x384xf32, #tpu.memory_space<vmem>>, vector<128x384xf32>
    %125 = arith.addf %124, %123 : vector<128x384xf32>
    %c0_77 = arith.constant 0 : index
    %c0_78 = arith.constant 0 : index
    %126 = vector.load %arg7[%c0_77, %c0_78] : memref<128x384xf32, #tpu.memory_space<vmem>>, vector<128x384xf32>
    tpu.vector_store %arg7[%c0_77, %c0_78], %125 {strides = array<i32>} : memref<128x384xf32, #tpu.memory_space<vmem>>, vector<128x384xf32>,
    %c0_79 = arith.constant 0 : index
    %c320 = arith.constant 320 : index
    %127 = vector.load %arg6[%c0_79, %c320] : memref<128x1152xbf16, #tpu.memory_space<vmem>>, vector<128x64xbf16>
    %c0_80 = arith.constant 0 : index
    %c704 = arith.constant 704 : index
    %128 = vector.load %arg6[%c0_80, %c704] : memref<128x1152xbf16, #tpu.memory_space<vmem>>, vector<128x64xbf16>
    %c0_81 = arith.constant 0 : index
    %c1088 = arith.constant 1088 : index
    %129 = vector.load %arg6[%c0_81, %c1088] : memref<128x1152xbf16, #tpu.memory_space<vmem>>, vector<128x64xbf16>
    %cst_82 = arith.constant dense<0.000000e+00> : vector<128x128xf32>
    %130 = tpu.matmul %127, %128, %cst_82 {dimension_numbers = #tpu.dot_dimension_numbers<[1], [1], [0], [0], [0, 0, 1, 0], [], []>} : vector<128x64xbf16>, vector<128x64xbf16>, vector<128x128xf32> -> vector<128x128xf32>
    %cst_83 = arith.constant -1.000000e+30 : f32
    %131 = vector.broadcast %cst_83 : f32 to vector<128x128xf32>
    %132 = arith.select %8, %130, %131 : vector<128x128xi1>, vector<128x128xf32>
    %cst_84 = arith.constant dense<0xFF800000> : vector<128xf32>
    %133 = vector.multi_reduction <maximumf>, %132, %cst_84 [1] : vector<128x128xf32> to vector<128xf32>
    %134 = vector.shape_cast %133 : vector<128xf32> to vector<128x1xf32>
    %135 = vector.broadcast %134 : vector<128x1xf32> to vector<128x128xf32>
    %136 = arith.subf %132, %135 : vector<128x128xf32>
    %137 = math.exp %136 : vector<128x128xf32>
    %cst_85 = arith.constant dense<0.000000e+00> : vector<128xf32>
    %138 = vector.multi_reduction <add>, %137, %cst_85 [1] : vector<128x128xf32> to vector<128xf32>
    %139 = vector.shape_cast %138 : vector<128xf32> to vector<128x1xf32>
    %140 = tpu.reciprocal %139 {approx = true} : vector<128x1xf32> -> vector<128x1xf32>
    %141 = vector.broadcast %140 : vector<128x1xf32> to vector<128x128xf32>
    %142 = arith.mulf %137, %141 : vector<128x128xf32>
    %143 = arith.truncf %142 : vector<128x128xf32> to vector<128x128xbf16>
    %cst_86 = arith.constant dense<0.000000e+00> : vector<128x64xf32>
    %144 = tpu.matmul %143, %129, %cst_86 {dimension_numbers = #tpu.dot_dimension_numbers<[1], [0], [0], [1], [0, 0, 1, 1], [], []>} : vector<128x128xbf16>, vector<128x64xbf16>, vector<128x64xf32> -> vector<128x64xf32>
    %145 = arith.truncf %144 : vector<128x64xf32> to vector<128x64xbf16>
    %c320_87 = arith.constant 320 : index
    %c0_88 = arith.constant 0 : index
    %146 = vector.load %arg3[%c320_87, %c0_88] : memref<384x384xbf16, #tpu.memory_space<vmem>>, vector<64x384xbf16>
    %cst_89 = arith.constant dense<0.000000e+00> : vector<128x384xf32>
    %147 = tpu.matmul %145, %146, %cst_89 {dimension_numbers = #tpu.dot_dimension_numbers<[1], [0], [0], [1], [0, 0, 1, 1], [], []>} : vector<128x64xbf16>, vector<64x384xbf16>, vector<128x384xf32> -> vector<128x384xf32>
    %c0_90 = arith.constant 0 : index
    %c0_91 = arith.constant 0 : index
    %148 = vector.load %arg7[%c0_90, %c0_91] : memref<128x384xf32, #tpu.memory_space<vmem>>, vector<128x384xf32>
    %149 = arith.addf %148, %147 : vector<128x384xf32>
    %c0_92 = arith.constant 0 : index
    %c0_93 = arith.constant 0 : index
    %150 = vector.load %arg7[%c0_92, %c0_93] : memref<128x384xf32, #tpu.memory_space<vmem>>, vector<128x384xf32>
    tpu.vector_store %arg7[%c0_92, %c0_93], %149 {strides = array<i32>} : memref<128x384xf32, #tpu.memory_space<vmem>>, vector<128x384xf32>,
    %c0_94 = arith.constant 0 : index
    %c0_95 = arith.constant 0 : index
    %151 = vector.load %arg7[%c0_94, %c0_95] : memref<128x384xf32, #tpu.memory_space<vmem>>, vector<128x384xf32>
    %c0_96 = arith.constant 0 : index
    %c0_97 = arith.constant 0 : index
    %152 = vector.load %arg4[%c0_96, %c0_97] : memref<1x384xf32, #tpu.memory_space<vmem>>, vector<1x384xf32>
    %153 = vector.broadcast %152 : vector<1x384xf32> to vector<128x384xf32>
    %154 = arith.addf %151, %153 : vector<128x384xf32>
    %c0_98 = arith.constant 0 : index
    %c0_99 = arith.constant 0 : index
    %155 = vector.load %arg5[%c0_98, %c0_99] : memref<128x384xf32, #tpu.memory_space<vmem>>, vector<128x384xf32>
    tpu.vector_store %arg5[%c0_98, %c0_99], %154 {strides = array<i32>} : memref<128x384xf32, #tpu.memory_space<vmem>>, vector<128x384xf32>,
    return
  }
  func.func @transform_0(%arg0: i32) -> (i32, i32) {
    %c0_i32 = arith.constant 0 : i32
    %c0_i32_0 = arith.constant 0 : i32
    return %arg0, %c0_i32 : i32, i32
  }
  func.func @transform_1(%arg0: i32) -> (i32, i32) {
    %c0_i32 = arith.constant 0 : i32
    %c0_i32_0 = arith.constant 0 : i32
    %c0_i32_1 = arith.constant 0 : i32
    return %c0_i32, %c0_i32_0 : i32, i32
  }
  func.func @transform_2(%arg0: i32) -> (i32, i32) {
    %c0_i32 = arith.constant 0 : i32
    %c0_i32_0 = arith.constant 0 : i32
    %c0_i32_1 = arith.constant 0 : i32
    return %c0_i32, %c0_i32_0 : i32, i32
  }
  func.func @transform_3(%arg0: i32) -> (i32, i32) {
    %c0_i32 = arith.constant 0 : i32
    %c0_i32_0 = arith.constant 0 : i32
    %c0_i32_1 = arith.constant 0 : i32
    return %c0_i32, %c0_i32_0 : i32, i32
  }
  func.func @transform_4(%arg0: i32) -> (i32, i32) {
    %c0_i32 = arith.constant 0 : i32
    %c0_i32_0 = arith.constant 0 : i32
    return %arg0, %c0_i32 : i32, i32
  }
}

</mosaic_0001>

<llo_original>
// kernel: tpu_custom_call.1
$region0: #{tpu_custom_call.1}
  #allocation0 [shape = 'u32[]', space=smem, size = 0x4, offset = 0x4, fixed_abs, tag = 'smem constant byte address 0x4 - core index']
  #allocation1 [shape = 'u32[144,128]{1,0:T(1,128)}', space=vmem, size = 0x12000, scoped, tag = 'internal scratch']
  #allocation2 [shape = 'bf16[128,1152]{1,0:T(16,128)(2,1)}', space=vmem, size = 0x48000, scoped, tag = 'scratch operand']
  #allocation3 [shape = 'f32[128,384]{1,0:T(8,128)}', space=vmem, size = 0x30000, scoped, tag = 'scratch operand']
  %s0 = inlined_call_operand.hbm [shape: f32[256,384], index: 0, kind: input, shape index: {}]
  %s1 = inlined_call_operand.hbm [shape: bf16[384,1152], index: 1, kind: input, shape index: {}]
  %s2 = inlined_call_operand.hbm [shape: bf16[384,384], index: 2, kind: input, shape index: {}]
  %s3 = inlined_call_operand.vmem [shape: f32[1,384], index: 3, kind: input, shape index: {}]
  %s4 = inlined_call_operand.hbm [shape: f32[256,384], index: 4, kind: output, shape index: {}]
  %s5 = sld [smem:[#allocation0]]
  $region61: #{tpu_custom_call.1} parent=0
    _
  %s7 = ssub.s32 1, %s5
  %s8 = scalar_select 0, %s7, %s5
  $region1: #{tpu_custom_call.1} parent=0
    #allocation4 [shape = 'u8[393216]{0}', space=vmem, size = 0x60000, scoped, tag = 'input window, operand 0']
    #allocation5 [shape = 's32[2]{0}', space=sflag, size = 0x8, scoped, tag = 'scoped memory for tpu_custom_call.1']
    #allocation6 [shape = 's32[2]{0}', space=sflag, size = 0x8, scoped, tag = 'scoped memory for tpu_custom_call.1']
    #allocation7 [shape = 'u8[884736]{0}', space=vmem, size = 0xd8000, scoped, tag = 'input window, operand 1, single buffered']
    #allocation8 [shape = 's32[1]{0}', space=sflag, size = 0x4, scoped, tag = 'scoped memory for tpu_custom_call.1']
    #allocation9 [shape = 'u8[294912]{0}', space=vmem, size = 0x48000, scoped, tag = 'input window, operand 2, single buffered']
    #allocation10 [shape = 'u8[393216]{0}', space=vmem, size = 0x60000, scoped, tag = 'output window, operand 0']
    %9 = vsyncpa [#allocation5], 0
    %s10 = scalar_lea.sflag [#allocation5], 1
    %11 = vsyncpa %s10, 0
    %12 = vsyncpa [#allocation8], 0
    %13 = vsyncpa [#allocation6], 0
    %s14 = scalar_lea.sflag [#allocation6], 1
    %15 = vsyncpa %s14, 0
    loop: start=0, step=1, limit=4
    $region2: #{tpu_custom_call.1} parent=1 // loop_pre_header
      _
    $region3: #{tpu_custom_call.1} parent=1 // loop_header
      %s17 = sphi 0, %s21
      %p18 = scmp.ge.s32.totalorder %s17, 4
      %s27 = sphi 0, %s29
      %s30 = sphi 0, %s27
      %s31 = sphi 0, %s30
      %s47 = sphi 0, %s31
      %s51 = sphi 0, %s51
      %s53 = sphi 0, %s51
      %s54 = sphi 0, %s53
      %s68 = sphi 0, %s54
      %s72 = sphi 0, %s72
      %s74 = sphi 0, %s72
      %s75 = sphi 0, %s74
      %s89 = sphi 0, %s75
      %s93 = sphi 0, %s93
      %s95 = sphi 0, %s93
      %s96 = sphi 0, %s95
      %s110 = sphi 0, %s96
      %s116 = sphi 0, %s118
      %s119 = sphi 0, %s116
      %s120 = sphi 0, %s119
      %s136 = sphi 0, %s120
    $region4: #{tpu_custom_call.1} parent=1 // loop_header_branch
      %20 = sbr.rel (%p18) target = $region8
    $region5: #{tpu_custom_call.1} parent=1 // loop_body
      %s22 = ssub.s32 %s17, 1
      %s23 = ssub.s32 %s17, 2
      %s24 = sadd.s32 %s17, 1
      %s25 = ssub.s32 %s17, %s24
      %p26 = scmp.eq.s32.totalorder %s25, 0
      %s28 = sadd.s32 %s27, 1
      %s29 = scalar_select %p26, %s27, %s28
      %p32 = pneg %p26
      %p33 = scmp.eq.s32.totalorder %s17, 1
      %p34 = por %p32, %p33
      %p35 = scmp.ne.s32.totalorder %s27, %s30
      %p36 = scmp.eq.s32.totalorder %s17, 0
      %p37 = por %p35, %p36
      %p38 = scmp.ne.s32.totalorder %s27, %s30
      %p39 = scmp.eq.s32.totalorder %s22, 1
      %p40 = por %p38, %p39
      %p41 = scmp.ne.s32.totalorder %s30, %s31
      %p42 = scmp.eq.s32.totalorder %s22, 0
      %p43 = por %p41, %p42
      %p44 = scmp.ne.s32.totalorder %s30, %s31
      %p45 = scmp.eq.s32.totalorder %s23, 1
      %p46 = por %p44, %p45
      %p48 = scmp.ne.s32.totalorder %s31, %s47
      %p49 = scmp.eq.s32.totalorder %s23, 0
      %p50 = por %p48, %p49
      %s52 = sadd.s32 %s51, 1
      %p55 = scmp.eq.s32.totalorder %s17, 1
      %p56 = scmp.ne.s32.totalorder %s51, %s53
      %p57 = scmp.eq.s32.totalorder %s17, 0
      %p58 = por %p56, %p57
      %p59 = scmp.ne.s32.totalorder %s51, %s53
      %p60 = scmp.eq.s32.totalorder %s22, 1
      %p61 = por %p59, %p60
      %p62 = scmp.ne.s32.totalorder %s53, %s54
      %p63 = scmp.eq.s32.totalorder %s22, 0
      %p64 = por %p62, %p63
      %p65 = scmp.ne.s32.totalorder %s53, %s54
      %p66 = scmp.eq.s32.totalorder %s23, 1
      %p67 = por %p65, %p66
      %p69 = scmp.ne.s32.totalorder %s54, %s68
      %p70 = scmp.eq.s32.totalorder %s23, 0
      %p71 = por %p69, %p70
      %s73 = sadd.s32 %s72, 1
      %p76 = scmp.eq.s32.totalorder %s17, 1
      %p77 = scmp.ne.s32.totalorder %s72, %s74
      %p78 = scmp.eq.s32.totalorder %s17, 0
      %p79 = por %p77, %p78
      %p80 = scmp.ne.s32.totalorder %s72, %s74
      %p81 = scmp.eq.s32.totalorder %s22, 1
      %p82 = por %p80, %p81
      %p83 = scmp.ne.s32.totalorder %s74, %s75
      %p84 = scmp.eq.s32.totalorder %s22, 0
      %p85 = por %p83, %p84
      %p86 = scmp.ne.s32.totalorder %s74, %s75
      %p87 = scmp.eq.s32.totalorder %s23, 1
      %p88 = por %p86, %p87
      %p90 = scmp.ne.s32.totalorder %s75, %s89
      %p91 = scmp.eq.s32.totalorder %s23, 0
      %p92 = por %p90, %p91
      %s94 = sadd.s32 %s93, 1
      %p97 = scmp.eq.s32.totalorder %s17, 1
      %p98 = scmp.ne.s32.totalorder %s93, %s95
      %p99 = scmp.eq.s32.totalorder %s17, 0
      %p100 = por %p98, %p99
      %p101 = scmp.ne.s32.totalorder %s93, %s95
      %p102 = scmp.eq.s32.totalorder %s22, 1
      %p103 = por %p101, %p102
      %p104 = scmp.ne.s32.totalorder %s95, %s96
      %p105 = scmp.eq.s32.totalorder %s22, 0
      %p106 = por %p104, %p105
      %p107 = scmp.ne.s32.totalorder %s95, %s96
      %p108 = scmp.eq.s32.totalorder %s23, 1
      %p109 = por %p107, %p108
      %p111 = scmp.ne.s32.totalorder %s96, %s110
      %p112 = scmp.eq.s32.totalorder %s23, 0
      %p113 = por %p111, %p112
      %s114 = ssub.s32 %s17, %s24
      %p115 = scmp.eq.s32.totalorder %s114, 0
      %s117 = sadd.s32 %s116, 1
      %s118 = scalar_select %p115, %s116, %s117
      %p121 = pneg %p115
      %p122 = scmp.eq.s32.totalorder %s17, 1
      %p123 = por %p121, %p122
      %p124 = scmp.ne.s32.totalorder %s116, %s119
      %p125 = scmp.eq.s32.totalorder %s17, 0
      %p126 = por %p124, %p125
      %p127 = scmp.ne.s32.totalorder %s116, %s119
      %p128 = scmp.eq.s32.totalorder %s22, 1
      %p129 = por %p127, %p128
      %p130 = scmp.ne.s32.totalorder %s119, %s120
      %p131 = scmp.eq.s32.totalorder %s22, 0
      %p132 = por %p130, %p131
      %p133 = scmp.ne.s32.totalorder %s119, %s120
      %p134 = scmp.eq.s32.totalorder %s23, 1
      %p135 = por %p133, %p134
      %p137 = scmp.ne.s32.totalorder %s120, %s136
      %p138 = scmp.eq.s32.totalorder %s23, 0
      %p139 = por %p137, %p138
      %p140 = scmp.le.s32.totalorder 1, %s17
      %p141 = scmp.lt.s32.totalorder %s17, 3
      %p142 = pnand %p140, %p141
      %p143 = pneg %p142
      // Predicated region
      $region9: #{tpu_custom_call.1} parent=5 // pred_check
        _
      $region10: #{tpu_custom_call.1} parent=5 // pred_check_branch
        %145 = sbr.rel (%p142) target = $region12
      $region11: #{tpu_custom_call.1} parent=5 // pred_region
        %s146 = ssub.s32 %s17, 1
        // Predicated region
        $region13: #{tpu_custom_call.1} parent=11 // pred_check
          %p147 = pneg %p64
        $region14: #{tpu_custom_call.1} parent=11 // pred_check_branch
          %149 = sbr.rel (%p147) target = $region16
        $region15: #{tpu_custom_call.1} parent=11 // pred_region
          %s151 = ssub.s32 27648, 27648
          %152 = vsyncadd [#allocation8], %s151
          %s153 = sshll.u32 [#allocation7], 4
          %s154 = int_to_ptr.vmem [resolvable:$true] %s153
          %159 = dma.hbm_to_vmem [thread:$0]  %s1, 27648, %s154, [#allocation8], 576, 576, 36
        $region16: #{tpu_custom_call.1} parent=11 // pred_fallthru
          _
        // Predicated region
        $region17: #{tpu_custom_call.1} parent=11 // pred_check
          %p160 = pneg %p85
        $region18: #{tpu_custom_call.1} parent=11 // pred_check_branch
          %162 = sbr.rel (%p160) target = $region20
        $region19: #{tpu_custom_call.1} parent=11 // pred_region
          %s164 = ssub.s32 9216, 9216
          %165 = vsyncadd [#allocation8], %s164
          %s166 = sshll.u32 [#allocation9], 4
          %s167 = int_to_ptr.vmem [resolvable:$true] %s166
          %172 = dma.hbm_to_vmem [thread:$0]  %s2, 9216, %s167, [#allocation8], 192, 192, 12
        $region20: #{tpu_custom_call.1} parent=11 // pred_fallthru
          _
        // Predicated region
        $region21: #{tpu_custom_call.1} parent=11 // pred_check
          %p173 = pneg %p106
        $region22: #{tpu_custom_call.1} parent=11 // pred_check_branch
          %175 = sbr.rel (%p173) target = $region24
        $region23: #{tpu_custom_call.1} parent=11 // pred_region
          _
        $region24: #{tpu_custom_call.1} parent=11 // pred_fallthru
          _
      $region12: #{tpu_custom_call.1} parent=5 // pred_fallthru
        _
      %p176 = scmp.lt.s32.totalorder %s17, 2
      // Predicated region
      $region25: #{tpu_custom_call.1} parent=5 // pred_check
        %p177 = pneg %p176
      $region26: #{tpu_custom_call.1} parent=5 // pred_check_branch
        %179 = sbr.rel (%p177) target = $region28
      $region27: #{tpu_custom_call.1} parent=5 // pred_region
        // Predicated region
        $region29: #{tpu_custom_call.1} parent=27 // pred_check
          %p180 = pneg %p37
        $region30: #{tpu_custom_call.1} parent=27 // pred_check_branch
          %182 = sbr.rel (%p180) target = $region32
        $region31: #{tpu_custom_call.1} parent=27 // pred_region
          %s183 = sand.u32 %s27, 1
          %s184 = scalar_lea.sflag [#allocation5], %s183
          %s185 = sand.u32 %s27, 1
          %s186 = smul.addr %s185, 384
          %s187 = scalar_lea.vmem [#allocation4], %s186
          %s188 = smul.u32 16, %s17
          %s190 = ssub.s32 6144, 6144
          %191 = vsyncadd %s184, %s190
          %s192 = smul.addr %s188, 3
          %s193 = smul.addr %s192, 128
          %s194 = scalar_lea.hbm %s0, %s193
          %s195 = sshll.u32 %s187, 4
          %s196 = int_to_ptr.vmem [resolvable:$true] %s195
          %201 = dma.hbm_to_vmem [thread:$0]  %s194, 6144, %s196, %s184, 384, 384, 24
        $region32: #{tpu_custom_call.1} parent=27 // pred_fallthru
          _
      $region28: #{tpu_custom_call.1} parent=5 // pred_fallthru
        _
      %p202 = scmp.le.s32.totalorder 1, %s17
      %p203 = scmp.lt.s32.totalorder %s17, 3
      %p204 = pnand %p202, %p203
      %p205 = pneg %p204
      // Predicated region
      $region33: #{tpu_custom_call.1} parent=5 // pred_check
        _
      $region34: #{tpu_custom_call.1} parent=5 // pred_check_branch
        %207 = sbr.rel (%p204) target = $region36
      $region35: #{tpu_custom_call.1} parent=5 // pred_region
        %s208 = ssub.s32 %s17, 1
        %s209 = sand.u32 %s30, 1
        %s210 = scalar_lea.sflag [#allocation5], %s209
        %s211 = sand.u32 %s30, 1
        %s212 = smul.addr %s211, 384
        %s213 = scalar_lea.vmem [#allocation4], %s212
        // Predicated region
        $region37: #{tpu_custom_call.1} parent=35 // pred_check
          %p214 = pneg %p43
        $region38: #{tpu_custom_call.1} parent=35 // pred_check_branch
          %216 = sbr.rel (%p214) target = $region40
        $region39: #{tpu_custom_call.1} parent=35 // pred_region
          %217 = dma.done %s210, 6144
        $region40: #{tpu_custom_call.1} parent=35 // pred_fallthru
          _
        // Predicated region
        $region41: #{tpu_custom_call.1} parent=35 // pred_check
          %p218 = pneg %p64
        $region42: #{tpu_custom_call.1} parent=35 // pred_check_branch
          %220 = sbr.rel (%p218) target = $region44
        $region43: #{tpu_custom_call.1} parent=35 // pred_region
          %221 = dma.done [#allocation8], 27648
        $region44: #{tpu_custom_call.1} parent=35 // pred_fallthru
          _
        // Predicated region
        $region45: #{tpu_custom_call.1} parent=35 // pred_check
          %p222 = pneg %p85
        $region46: #{tpu_custom_call.1} parent=35 // pred_check_branch
          %224 = sbr.rel (%p222) target = $region48
        $region47: #{tpu_custom_call.1} parent=35 // pred_region
          %225 = dma.done [#allocation8], 9216
        $region48: #{tpu_custom_call.1} parent=35 // pred_fallthru
          _
        %s226 = sand.u32 %s30, 1
        %s227 = scalar_lea.sflag [#allocation5], %s226
        %s228 = sand.u32 %s30, 1
        %s229 = smul.addr %s228, 384
        %s230 = scalar_lea.vmem [#allocation4], %s229
        %p231 = pneg %p43
        %p232 = pneg %p40
        %p233 = pneg %p64
        %p234 = pneg %p61
        %p235 = pneg %p85
        %p236 = pneg %p82
        %p237 = pneg %p106
        %p238 = pneg %p103
        %p239 = pneg %p132
        %p240 = pneg %p129
        %s241 = sand.u32 %s119, 1
        %s242 = scalar_lea.sflag [#allocation6], %s241
        %s243 = sand.u32 %s119, 1
        %s244 = smul.addr %s243, 384
        %s245 = scalar_lea.vmem [#allocation10], %s244
        %s246 = smul.u32 16, %s22
        %s247 = smul.u32 16, %s22
        %v249 = vld [vmem:[%s213] sm:$0xff]
        %v250 = vld [vmem:[%s213 + $0x8] sm:$0xff]
        %v251 = vld [vmem:[%s213 + $0x10] sm:$0xff]
        %v252 = vld [vmem:[%s213 + $0x18] sm:$0xff]
        %v253 = vld [vmem:[%s213 + $0x20] sm:$0xff]
        %v254 = vld [vmem:[%s213 + $0x28] sm:$0xff]
        %v255 = vld [vmem:[%s213 + $0x30] sm:$0xff]
        %v256 = vld [vmem:[%s213 + $0x38] sm:$0xff]
        %v257 = vld [vmem:[%s213 + $0x40] sm:$0xff]
        %v258 = vld [vmem:[%s213 + $0x48] sm:$0xff]
        %v259 = vld [vmem:[%s213 + $0x50] sm:$0xff]
        %v260 = vld [vmem:[%s213 + $0x58] sm:$0xff]
        %v261 = vld [vmem:[%s213 + $0x60] sm:$0xff]
        %v262 = vld [vmem:[%s213 + $0x68] sm:$0xff]
        %v263 = vld [vmem:[%s213 + $0x70] sm:$0xff]
        %v264 = vld [vmem:[%s213 + $0x78] sm:$0xff]
        %v265 = vld [vmem:[%s213 + $0x80] sm:$0xff]
        %v266 = vld [vmem:[%s213 + $0x88] sm:$0xff]
        %v267 = vld [vmem:[%s213 + $0x90] sm:$0xff]
        %v268 = vld [vmem:[%s213 + $0x98] sm:$0xff]
        %v269 = vld [vmem:[%s213 + $0xa0] sm:$0xff]
        %v270 = vld [vmem:[%s213 + $0xa8] sm:$0xff]
        %v271 = vld [vmem:[%s213 + $0xb0] sm:$0xff]
        %v272 = vld [vmem:[%s213 + $0xb8] sm:$0xff]
        %v273 = vld [vmem:[%s213 + $0xc0] sm:$0xff]
        %v274 = vld [vmem:[%s213 + $0xc8] sm:$0xff]
        %v275 = vld [vmem:[%s213 + $0xd0] sm:$0xff]
        %v276 = vld [vmem:[%s213 + $0xd8] sm:$0xff]
        %v277 = vld [vmem:[%s213 + $0xe0] sm:$0xff]
        %v278 = vld [vmem:[%s213 + $0xe8] sm:$0xff]
        %v279 = vld [vmem:[%s213 + $0xf0] sm:$0xff]
        %v280 = vld [vmem:[%s213 + $0xf8] sm:$0xff]
        %v281 = vld [vmem:[%s213 + $0x100] sm:$0xff]
        %v282 = vld [vmem:[%s213 + $0x108] sm:$0xff]
        %v283 = vld [vmem:[%s213 + $0x110] sm:$0xff]
        %v284 = vld [vmem:[%s213 + $0x118] sm:$0xff]
        %v285 = vld [vmem:[%s213 + $0x120] sm:$0xff]
        %v286 = vld [vmem:[%s213 + $0x128] sm:$0xff]
        %v287 = vld [vmem:[%s213 + $0x130] sm:$0xff]
        %v288 = vld [vmem:[%s213 + $0x138] sm:$0xff]
        %v289 = vld [vmem:[%s213 + $0x140] sm:$0xff]
        %v290 = vld [vmem:[%s213 + $0x148] sm:$0xff]
        %v291 = vld [vmem:[%s213 + $0x150] sm:$0xff]
        %v292 = vld [vmem:[%s213 + $0x158] sm:$0xff]
        %v293 = vld [vmem:[%s213 + $0x160] sm:$0xff]
        %v294 = vld [vmem:[%s213 + $0x168] sm:$0xff]
        %v295 = vld [vmem:[%s213 + $0x170] sm:$0xff]
        %v296 = vld [vmem:[%s213 + $0x178] sm:$0xff]
        %v297 = vpack.c.bf16 %v252, %v249
        %v298 = vpack.c.bf16 %v253, %v250
        %v299 = vpack.c.bf16 %v254, %v251
        %v300 = vpack.c.bf16 %v258, %v255
        %v301 = vpack.c.bf16 %v259, %v256
        %v302 = vpack.c.bf16 %v260, %v257
        %v303 = vpack.c.bf16 %v264, %v261
        %v304 = vpack.c.bf16 %v265, %v262
        %v305 = vpack.c.bf16 %v266, %v263
        %v306 = vpack.c.bf16 %v270, %v267
        %v307 = vpack.c.bf16 %v271, %v268
        %v308 = vpack.c.bf16 %v272, %v269
        %v309 = vpack.c.bf16 %v276, %v273
        %v310 = vpack.c.bf16 %v277, %v274
        %v311 = vpack.c.bf16 %v278, %v275
        %v312 = vpack.c.bf16 %v282, %v279
        %v313 = vpack.c.bf16 %v283, %v280
        %v314 = vpack.c.bf16 %v284, %v281
        %v315 = vpack.c.bf16 %v288, %v285
        %v316 = vpack.c.bf16 %v289, %v286
        %v317 = vpack.c.bf16 %v290, %v287
        %v318 = vpack.c.bf16 %v294, %v291
        %v319 = vpack.c.bf16 %v295, %v292
        %v320 = vpack.c.bf16 %v296, %v293
        %v321 = vld [vmem:[#allocation7] sm:$0xff]
        %v322 = vld [vmem:[#allocation7 + $0x8] sm:$0xff]
        %v323 = vld [vmem:[#allocation7 + $0x10] sm:$0xff]
        %v324 = vld [vmem:[#allocation7 + $0x18] sm:$0xff]
        %v325 = vld [vmem:[#allocation7 + $0x20] sm:$0xf]
        %v326 = vld [vmem:[#allocation7 + $0x24] sm:$0xff]
        %v327 = vld [vmem:[#allocation7 + $0x2c] sm:$0xff]
        %v328 = vld [vmem:[#allocation7 + $0x34] sm:$0xff]
        %v329 = vld [vmem:[#allocation7 + $0x3c] sm:$0xff]
        %v330 = vld [vmem:[#allocation7 + $0x44] sm:$0xf]
        %v331 = vld [vmem:[#allocation7 + $0x48] sm:$0xff]
        %v332 = vld [vmem:[#allocation7 + $0x50] sm:$0xff]
        %v333 = vld [vmem:[#allocation7 + $0x58] sm:$0xff]
        %v334 = vld [vmem:[#allocation7 + $0x60] sm:$0xff]
        %v335 = vld [vmem:[#allocation7 + $0x68] sm:$0xf]
        %v336 = vld [vmem:[#allocation7 + $0x6c] sm:$0xff]
        %v337 = vld [vmem:[#allocation7 + $0x74] sm:$0xff]
        %v338 = vld [vmem:[#allocation7 + $0x7c] sm:$0xff]
        %v339 = vld [vmem:[#allocation7 + $0x84] sm:$0xff]
        %v340 = vld [vmem:[#allocation7 + $0x8c] sm:$0xf]
        %v341 = vld [vmem:[#allocation7 + $0x90] sm:$0xff]
        %v342 = vld [vmem:[#allocation7 + $0x98] sm:$0xff]
        %v343 = vld [vmem:[#allocation7 + $0xa0] sm:$0xff]
        %v344 = vld [vmem:[#allocation7 + $0xa8] sm:$0xff]
        %v345 = vld [vmem:[#allocation7 + $0xb0] sm:$0xf]
        %v346 = vld [vmem:[#allocation7 + $0xb4] sm:$0xff]
        %v347 = vld [vmem:[#allocation7 + $0xbc] sm:$0xff]
        %v348 = vld [vmem:[#allocation7 + $0xc4] sm:$0xff]
        %v349 = vld [vmem:[#allocation7 + $0xcc] sm:$0xff]
        %v350 = vld [vmem:[#allocation7 + $0xd4] sm:$0xf]
        %v351 = vld [vmem:[#allocation7 + $0xd8] sm:$0xff]
        %v352 = vld [vmem:[#allocation7 + $0xe0] sm:$0xff]
        %v353 = vld [vmem:[#allocation7 + $0xe8] sm:$0xff]
        %v354 = vld [vmem:[#allocation7 + $0xf0] sm:$0xff]
        %v355 = vld [vmem:[#allocation7 + $0xf8] sm:$0xf]
        %v356 = vld [vmem:[#allocation7 + $0xfc] sm:$0xff]
        %v357 = vld [vmem:[#allocation7 + $0x104] sm:$0xff]
        %v358 = vld [vmem:[#allocation7 + $0x10c] sm:$0xff]
        %v359 = vld [vmem:[#allocation7 + $0x114] sm:$0xff]
        %v360 = vld [vmem:[#allocation7 + $0x11c] sm:$0xf]
        %v361 = vld [vmem:[#allocation7 + $0x120] sm:$0xff]
        %v362 = vld [vmem:[#allocation7 + $0x128] sm:$0xff]
        %v363 = vld [vmem:[#allocation7 + $0x130] sm:$0xff]
        %v364 = vld [vmem:[#allocation7 + $0x138] sm:$0xff]
        %v365 = vld [vmem:[#allocation7 + $0x140] sm:$0xf]
        %v366 = vld [vmem:[#allocation7 + $0x144] sm:$0xff]
        %v367 = vld [vmem:[#allocation7 + $0x14c] sm:$0xff]
        %v368 = vld [vmem:[#allocation7 + $0x154] sm:$0xff]
        %v369 = vld [vmem:[#allocation7 + $0x15c] sm:$0xff]
        %v370 = vld [vmem:[#allocation7 + $0x164] sm:$0xf]
        %v371 = vld [vmem:[#allocation7 + $0x168] sm:$0xff]
        %v372 = vld [vmem:[#allocation7 + $0x170] sm:$0xff]
        %v373 = vld [vmem:[#allocation7 + $0x178] sm:$0xff]
        %v374 = vld [vmem:[#allocation7 + $0x180] sm:$0xff]
        %v375 = vld [vmem:[#allocation7 + $0x188] sm:$0xf]
        %v376 = vld [vmem:[#allocation7 + $0x18c] sm:$0xff]
        %v377 = vld [vmem:[#allocation7 + $0x194] sm:$0xff]
        %v378 = vld [vmem:[#allocation7 + $0x19c] sm:$0xff]
        %v379 = vld [vmem:[#allocation7 + $0x1a4] sm:$0xff]
        %v380 = vld [vmem:[#allocation7 + $0x1ac] sm:$0xf]
        %v381 = vld [vmem:[#allocation7 + $0x1b0] sm:$0xff]
        %v382 = vld [vmem:[#allocation7 + $0x1b8] sm:$0xff]
        %v383 = vld [vmem:[#allocation7 + $0x1c0] sm:$0xff]
        %v384 = vld [vmem:[#allocation7 + $0x1c8] sm:$0xff]
        %v385 = vld [vmem:[#allocation7 + $0x1d0] sm:$0xf]
        %v386 = vld [vmem:[#allocation7 + $0x1d4] sm:$0xff]
        %v387 = vld [vmem:[#allocation7 + $0x1dc] sm:$0xff]
        %v388 = vld [vmem:[#allocation7 + $0x1e4] sm:$0xff]
        %v389 = vld [vmem:[#allocation7 + $0x1ec] sm:$0xff]
        %v390 = vld [vmem:[#allocation7 + $0x1f4] sm:$0xf]
        %v391 = vld [vmem:[#allocation7 + $0x1f8] sm:$0xff]
        %v392 = vld [vmem:[#allocation7 + $0x200] sm:$0xff]
        %v393 = vld [vmem:[#allocation7 + $0x208] sm:$0xff]
        %v394 = vld [vmem:[#allocation7 + $0x210] sm:$0xff]
        %v395 = vld [vmem:[#allocation7 + $0x218] sm:$0xf]
        %v396 = vld [vmem:[#allocation7 + $0x21c] sm:$0xff]
        %v397 = vld [vmem:[#allocation7 + $0x224] sm:$0xff]
        %v398 = vld [vmem:[#allocation7 + $0x22c] sm:$0xff]
        %v399 = vld [vmem:[#allocation7 + $0x234] sm:$0xff]
        %v400 = vld [vmem:[#allocation7 + $0x23c] sm:$0xf]
        %v401 = vld [vmem:[#allocation7 + $0x240] sm:$0xff]
        %v402 = vld [vmem:[#allocation7 + $0x248] sm:$0xff]
        %v403 = vld [vmem:[#allocation7 + $0x250] sm:$0xff]
        %v404 = vld [vmem:[#allocation7 + $0x258] sm:$0xff]
        %v405 = vld [vmem:[#allocation7 + $0x260] sm:$0xf]
        %v406 = vld [vmem:[#allocation7 + $0x264] sm:$0xff]
        %v407 = vld [vmem:[#allocation7 + $0x26c] sm:$0xff]
        %v408 = vld [vmem:[#allocation7 + $0x274] sm:$0xff]
        %v409 = vld [vmem:[#allocation7 + $0x27c] sm:$0xff]
        %v410 = vld [vmem:[#allocation7 + $0x284] sm:$0xf]
        %v411 = vld [vmem:[#allocation7 + $0x288] sm:$0xff]
        %v412 = vld [vmem:[#allocation7 + $0x290] sm:$0xff]
        %v413 = vld [vmem:[#allocation7 + $0x298] sm:$0xff]
        %v414 = vld [vmem:[#allocation7 + $0x2a0] sm:$0xff]
        %v415 = vld [vmem:[#allocation7 + $0x2a8] sm:$0xf]
        %v416 = vld [vmem:[#allocation7 + $0x2ac] sm:$0xff]
        %v417 = vld [vmem:[#allocation7 + $0x2b4] sm:$0xff]
        %v418 = vld [vmem:[#allocation7 + $0x2bc] sm:$0xff]
        %v419 = vld [vmem:[#allocation7 + $0x2c4] sm:$0xff]
        %v420 = vld [vmem:[#allocation7 + $0x2cc] sm:$0xf]
        %v421 = vld [vmem:[#allocation7 + $0x2d0] sm:$0xff]
        %v422 = vld [vmem:[#allocation7 + $0x2d8] sm:$0xff]
        %v423 = vld [vmem:[#allocation7 + $0x2e0] sm:$0xff]
        %v424 = vld [vmem:[#allocation7 + $0x2e8] sm:$0xff]
        %v425 = vld [vmem:[#allocation7 + $0x2f0] sm:$0xf]
        %v426 = vld [vmem:[#allocation7 + $0x2f4] sm:$0xff]
        %v427 = vld [vmem:[#allocation7 + $0x2fc] sm:$0xff]
        %v428 = vld [vmem:[#allocation7 + $0x304] sm:$0xff]
        %v429 = vld [vmem:[#allocation7 + $0x30c] sm:$0xff]
        %v430 = vld [vmem:[#allocation7 + $0x314] sm:$0xf]
        %v431 = vld [vmem:[#allocation7 + $0x318] sm:$0xff]
        %v432 = vld [vmem:[#allocation7 + $0x320] sm:$0xff]
        %v433 = vld [vmem:[#allocation7 + $0x328] sm:$0xff]
        %v434 = vld [vmem:[#allocation7 + $0x330] sm:$0xff]
        %v435 = vld [vmem:[#allocation7 + $0x338] sm:$0xf]
        %v436 = vld [vmem:[#allocation7 + $0x33c] sm:$0xff]
        %v437 = vld [vmem:[#allocation7 + $0x344] sm:$0xff]
        %v438 = vld [vmem:[#allocation7 + $0x34c] sm:$0xff]
        %v439 = vld [vmem:[#allocation7 + $0x354] sm:$0xff]
        %v440 = vld [vmem:[#allocation7 + $0x35c] sm:$0xf]
        %v441 = vld [vmem:[#allocation7 + $0x360] sm:$0xff]
        %v442 = vld [vmem:[#allocation7 + $0x368] sm:$0xff]
        %v443 = vld [vmem:[#allocation7 + $0x370] sm:$0xff]
        %v444 = vld [vmem:[#allocation7 + $0x378] sm:$0xff]
        %v445 = vld [vmem:[#allocation7 + $0x380] sm:$0xf]
        %v446 = vld [vmem:[#allocation7 + $0x384] sm:$0xff]
        %v447 = vld [vmem:[#allocation7 + $0x38c] sm:$0xff]
        %v448 = vld [vmem:[#allocation7 + $0x394] sm:$0xff]
        %v449 = vld [vmem:[#allocation7 + $0x39c] sm:$0xff]
        %v450 = vld [vmem:[#allocation7 + $0x3a4] sm:$0xf]
        %v451 = vld [vmem:[#allocation7 + $0x3a8] sm:$0xff]
        %v452 = vld [vmem:[#allocation7 + $0x3b0] sm:$0xff]
        %v453 = vld [vmem:[#allocation7 + $0x3b8] sm:$0xff]
        %v454 = vld [vmem:[#allocation7 + $0x3c0] sm:$0xff]
        %v455 = vld [vmem:[#allocation7 + $0x3c8] sm:$0xf]
        %v456 = vld [vmem:[#allocation7 + $0x3cc] sm:$0xff]
        %v457 = vld [vmem:[#allocation7 + $0x3d4] sm:$0xff]
        %v458 = vld [vmem:[#allocation7 + $0x3dc] sm:$0xff]
        %v459 = vld [vmem:[#allocation7 + $0x3e4] sm:$0xff]
        %v460 = vld [vmem:[#allocation7 + $0x3ec] sm:$0xf]
        %v461 = vld [vmem:[#allocation7 + $0x3f0] sm:$0xff]
        %v462 = vld [vmem:[#allocation7 + $0x3f8] sm:$0xff]
        %v463 = vld [vmem:[#allocation7 + $0x400] sm:$0xff]
        %v464 = vld [vmem:[#allocation7 + $0x408] sm:$0xff]
        %v465 = vld [vmem:[#allocation7 + $0x410] sm:$0xf]
        %v466 = vld [vmem:[#allocation7 + $0x414] sm:$0xff]
        %v467 = vld [vmem:[#allocation7 + $0x41c] sm:$0xff]
        %v468 = vld [vmem:[#allocation7 + $0x424] sm:$0xff]
        %v469 = vld [vmem:[#allocation7 + $0x42c] sm:$0xff]
        %v470 = vld [vmem:[#allocation7 + $0x434] sm:$0xf]
        %v471 = vld [vmem:[#allocation7 + $0x438] sm:$0xff]
        %v472 = vld [vmem:[#allocation7 + $0x440] sm:$0xff]
        %v473 = vld [vmem:[#allocation7 + $0x448] sm:$0xff]
        %v474 = vld [vmem:[#allocation7 + $0x450] sm:$0xff]
        %v475 = vld [vmem:[#allocation7 + $0x458] sm:$0xf]
        %v476 = vld [vmem:[#allocation7 + $0x45c] sm:$0xff]
        %v477 = vld [vmem:[#allocation7 + $0x464] sm:$0xff]
        %v478 = vld [vmem:[#allocation7 + $0x46c] sm:$0xff]
        %v479 = vld [vmem:[#allocation7 + $0x474] sm:$0xff]
        %v480 = vld [vmem:[#allocation7 + $0x47c] sm:$0xf]
        %v481 = vld [vmem:[#allocation7 + $0x480] sm:$0xff]
        %v482 = vld [vmem:[#allocation7 + $0x488] sm:$0xff]
        %v483 = vld [vmem:[#allocation7 + $0x490] sm:$0xff]
        %v484 = vld [vmem:[#allocation7 + $0x498] sm:$0xff]
        %v485 = vld [vmem:[#allocation7 + $0x4a0] sm:$0xf]
        %v486 = vld [vmem:[#allocation7 + $0x4a4] sm:$0xff]
        %v487 = vld [vmem:[#allocation7 + $0x4ac] sm:$0xff]
        %v488 = vld [vmem:[#allocation7 + $0x4b4] sm:$0xff]
        %v489 = vld [vmem:[#allocation7 + $0x4bc] sm:$0xff]
        %v490 = vld [vmem:[#allocation7 + $0x4c4] sm:$0xf]
        %v491 = vld [vmem:[#allocation7 + $0x4c8] sm:$0xff]
        %v492 = vld [vmem:[#allocation7 + $0x4d0] sm:$0xff]
        %v493 = vld [vmem:[#allocation7 + $0x4d8] sm:$0xff]
        %v494 = vld [vmem:[#allocation7 + $0x4e0] sm:$0xff]
        %v495 = vld [vmem:[#allocation7 + $0x4e8] sm:$0xf]
        %v496 = vld [vmem:[#allocation7 + $0x4ec] sm:$0xff]
        %v497 = vld [vmem:[#allocation7 + $0x4f4] sm:$0xff]
        %v498 = vld [vmem:[#allocation7 + $0x4fc] sm:$0xff]
        %v499 = vld [vmem:[#allocation7 + $0x504] sm:$0xff]
        %v500 = vld [vmem:[#allocation7 + $0x50c] sm:$0xf]
        %v501 = vld [vmem:[#allocation7 + $0x510] sm:$0xff]
        %v502 = vld [vmem:[#allocation7 + $0x518] sm:$0xff]
        %v503 = vld [vmem:[#allocation7 + $0x520] sm:$0xff]
        %v504 = vld [vmem:[#allocation7 + $0x528] sm:$0xff]
        %v505 = vld [vmem:[#allocation7 + $0x530] sm:$0xf]
        %v506 = vld [vmem:[#allocation7 + $0x534] sm:$0xff]
        %v507 = vld [vmem:[#allocation7 + $0x53c] sm:$0xff]
        %v508 = vld [vmem:[#allocation7 + $0x544] sm:$0xff]
        %v509 = vld [vmem:[#allocation7 + $0x54c] sm:$0xff]
        %v510 = vld [vmem:[#allocation7 + $0x554] sm:$0xf]
        %v511 = vld [vmem:[#allocation7 + $0x558] sm:$0xff]
        %v512 = vld [vmem:[#allocation7 + $0x560] sm:$0xff]
        %v513 = vld [vmem:[#allocation7 + $0x568] sm:$0xff]
        %v514 = vld [vmem:[#allocation7 + $0x570] sm:$0xff]
        %v515 = vld [vmem:[#allocation7 + $0x578] sm:$0xf]
        %v516 = vld [vmem:[#allocation7 + $0x57c] sm:$0xff]
        %v517 = vld [vmem:[#allocation7 + $0x584] sm:$0xff]
        %v518 = vld [vmem:[#allocation7 + $0x58c] sm:$0xff]
        %v519 = vld [vmem:[#allocation7 + $0x594] sm:$0xff]
        %v520 = vld [vmem:[#allocation7 + $0x59c] sm:$0xf]
        %v521 = vld [vmem:[#allocation7 + $0x5a0] sm:$0xff]
        %v522 = vld [vmem:[#allocation7 + $0x5a8] sm:$0xff]
        %v523 = vld [vmem:[#allocation7 + $0x5b0] sm:$0xff]
        %v524 = vld [vmem:[#allocation7 + $0x5b8] sm:$0xff]
        %v525 = vld [vmem:[#allocation7 + $0x5c0] sm:$0xf]
        %v526 = vld [vmem:[#allocation7 + $0x5c4] sm:$0xff]
        %v527 = vld [vmem:[#allocation7 + $0x5cc] sm:$0xff]
        %v528 = vld [vmem:[#allocation7 + $0x5d4] sm:$0xff]
        %v529 = vld [vmem:[#allocation7 + $0x5dc] sm:$0xff]
        %v530 = vld [vmem:[#allocation7 + $0x5e4] sm:$0xf]
        %v531 = vld [vmem:[#allocation7 + $0x5e8] sm:$0xff]
        %v532 = vld [vmem:[#allocation7 + $0x5f0] sm:$0xff]
        %v533 = vld [vmem:[#allocation7 + $0x5f8] sm:$0xff]
        %v534 = vld [vmem:[#allocation7 + $0x600] sm:$0xff]
        %v535 = vld [vmem:[#allocation7 + $0x608] sm:$0xf]
        %v536 = vld [vmem:[#allocation7 + $0x60c] sm:$0xff]
        %v537 = vld [vmem:[#allocation7 + $0x614] sm:$0xff]
        %v538 = vld [vmem:[#allocation7 + $0x61c] sm:$0xff]
        %v539 = vld [vmem:[#allocation7 + $0x624] sm:$0xff]
        %v540 = vld [vmem:[#allocation7 + $0x62c] sm:$0xf]
        %v541 = vld [vmem:[#allocation7 + $0x630] sm:$0xff]
        %v542 = vld [vmem:[#allocation7 + $0x638] sm:$0xff]
        %v543 = vld [vmem:[#allocation7 + $0x640] sm:$0xff]
        %v544 = vld [vmem:[#allocation7 + $0x648] sm:$0xff]
        %v545 = vld [vmem:[#allocation7 + $0x650] sm:$0xf]
        %v546 = vld [vmem:[#allocation7 + $0x654] sm:$0xff]
        %v547 = vld [vmem:[#allocation7 + $0x65c] sm:$0xff]
        %v548 = vld [vmem:[#allocation7 + $0x664] sm:$0xff]
        %v549 = vld [vmem:[#allocation7 + $0x66c] sm:$0xff]
        %v550 = vld [vmem:[#allocation7 + $0x674] sm:$0xf]
        %v551 = vld [vmem:[#allocation7 + $0x678] sm:$0xff]
        %v552 = vld [vmem:[#allocation7 + $0x680] sm:$0xff]
        %v553 = vld [vmem:[#allocation7 + $0x688] sm:$0xff]
        %v554 = vld [vmem:[#allocation7 + $0x690] sm:$0xff]
        %v555 = vld [vmem:[#allocation7 + $0x698] sm:$0xf]
        %v556 = vld [vmem:[#allocation7 + $0x69c] sm:$0xff]
        %v557 = vld [vmem:[#allocation7 + $0x6a4] sm:$0xff]
        %v558 = vld [vmem:[#allocation7 + $0x6ac] sm:$0xff]
        %v559 = vld [vmem:[#allocation7 + $0x6b4] sm:$0xff]
        %v560 = vld [vmem:[#allocation7 + $0x6bc] sm:$0xf]
        %v801 = vunpack.c.l.b16 %v321
        %v802 = vunpack.c.h.b16 %v321
        %v803 = vunpack.c.l.b16 %v322
        %v804 = vunpack.c.h.b16 %v322
        %v805 = vunpack.c.l.b16 %v323
        %v806 = vunpack.c.h.b16 %v323
        %v807 = vunpack.c.l.b16 %v324
        %v808 = vunpack.c.h.b16 %v324
        %v809 = vunpack.c.l.b16 %v325
        %v810 = vunpack.c.l.b16 %v326
        %v811 = vunpack.c.h.b16 %v326
        %v812 = vunpack.c.l.b16 %v327
        %v813 = vunpack.c.h.b16 %v327
        %v814 = vunpack.c.l.b16 %v328
        %v815 = vunpack.c.h.b16 %v328
        %v816 = vunpack.c.l.b16 %v329
        %v817 = vunpack.c.h.b16 %v329
        %v818 = vunpack.c.l.b16 %v330
        %v819 = vunpack.c.l.b16 %v331
        %v820 = vunpack.c.h.b16 %v331
        %v821 = vunpack.c.l.b16 %v332
        %v822 = vunpack.c.h.b16 %v332
        %v823 = vunpack.c.l.b16 %v333
        %v824 = vunpack.c.h.b16 %v333
        %v825 = vunpack.c.l.b16 %v334
        %v826 = vunpack.c.h.b16 %v334
        %v827 = vunpack.c.l.b16 %v335
        %v828 = vunpack.c.l.b16 %v336
        %v829 = vunpack.c.h.b16 %v336
        %v830 = vunpack.c.l.b16 %v337
        %v831 = vunpack.c.h.b16 %v337
        %v832 = vunpack.c.l.b16 %v338
        %v833 = vunpack.c.h.b16 %v338
        %v834 = vunpack.c.l.b16 %v339
        %v835 = vunpack.c.h.b16 %v339
        %v836 = vunpack.c.l.b16 %v340
        %v837 = vunpack.c.l.b16 %v341
        %v838 = vunpack.c.h.b16 %v341
        %v839 = vunpack.c.l.b16 %v342
        %v840 = vunpack.c.h.b16 %v342
        %v841 = vunpack.c.l.b16 %v343
        %v842 = vunpack.c.h.b16 %v343
        %v843 = vunpack.c.l.b16 %v344
        %v844 = vunpack.c.h.b16 %v344
        %v845 = vunpack.c.l.b16 %v345
        %v846 = vunpack.c.l.b16 %v346
        %v847 = vunpack.c.h.b16 %v346
        %v848 = vunpack.c.l.b16 %v347
        %v849 = vunpack.c.h.b16 %v347
        %v850 = vunpack.c.l.b16 %v348
        %v851 = vunpack.c.h.b16 %v348
        %v852 = vunpack.c.l.b16 %v349
        %v853 = vunpack.c.h.b16 %v349
        %v854 = vunpack.c.l.b16 %v350
        %v855 = vunpack.c.l.b16 %v351
        %v856 = vunpack.c.h.b16 %v351
        %v857 = vunpack.c.l.b16 %v352
        %v858 = vunpack.c.h.b16 %v352
        %v859 = vunpack.c.l.b16 %v353
        %v860 = vunpack.c.h.b16 %v353
        %v861 = vunpack.c.l.b16 %v354
        %v862 = vunpack.c.h.b16 %v354
        %v863 = vunpack.c.l.b16 %v355
        %v864 = vunpack.c.l.b16 %v356
        %v865 = vunpack.c.h.b16 %v356
        %v866 = vunpack.c.l.b16 %v357
        %v867 = vunpack.c.h.b16 %v357
        %v868 = vunpack.c.l.b16 %v358
        %v869 = vunpack.c.h.b16 %v358
        %v870 = vunpack.c.l.b16 %v359
        %v871 = vunpack.c.h.b16 %v359
        %v872 = vunpack.c.l.b16 %v360
        %v873 = vunpack.c.l.b16 %v361
        %v874 = vunpack.c.h.b16 %v361
        %v875 = vunpack.c.l.b16 %v362
        %v876 = vunpack.c.h.b16 %v362
        %v877 = vunpack.c.l.b16 %v363
        %v878 = vunpack.c.h.b16 %v363
        %v879 = vunpack.c.l.b16 %v364
        %v880 = vunpack.c.h.b16 %v364
        %v881 = vunpack.c.l.b16 %v365
        %v882 = vunpack.c.l.b16 %v366
        %v883 = vunpack.c.h.b16 %v366
        %v884 = vunpack.c.l.b16 %v367
        %v885 = vunpack.c.h.b16 %v367
        %v886 = vunpack.c.l.b16 %v368
        %v887 = vunpack.c.h.b16 %v368
        %v888 = vunpack.c.l.b16 %v369
        %v889 = vunpack.c.h.b16 %v369
        %v890 = vunpack.c.l.b16 %v370
        %v891 = vunpack.c.l.b16 %v371
        %v892 = vunpack.c.h.b16 %v371
        %v893 = vunpack.c.l.b16 %v372
        %v894 = vunpack.c.h.b16 %v372
        %v895 = vunpack.c.l.b16 %v373
        %v896 = vunpack.c.h.b16 %v373
        %v897 = vunpack.c.l.b16 %v374
        %v898 = vunpack.c.h.b16 %v374
        %v899 = vunpack.c.l.b16 %v375
        %v900 = vunpack.c.l.b16 %v376
        %v901 = vunpack.c.h.b16 %v376
        %v902 = vunpack.c.l.b16 %v377
        %v903 = vunpack.c.h.b16 %v377
        %v904 = vunpack.c.l.b16 %v378
        %v905 = vunpack.c.h.b16 %v378
        %v906 = vunpack.c.l.b16 %v379
        %v907 = vunpack.c.h.b16 %v379
        %v908 = vunpack.c.l.b16 %v380
        %v909 = vunpack.c.l.b16 %v381
        %v910 = vunpack.c.h.b16 %v381
        %v911 = vunpack.c.l.b16 %v382
        %v912 = vunpack.c.h.b16 %v382
        %v913 = vunpack.c.l.b16 %v383
        %v914 = vunpack.c.h.b16 %v383
        %v915 = vunpack.c.l.b16 %v384
        %v916 = vunpack.c.h.b16 %v384
        %v917 = vunpack.c.l.b16 %v385
        %v918 = vunpack.c.l.b16 %v386
        %v919 = vunpack.c.h.b16 %v386
        %v920 = vunpack.c.l.b16 %v387
        %v921 = vunpack.c.h.b16 %v387
        %v922 = vunpack.c.l.b16 %v388
        %v923 = vunpack.c.h.b16 %v388
        %v924 = vunpack.c.l.b16 %v389
        %v925 = vunpack.c.h.b16 %v389
        %v926 = vunpack.c.l.b16 %v390
        %v927 = vunpack.c.l.b16 %v391
        %v928 = vunpack.c.h.b16 %v391
        %v929 = vunpack.c.l.b16 %v392
        %v930 = vunpack.c.h.b16 %v392
        %v931 = vunpack.c.l.b16 %v393
        %v932 = vunpack.c.h.b16 %v393
        %v933 = vunpack.c.l.b16 %v394
        %v934 = vunpack.c.h.b16 %v394
        %v935 = vunpack.c.l.b16 %v395
        %v936 = vunpack.c.l.b16 %v396
        %v937 = vunpack.c.h.b16 %v396
        %v938 = vunpack.c.l.b16 %v397
        %v939 = vunpack.c.h.b16 %v397
        %v940 = vunpack.c.l.b16 %v398
        %v941 = vunpack.c.h.b16 %v398
        %v942 = vunpack.c.l.b16 %v399
        %v943 = vunpack.c.h.b16 %v399
        %v944 = vunpack.c.l.b16 %v400
        %v945 = vunpack.c.l.b16 %v401
        %v946 = vunpack.c.h.b16 %v401
        %v947 = vunpack.c.l.b16 %v402
        %v948 = vunpack.c.h.b16 %v402
        %v949 = vunpack.c.l.b16 %v403
        %v950 = vunpack.c.h.b16 %v403
        %v951 = vunpack.c.l.b16 %v404
        %v952 = vunpack.c.h.b16 %v404
        %v953 = vunpack.c.l.b16 %v405
        %v954 = vunpack.c.l.b16 %v406
        %v955 = vunpack.c.h.b16 %v406
        %v956 = vunpack.c.l.b16 %v407
        %v957 = vunpack.c.h.b16 %v407
        %v958 = vunpack.c.l.b16 %v408
        %v959 = vunpack.c.h.b16 %v408
        %v960 = vunpack.c.l.b16 %v409
        %v961 = vunpack.c.h.b16 %v409
        %v962 = vunpack.c.l.b16 %v410
        %v963 = vunpack.c.l.b16 %v411
        %v964 = vunpack.c.h.b16 %v411
        %v965 = vunpack.c.l.b16 %v412
        %v966 = vunpack.c.h.b16 %v412
        %v967 = vunpack.c.l.b16 %v413
        %v968 = vunpack.c.h.b16 %v413
        %v969 = vunpack.c.l.b16 %v414
        %v970 = vunpack.c.h.b16 %v414
        %v971 = vunpack.c.l.b16 %v415
        %v972 = vunpack.c.l.b16 %v416
        %v973 = vunpack.c.h.b16 %v416
        %v974 = vunpack.c.l.b16 %v417
        %v975 = vunpack.c.h.b16 %v417
        %v976 = vunpack.c.l.b16 %v418
        %v977 = vunpack.c.h.b16 %v418
        %v978 = vunpack.c.l.b16 %v419
        %v979 = vunpack.c.h.b16 %v419
        %v980 = vunpack.c.l.b16 %v420
        %v981 = vunpack.c.l.b16 %v421
        %v982 = vunpack.c.h.b16 %v421
        %v983 = vunpack.c.l.b16 %v422
        %v984 = vunpack.c.h.b16 %v422
        %v985 = vunpack.c.l.b16 %v423
        %v986 = vunpack.c.h.b16 %v423
        %v987 = vunpack.c.l.b16 %v424
        %v988 = vunpack.c.h.b16 %v424
        %v989 = vunpack.c.l.b16 %v425
        %v990 = vunpack.c.l.b16 %v426
        %v991 = vunpack.c.h.b16 %v426
        %v992 = vunpack.c.l.b16 %v427
        %v993 = vunpack.c.h.b16 %v427
        %v994 = vunpack.c.l.b16 %v428
        %v995 = vunpack.c.h.b16 %v428
        %v996 = vunpack.c.l.b16 %v429
        %v997 = vunpack.c.h.b16 %v429
        %v998 = vunpack.c.l.b16 %v430
        %v999 = vunpack.c.l.b16 %v431
        %v1000 = vunpack.c.h.b16 %v431
        %v1001 = vunpack.c.l.b16 %v432
        %v1002 = vunpack.c.h.b16 %v432
        %v1003 = vunpack.c.l.b16 %v433
        %v1004 = vunpack.c.h.b16 %v433
        %v1005 = vunpack.c.l.b16 %v434
        %v1006 = vunpack.c.h.b16 %v434
        %v1007 = vunpack.c.l.b16 %v435
        %v1008 = vunpack.c.l.b16 %v436
        %v1009 = vunpack.c.h.b16 %v436
        %v1010 = vunpack.c.l.b16 %v437
        %v1011 = vunpack.c.h.b16 %v437
        %v1012 = vunpack.c.l.b16 %v438
        %v1013 = vunpack.c.h.b16 %v438
        %v1014 = vunpack.c.l.b16 %v439
        %v1015 = vunpack.c.h.b16 %v439
        %v1016 = vunpack.c.l.b16 %v440
        %v1017 = vunpack.c.l.b16 %v441
        %v1018 = vunpack.c.h.b16 %v441
        %v1019 = vunpack.c.l.b16 %v442
        %v1020 = vunpack.c.h.b16 %v442
        %v1021 = vunpack.c.l.b16 %v443
        %v1022 = vunpack.c.h.b16 %v443
        %v1023 = vunpack.c.l.b16 %v444
        %v1024 = vunpack.c.h.b16 %v444
        %v1025 = vunpack.c.l.b16 %v445
        %v1026 = vunpack.c.l.b16 %v446
        %v1027 = vunpack.c.h.b16 %v446
        %v1028 = vunpack.c.l.b16 %v447
        %v1029 = vunpack.c.h.b16 %v447
        %v1030 = vunpack.c.l.b16 %v448
        %v1031 = vunpack.c.h.b16 %v448
        %v1032 = vunpack.c.l.b16 %v449
        %v1033 = vunpack.c.h.b16 %v449
        %v1034 = vunpack.c.l.b16 %v450
        %v1035 = vunpack.c.l.b16 %v451
        %v1036 = vunpack.c.h.b16 %v451
        %v1037 = vunpack.c.l.b16 %v452
        %v1038 = vunpack.c.h.b16 %v452
        %v1039 = vunpack.c.l.b16 %v453
        %v1040 = vunpack.c.h.b16 %v453
        %v1041 = vunpack.c.l.b16 %v454
        %v1042 = vunpack.c.h.b16 %v454
        %v1043 = vunpack.c.l.b16 %v455
        %v1044 = vunpack.c.l.b16 %v456
        %v1045 = vunpack.c.h.b16 %v456
        %v1046 = vunpack.c.l.b16 %v457
        %v1047 = vunpack.c.h.b16 %v457
        %v1048 = vunpack.c.l.b16 %v458
        %v1049 = vunpack.c.h.b16 %v458
        %v1050 = vunpack.c.l.b16 %v459
        %v1051 = vunpack.c.h.b16 %v459
        %v1052 = vunpack.c.l.b16 %v460
        %v1053 = vunpack.c.l.b16 %v461
        %v1054 = vunpack.c.h.b16 %v461
        %v1055 = vunpack.c.l.b16 %v462
        %v1056 = vunpack.c.h.b16 %v462
        %v1057 = vunpack.c.l.b16 %v463
        %v1058 = vunpack.c.h.b16 %v463
        %v1059 = vunpack.c.l.b16 %v464
        %v1060 = vunpack.c.h.b16 %v464
        %v1061 = vunpack.c.l.b16 %v465
        %v1062 = vunpack.c.l.b16 %v466
        %v1063 = vunpack.c.h.b16 %v466
        %v1064 = vunpack.c.l.b16 %v467
        %v1065 = vunpack.c.h.b16 %v467
        %v1066 = vunpack.c.l.b16 %v468
        %v1067 = vunpack.c.h.b16 %v468
        %v1068 = vunpack.c.l.b16 %v469
        %v1069 = vunpack.c.h.b16 %v469
        %v1070 = vunpack.c.l.b16 %v470
        %v1071 = vunpack.c.l.b16 %v471
        %v1072 = vunpack.c.h.b16 %v471
        %v1073 = vunpack.c.l.b16 %v472
        %v1074 = vunpack.c.h.b16 %v472
        %v1075 = vunpack.c.l.b16 %v473
        %v1076 = vunpack.c.h.b16 %v473
        %v1077 = vunpack.c.l.b16 %v474
        %v1078 = vunpack.c.h.b16 %v474
        %v1079 = vunpack.c.l.b16 %v475
        %v1080 = vunpack.c.l.b16 %v476
        %v1081 = vunpack.c.h.b16 %v476
        %v1082 = vunpack.c.l.b16 %v477
        %v1083 = vunpack.c.h.b16 %v477
        %v1084 = vunpack.c.l.b16 %v478
        %v1085 = vunpack.c.h.b16 %v478
        %v1086 = vunpack.c.l.b16 %v479
        %v1087 = vunpack.c.h.b16 %v479
        %v1088 = vunpack.c.l.b16 %v480
        %v1089 = vunpack.c.l.b16 %v481
        %v1090 = vunpack.c.h.b16 %v481
        %v1091 = vunpack.c.l.b16 %v482
        %v1092 = vunpack.c.h.b16 %v482
        %v1093 = vunpack.c.l.b16 %v483
        %v1094 = vunpack.c.h.b16 %v483
        %v1095 = vunpack.c.l.b16 %v484
        %v1096 = vunpack.c.h.b16 %v484
        %v1097 = vunpack.c.l.b16 %v485
        %v1098 = vunpack.c.l.b16 %v486
        %v1099 = vunpack.c.h.b16 %v486
        %v1100 = vunpack.c.l.b16 %v487
        %v1101 = vunpack.c.h.b16 %v487
        %v1102 = vunpack.c.l.b16 %v488
        %v1103 = vunpack.c.h.b16 %v488
        %v1104 = vunpack.c.l.b16 %v489
        %v1105 = vunpack.c.h.b16 %v489
        %v1106 = vunpack.c.l.b16 %v490
        %v1107 = vunpack.c.l.b16 %v491
        %v1108 = vunpack.c.h.b16 %v491
        %v1109 = vunpack.c.l.b16 %v492
        %v1110 = vunpack.c.h.b16 %v492
        %v1111 = vunpack.c.l.b16 %v493
        %v1112 = vunpack.c.h.b16 %v493
        %v1113 = vunpack.c.l.b16 %v494
        %v1114 = vunpack.c.h.b16 %v494
        %v1115 = vunpack.c.l.b16 %v495
        %v1116 = vunpack.c.l.b16 %v496
        %v1117 = vunpack.c.h.b16 %v496
        %v1118 = vunpack.c.l.b16 %v497
        %v1119 = vunpack.c.h.b16 %v497
        %v1120 = vunpack.c.l.b16 %v498
        %v1121 = vunpack.c.h.b16 %v498
        %v1122 = vunpack.c.l.b16 %v499
        %v1123 = vunpack.c.h.b16 %v499
        %v1124 = vunpack.c.l.b16 %v500
        %v1125 = vunpack.c.l.b16 %v501
        %v1126 = vunpack.c.h.b16 %v501
        %v1127 = vunpack.c.l.b16 %v502
        %v1128 = vunpack.c.h.b16 %v502
        %v1129 = vunpack.c.l.b16 %v503
        %v1130 = vunpack.c.h.b16 %v503
        %v1131 = vunpack.c.l.b16 %v504
        %v1132 = vunpack.c.h.b16 %v504
        %v1133 = vunpack.c.l.b16 %v505
        %v1134 = vunpack.c.l.b16 %v506
        %v1135 = vunpack.c.h.b16 %v506
        %v1136 = vunpack.c.l.b16 %v507
        %v1137 = vunpack.c.h.b16 %v507
        %v1138 = vunpack.c.l.b16 %v508
        %v1139 = vunpack.c.h.b16 %v508
        %v1140 = vunpack.c.l.b16 %v509
        %v1141 = vunpack.c.h.b16 %v509
        %v1142 = vunpack.c.l.b16 %v510
        %v1143 = vunpack.c.l.b16 %v511
        %v1144 = vunpack.c.h.b16 %v511
        %v1145 = vunpack.c.l.b16 %v512
        %v1146 = vunpack.c.h.b16 %v512
        %v1147 = vunpack.c.l.b16 %v513
        %v1148 = vunpack.c.h.b16 %v513
        %v1149 = vunpack.c.l.b16 %v514
        %v1150 = vunpack.c.h.b16 %v514
        %v1151 = vunpack.c.l.b16 %v515
        %v1152 = vunpack.c.l.b16 %v516
        %v1153 = vunpack.c.h.b16 %v516
        %v1154 = vunpack.c.l.b16 %v517
        %v1155 = vunpack.c.h.b16 %v517
        %v1156 = vunpack.c.l.b16 %v518
        %v1157 = vunpack.c.h.b16 %v518
        %v1158 = vunpack.c.l.b16 %v519
        %v1159 = vunpack.c.h.b16 %v519
        %v1160 = vunpack.c.l.b16 %v520
        %v1161 = vunpack.c.l.b16 %v521
        %v1162 = vunpack.c.h.b16 %v521
        %v1163 = vunpack.c.l.b16 %v522
        %v1164 = vunpack.c.h.b16 %v522
        %v1165 = vunpack.c.l.b16 %v523
        %v1166 = vunpack.c.h.b16 %v523
        %v1167 = vunpack.c.l.b16 %v524
        %v1168 = vunpack.c.h.b16 %v524
        %v1169 = vunpack.c.l.b16 %v525
        %v1170 = vunpack.c.l.b16 %v526
        %v1171 = vunpack.c.h.b16 %v526
        %v1172 = vunpack.c.l.b16 %v527
        %v1173 = vunpack.c.h.b16 %v527
        %v1174 = vunpack.c.l.b16 %v528
        %v1175 = vunpack.c.h.b16 %v528
        %v1176 = vunpack.c.l.b16 %v529
        %v1177 = vunpack.c.h.b16 %v529
        %v1178 = vunpack.c.l.b16 %v530
        %v1179 = vunpack.c.l.b16 %v531
        %v1180 = vunpack.c.h.b16 %v531
        %v1181 = vunpack.c.l.b16 %v532
        %v1182 = vunpack.c.h.b16 %v532
        %v1183 = vunpack.c.l.b16 %v533
        %v1184 = vunpack.c.h.b16 %v533
        %v1185 = vunpack.c.l.b16 %v534
        %v1186 = vunpack.c.h.b16 %v534
        %v1187 = vunpack.c.l.b16 %v535
        %v1188 = vunpack.c.l.b16 %v536
        %v1189 = vunpack.c.h.b16 %v536
        %v1190 = vunpack.c.l.b16 %v537
        %v1191 = vunpack.c.h.b16 %v537
        %v1192 = vunpack.c.l.b16 %v538
        %v1193 = vunpack.c.h.b16 %v538
        %v1194 = vunpack.c.l.b16 %v539
        %v1195 = vunpack.c.h.b16 %v539
        %v1196 = vunpack.c.l.b16 %v540
        %v1197 = vunpack.c.l.b16 %v541
        %v1198 = vunpack.c.h.b16 %v541
        %v1199 = vunpack.c.l.b16 %v542
        %v1200 = vunpack.c.h.b16 %v542
        %v1201 = vunpack.c.l.b16 %v543
        %v1202 = vunpack.c.h.b16 %v543
        %v1203 = vunpack.c.l.b16 %v544
        %v1204 = vunpack.c.h.b16 %v544
        %v1205 = vunpack.c.l.b16 %v545
        %v1206 = vunpack.c.l.b16 %v546
        %v1207 = vunpack.c.h.b16 %v546
        %v1208 = vunpack.c.l.b16 %v547
        %v1209 = vunpack.c.h.b16 %v547
        %v1210 = vunpack.c.l.b16 %v548
        %v1211 = vunpack.c.h.b16 %v548
        %v1212 = vunpack.c.l.b16 %v549
        %v1213 = vunpack.c.h.b16 %v549
        %v1214 = vunpack.c.l.b16 %v550
        %v1215 = vunpack.c.l.b16 %v551
        %v1216 = vunpack.c.h.b16 %v551
        %v1217 = vunpack.c.l.b16 %v552
        %v1218 = vunpack.c.h.b16 %v552
        %v1219 = vunpack.c.l.b16 %v553
        %v1220 = vunpack.c.h.b16 %v553
        %v1221 = vunpack.c.l.b16 %v554
        %v1222 = vunpack.c.h.b16 %v554
        %v1223 = vunpack.c.l.b16 %v555
        %v1224 = vunpack.c.l.b16 %v556
        %v1225 = vunpack.c.h.b16 %v556
        %v1226 = vunpack.c.l.b16 %v557
        %v1227 = vunpack.c.h.b16 %v557
        %v1228 = vunpack.c.l.b16 %v558
        %v1229 = vunpack.c.h.b16 %v558
        %v1230 = vunpack.c.l.b16 %v559
        %v1231 = vunpack.c.h.b16 %v559
        %v1232 = vunpack.c.l.b16 %v560
        %v1233 = vpack.c.b16 %v810, %v801
        %v1234 = vpack.c.b16 %v811, %v802
        %v1235 = vpack.c.b16 %v812, %v803
        %v1236 = vpack.c.b16 %v813, %v804
        %v1237 = vpack.c.b16 %v814, %v805
        %v1238 = vpack.c.b16 %v815, %v806
        %v1239 = vpack.c.b16 %v816, %v807
        %v1240 = vpack.c.b16 %v817, %v808
        %v1241 = vpack.c.b16 %v818, %v809
        %v1242 = vpack.c.b16 %v828, %v819
        %v1243 = vpack.c.b16 %v829, %v820
        %v1244 = vpack.c.b16 %v830, %v821
        %v1245 = vpack.c.b16 %v831, %v822
        %v1246 = vpack.c.b16 %v832, %v823
        %v1247 = vpack.c.b16 %v833, %v824
        %v1248 = vpack.c.b16 %v834, %v825
        %v1249 = vpack.c.b16 %v835, %v826
        %v1250 = vpack.c.b16 %v836, %v827
        %v1251 = vpack.c.b16 %v846, %v837
        %v1252 = vpack.c.b16 %v847, %v838
        %v1253 = vpack.c.b16 %v848, %v839
        %v1254 = vpack.c.b16 %v849, %v840
        %v1255 = vpack.c.b16 %v850, %v841
        %v1256 = vpack.c.b16 %v851, %v842
        %v1257 = vpack.c.b16 %v852, %v843
        %v1258 = vpack.c.b16 %v853, %v844
        %v1259 = vpack.c.b16 %v854, %v845
        %v1260 = vpack.c.b16 %v864, %v855
        %v1261 = vpack.c.b16 %v865, %v856
        %v1262 = vpack.c.b16 %v866, %v857
        %v1263 = vpack.c.b16 %v867, %v858
        %v1264 = vpack.c.b16 %v868, %v859
        %v1265 = vpack.c.b16 %v869, %v860
        %v1266 = vpack.c.b16 %v870, %v861
        %v1267 = vpack.c.b16 %v871, %v862
        %v1268 = vpack.c.b16 %v872, %v863
        %v1269 = vpack.c.b16 %v882, %v873
        %v1270 = vpack.c.b16 %v883, %v874
        %v1271 = vpack.c.b16 %v884, %v875
        %v1272 = vpack.c.b16 %v885, %v876
        %v1273 = vpack.c.b16 %v886, %v877
        %v1274 = vpack.c.b16 %v887, %v878
        %v1275 = vpack.c.b16 %v888, %v879
        %v1276 = vpack.c.b16 %v889, %v880
        %v1277 = vpack.c.b16 %v890, %v881
        %v1278 = vpack.c.b16 %v900, %v891
        %v1279 = vpack.c.b16 %v901, %v892
        %v1280 = vpack.c.b16 %v902, %v893
        %v1281 = vpack.c.b16 %v903, %v894
        %v1282 = vpack.c.b16 %v904, %v895
        %v1283 = vpack.c.b16 %v905, %v896
        %v1284 = vpack.c.b16 %v906, %v897
        %v1285 = vpack.c.b16 %v907, %v898
        %v1286 = vpack.c.b16 %v908, %v899
        %v1287 = vpack.c.b16 %v918, %v909
        %v1288 = vpack.c.b16 %v919, %v910
        %v1289 = vpack.c.b16 %v920, %v911
        %v1290 = vpack.c.b16 %v921, %v912
        %v1291 = vpack.c.b16 %v922, %v913
        %v1292 = vpack.c.b16 %v923, %v914
        %v1293 = vpack.c.b16 %v924, %v915
        %v1294 = vpack.c.b16 %v925, %v916
        %v1295 = vpack.c.b16 %v926, %v917
        %v1296 = vpack.c.b16 %v936, %v927
        %v1297 = vpack.c.b16 %v937, %v928
        %v1298 = vpack.c.b16 %v938, %v929
        %v1299 = vpack.c.b16 %v939, %v930
        %v1300 = vpack.c.b16 %v940, %v931
        %v1301 = vpack.c.b16 %v941, %v932
        %v1302 = vpack.c.b16 %v942, %v933
        %v1303 = vpack.c.b16 %v943, %v934
        %v1304 = vpack.c.b16 %v944, %v935
        %v1305 = vpack.c.b16 %v954, %v945
        %v1306 = vpack.c.b16 %v955, %v946
        %v1307 = vpack.c.b16 %v956, %v947
        %v1308 = vpack.c.b16 %v957, %v948
        %v1309 = vpack.c.b16 %v958, %v949
        %v1310 = vpack.c.b16 %v959, %v950
        %v1311 = vpack.c.b16 %v960, %v951
        %v1312 = vpack.c.b16 %v961, %v952
        %v1313 = vpack.c.b16 %v962, %v953
        %v1314 = vpack.c.b16 %v972, %v963
        %v1315 = vpack.c.b16 %v973, %v964
        %v1316 = vpack.c.b16 %v974, %v965
        %v1317 = vpack.c.b16 %v975, %v966
        %v1318 = vpack.c.b16 %v976, %v967
        %v1319 = vpack.c.b16 %v977, %v968
        %v1320 = vpack.c.b16 %v978, %v969
        %v1321 = vpack.c.b16 %v979, %v970
        %v1322 = vpack.c.b16 %v980, %v971
        %v1323 = vpack.c.b16 %v990, %v981
        %v1324 = vpack.c.b16 %v991, %v982
        %v1325 = vpack.c.b16 %v992, %v983
        %v1326 = vpack.c.b16 %v993, %v984
        %v1327 = vpack.c.b16 %v994, %v985
        %v1328 = vpack.c.b16 %v995, %v986
        %v1329 = vpack.c.b16 %v996, %v987
        %v1330 = vpack.c.b16 %v997, %v988
        %v1331 = vpack.c.b16 %v998, %v989
        %v1332 = vpack.c.b16 %v1008, %v999
        %v1333 = vpack.c.b16 %v1009, %v1000
        %v1334 = vpack.c.b16 %v1010, %v1001
        %v1335 = vpack.c.b16 %v1011, %v1002
        %v1336 = vpack.c.b16 %v1012, %v1003
        %v1337 = vpack.c.b16 %v1013, %v1004
        %v1338 = vpack.c.b16 %v1014, %v1005
        %v1339 = vpack.c.b16 %v1015, %v1006
        %v1340 = vpack.c.b16 %v1016, %v1007
        %v1341 = vpack.c.b16 %v1026, %v1017
        %v1342 = vpack.c.b16 %v1027, %v1018
        %v1343 = vpack.c.b16 %v1028, %v1019
        %v1344 = vpack.c.b16 %v1029, %v1020
        %v1345 = vpack.c.b16 %v1030, %v1021
        %v1346 = vpack.c.b16 %v1031, %v1022
        %v1347 = vpack.c.b16 %v1032, %v1023
        %v1348 = vpack.c.b16 %v1033, %v1024
        %v1349 = vpack.c.b16 %v1034, %v1025
        %v1350 = vpack.c.b16 %v1044, %v1035
        %v1351 = vpack.c.b16 %v1045, %v1036
        %v1352 = vpack.c.b16 %v1046, %v1037
        %v1353 = vpack.c.b16 %v1047, %v1038
        %v1354 = vpack.c.b16 %v1048, %v1039
        %v1355 = vpack.c.b16 %v1049, %v1040
        %v1356 = vpack.c.b16 %v1050, %v1041
        %v1357 = vpack.c.b16 %v1051, %v1042
        %v1358 = vpack.c.b16 %v1052, %v1043
        %v1359 = vpack.c.b16 %v1062, %v1053
        %v1360 = vpack.c.b16 %v1063, %v1054
        %v1361 = vpack.c.b16 %v1064, %v1055
        %v1362 = vpack.c.b16 %v1065, %v1056
        %v1363 = vpack.c.b16 %v1066, %v1057
        %v1364 = vpack.c.b16 %v1067, %v1058
        %v1365 = vpack.c.b16 %v1068, %v1059
        %v1366 = vpack.c.b16 %v1069, %v1060
        %v1367 = vpack.c.b16 %v1070, %v1061
        %v1368 = vpack.c.b16 %v1080, %v1071
        %v1369 = vpack.c.b16 %v1081, %v1072
        %v1370 = vpack.c.b16 %v1082, %v1073
        %v1371 = vpack.c.b16 %v1083, %v1074
        %v1372 = vpack.c.b16 %v1084, %v1075
        %v1373 = vpack.c.b16 %v1085, %v1076
        %v1374 = vpack.c.b16 %v1086, %v1077
        %v1375 = vpack.c.b16 %v1087, %v1078
        %v1376 = vpack.c.b16 %v1088, %v1079
        %v1377 = vpack.c.b16 %v1098, %v1089
        %v1378 = vpack.c.b16 %v1099, %v1090
        %v1379 = vpack.c.b16 %v1100, %v1091
        %v1380 = vpack.c.b16 %v1101, %v1092
        %v1381 = vpack.c.b16 %v1102, %v1093
        %v1382 = vpack.c.b16 %v1103, %v1094
        %v1383 = vpack.c.b16 %v1104, %v1095
        %v1384 = vpack.c.b16 %v1105, %v1096
        %v1385 = vpack.c.b16 %v1106, %v1097
        %v1386 = vpack.c.b16 %v1116, %v1107
        %v1387 = vpack.c.b16 %v1117, %v1108
        %v1388 = vpack.c.b16 %v1118, %v1109
        %v1389 = vpack.c.b16 %v1119, %v1110
        %v1390 = vpack.c.b16 %v1120, %v1111
        %v1391 = vpack.c.b16 %v1121, %v1112
        %v1392 = vpack.c.b16 %v1122, %v1113
        %v1393 = vpack.c.b16 %v1123, %v1114
        %v1394 = vpack.c.b16 %v1124, %v1115
        %v1395 = vpack.c.b16 %v1134, %v1125
        %v1396 = vpack.c.b16 %v1135, %v1126
        %v1397 = vpack.c.b16 %v1136, %v1127
        %v1398 = vpack.c.b16 %v1137, %v1128
        %v1399 = vpack.c.b16 %v1138, %v1129
        %v1400 = vpack.c.b16 %v1139, %v1130
        %v1401 = vpack.c.b16 %v1140, %v1131
        %v1402 = vpack.c.b16 %v1141, %v1132
        %v1403 = vpack.c.b16 %v1142, %v1133
        %v1404 = vpack.c.b16 %v1152, %v1143
        %v1405 = vpack.c.b16 %v1153, %v1144
        %v1406 = vpack.c.b16 %v1154, %v1145
        %v1407 = vpack.c.b16 %v1155, %v1146
        %v1408 = vpack.c.b16 %v1156, %v1147
        %v1409 = vpack.c.b16 %v1157, %v1148
        %v1410 = vpack.c.b16 %v1158, %v1149
        %v1411 = vpack.c.b16 %v1159, %v1150
        %v1412 = vpack.c.b16 %v1160, %v1151
        %v1413 = vpack.c.b16 %v1170, %v1161
        %v1414 = vpack.c.b16 %v1171, %v1162
        %v1415 = vpack.c.b16 %v1172, %v1163
        %v1416 = vpack.c.b16 %v1173, %v1164
        %v1417 = vpack.c.b16 %v1174, %v1165
        %v1418 = vpack.c.b16 %v1175, %v1166
        %v1419 = vpack.c.b16 %v1176, %v1167
        %v1420 = vpack.c.b16 %v1177, %v1168
        %v1421 = vpack.c.b16 %v1178, %v1169
        %v1422 = vpack.c.b16 %v1188, %v1179
        %v1423 = vpack.c.b16 %v1189, %v1180
        %v1424 = vpack.c.b16 %v1190, %v1181
        %v1425 = vpack.c.b16 %v1191, %v1182
        %v1426 = vpack.c.b16 %v1192, %v1183
        %v1427 = vpack.c.b16 %v1193, %v1184
        %v1428 = vpack.c.b16 %v1194, %v1185
        %v1429 = vpack.c.b16 %v1195, %v1186
        %v1430 = vpack.c.b16 %v1196, %v1187
        %v1431 = vpack.c.b16 %v1206, %v1197
        %v1432 = vpack.c.b16 %v1207, %v1198
        %v1433 = vpack.c.b16 %v1208, %v1199
        %v1434 = vpack.c.b16 %v1209, %v1200
        %v1435 = vpack.c.b16 %v1210, %v1201
        %v1436 = vpack.c.b16 %v1211, %v1202
        %v1437 = vpack.c.b16 %v1212, %v1203
        %v1438 = vpack.c.b16 %v1213, %v1204
        %v1439 = vpack.c.b16 %v1214, %v1205
        %v1440 = vpack.c.b16 %v1224, %v1215
        %v1441 = vpack.c.b16 %v1225, %v1216
        %v1442 = vpack.c.b16 %v1226, %v1217
        %v1443 = vpack.c.b16 %v1227, %v1218
        %v1444 = vpack.c.b16 %v1228, %v1219
        %v1445 = vpack.c.b16 %v1229, %v1220
        %v1446 = vpack.c.b16 %v1230, %v1221
        %v1447 = vpack.c.b16 %v1231, %v1222
        %v1448 = vpack.c.b16 %v1232, %v1223
        %1665 = vmatprep.subr.bf16.mxu0 %v1234
        %1666 = vmatpush1.bf16.msra.mxu0 %v1233
        %1667 = vmatprep.subr.bf16.mxu0 %v1243
        %1668 = vmatpush1.bf16.msra.mxu0 %v1242
        %1669 = vmatprep.subr.bf16.mxu0 %v1252
        %1670 = vmatpush1.bf16.msra.mxu0 %v1251
        %1671 = vmatprep.subr.bf16.mxu0 %v1261
        %1672 = vmatpush1.bf16.msra.mxu0 %v1260
        %1673 = vmatprep.subr.bf16.mxu0 %v1270
        %1674 = vmatpush1.bf16.msra.mxu0 %v1269
        %1675 = vmatprep.subr.bf16.mxu0 %v1279
        %1676 = vmatpush1.bf16.msra.mxu0 %v1278
        %1677 = vmatprep.subr.bf16.mxu0 %v1288
        %1678 = vmatpush1.bf16.msra.mxu0 %v1287
        %1679 = vmatprep.subr.bf16.mxu0 %v1297
        %1680 = vmatpush1.bf16.msra.mxu0 %v1296
        %1681 = vmatprep.subr.bf16.mxu0 %v1306
        %1682 = vmatpush1.bf16.msra.mxu0 %v1305
        %1683 = vmatprep.subr.bf16.mxu0 %v1315
        %1684 = vmatpush1.bf16.msra.mxu0 %v1314
        %1685 = vmatprep.subr.bf16.mxu0 %v1324
        %1686 = vmatpush1.bf16.msra.mxu0 %v1323
        %1687 = vmatprep.subr.bf16.mxu0 %v1333
        %1688 = vmatpush1.bf16.msra.mxu0 %v1332
        %1689 = vmatprep.subr.bf16.mxu0 %v1342
        %1690 = vmatpush1.bf16.msra.mxu0 %v1341
        %1691 = vmatprep.subr.bf16.mxu0 %v1351
        %1692 = vmatpush1.bf16.msra.mxu0 %v1350
        %1693 = vmatprep.subr.bf16.mxu0 %v1360
        %1694 = vmatpush1.bf16.msra.mxu0 %v1359
        %1695 = vmatprep.subr.bf16.mxu0 %v1369
        %1696 = vmatpush1.bf16.msra.mxu0 %v1368
        %1697 = vmatprep.mubr.bf16.mxu0 %v298
        %1698 = vmatmul.mubr.bf16.gmra.mrb[0].mxu0 %v297
        %v1699 = vpop.f32.mrb[0].mxu0
        %v1700 = vadd.f32 0.0, %v1699
        %v1701 = vpop.f32.mrb[0].mxu0
        %v1702 = vadd.f32 0.0, %v1701
        %v1703 = vpop.f32.mrb[0].mxu0
        %v1704 = vadd.f32 0.0, %v1703
        %v1705 = vpop.f32.mrb[0].mxu0
        %v1706 = vadd.f32 0.0, %v1705
        %1707 = vmatprep.mubr.bf16.mxu0 %v301
        %1708 = vmatmul.mubr.bf16.gmra.mrb[0].mxu0 %v300
        %v1709 = vpop.f32.mrb[0].mxu0
        %v1710 = vadd.f32 0.0, %v1709
        %v1711 = vpop.f32.mrb[0].mxu0
        %v1712 = vadd.f32 0.0, %v1711
        %v1713 = vpop.f32.mrb[0].mxu0
        %v1714 = vadd.f32 0.0, %v1713
        %v1715 = vpop.f32.mrb[0].mxu0
        %v1716 = vadd.f32 0.0, %v1715
        %1717 = vmatprep.mubr.bf16.mxu0 %v304
        %1718 = vmatmul.mubr.bf16.gmra.mrb[0].mxu0 %v303
        %v1719 = vpop.f32.mrb[0].mxu0
        %v1720 = vadd.f32 0.0, %v1719
        %v1721 = vpop.f32.mrb[0].mxu0
        %v1722 = vadd.f32 0.0, %v1721
        %v1723 = vpop.f32.mrb[0].mxu0
        %v1724 = vadd.f32 0.0, %v1723
        %v1725 = vpop.f32.mrb[0].mxu0
        %v1726 = vadd.f32 0.0, %v1725
        %1727 = vmatprep.mubr.bf16.mxu0 %v307
        %1728 = vmatmul.mubr.bf16.gmra.mrb[0].mxu0 %v306
        %v1729 = vpop.f32.mrb[0].mxu0
        %v1730 = vadd.f32 0.0, %v1729
        %v1731 = vpop.f32.mrb[0].mxu0
        %v1732 = vadd.f32 0.0, %v1731
        %v1733 = vpop.f32.mrb[0].mxu0
        %v1734 = vadd.f32 0.0, %v1733
        %v1735 = vpop.f32.mrb[0].mxu0
        %v1736 = vadd.f32 0.0, %v1735
        %1737 = vmatprep.mubr.bf16.mxu0 %v310
        %1738 = vmatmul.mubr.bf16.gmra.mrb[0].mxu0 %v309
        %v1739 = vpop.f32.mrb[0].mxu0
        %v1740 = vadd.f32 0.0, %v1739
        %v1741 = vpop.f32.mrb[0].mxu0
        %v1742 = vadd.f32 0.0, %v1741
        %v1743 = vpop.f32.mrb[0].mxu0
        %v1744 = vadd.f32 0.0, %v1743
        %v1745 = vpop.f32.mrb[0].mxu0
        %v1746 = vadd.f32 0.0, %v1745
        %1747 = vmatprep.mubr.bf16.mxu0 %v313
        %1748 = vmatmul.mubr.bf16.gmra.mrb[0].mxu0 %v312
        %v1749 = vpop.f32.mrb[0].mxu0
        %v1750 = vadd.f32 0.0, %v1749
        %v1751 = vpop.f32.mrb[0].mxu0
        %v1752 = vadd.f32 0.0, %v1751
        %v1753 = vpop.f32.mrb[0].mxu0
        %v1754 = vadd.f32 0.0, %v1753
        %v1755 = vpop.f32.mrb[0].mxu0
        %v1756 = vadd.f32 0.0, %v1755
        %1757 = vmatprep.mubr.bf16.mxu0 %v316
        %1758 = vmatmul.mubr.bf16.gmra.mrb[0].mxu0 %v315
        %v1759 = vpop.f32.mrb[0].mxu0
        %v1760 = vadd.f32 0.0, %v1759
        %v1761 = vpop.f32.mrb[0].mxu0
        %v1762 = vadd.f32 0.0, %v1761
        %v1763 = vpop.f32.mrb[0].mxu0
        %v1764 = vadd.f32 0.0, %v1763
        %v1765 = vpop.f32.mrb[0].mxu0
        %v1766 = vadd.f32 0.0, %v1765
        %1767 = vmatprep.mubr.bf16.mxu0 %v319
        %1768 = vmatmul.mubr.bf16.gmra.mrb[0].mxu0 %v318
        %v1769 = vpop.f32.mrb[0].mxu0
        %v1770 = vadd.f32 0.0, %v1769
        %v1771 = vpop.f32.mrb[0].mxu0
        %v1772 = vadd.f32 0.0, %v1771
        %v1773 = vpop.f32.mrb[0].mxu0
        %v1774 = vadd.f32 0.0, %v1773
        %v1775 = vpop.f32.mrb[0].mxu0
        %v1776 = vadd.f32 0.0, %v1775
        %1777 = vdwg.mxu0
        %1778 = vmatprep.subr.bf16.mxu0 %v1378
        %1779 = vmatpush1.bf16.msra.mxu0 %v1377
        %1780 = vmatprep.subr.bf16.mxu0 %v1387
        %1781 = vmatpush1.bf16.msra.mxu0 %v1386
        %1782 = vmatprep.subr.bf16.mxu0 %v1396
        %1783 = vmatpush1.bf16.msra.mxu0 %v1395
        %1784 = vmatprep.subr.bf16.mxu0 %v1405
        %1785 = vmatpush1.bf16.msra.mxu0 %v1404
        %1786 = vmatprep.subr.bf16.mxu0 %v1414
        %1787 = vmatpush1.bf16.msra.mxu0 %v1413
        %1788 = vmatprep.subr.bf16.mxu0 %v1423
        %1789 = vmatpush1.bf16.msra.mxu0 %v1422
        %1790 = vmatprep.subr.bf16.mxu0 %v1432
        %1791 = vmatpush1.bf16.msra.mxu0 %v1431
        %1792 = vmatprep.subr.bf16.mxu0 %v1441
        %1793 = vmatpush1.bf16.msra.mxu0 %v1440
        %1794 = vmatprep.subr.bf16.mxu0 0
        %1795 = vmatpush1.bf16.msra.mxu0 0
        %1796 = vmatprep.subr.bf16.mxu0 0
        %1797 = vmatpush1.bf16.msra.mxu0 0
        %1798 = vmatprep.subr.bf16.mxu0 0
        %1799 = vmatpush1.bf16.msra.mxu0 0
        %1800 = vmatprep.subr.bf16.mxu0 0
        %1801 = vmatpush1.bf16.msra.mxu0 0
        %1802 = vmatprep.subr.bf16.mxu0 0
        %1803 = vmatpush1.bf16.msra.mxu0 0
        %1804 = vmatprep.subr.bf16.mxu0 0
        %1805 = vmatpush1.bf16.msra.mxu0 0
        %1806 = vmatprep.subr.bf16.mxu0 0
        %1807 = vmatpush1.bf16.msra.mxu0 0
        %1808 = vmatprep.subr.bf16.mxu0 0
        %1809 = vmatpush1.bf16.msra.mxu0 0
        %1810 = vmatprep.mubr.bf16.mxu0 0
        %1811 = vmatmul.mubr.bf16.gmra.mrb[0].mxu0 %v299
        %v1812 = vpop.f32.mrb[0].mxu0
        %v1813 = vadd.f32 %v1700, %v1812
        %v1814 = vpop.f32.mrb[0].mxu0
        %v1815 = vadd.f32 %v1702, %v1814
        %v1816 = vpop.f32.mrb[0].mxu0
        %v1817 = vadd.f32 %v1704, %v1816
        %v1818 = vpop.f32.mrb[0].mxu0
        %v1819 = vadd.f32 %v1706, %v1818
        %1820 = vmatprep.mubr.bf16.mxu0 0
        %1821 = vmatmul.mubr.bf16.gmra.mrb[0].mxu0 %v302
        %v1822 = vpop.f32.mrb[0].mxu0
        %v1823 = vadd.f32 %v1710, %v1822
        %v1824 = vpop.f32.mrb[0].mxu0
        %v1825 = vadd.f32 %v1712, %v1824
        %v1826 = vpop.f32.mrb[0].mxu0
        %v1827 = vadd.f32 %v1714, %v1826
        %v1828 = vpop.f32.mrb[0].mxu0
        %v1829 = vadd.f32 %v1716, %v1828
        %1830 = vmatprep.mubr.bf16.mxu0 0
        %1831 = vmatmul.mubr.bf16.gmra.mrb[0].mxu0 %v305
        %v1832 = vpop.f32.mrb[0].mxu0
        %v1833 = vadd.f32 %v1720, %v1832
        %v1834 = vpop.f32.mrb[0].mxu0
        %v1835 = vadd.f32 %v1722, %v1834
        %v1836 = vpop.f32.mrb[0].mxu0
        %v1837 = vadd.f32 %v1724, %v1836
        %v1838 = vpop.f32.mrb[0].mxu0
        %v1839 = vadd.f32 %v1726, %v1838
        %1840 = vmatprep.mubr.bf16.mxu0 0
        %1841 = vmatmul.mubr.bf16.gmra.mrb[0].mxu0 %v308
        %v1842 = vpop.f32.mrb[0].mxu0
        %v1843 = vadd.f32 %v1730, %v1842
        %v1844 = vpop.f32.mrb[0].mxu0
        %v1845 = vadd.f32 %v1732, %v1844
        %v1846 = vpop.f32.mrb[0].mxu0
        %v1847 = vadd.f32 %v1734, %v1846
        %v1848 = vpop.f32.mrb[0].mxu0
        %v1849 = vadd.f32 %v1736, %v1848
        %1850 = vmatprep.mubr.bf16.mxu0 0
        %1851 = vmatmul.mubr.bf16.gmra.mrb[0].mxu0 %v311
        %v1852 = vpop.f32.mrb[0].mxu0
        %v1853 = vadd.f32 %v1740, %v1852
        %v1854 = vpop.f32.mrb[0].mxu0
        %v1855 = vadd.f32 %v1742, %v1854
        %v1856 = vpop.f32.mrb[0].mxu0
        %v1857 = vadd.f32 %v1744, %v1856
        %v1858 = vpop.f32.mrb[0].mxu0
        %v1859 = vadd.f32 %v1746, %v1858
        %1860 = vmatprep.mubr.bf16.mxu0 0
        %1861 = vmatmul.mubr.bf16.gmra.mrb[0].mxu0 %v314
        %v1862 = vpop.f32.mrb[0].mxu0
        %v1863 = vadd.f32 %v1750, %v1862
        %v1864 = vpop.f32.mrb[0].mxu0
        %v1865 = vadd.f32 %v1752, %v1864
        %v1866 = vpop.f32.mrb[0].mxu0
        %v1867 = vadd.f32 %v1754, %v1866
        %v1868 = vpop.f32.mrb[0].mxu0
        %v1869 = vadd.f32 %v1756, %v1868
        %1870 = vmatprep.mubr.bf16.mxu0 0
        %1871 = vmatmul.mubr.bf16.gmra.mrb[0].mxu0 %v317
        %v1872 = vpop.f32.mrb[0].mxu0
        %v1873 = vadd.f32 %v1760, %v1872
        %v1874 = vpop.f32.mrb[0].mxu0
        %v1875 = vadd.f32 %v1762, %v1874
        %v1876 = vpop.f32.mrb[0].mxu0
        %v1877 = vadd.f32 %v1764, %v1876
        %v1878 = vpop.f32.mrb[0].mxu0
        %v1879 = vadd.f32 %v1766, %v1878
        %1880 = vmatprep.mubr.bf16.mxu0 0
        %1881 = vmatmul.mubr.bf16.gmra.mrb[0].mxu0 %v320
        %v1882 = vpop.f32.mrb[0].mxu0
        %v1883 = vadd.f32 %v1770, %v1882
        %v1884 = vpop.f32.mrb[0].mxu0
        %v1885 = vadd.f32 %v1772, %v1884
        %v1886 = vpop.f32.mrb[0].mxu0
        %v1887 = vadd.f32 %v1774, %v1886
        %v1888 = vpop.f32.mrb[0].mxu0
        %v1889 = vadd.f32 %v1776, %v1888
        %1890 = vdwg.mxu0
        %1891 = vmatprep.subr.bf16.mxu0 %v1236
        %1892 = vmatpush1.bf16.msra.mxu0 %v1235
        %1893 = vmatprep.subr.bf16.mxu0 %v1245
        %1894 = vmatpush1.bf16.msra.mxu0 %v1244
        %1895 = vmatprep.subr.bf16.mxu0 %v1254
        %1896 = vmatpush1.bf16.msra.mxu0 %v1253
        %1897 = vmatprep.subr.bf16.mxu0 %v1263
        %1898 = vmatpush1.bf16.msra.mxu0 %v1262
        %1899 = vmatprep.subr.bf16.mxu0 %v1272
        %1900 = vmatpush1.bf16.msra.mxu0 %v1271
        %1901 = vmatprep.subr.bf16.mxu0 %v1281
        %1902 = vmatpush1.bf16.msra.mxu0 %v1280
        %1903 = vmatprep.subr.bf16.mxu0 %v1290
        %1904 = vmatpush1.bf16.msra.mxu0 %v1289
        %1905 = vmatprep.subr.bf16.mxu0 %v1299
        %1906 = vmatpush1.bf16.msra.mxu0 %v1298
        %1907 = vmatprep.subr.bf16.mxu0 %v1308
        %1908 = vmatpush1.bf16.msra.mxu0 %v1307
        %1909 = vmatprep.subr.bf16.mxu0 %v1317
        %1910 = vmatpush1.bf16.msra.mxu0 %v1316
        %1911 = vmatprep.subr.bf16.mxu0 %v1326
        %1912 = vmatpush1.bf16.msra.mxu0 %v1325
        %1913 = vmatprep.subr.bf16.mxu0 %v1335
        %1914 = vmatpush1.bf16.msra.mxu0 %v1334
        %1915 = vmatprep.subr.bf16.mxu0 %v1344
        %1916 = vmatpush1.bf16.msra.mxu0 %v1343
        %1917 = vmatprep.subr.bf16.mxu0 %v1353
        %1918 = vmatpush1.bf16.msra.mxu0 %v1352
        %1919 = vmatprep.subr.bf16.mxu0 %v1362
        %1920 = vmatpush1.bf16.msra.mxu0 %v1361
        %1921 = vmatprep.subr.bf16.mxu0 %v1371
        %1922 = vmatpush1.bf16.msra.mxu0 %v1370
        %1923 = vmatprep.mubr.bf16.mxu0 %v298
        %1924 = vmatmul.mubr.bf16.gmra.mrb[0].mxu0 %v297
        %v1925 = vpop.f32.mrb[0].mxu0
        %v1926 = vadd.f32 0.0, %v1925
        %v1927 = vpop.f32.mrb[0].mxu0
        %v1928 = vadd.f32 0.0, %v1927
        %v1929 = vpop.f32.mrb[0].mxu0
        %v1930 = vadd.f32 0.0, %v1929
        %v1931 = vpop.f32.mrb[0].mxu0
        %v1932 = vadd.f32 0.0, %v1931
        %1933 = vmatprep.mubr.bf16.mxu0 %v301
        %1934 = vmatmul.mubr.bf16.gmra.mrb[0].mxu0 %v300
        %v1935 = vpop.f32.mrb[0].mxu0
        %v1936 = vadd.f32 0.0, %v1935
        %v1937 = vpop.f32.mrb[0].mxu0
        %v1938 = vadd.f32 0.0, %v1937
        %v1939 = vpop.f32.mrb[0].mxu0
        %v1940 = vadd.f32 0.0, %v1939
        %v1941 = vpop.f32.mrb[0].mxu0
        %v1942 = vadd.f32 0.0, %v1941
        %1943 = vmatprep.mubr.bf16.mxu0 %v304
        %1944 = vmatmul.mubr.bf16.gmra.mrb[0].mxu0 %v303
        %v1945 = vpop.f32.mrb[0].mxu0
        %v1946 = vadd.f32 0.0, %v1945
        %v1947 = vpop.f32.mrb[0].mxu0
        %v1948 = vadd.f32 0.0, %v1947
        %v1949 = vpop.f32.mrb[0].mxu0
        %v1950 = vadd.f32 0.0, %v1949
        %v1951 = vpop.f32.mrb[0].mxu0
        %v1952 = vadd.f32 0.0, %v1951
        %1953 = vmatprep.mubr.bf16.mxu0 %v307
        %1954 = vmatmul.mubr.bf16.gmra.mrb[0].mxu0 %v306
        %v1955 = vpop.f32.mrb[0].mxu0
        %v1956 = vadd.f32 0.0, %v1955
        %v1957 = vpop.f32.mrb[0].mxu0
        %v1958 = vadd.f32 0.0, %v1957
        %v1959 = vpop.f32.mrb[0].mxu0
        %v1960 = vadd.f32 0.0, %v1959
        %v1961 = vpop.f32.mrb[0].mxu0
        %v1962 = vadd.f32 0.0, %v1961
        %1963 = vmatprep.mubr.bf16.mxu0 %v310
        %1964 = vmatmul.mubr.bf16.gmra.mrb[0].mxu0 %v309
        %v1965 = vpop.f32.mrb[0].mxu0
        %v1966 = vadd.f32 0.0, %v1965
        %v1967 = vpop.f32.mrb[0].mxu0
        %v1968 = vadd.f32 0.0, %v1967
        %v1969 = vpop.f32.mrb[0].mxu0
        %v1970 = vadd.f32 0.0, %v1969
        %v1971 = vpop.f32.mrb[0].mxu0
        %v1972 = vadd.f32 0.0, %v1971
        %1973 = vmatprep.mubr.bf16.mxu0 %v313
        %1974 = vmatmul.mubr.bf16.gmra.mrb[0].mxu0 %v312
        %v1975 = vpop.f32.mrb[0].mxu0
        %v1976 = vadd.f32 0.0, %v1975
        %v1977 = vpop.f32.mrb[0].mxu0
        %v1978 = vadd.f32 0.0, %v1977
        %v1979 = vpop.f32.mrb[0].mxu0
        %v1980 = vadd.f32 0.0, %v1979
        %v1981 = vpop.f32.mrb[0].mxu0
        %v1982 = vadd.f32 0.0, %v1981
        %1983 = vmatprep.mubr.bf16.mxu0 %v316
        %1984 = vmatmul.mubr.bf16.gmra.mrb[0].mxu0 %v315
        %v1985 = vpop.f32.mrb[0].mxu0
        %v1986 = vadd.f32 0.0, %v1985
        %v1987 = vpop.f32.mrb[0].mxu0
        %v1988 = vadd.f32 0.0, %v1987
        %v1989 = vpop.f32.mrb[0].mxu0
        %v1990 = vadd.f32 0.0, %v1989
        %v1991 = vpop.f32.mrb[0].mxu0
        %v1992 = vadd.f32 0.0, %v1991
        %1993 = vmatprep.mubr.bf16.mxu0 %v319
        %1994 = vmatmul.mubr.bf16.gmra.mrb[0].mxu0 %v318
        %v1995 = vpop.f32.mrb[0].mxu0
        %v1996 = vadd.f32 0.0, %v1995
        %v1997 = vpop.f32.mrb[0].mxu0
        %v1998 = vadd.f32 0.0, %v1997
        %v1999 = vpop.f32.mrb[0].mxu0
        %v2000 = vadd.f32 0.0, %v1999
        %v2001 = vpop.f32.mrb[0].mxu0
        %v2002 = vadd.f32 0.0, %v2001
        %2003 = vdwg.mxu0
        %2004 = vmatprep.subr.bf16.mxu0 %v1380
        %2005 = vmatpush1.bf16.msra.mxu0 %v1379
        %2006 = vmatprep.subr.bf16.mxu0 %v1389
        %2007 = vmatpush1.bf16.msra.mxu0 %v1388
        %2008 = vmatprep.subr.bf16.mxu0 %v1398
        %2009 = vmatpush1.bf16.msra.mxu0 %v1397
        %2010 = vmatprep.subr.bf16.mxu0 %v1407
        %2011 = vmatpush1.bf16.msra.mxu0 %v1406
        %2012 = vmatprep.subr.bf16.mxu0 %v1416
        %2013 = vmatpush1.bf16.msra.mxu0 %v1415
        %2014 = vmatprep.subr.bf16.mxu0 %v1425
        %2015 = vmatpush1.bf16.msra.mxu0 %v1424
        %2016 = vmatprep.subr.bf16.mxu0 %v1434
        %2017 = vmatpush1.bf16.msra.mxu0 %v1433
        %2018 = vmatprep.subr.bf16.mxu0 %v1443
        %2019 = vmatpush1.bf16.msra.mxu0 %v1442
        %2020 = vmatprep.subr.bf16.mxu0 0
        %2021 = vmatpush1.bf16.msra.mxu0 0
        %2022 = vmatprep.subr.bf16.mxu0 0
        %2023 = vmatpush1.bf16.msra.mxu0 0
        %2024 = vmatprep.subr.bf16.mxu0 0
        %2025 = vmatpush1.bf16.msra.mxu0 0
        %2026 = vmatprep.subr.bf16.mxu0 0
        %2027 = vmatpush1.bf16.msra.mxu0 0
        %2028 = vmatprep.subr.bf16.mxu0 0
        %2029 = vmatpush1.bf16.msra.mxu0 0
        %2030 = vmatprep.subr.bf16.mxu0 0
        %2031 = vmatpush1.bf16.msra.mxu0 0
        %2032 = vmatprep.subr.bf16.mxu0 0
        %2033 = vmatpush1.bf16.msra.mxu0 0
        %2034 = vmatprep.subr.bf16.mxu0 0
        %2035 = vmatpush1.bf16.msra.mxu0 0
        %2036 = vmatprep.mubr.bf16.mxu0 0
        %2037 = vmatmul.mubr.bf16.gmra.mrb[0].mxu0 %v299
        %v2038 = vpop.f32.mrb[0].mxu0
        %v2039 = vadd.f32 %v1926, %v2038
        %v2040 = vpop.f32.mrb[0].mxu0
        %v2041 = vadd.f32 %v1928, %v2040
        %v2042 = vpop.f32.mrb[0].mxu0
        %v2043 = vadd.f32 %v1930, %v2042
        %v2044 = vpop.f32.mrb[0].mxu0
        %v2045 = vadd.f32 %v1932, %v2044
        %2046 = vmatprep.mubr.bf16.mxu0 0
        %2047 = vmatmul.mubr.bf16.gmra.mrb[0].mxu0 %v302
        %v2048 = vpop.f32.mrb[0].mxu0
        %v2049 = vadd.f32 %v1936, %v2048
        %v2050 = vpop.f32.mrb[0].mxu0
        %v2051 = vadd.f32 %v1938, %v2050
        %v2052 = vpop.f32.mrb[0].mxu0
        %v2053 = vadd.f32 %v1940, %v2052
        %v2054 = vpop.f32.mrb[0].mxu0
        %v2055 = vadd.f32 %v1942, %v2054
        %2056 = vmatprep.mubr.bf16.mxu0 0
        %2057 = vmatmul.mubr.bf16.gmra.mrb[0].mxu0 %v305
        %v2058 = vpop.f32.mrb[0].mxu0
        %v2059 = vadd.f32 %v1946, %v2058
        %v2060 = vpop.f32.mrb[0].mxu0
        %v2061 = vadd.f32 %v1948, %v2060
        %v2062 = vpop.f32.mrb[0].mxu0
        %v2063 = vadd.f32 %v1950, %v2062
        %v2064 = vpop.f32.mrb[0].mxu0
        %v2065 = vadd.f32 %v1952, %v2064
        %2066 = vmatprep.mubr.bf16.mxu0 0
        %2067 = vmatmul.mubr.bf16.gmra.mrb[0].mxu0 %v308
        %v2068 = vpop.f32.mrb[0].mxu0
        %v2069 = vadd.f32 %v1956, %v2068
        %v2070 = vpop.f32.mrb[0].mxu0
        %v2071 = vadd.f32 %v1958, %v2070
        %v2072 = vpop.f32.mrb[0].mxu0
        %v2073 = vadd.f32 %v1960, %v2072
        %v2074 = vpop.f32.mrb[0].mxu0
        %v2075 = vadd.f32 %v1962, %v2074
        %2076 = vmatprep.mubr.bf16.mxu0 0
        %2077 = vmatmul.mubr.bf16.gmra.mrb[0].mxu0 %v311
        %v2078 = vpop.f32.mrb[0].mxu0
        %v2079 = vadd.f32 %v1966, %v2078
        %v2080 = vpop.f32.mrb[0].mxu0
        %v2081 = vadd.f32 %v1968, %v2080
        %v2082 = vpop.f32.mrb[0].mxu0
        %v2083 = vadd.f32 %v1970, %v2082
        %v2084 = vpop.f32.mrb[0].mxu0
        %v2085 = vadd.f32 %v1972, %v2084
        %2086 = vmatprep.mubr.bf16.mxu0 0
        %2087 = vmatmul.mubr.bf16.gmra.mrb[0].mxu0 %v314
        %v2088 = vpop.f32.mrb[0].mxu0
        %v2089 = vadd.f32 %v1976, %v2088
        %v2090 = vpop.f32.mrb[0].mxu0
        %v2091 = vadd.f32 %v1978, %v2090
        %v2092 = vpop.f32.mrb[0].mxu0
        %v2093 = vadd.f32 %v1980, %v2092
        %v2094 = vpop.f32.mrb[0].mxu0
        %v2095 = vadd.f32 %v1982, %v2094
        %2096 = vmatprep.mubr.bf16.mxu0 0
        %2097 = vmatmul.mubr.bf16.gmra.mrb[0].mxu0 %v317
        %v2098 = vpop.f32.mrb[0].mxu0
        %v2099 = vadd.f32 %v1986, %v2098
        %v2100 = vpop.f32.mrb[0].mxu0
        %v2101 = vadd.f32 %v1988, %v2100
        %v2102 = vpop.f32.mrb[0].mxu0
        %v2103 = vadd.f32 %v1990, %v2102
        %v2104 = vpop.f32.mrb[0].mxu0
        %v2105 = vadd.f32 %v1992, %v2104
        %2106 = vmatprep.mubr.bf16.mxu0 0
        %2107 = vmatmul.mubr.bf16.gmra.mrb[0].mxu0 %v320
        %v2108 = vpop.f32.mrb[0].mxu0
        %v2109 = vadd.f32 %v1996, %v2108
        %v2110 = vpop.f32.mrb[0].mxu0
        %v2111 = vadd.f32 %v1998, %v2110
        %v2112 = vpop.f32.mrb[0].mxu0
        %v2113 = vadd.f32 %v2000, %v2112
        %v2114 = vpop.f32.mrb[0].mxu0
        %v2115 = vadd.f32 %v2002, %v2114
        %2116 = vdwg.mxu0
        %2117 = vmatprep.subr.bf16.mxu0 %v1238
        %2118 = vmatpush1.bf16.msra.mxu0 %v1237
        %2119 = vmatprep.subr.bf16.mxu0 %v1247
        %2120 = vmatpush1.bf16.msra.mxu0 %v1246
        %2121 = vmatprep.subr.bf16.mxu0 %v1256
        %2122 = vmatpush1.bf16.msra.mxu0 %v1255
        %2123 = vmatprep.subr.bf16.mxu0 %v1265
        %2124 = vmatpush1.bf16.msra.mxu0 %v1264
        %2125 = vmatprep.subr.bf16.mxu0 %v1274
        %2126 = vmatpush1.bf16.msra.mxu0 %v1273
        %2127 = vmatprep.subr.bf16.mxu0 %v1283
        %2128 = vmatpush1.bf16.msra.mxu0 %v1282
        %2129 = vmatprep.subr.bf16.mxu0 %v1292
        %2130 = vmatpush1.bf16.msra.mxu0 %v1291
        %2131 = vmatprep.subr.bf16.mxu0 %v1301
        %2132 = vmatpush1.bf16.msra.mxu0 %v1300
        %2133 = vmatprep.subr.bf16.mxu0 %v1310
        %2134 = vmatpush1.bf16.msra.mxu0 %v1309
        %2135 = vmatprep.subr.bf16.mxu0 %v1319
        %2136 = vmatpush1.bf16.msra.mxu0 %v1318
        %2137 = vmatprep.subr.bf16.mxu0 %v1328
        %2138 = vmatpush1.bf16.msra.mxu0 %v1327
        %2139 = vmatprep.subr.bf16.mxu0 %v1337
        %2140 = vmatpush1.bf16.msra.mxu0 %v1336
        %2141 = vmatprep.subr.bf16.mxu0 %v1346
        %2142 = vmatpush1.bf16.msra.mxu0 %v1345
        %2143 = vmatprep.subr.bf16.mxu0 %v1355
        %2144 = vmatpush1.bf16.msra.mxu0 %v1354
        %2145 = vmatprep.subr.bf16.mxu0 %v1364
        %2146 = vmatpush1.bf16.msra.mxu0 %v1363
        %2147 = vmatprep.subr.bf16.mxu0 %v1373
        %2148 = vmatpush1.bf16.msra.mxu0 %v1372
        %2149 = vmatprep.mubr.bf16.mxu0 %v298
        %2150 = vmatmul.mubr.bf16.gmra.mrb[0].mxu0 %v297
        %v2151 = vpop.f32.mrb[0].mxu0
        %v2152 = vadd.f32 0.0, %v2151
        %v2153 = vpop.f32.mrb[0].mxu0
        %v2154 = vadd.f32 0.0, %v2153
        %v2155 = vpop.f32.mrb[0].mxu0
        %v2156 = vadd.f32 0.0, %v2155
        %v2157 = vpop.f32.mrb[0].mxu0
        %v2158 = vadd.f32 0.0, %v2157
        %2159 = vmatprep.mubr.bf16.mxu0 %v301
        %2160 = vmatmul.mubr.bf16.gmra.mrb[0].mxu0 %v300
        %v2161 = vpop.f32.mrb[0].mxu0
        %v2162 = vadd.f32 0.0, %v2161
        %v2163 = vpop.f32.mrb[0].mxu0
        %v2164 = vadd.f32 0.0, %v2163
        %v2165 = vpop.f32.mrb[0].mxu0
        %v2166 = vadd.f32 0.0, %v2165
        %v2167 = vpop.f32.mrb[0].mxu0
        %v2168 = vadd.f32 0.0, %v2167
        %2169 = vmatprep.mubr.bf16.mxu0 %v304
        %2170 = vmatmul.mubr.bf16.gmra.mrb[0].mxu0 %v303
        %v2171 = vpop.f32.mrb[0].mxu0
        %v2172 = vadd.f32 0.0, %v2171
        %v2173 = vpop.f32.mrb[0].mxu0
        %v2174 = vadd.f32 0.0, %v2173
        %v2175 = vpop.f32.mrb[0].mxu0
        %v2176 = vadd.f32 0.0, %v2175
        %v2177 = vpop.f32.mrb[0].mxu0
        %v2178 = vadd.f32 0.0, %v2177
        %2179 = vmatprep.mubr.bf16.mxu0 %v307
        %2180 = vmatmul.mubr.bf16.gmra.mrb[0].mxu0 %v306
        %v2181 = vpop.f32.mrb[0].mxu0
        %v2182 = vadd.f32 0.0, %v2181
        %v2183 = vpop.f32.mrb[0].mxu0
        %v2184 = vadd.f32 0.0, %v2183
        %v2185 = vpop.f32.mrb[0].mxu0
        %v2186 = vadd.f32 0.0, %v2185
        %v2187 = vpop.f32.mrb[0].mxu0
        %v2188 = vadd.f32 0.0, %v2187
        %2189 = vmatprep.mubr.bf16.mxu0 %v310
        %2190 = vmatmul.mubr.bf16.gmra.mrb[0].mxu0 %v309
        %v2191 = vpop.f32.mrb[0].mxu0
        %v2192 = vadd.f32 0.0, %v2191
        %v2193 = vpop.f32.mrb[0].mxu0
        %v2194 = vadd.f32 0.0, %v2193
        %v2195 = vpop.f32.mrb[0].mxu0
        %v2196 = vadd.f32 0.0, %v2195
        %v2197 = vpop.f32.mrb[0].mxu0
        %v2198 = vadd.f32 0.0, %v2197
        %2199 = vmatprep.mubr.bf16.mxu0 %v313
        %2200 = vmatmul.mubr.bf16.gmra.mrb[0].mxu0 %v312
        %v2201 = vpop.f32.mrb[0].mxu0
        %v2202 = vadd.f32 0.0, %v2201
        %v2203 = vpop.f32.mrb[0].mxu0
        %v2204 = vadd.f32 0.0, %v2203
        %v2205 = vpop.f32.mrb[0].mxu0
        %v2206 = vadd.f32 0.0, %v2205
        %v2207 = vpop.f32.mrb[0].mxu0
        %v2208 = vadd.f32 0.0, %v2207
        %2209 = vmatprep.mubr.bf16.mxu0 %v316
        %2210 = vmatmul.mubr.bf16.gmra.mrb[0].mxu0 %v315
        %v2211 = vpop.f32.mrb[0].mxu0
        %v2212 = vadd.f32 0.0, %v2211
        %v2213 = vpop.f32.mrb[0].mxu0
        %v2214 = vadd.f32 0.0, %v2213
        %v2215 = vpop.f32.mrb[0].mxu0
        %v2216 = vadd.f32 0.0, %v2215
        %v2217 = vpop.f32.mrb[0].mxu0
        %v2218 = vadd.f32 0.0, %v2217
        %2219 = vmatprep.mubr.bf16.mxu0 %v319
        %2220 = vmatmul.mubr.bf16.gmra.mrb[0].mxu0 %v318
        %v2221 = vpop.f32.mrb[0].mxu0
        %v2222 = vadd.f32 0.0, %v2221
        %v2223 = vpop.f32.mrb[0].mxu0
        %v2224 = vadd.f32 0.0, %v2223
        %v2225 = vpop.f32.mrb[0].mxu0
        %v2226 = vadd.f32 0.0, %v2225
        %v2227 = vpop.f32.mrb[0].mxu0
        %v2228 = vadd.f32 0.0, %v2227
        %2229 = vdwg.mxu0
        %2230 = vmatprep.subr.bf16.mxu0 %v1382
        %2231 = vmatpush1.bf16.msra.mxu0 %v1381
        %2232 = vmatprep.subr.bf16.mxu0 %v1391
        %2233 = vmatpush1.bf16.msra.mxu0 %v1390
        %2234 = vmatprep.subr.bf16.mxu0 %v1400
        %2235 = vmatpush1.bf16.msra.mxu0 %v1399
        %2236 = vmatprep.subr.bf16.mxu0 %v1409
        %2237 = vmatpush1.bf16.msra.mxu0 %v1408
        %2238 = vmatprep.subr.bf16.mxu0 %v1418
        %2239 = vmatpush1.bf16.msra.mxu0 %v1417
        %2240 = vmatprep.subr.bf16.mxu0 %v1427
        %2241 = vmatpush1.bf16.msra.mxu0 %v1426
        %2242 = vmatprep.subr.bf16.mxu0 %v1436
        %2243 = vmatpush1.bf16.msra.mxu0 %v1435
        %2244 = vmatprep.subr.bf16.mxu0 %v1445
        %2245 = vmatpush1.bf16.msra.mxu0 %v1444
        %2246 = vmatprep.subr.bf16.mxu0 0
        %2247 = vmatpush1.bf16.msra.mxu0 0
        %2248 = vmatprep.subr.bf16.mxu0 0
        %2249 = vmatpush1.bf16.msra.mxu0 0
        %2250 = vmatprep.subr.bf16.mxu0 0
        %2251 = vmatpush1.bf16.msra.mxu0 0
        %2252 = vmatprep.subr.bf16.mxu0 0
        %2253 = vmatpush1.bf16.msra.mxu0 0
        %2254 = vmatprep.subr.bf16.mxu0 0
        %2255 = vmatpush1.bf16.msra.mxu0 0
        %2256 = vmatprep.subr.bf16.mxu0 0
        %2257 = vmatpush1.bf16.msra.mxu0 0
        %2258 = vmatprep.subr.bf16.mxu0 0
        %2259 = vmatpush1.bf16.msra.mxu0 0
        %2260 = vmatprep.subr.bf16.mxu0 0
        %2261 = vmatpush1.bf16.msra.mxu0 0
        %2262 = vmatprep.mubr.bf16.mxu0 0
        %2263 = vmatmul.mubr.bf16.gmra.mrb[0].mxu0 %v299
        %v2264 = vpop.f32.mrb[0].mxu0
        %v2265 = vadd.f32 %v2152, %v2264
        %v2266 = vpop.f32.mrb[0].mxu0
        %v2267 = vadd.f32 %v2154, %v2266
        %v2268 = vpop.f32.mrb[0].mxu0
        %v2269 = vadd.f32 %v2156, %v2268
        %v2270 = vpop.f32.mrb[0].mxu0
        %v2271 = vadd.f32 %v2158, %v2270
        %2272 = vmatprep.mubr.bf16.mxu0 0
        %2273 = vmatmul.mubr.bf16.gmra.mrb[0].mxu0 %v302
        %v2274 = vpop.f32.mrb[0].mxu0
        %v2275 = vadd.f32 %v2162, %v2274
        %v2276 = vpop.f32.mrb[0].mxu0
        %v2277 = vadd.f32 %v2164, %v2276
        %v2278 = vpop.f32.mrb[0].mxu0
        %v2279 = vadd.f32 %v2166, %v2278
        %v2280 = vpop.f32.mrb[0].mxu0
        %v2281 = vadd.f32 %v2168, %v2280
        %2282 = vmatprep.mubr.bf16.mxu0 0
        %2283 = vmatmul.mubr.bf16.gmra.mrb[0].mxu0 %v305
        %v2284 = vpop.f32.mrb[0].mxu0
        %v2285 = vadd.f32 %v2172, %v2284
        %v2286 = vpop.f32.mrb[0].mxu0
        %v2287 = vadd.f32 %v2174, %v2286
        %v2288 = vpop.f32.mrb[0].mxu0
        %v2289 = vadd.f32 %v2176, %v2288
        %v2290 = vpop.f32.mrb[0].mxu0
        %v2291 = vadd.f32 %v2178, %v2290
        %2292 = vmatprep.mubr.bf16.mxu0 0
        %2293 = vmatmul.mubr.bf16.gmra.mrb[0].mxu0 %v308
        %v2294 = vpop.f32.mrb[0].mxu0
        %v2295 = vadd.f32 %v2182, %v2294
        %v2296 = vpop.f32.mrb[0].mxu0
        %v2297 = vadd.f32 %v2184, %v2296
        %v2298 = vpop.f32.mrb[0].mxu0
        %v2299 = vadd.f32 %v2186, %v2298
        %v2300 = vpop.f32.mrb[0].mxu0
        %v2301 = vadd.f32 %v2188, %v2300
        %2302 = vmatprep.mubr.bf16.mxu0 0
        %2303 = vmatmul.mubr.bf16.gmra.mrb[0].mxu0 %v311
        %v2304 = vpop.f32.mrb[0].mxu0
        %v2305 = vadd.f32 %v2192, %v2304
        %v2306 = vpop.f32.mrb[0].mxu0
        %v2307 = vadd.f32 %v2194, %v2306
        %v2308 = vpop.f32.mrb[0].mxu0
        %v2309 = vadd.f32 %v2196, %v2308
        %v2310 = vpop.f32.mrb[0].mxu0
        %v2311 = vadd.f32 %v2198, %v2310
        %2312 = vmatprep.mubr.bf16.mxu0 0
        %2313 = vmatmul.mubr.bf16.gmra.mrb[0].mxu0 %v314
        %v2314 = vpop.f32.mrb[0].mxu0
        %v2315 = vadd.f32 %v2202, %v2314
        %v2316 = vpop.f32.mrb[0].mxu0
        %v2317 = vadd.f32 %v2204, %v2316
        %v2318 = vpop.f32.mrb[0].mxu0
        %v2319 = vadd.f32 %v2206, %v2318
        %v2320 = vpop.f32.mrb[0].mxu0
        %v2321 = vadd.f32 %v2208, %v2320
        %2322 = vmatprep.mubr.bf16.mxu0 0
        %2323 = vmatmul.mubr.bf16.gmra.mrb[0].mxu0 %v317
        %v2324 = vpop.f32.mrb[0].mxu0
        %v2325 = vadd.f32 %v2212, %v2324
        %v2326 = vpop.f32.mrb[0].mxu0
        %v2327 = vadd.f32 %v2214, %v2326
        %v2328 = vpop.f32.mrb[0].mxu0
        %v2329 = vadd.f32 %v2216, %v2328
        %v2330 = vpop.f32.mrb[0].mxu0
        %v2331 = vadd.f32 %v2218, %v2330
        %2332 = vmatprep.mubr.bf16.mxu0 0
        %2333 = vmatmul.mubr.bf16.gmra.mrb[0].mxu0 %v320
        %v2334 = vpop.f32.mrb[0].mxu0
        %v2335 = vadd.f32 %v2222, %v2334
        %v2336 = vpop.f32.mrb[0].mxu0
        %v2337 = vadd.f32 %v2224, %v2336
        %v2338 = vpop.f32.mrb[0].mxu0
        %v2339 = vadd.f32 %v2226, %v2338
        %v2340 = vpop.f32.mrb[0].mxu0
        %v2341 = vadd.f32 %v2228, %v2340
        %2342 = vdwg.mxu0
        %2343 = vmatprep.subr.bf16.mxu0 %v1240
        %2344 = vmatpush1.bf16.msra.mxu0 %v1239
        %2345 = vmatprep.subr.bf16.mxu0 %v1249
        %2346 = vmatpush1.bf16.msra.mxu0 %v1248
        %2347 = vmatprep.subr.bf16.mxu0 %v1258
        %2348 = vmatpush1.bf16.msra.mxu0 %v1257
        %2349 = vmatprep.subr.bf16.mxu0 %v1267
        %2350 = vmatpush1.bf16.msra.mxu0 %v1266
        %2351 = vmatprep.subr.bf16.mxu0 %v1276
        %2352 = vmatpush1.bf16.msra.mxu0 %v1275
        %2353 = vmatprep.subr.bf16.mxu0 %v1285
        %2354 = vmatpush1.bf16.msra.mxu0 %v1284
        %2355 = vmatprep.subr.bf16.mxu0 %v1294
        %2356 = vmatpush1.bf16.msra.mxu0 %v1293
        %2357 = vmatprep.subr.bf16.mxu0 %v1303
        %2358 = vmatpush1.bf16.msra.mxu0 %v1302
        %2359 = vmatprep.subr.bf16.mxu0 %v1312
        %2360 = vmatpush1.bf16.msra.mxu0 %v1311
        %2361 = vmatprep.subr.bf16.mxu0 %v1321
        %2362 = vmatpush1.bf16.msra.mxu0 %v1320
        %2363 = vmatprep.subr.bf16.mxu0 %v1330
        %2364 = vmatpush1.bf16.msra.mxu0 %v1329
        %2365 = vmatprep.subr.bf16.mxu0 %v1339
        %2366 = vmatpush1.bf16.msra.mxu0 %v1338
        %2367 = vmatprep.subr.bf16.mxu0 %v1348
        %2368 = vmatpush1.bf16.msra.mxu0 %v1347
        %2369 = vmatprep.subr.bf16.mxu0 %v1357
        %2370 = vmatpush1.bf16.msra.mxu0 %v1356
        %2371 = vmatprep.subr.bf16.mxu0 %v1366
        %2372 = vmatpush1.bf16.msra.mxu0 %v1365
        %2373 = vmatprep.subr.bf16.mxu0 %v1375
        %2374 = vmatpush1.bf16.msra.mxu0 %v1374
        %2375 = vmatprep.mubr.bf16.mxu0 %v298
        %2376 = vmatmul.mubr.bf16.gmra.mrb[0].mxu0 %v297
        %v2377 = vpop.f32.mrb[0].mxu0
        %v2378 = vadd.f32 0.0, %v2377
        %v2379 = vpop.f32.mrb[0].mxu0
        %v2380 = vadd.f32 0.0, %v2379
        %v2381 = vpop.f32.mrb[0].mxu0
        %v2382 = vadd.f32 0.0, %v2381
        %v2383 = vpop.f32.mrb[0].mxu0
        %v2384 = vadd.f32 0.0, %v2383
        %2385 = vmatprep.mubr.bf16.mxu0 %v301
        %2386 = vmatmul.mubr.bf16.gmra.mrb[0].mxu0 %v300
        %v2387 = vpop.f32.mrb[0].mxu0
        %v2388 = vadd.f32 0.0, %v2387
        %v2389 = vpop.f32.mrb[0].mxu0
        %v2390 = vadd.f32 0.0, %v2389
        %v2391 = vpop.f32.mrb[0].mxu0
        %v2392 = vadd.f32 0.0, %v2391
        %v2393 = vpop.f32.mrb[0].mxu0
        %v2394 = vadd.f32 0.0, %v2393
        %2395 = vmatprep.mubr.bf16.mxu0 %v304
        %2396 = vmatmul.mubr.bf16.gmra.mrb[0].mxu0 %v303
        %v2397 = vpop.f32.mrb[0].mxu0
        %v2398 = vadd.f32 0.0, %v2397
        %v2399 = vpop.f32.mrb[0].mxu0
        %v2400 = vadd.f32 0.0, %v2399
        %v2401 = vpop.f32.mrb[0].mxu0
        %v2402 = vadd.f32 0.0, %v2401
        %v2403 = vpop.f32.mrb[0].mxu0
        %v2404 = vadd.f32 0.0, %v2403
        %2405 = vmatprep.mubr.bf16.mxu0 %v307
        %2406 = vmatmul.mubr.bf16.gmra.mrb[0].mxu0 %v306
        %v2407 = vpop.f32.mrb[0].mxu0
        %v2408 = vadd.f32 0.0, %v2407
        %v2409 = vpop.f32.mrb[0].mxu0
        %v2410 = vadd.f32 0.0, %v2409
        %v2411 = vpop.f32.mrb[0].mxu0
        %v2412 = vadd.f32 0.0, %v2411
        %v2413 = vpop.f32.mrb[0].mxu0
        %v2414 = vadd.f32 0.0, %v2413
        %2415 = vmatprep.mubr.bf16.mxu0 %v310
        %2416 = vmatmul.mubr.bf16.gmra.mrb[0].mxu0 %v309
        %v2417 = vpop.f32.mrb[0].mxu0
        %v2418 = vadd.f32 0.0, %v2417
        %v2419 = vpop.f32.mrb[0].mxu0
        %v2420 = vadd.f32 0.0, %v2419
        %v2421 = vpop.f32.mrb[0].mxu0
        %v2422 = vadd.f32 0.0, %v2421
        %v2423 = vpop.f32.mrb[0].mxu0
        %v2424 = vadd.f32 0.0, %v2423
        %2425 = vmatprep.mubr.bf16.mxu0 %v313
        %2426 = vmatmul.mubr.bf16.gmra.mrb[0].mxu0 %v312
        %v2427 = vpop.f32.mrb[0].mxu0
        %v2428 = vadd.f32 0.0, %v2427
        %v2429 = vpop.f32.mrb[0].mxu0
        %v2430 = vadd.f32 0.0, %v2429
        %v2431 = vpop.f32.mrb[0].mxu0
        %v2432 = vadd.f32 0.0, %v2431
        %v2433 = vpop.f32.mrb[0].mxu0
        %v2434 = vadd.f32 0.0, %v2433
        %2435 = vmatprep.mubr.bf16.mxu0 %v316
        %2436 = vmatmul.mubr.bf16.gmra.mrb[0].mxu0 %v315
        %v2437 = vpop.f32.mrb[0].mxu0
        %v2438 = vadd.f32 0.0, %v2437
        %v2439 = vpop.f32.mrb[0].mxu0
        %v2440 = vadd.f32 0.0, %v2439
        %v2441 = vpop.f32.mrb[0].mxu0
        %v2442 = vadd.f32 0.0, %v2441
        %v2443 = vpop.f32.mrb[0].mxu0
        %v2444 = vadd.f32 0.0, %v2443
        %2445 = vmatprep.mubr.bf16.mxu0 %v319
        %2446 = vmatmul.mubr.bf16.gmra.mrb[0].mxu0 %v318
        %v2447 = vpop.f32.mrb[0].mxu0
        %v2448 = vadd.f32 0.0, %v2447
        %v2449 = vpop.f32.mrb[0].mxu0
        %v2450 = vadd.f32 0.0, %v2449
        %v2451 = vpop.f32.mrb[0].mxu0
        %v2452 = vadd.f32 0.0, %v2451
        %v2453 = vpop.f32.mrb[0].mxu0
        %v2454 = vadd.f32 0.0, %v2453
        %2455 = vdwg.mxu0
        %2456 = vmatprep.subr.bf16.mxu0 %v1384
        %2457 = vmatpush1.bf16.msra.mxu0 %v1383
        %2458 = vmatprep.subr.bf16.mxu0 %v1393
        %2459 = vmatpush1.bf16.msra.mxu0 %v1392
        %2460 = vmatprep.subr.bf16.mxu0 %v1402
        %2461 = vmatpush1.bf16.msra.mxu0 %v1401
        %2462 = vmatprep.subr.bf16.mxu0 %v1411
        %2463 = vmatpush1.bf16.msra.mxu0 %v1410
        %2464 = vmatprep.subr.bf16.mxu0 %v1420
        %2465 = vmatpush1.bf16.msra.mxu0 %v1419
        %2466 = vmatprep.subr.bf16.mxu0 %v1429
        %2467 = vmatpush1.bf16.msra.mxu0 %v1428
        %2468 = vmatprep.subr.bf16.mxu0 %v1438
        %2469 = vmatpush1.bf16.msra.mxu0 %v1437
        %2470 = vmatprep.subr.bf16.mxu0 %v1447
        %2471 = vmatpush1.bf16.msra.mxu0 %v1446
        %2472 = vmatprep.subr.bf16.mxu0 0
        %2473 = vmatpush1.bf16.msra.mxu0 0
        %2474 = vmatprep.subr.bf16.mxu0 0
        %2475 = vmatpush1.bf16.msra.mxu0 0
        %2476 = vmatprep.subr.bf16.mxu0 0
        %2477 = vmatpush1.bf16.msra.mxu0 0
        %2478 = vmatprep.subr.bf16.mxu0 0
        %2479 = vmatpush1.bf16.msra.mxu0 0
        %2480 = vmatprep.subr.bf16.mxu0 0
        %2481 = vmatpush1.bf16.msra.mxu0 0
        %2482 = vmatprep.subr.bf16.mxu0 0
        %2483 = vmatpush1.bf16.msra.mxu0 0
        %2484 = vmatprep.subr.bf16.mxu0 0
        %2485 = vmatpush1.bf16.msra.mxu0 0
        %2486 = vmatprep.subr.bf16.mxu0 0
        %2487 = vmatpush1.bf16.msra.mxu0 0
        %2488 = vmatprep.mubr.bf16.mxu0 0
        %2489 = vmatmul.mubr.bf16.gmra.mrb[0].mxu0 %v299
        %v2490 = vpop.f32.mrb[0].mxu0
        %v2491 = vadd.f32 %v2378, %v2490
        %v2492 = vpop.f32.mrb[0].mxu0
        %v2493 = vadd.f32 %v2380, %v2492
        %v2494 = vpop.f32.mrb[0].mxu0
        %v2495 = vadd.f32 %v2382, %v2494
        %v2496 = vpop.f32.mrb[0].mxu0
        %v2497 = vadd.f32 %v2384, %v2496
        %2498 = vmatprep.mubr.bf16.mxu0 0
        %2499 = vmatmul.mubr.bf16.gmra.mrb[0].mxu0 %v302
        %v2500 = vpop.f32.mrb[0].mxu0
        %v2501 = vadd.f32 %v2388, %v2500
        %v2502 = vpop.f32.mrb[0].mxu0
        %v2503 = vadd.f32 %v2390, %v2502
        %v2504 = vpop.f32.mrb[0].mxu0
        %v2505 = vadd.f32 %v2392, %v2504
        %v2506 = vpop.f32.mrb[0].mxu0
        %v2507 = vadd.f32 %v2394, %v2506
        %2508 = vmatprep.mubr.bf16.mxu0 0
        %2509 = vmatmul.mubr.bf16.gmra.mrb[0].mxu0 %v305
        %v2510 = vpop.f32.mrb[0].mxu0
        %v2511 = vadd.f32 %v2398, %v2510
        %v2512 = vpop.f32.mrb[0].mxu0
        %v2513 = vadd.f32 %v2400, %v2512
        %v2514 = vpop.f32.mrb[0].mxu0
        %v2515 = vadd.f32 %v2402, %v2514
        %v2516 = vpop.f32.mrb[0].mxu0
        %v2517 = vadd.f32 %v2404, %v2516
        %2518 = vmatprep.mubr.bf16.mxu0 0
        %2519 = vmatmul.mubr.bf16.gmra.mrb[0].mxu0 %v308
        %v2520 = vpop.f32.mrb[0].mxu0
        %v2521 = vadd.f32 %v2408, %v2520
        %v2522 = vpop.f32.mrb[0].mxu0
        %v2523 = vadd.f32 %v2410, %v2522
        %v2524 = vpop.f32.mrb[0].mxu0
        %v2525 = vadd.f32 %v2412, %v2524
        %v2526 = vpop.f32.mrb[0].mxu0
        %v2527 = vadd.f32 %v2414, %v2526
        %2528 = vmatprep.mubr.bf16.mxu0 0
        %2529 = vmatmul.mubr.bf16.gmra.mrb[0].mxu0 %v311
        %v2530 = vpop.f32.mrb[0].mxu0
        %v2531 = vadd.f32 %v2418, %v2530
        %v2532 = vpop.f32.mrb[0].mxu0
        %v2533 = vadd.f32 %v2420, %v2532
        %v2534 = vpop.f32.mrb[0].mxu0
        %v2535 = vadd.f32 %v2422, %v2534
        %v2536 = vpop.f32.mrb[0].mxu0
        %v2537 = vadd.f32 %v2424, %v2536
        %2538 = vmatprep.mubr.bf16.mxu0 0
        %2539 = vmatmul.mubr.bf16.gmra.mrb[0].mxu0 %v314
        %v2540 = vpop.f32.mrb[0].mxu0
        %v2541 = vadd.f32 %v2428, %v2540
        %v2542 = vpop.f32.mrb[0].mxu0
        %v2543 = vadd.f32 %v2430, %v2542
        %v2544 = vpop.f32.mrb[0].mxu0
        %v2545 = vadd.f32 %v2432, %v2544
        %v2546 = vpop.f32.mrb[0].mxu0
        %v2547 = vadd.f32 %v2434, %v2546
        %2548 = vmatprep.mubr.bf16.mxu0 0
        %2549 = vmatmul.mubr.bf16.gmra.mrb[0].mxu0 %v317
        %v2550 = vpop.f32.mrb[0].mxu0
        %v2551 = vadd.f32 %v2438, %v2550
        %v2552 = vpop.f32.mrb[0].mxu0
        %v2553 = vadd.f32 %v2440, %v2552
        %v2554 = vpop.f32.mrb[0].mxu0
        %v2555 = vadd.f32 %v2442, %v2554
        %v2556 = vpop.f32.mrb[0].mxu0
        %v2557 = vadd.f32 %v2444, %v2556
        %2558 = vmatprep.mubr.bf16.mxu0 0
        %2559 = vmatmul.mubr.bf16.gmra.mrb[0].mxu0 %v320
        %v2560 = vpop.f32.mrb[0].mxu0
        %v2561 = vadd.f32 %v2448, %v2560
        %v2562 = vpop.f32.mrb[0].mxu0
        %v2563 = vadd.f32 %v2450, %v2562
        %v2564 = vpop.f32.mrb[0].mxu0
        %v2565 = vadd.f32 %v2452, %v2564
        %v2566 = vpop.f32.mrb[0].mxu0
        %v2567 = vadd.f32 %v2454, %v2566
        %2568 = vdwg.mxu0
        %2569 = vmatprep.subr.bf16.mxu0 0
        %2570 = vmatpush1.bf16.msra.mxu0 %v1241
        %2571 = vmatprep.subr.bf16.mxu0 0
        %2572 = vmatpush1.bf16.msra.mxu0 %v1250
        %2573 = vmatprep.subr.bf16.mxu0 0
        %2574 = vmatpush1.bf16.msra.mxu0 %v1259
        %2575 = vmatprep.subr.bf16.mxu0 0
        %2576 = vmatpush1.bf16.msra.mxu0 %v1268
        %2577 = vmatprep.subr.bf16.mxu0 0
        %2578 = vmatpush1.bf16.msra.mxu0 %v1277
        %2579 = vmatprep.subr.bf16.mxu0 0
        %2580 = vmatpush1.bf16.msra.mxu0 %v1286
        %2581 = vmatprep.subr.bf16.mxu0 0
        %2582 = vmatpush1.bf16.msra.mxu0 %v1295
        %2583 = vmatprep.subr.bf16.mxu0 0
        %2584 = vmatpush1.bf16.msra.mxu0 %v1304
        %2585 = vmatprep.subr.bf16.mxu0 0
        %2586 = vmatpush1.bf16.msra.mxu0 %v1313
        %2587 = vmatprep.subr.bf16.mxu0 0
        %2588 = vmatpush1.bf16.msra.mxu0 %v1322
        %2589 = vmatprep.subr.bf16.mxu0 0
        %2590 = vmatpush1.bf16.msra.mxu0 %v1331
        %2591 = vmatprep.subr.bf16.mxu0 0
        %2592 = vmatpush1.bf16.msra.mxu0 %v1340
        %2593 = vmatprep.subr.bf16.mxu0 0
        %2594 = vmatpush1.bf16.msra.mxu0 %v1349
        %2595 = vmatprep.subr.bf16.mxu0 0
        %2596 = vmatpush1.bf16.msra.mxu0 %v1358
        %2597 = vmatprep.subr.bf16.mxu0 0
        %2598 = vmatpush1.bf16.msra.mxu0 %v1367
        %2599 = vmatprep.subr.bf16.mxu0 0
        %2600 = vmatpush1.bf16.msra.mxu0 %v1376
        %2601 = vmatprep.mubr.bf16.mxu0 %v298
        %2602 = vmatmul.mubr.bf16.gmra.mrb[0].mxu0 %v297
        %v2603 = vpop.f32.mrb[0].mxu0
        %v2604 = vadd.f32 0.0, %v2603
        %v2605 = vpop.f32.mrb[0].mxu0
        %v2606 = vpop.f32.mrb[0].mxu0
        %v2607 = vadd.f32 0.0, %v2606
        %v2608 = vpop.f32.mrb[0].mxu0
        %2609 = vmatprep.mubr.bf16.mxu0 %v301
        %2610 = vmatmul.mubr.bf16.gmra.mrb[0].mxu0 %v300
        %v2611 = vpop.f32.mrb[0].mxu0
        %v2612 = vadd.f32 0.0, %v2611
        %v2613 = vpop.f32.mrb[0].mxu0
        %v2614 = vpop.f32.mrb[0].mxu0
        %v2615 = vadd.f32 0.0, %v2614
        %v2616 = vpop.f32.mrb[0].mxu0
        %2617 = vmatprep.mubr.bf16.mxu0 %v304
        %2618 = vmatmul.mubr.bf16.gmra.mrb[0].mxu0 %v303
        %v2619 = vpop.f32.mrb[0].mxu0
        %v2620 = vadd.f32 0.0, %v2619
        %v2621 = vpop.f32.mrb[0].mxu0
        %v2622 = vpop.f32.mrb[0].mxu0
        %v2623 = vadd.f32 0.0, %v2622
        %v2624 = vpop.f32.mrb[0].mxu0
        %2625 = vmatprep.mubr.bf16.mxu0 %v307
        %2626 = vmatmul.mubr.bf16.gmra.mrb[0].mxu0 %v306
        %v2627 = vpop.f32.mrb[0].mxu0
        %v2628 = vadd.f32 0.0, %v2627
        %v2629 = vpop.f32.mrb[0].mxu0
        %v2630 = vpop.f32.mrb[0].mxu0
        %v2631 = vadd.f32 0.0, %v2630
        %v2632 = vpop.f32.mrb[0].mxu0
        %2633 = vmatprep.mubr.bf16.mxu0 %v310
        %2634 = vmatmul.mubr.bf16.gmra.mrb[0].mxu0 %v309
        %v2635 = vpop.f32.mrb[0].mxu0
        %v2636 = vadd.f32 0.0, %v2635
        %v2637 = vpop.f32.mrb[0].mxu0
        %v2638 = vpop.f32.mrb[0].mxu0
        %v2639 = vadd.f32 0.0, %v2638
        %v2640 = vpop.f32.mrb[0].mxu0
        %2641 = vmatprep.mubr.bf16.mxu0 %v313
        %2642 = vmatmul.mubr.bf16.gmra.mrb[0].mxu0 %v312
        %v2643 = vpop.f32.mrb[0].mxu0
        %v2644 = vadd.f32 0.0, %v2643
        %v2645 = vpop.f32.mrb[0].mxu0
        %v2646 = vpop.f32.mrb[0].mxu0
        %v2647 = vadd.f32 0.0, %v2646
        %v2648 = vpop.f32.mrb[0].mxu0
        %2649 = vmatprep.mubr.bf16.mxu0 %v316
        %2650 = vmatmul.mubr.bf16.gmra.mrb[0].mxu0 %v315
        %v2651 = vpop.f32.mrb[0].mxu0
        %v2652 = vadd.f32 0.0, %v2651
        %v2653 = vpop.f32.mrb[0].mxu0
        %v2654 = vpop.f32.mrb[0].mxu0
        %v2655 = vadd.f32 0.0, %v2654
        %v2656 = vpop.f32.mrb[0].mxu0
        %2657 = vmatprep.mubr.bf16.mxu0 %v319
        %2658 = vmatmul.mubr.bf16.gmra.mrb[0].mxu0 %v318
        %v2659 = vpop.f32.mrb[0].mxu0
        %v2660 = vadd.f32 0.0, %v2659
        %v2661 = vpop.f32.mrb[0].mxu0
        %v2662 = vpop.f32.mrb[0].mxu0
        %v2663 = vadd.f32 0.0, %v2662
        %v2664 = vpop.f32.mrb[0].mxu0
        %2665 = vdwg.mxu0
        %2666 = vmatprep.subr.bf16.mxu0 0
        %2667 = vmatpush1.bf16.msra.mxu0 %v1385
        %2668 = vmatprep.subr.bf16.mxu0 0
        %2669 = vmatpush1.bf16.msra.mxu0 %v1394
        %2670 = vmatprep.subr.bf16.mxu0 0
        %2671 = vmatpush1.bf16.msra.mxu0 %v1403
        %2672 = vmatprep.subr.bf16.mxu0 0
        %2673 = vmatpush1.bf16.msra.mxu0 %v1412
        %2674 = vmatprep.subr.bf16.mxu0 0
        %2675 = vmatpush1.bf16.msra.mxu0 %v1421
        %2676 = vmatprep.subr.bf16.mxu0 0
        %2677 = vmatpush1.bf16.msra.mxu0 %v1430
        %2678 = vmatprep.subr.bf16.mxu0 0
        %2679 = vmatpush1.bf16.msra.mxu0 %v1439
        %2680 = vmatprep.subr.bf16.mxu0 0
        %2681 = vmatpush1.bf16.msra.mxu0 %v1448
        %2682 = vmatprep.subr.bf16.mxu0 0
        %2683 = vmatpush1.bf16.msra.mxu0 0
        %2684 = vmatprep.subr.bf16.mxu0 0
        %2685 = vmatpush1.bf16.msra.mxu0 0
        %2686 = vmatprep.subr.bf16.mxu0 0
        %2687 = vmatpush1.bf16.msra.mxu0 0
        %2688 = vmatprep.subr.bf16.mxu0 0
        %2689 = vmatpush1.bf16.msra.mxu0 0
        %2690 = vmatprep.subr.bf16.mxu0 0
        %2691 = vmatpush1.bf16.msra.mxu0 0
        %2692 = vmatprep.subr.bf16.mxu0 0
        %2693 = vmatpush1.bf16.msra.mxu0 0
        %2694 = vmatprep.subr.bf16.mxu0 0
        %2695 = vmatpush1.bf16.msra.mxu0 0
        %2696 = vmatprep.subr.bf16.mxu0 0
        %2697 = vmatpush1.bf16.msra.mxu0 0
        %2698 = vmatprep.mubr.bf16.mxu0 0
        %2699 = vmatmul.mubr.bf16.gmra.mrb[0].mxu0 %v299
        %v2700 = vpop.f32.mrb[0].mxu0
        %v2701 = vadd.f32 %v2604, %v2700
        %v2702 = vpop.f32.mrb[0].mxu0
        %v2703 = vpop.f32.mrb[0].mxu0
        %v2704 = vadd.f32 %v2607, %v2703
        %v2705 = vpop.f32.mrb[0].mxu0
        %2706 = vmatprep.mubr.bf16.mxu0 0
        %2707 = vmatmul.mubr.bf16.gmra.mrb[0].mxu0 %v302
        %v2708 = vpop.f32.mrb[0].mxu0
        %v2709 = vadd.f32 %v2612, %v2708
        %v2710 = vpop.f32.mrb[0].mxu0
        %v2711 = vpop.f32.mrb[0].mxu0
        %v2712 = vadd.f32 %v2615, %v2711
        %v2713 = vpop.f32.mrb[0].mxu0
        %2714 = vmatprep.mubr.bf16.mxu0 0
        %2715 = vmatmul.mubr.bf16.gmra.mrb[0].mxu0 %v305
        %v2716 = vpop.f32.mrb[0].mxu0
        %v2717 = vadd.f32 %v2620, %v2716
        %v2718 = vpop.f32.mrb[0].mxu0
        %v2719 = vpop.f32.mrb[0].mxu0
        %v2720 = vadd.f32 %v2623, %v2719
        %v2721 = vpop.f32.mrb[0].mxu0
        %2722 = vmatprep.mubr.bf16.mxu0 0
        %2723 = vmatmul.mubr.bf16.gmra.mrb[0].mxu0 %v308
        %v2724 = vpop.f32.mrb[0].mxu0
        %v2725 = vadd.f32 %v2628, %v2724
        %v2726 = vpop.f32.mrb[0].mxu0
        %v2727 = vpop.f32.mrb[0].mxu0
        %v2728 = vadd.f32 %v2631, %v2727
        %v2729 = vpop.f32.mrb[0].mxu0
        %2730 = vmatprep.mubr.bf16.mxu0 0
        %2731 = vmatmul.mubr.bf16.gmra.mrb[0].mxu0 %v311
        %v2732 = vpop.f32.mrb[0].mxu0
        %v2733 = vadd.f32 %v2636, %v2732
        %v2734 = vpop.f32.mrb[0].mxu0
        %v2735 = vpop.f32.mrb[0].mxu0
        %v2736 = vadd.f32 %v2639, %v2735
        %v2737 = vpop.f32.mrb[0].mxu0
        %2738 = vmatprep.mubr.bf16.mxu0 0
        %2739 = vmatmul.mubr.bf16.gmra.mrb[0].mxu0 %v314
        %v2740 = vpop.f32.mrb[0].mxu0
        %v2741 = vadd.f32 %v2644, %v2740
        %v2742 = vpop.f32.mrb[0].mxu0
        %v2743 = vpop.f32.mrb[0].mxu0
        %v2744 = vadd.f32 %v2647, %v2743
        %v2745 = vpop.f32.mrb[0].mxu0
        %2746 = vmatprep.mubr.bf16.mxu0 0
        %2747 = vmatmul.mubr.bf16.gmra.mrb[0].mxu0 %v317
        %v2748 = vpop.f32.mrb[0].mxu0
        %v2749 = vadd.f32 %v2652, %v2748
        %v2750 = vpop.f32.mrb[0].mxu0
        %v2751 = vpop.f32.mrb[0].mxu0
        %v2752 = vadd.f32 %v2655, %v2751
        %v2753 = vpop.f32.mrb[0].mxu0
        %2754 = vmatprep.mubr.bf16.mxu0 0
        %2755 = vmatmul.mubr.bf16.gmra.mrb[0].mxu0 %v320
        %v2756 = vpop.f32.mrb[0].mxu0
        %v2757 = vadd.f32 %v2660, %v2756
        %v2758 = vpop.f32.mrb[0].mxu0
        %v2759 = vpop.f32.mrb[0].mxu0
        %v2760 = vadd.f32 %v2663, %v2759
        %v2761 = vpop.f32.mrb[0].mxu0
        %2762 = vdwg.mxu0
        %v2763 = vpack.c.bf16 %v1817, %v1813
        %v2764 = vpack.c.bf16 %v1819, %v1815
        %v2765 = vpack.c.bf16 %v2043, %v2039
        %v2766 = vpack.c.bf16 %v2045, %v2041
        %v2767 = vpack.c.bf16 %v2269, %v2265
        %v2768 = vpack.c.bf16 %v2271, %v2267
        %v2769 = vpack.c.bf16 %v2495, %v2491
        %v2770 = vpack.c.bf16 %v2497, %v2493
        %v2771 = vpack.c.bf16 %v2704, %v2701
        %v2772 = vpack.c.bf16 %v1827, %v1823
        %v2773 = vpack.c.bf16 %v1829, %v1825
        %v2774 = vpack.c.bf16 %v2053, %v2049
        %v2775 = vpack.c.bf16 %v2055, %v2051
        %v2776 = vpack.c.bf16 %v2279, %v2275
        %v2777 = vpack.c.bf16 %v2281, %v2277
        %v2778 = vpack.c.bf16 %v2505, %v2501
        %v2779 = vpack.c.bf16 %v2507, %v2503
        %v2780 = vpack.c.bf16 %v2712, %v2709
        %v2781 = vpack.c.bf16 %v1837, %v1833
        %v2782 = vpack.c.bf16 %v1839, %v1835
        %v2783 = vpack.c.bf16 %v2063, %v2059
        %v2784 = vpack.c.bf16 %v2065, %v2061
        %v2785 = vpack.c.bf16 %v2289, %v2285
        %v2786 = vpack.c.bf16 %v2291, %v2287
        %v2787 = vpack.c.bf16 %v2515, %v2511
        %v2788 = vpack.c.bf16 %v2517, %v2513
        %v2789 = vpack.c.bf16 %v2720, %v2717
        %v2790 = vpack.c.bf16 %v1847, %v1843
        %v2791 = vpack.c.bf16 %v1849, %v1845
        %v2792 = vpack.c.bf16 %v2073, %v2069
        %v2793 = vpack.c.bf16 %v2075, %v2071
        %v2794 = vpack.c.bf16 %v2299, %v2295
        %v2795 = vpack.c.bf16 %v2301, %v2297
        %v2796 = vpack.c.bf16 %v2525, %v2521
        %v2797 = vpack.c.bf16 %v2527, %v2523
        %v2798 = vpack.c.bf16 %v2728, %v2725
        %v2799 = vpack.c.bf16 %v1857, %v1853
        %v2800 = vpack.c.bf16 %v1859, %v1855
        %v2801 = vpack.c.bf16 %v2083, %v2079
        %v2802 = vpack.c.bf16 %v2085, %v2081
        %v2803 = vpack.c.bf16 %v2309, %v2305
        %v2804 = vpack.c.bf16 %v2311, %v2307
        %v2805 = vpack.c.bf16 %v2535, %v2531
        %v2806 = vpack.c.bf16 %v2537, %v2533
        %v2807 = vpack.c.bf16 %v2736, %v2733
        %v2808 = vpack.c.bf16 %v1867, %v1863
        %v2809 = vpack.c.bf16 %v1869, %v1865
        %v2810 = vpack.c.bf16 %v2093, %v2089
        %v2811 = vpack.c.bf16 %v2095, %v2091
        %v2812 = vpack.c.bf16 %v2319, %v2315
        %v2813 = vpack.c.bf16 %v2321, %v2317
        %v2814 = vpack.c.bf16 %v2545, %v2541
        %v2815 = vpack.c.bf16 %v2547, %v2543
        %v2816 = vpack.c.bf16 %v2744, %v2741
        %v2817 = vpack.c.bf16 %v1877, %v1873
        %v2818 = vpack.c.bf16 %v1879, %v1875
        %v2819 = vpack.c.bf16 %v2103, %v2099
        %v2820 = vpack.c.bf16 %v2105, %v2101
        %v2821 = vpack.c.bf16 %v2329, %v2325
        %v2822 = vpack.c.bf16 %v2331, %v2327
        %v2823 = vpack.c.bf16 %v2555, %v2551
        %v2824 = vpack.c.bf16 %v2557, %v2553
        %v2825 = vpack.c.bf16 %v2752, %v2749
        %v2826 = vpack.c.bf16 %v1887, %v1883
        %v2827 = vpack.c.bf16 %v1889, %v1885
        %v2828 = vpack.c.bf16 %v2113, %v2109
        %v2829 = vpack.c.bf16 %v2115, %v2111
        %v2830 = vpack.c.bf16 %v2339, %v2335
        %v2831 = vpack.c.bf16 %v2341, %v2337
        %v2832 = vpack.c.bf16 %v2565, %v2561
        %v2833 = vpack.c.bf16 %v2567, %v2563
        %v2834 = vpack.c.bf16 %v2760, %v2757
        %2835 = vst [vmem:[#allocation2] sm:$0xff] %v2763
        %2836 = vst [vmem:[#allocation2 + $0x8] sm:$0xff] %v2764
        %2837 = vst [vmem:[#allocation2 + $0x10] sm:$0xff] %v2765
        %2838 = vst [vmem:[#allocation2 + $0x18] sm:$0xff] %v2766
        %2839 = vst [vmem:[#allocation2 + $0x20] sm:$0xff] %v2767
        %2840 = vst [vmem:[#allocation2 + $0x28] sm:$0xff] %v2768
        %2841 = vst [vmem:[#allocation2 + $0x30] sm:$0xff] %v2769
        %2842 = vst [vmem:[#allocation2 + $0x38] sm:$0xff] %v2770
        %2843 = vst [vmem:[#allocation2 + $0x40] sm:$0xff] %v2771
        %2844 = vst [vmem:[#allocation2 + $0x48] sm:$0xff] %v2772
        %2845 = vst [vmem:[#allocation2 + $0x50] sm:$0xff] %v2773
        %2846 = vst [vmem:[#allocation2 + $0x58] sm:$0xff] %v2774
        %2847 = vst [vmem:[#allocation2 + $0x60] sm:$0xff] %v2775
        %2848 = vst [vmem:[#allocation2 + $0x68] sm:$0xff] %v2776
        %2849 = vst [vmem:[#allocation2 + $0x70] sm:$0xff] %v2777
        %2850 = vst [vmem:[#allocation2 + $0x78] sm:$0xff] %v2778
        %2851 = vst [vmem:[#allocation2 + $0x80] sm:$0xff] %v2779
        %2852 = vst [vmem:[#allocation2 + $0x88] sm:$0xff] %v2780
        %2853 = vst [vmem:[#allocation2 + $0x90] sm:$0xff] %v2781
        %2854 = vst [vmem:[#allocation2 + $0x98] sm:$0xff] %v2782
        %2855 = vst [vmem:[#allocation2 + $0xa0] sm:$0xff] %v2783
        %2856 = vst [vmem:[#allocation2 + $0xa8] sm:$0xff] %v2784
        %2857 = vst [vmem:[#allocation2 + $0xb0] sm:$0xff] %v2785
        %2858 = vst [vmem:[#allocation2 + $0xb8] sm:$0xff] %v2786
        %2859 = vst [vmem:[#allocation2 + $0xc0] sm:$0xff] %v2787
        %2860 = vst [vmem:[#allocation2 + $0xc8] sm:$0xff] %v2788
        %2861 = vst [vmem:[#allocation2 + $0xd0] sm:$0xff] %v2789
        %2862 = vst [vmem:[#allocation2 + $0xd8] sm:$0xff] %v2790
        %2863 = vst [vmem:[#allocation2 + $0xe0] sm:$0xff] %v2791
        %2864 = vst [vmem:[#allocation2 + $0xe8] sm:$0xff] %v2792
        %2865 = vst [vmem:[#allocation2 + $0xf0] sm:$0xff] %v2793
        %2866 = vst [vmem:[#allocation2 + $0xf8] sm:$0xff] %v2794
        %2867 = vst [vmem:[#allocation2 + $0x100] sm:$0xff] %v2795
        %2868 = vst [vmem:[#allocation2 + $0x108] sm:$0xff] %v2796
        %2869 = vst [vmem:[#allocation2 + $0x110] sm:$0xff] %v2797
        %2870 = vst [vmem:[#allocation2 + $0x118] sm:$0xff] %v2798
        %2871 = vst [vmem:[#allocation2 + $0x120] sm:$0xff] %v2799
        %2872 = vst [vmem:[#allocation2 + $0x128] sm:$0xff] %v2800
        %2873 = vst [vmem:[#allocation2 + $0x130] sm:$0xff] %v2801
        %2874 = vst [vmem:[#allocation2 + $0x138] sm:$0xff] %v2802
        %2875 = vst [vmem:[#allocation2 + $0x140] sm:$0xff] %v2803
        %2876 = vst [vmem:[#allocation2 + $0x148] sm:$0xff] %v2804
        %2877 = vst [vmem:[#allocation2 + $0x150] sm:$0xff] %v2805
        %2878 = vst [vmem:[#allocation2 + $0x158] sm:$0xff] %v2806
        %2879 = vst [vmem:[#allocation2 + $0x160] sm:$0xff] %v2807
        %2880 = vst [vmem:[#allocation2 + $0x168] sm:$0xff] %v2808
        %2881 = vst [vmem:[#allocation2 + $0x170] sm:$0xff] %v2809
        %2882 = vst [vmem:[#allocation2 + $0x178] sm:$0xff] %v2810
        %2883 = vst [vmem:[#allocation2 + $0x180] sm:$0xff] %v2811
        %2884 = vst [vmem:[#allocation2 + $0x188] sm:$0xff] %v2812
        %2885 = vst [vmem:[#allocation2 + $0x190] sm:$0xff] %v2813
        %2886 = vst [vmem:[#allocation2 + $0x198] sm:$0xff] %v2814
        %2887 = vst [vmem:[#allocation2 + $0x1a0] sm:$0xff] %v2815
        %2888 = vst [vmem:[#allocation2 + $0x1a8] sm:$0xff] %v2816
        %2889 = vst [vmem:[#allocation2 + $0x1b0] sm:$0xff] %v2817
        %2890 = vst [vmem:[#allocation2 + $0x1b8] sm:$0xff] %v2818
        %2891 = vst [vmem:[#allocation2 + $0x1c0] sm:$0xff] %v2819
        %2892 = vst [vmem:[#allocation2 + $0x1c8] sm:$0xff] %v2820
        %2893 = vst [vmem:[#allocation2 + $0x1d0] sm:$0xff] %v2821
        %2894 = vst [vmem:[#allocation2 + $0x1d8] sm:$0xff] %v2822
        %2895 = vst [vmem:[#allocation2 + $0x1e0] sm:$0xff] %v2823
        %2896 = vst [vmem:[#allocation2 + $0x1e8] sm:$0xff] %v2824
        %2897 = vst [vmem:[#allocation2 + $0x1f0] sm:$0xff] %v2825
        %2898 = vst [vmem:[#allocation2 + $0x1f8] sm:$0xff] %v2826
        %2899 = vst [vmem:[#allocation2 + $0x200] sm:$0xff] %v2827
        %2900 = vst [vmem:[#allocation2 + $0x208] sm:$0xff] %v2828
        %2901 = vst [vmem:[#allocation2 + $0x210] sm:$0xff] %v2829
        %2902 = vst [vmem:[#allocation2 + $0x218] sm:$0xff] %v2830
        %2903 = vst [vmem:[#allocation2 + $0x220] sm:$0xff] %v2831
        %2904 = vst [vmem:[#allocation2 + $0x228] sm:$0xff] %v2832
        %2905 = vst [vmem:[#allocation2 + $0x230] sm:$0xff] %v2833
        %2906 = vst [vmem:[#allocation2 + $0x238] sm:$0xff] %v2834
        %v2907 = vlaneseq
        %v2908 = vshrl.u32 %v2907, 7
        %v2909 = vadd.s32 %v2908, 8
        %v2910 = vadd.s32 %v2908, 16
        %v2911 = vadd.s32 %v2908, 24
        %v2912 = vadd.s32 %v2908, 32
        %v2913 = vadd.s32 %v2908, 40
        %v2914 = vadd.s32 %v2908, 48
        %v2915 = vadd.s32 %v2908, 56
        %v2916 = vadd.s32 %v2908, 64
        %v2917 = vadd.s32 %v2908, 72
        %v2918 = vadd.s32 %v2908, 80
        %v2919 = vadd.s32 %v2908, 88
        %v2920 = vadd.s32 %v2908, 96
        %v2921 = vadd.s32 %v2908, 104
        %v2922 = vadd.s32 %v2908, 112
        %v2923 = vadd.s32 %v2908, 120
        %v2924 = vlaneseq
        %v2925 = vand.u32 %v2924, 127
        %vm2926 = vcmp.le.s32.totalorder %v2925, %v2908
        %vm2927 = vcmp.le.s32.totalorder %v2925, %v2909
        %vm2928 = vcmp.le.s32.totalorder %v2925, %v2910
        %vm2929 = vcmp.le.s32.totalorder %v2925, %v2911
        %vm2930 = vcmp.le.s32.totalorder %v2925, %v2912
        %vm2931 = vcmp.le.s32.totalorder %v2925, %v2913
        %vm2932 = vcmp.le.s32.totalorder %v2925, %v2914
        %vm2933 = vcmp.le.s32.totalorder %v2925, %v2915
        %vm2934 = vcmp.le.s32.totalorder %v2925, %v2916
        %vm2935 = vcmp.le.s32.totalorder %v2925, %v2917
        %vm2936 = vcmp.le.s32.totalorder %v2925, %v2918
        %vm2937 = vcmp.le.s32.totalorder %v2925, %v2919
        %vm2938 = vcmp.le.s32.totalorder %v2925, %v2920
        %vm2939 = vcmp.le.s32.totalorder %v2925, %v2921
        %vm2940 = vcmp.le.s32.totalorder %v2925, %v2922
        %vm2941 = vcmp.le.s32.totalorder %v2925, %v2923
        %v2942 = vld [vmem:[#allocation2] sm:$0xff]
        %v2943 = vld [vmem:[#allocation2 + $0x48] sm:$0xff]
        %v2944 = vld [vmem:[#allocation2 + $0x90] sm:$0xff]
        %v2945 = vld [vmem:[#allocation2 + $0xd8] sm:$0xff]
        %v2946 = vld [vmem:[#allocation2 + $0x120] sm:$0xff]
        %v2947 = vld [vmem:[#allocation2 + $0x168] sm:$0xff]
        %v2948 = vld [vmem:[#allocation2 + $0x1b0] sm:$0xff]
        %v2949 = vld [vmem:[#allocation2 + $0x1f8] sm:$0xff]
        %v2950 = vld [vmem:[#allocation2 + $0x18] sm:$0xff]
        %v2951 = vld [vmem:[#allocation2 + $0x60] sm:$0xff]
        %v2952 = vld [vmem:[#allocation2 + $0xa8] sm:$0xff]
        %v2953 = vld [vmem:[#allocation2 + $0xf0] sm:$0xff]
        %v2954 = vld [vmem:[#allocation2 + $0x138] sm:$0xff]
        %v2955 = vld [vmem:[#allocation2 + $0x180] sm:$0xff]
        %v2956 = vld [vmem:[#allocation2 + $0x1c8] sm:$0xff]
        %v2957 = vld [vmem:[#allocation2 + $0x210] sm:$0xff]
        %v2958 = vld [vmem:[#allocation2 + $0x30] sm:$0xff]
        %v2959 = vld [vmem:[#allocation2 + $0x78] sm:$0xff]
        %v2960 = vld [vmem:[#allocation2 + $0xc0] sm:$0xff]
        %v2961 = vld [vmem:[#allocation2 + $0x108] sm:$0xff]
        %v2962 = vld [vmem:[#allocation2 + $0x150] sm:$0xff]
        %v2963 = vld [vmem:[#allocation2 + $0x198] sm:$0xff]
        %v2964 = vld [vmem:[#allocation2 + $0x1e0] sm:$0xff]
        %v2965 = vld [vmem:[#allocation2 + $0x228] sm:$0xff]
        %vm2966 = vcmask 523264
        %v2968 = vsel %vm2966, %v2942, 0
        %v2971 = vsel %vm2966, %v2943, 0
        %v2974 = vsel %vm2966, %v2944, 0
        %v2977 = vsel %vm2966, %v2945, 0
        %v2980 = vsel %vm2966, %v2946, 0
        %v2983 = vsel %vm2966, %v2947, 0
        %v2986 = vsel %vm2966, %v2948, 0
        %v2989 = vsel %vm2966, %v2949, 0
        %v2992 = vsel %vm2966, %v2950, 0
        %v2995 = vsel %vm2966, %v2951, 0
        %v2998 = vsel %vm2966, %v2952, 0
        %v3001 = vsel %vm2966, %v2953, 0
        %v3004 = vsel %vm2966, %v2954, 0
        %v3007 = vsel %vm2966, %v2955, 0
        %v3010 = vsel %vm2966, %v2956, 0
        %v3013 = vsel %vm2966, %v2957, 0
        %3015 = vmatprep.subr.bf16.mxu0 0
        %3016 = vmatpush1.bf16.xpose.msra.mxu0 %v2992
        %3017 = vmatprep.subr.bf16.mxu0 0
        %3018 = vmatpush1.bf16.xpose.msra.mxu0 %v2995
        %3019 = vmatprep.subr.bf16.mxu0 0
        %3020 = vmatpush1.bf16.xpose.msra.mxu0 %v2998
        %3021 = vmatprep.subr.bf16.mxu0 0
        %3022 = vmatpush1.bf16.xpose.msra.mxu0 %v3001
        %3023 = vmatprep.subr.bf16.mxu0 0
        %3024 = vmatpush1.bf16.xpose.msra.mxu0 %v3004
        %3025 = vmatprep.subr.bf16.mxu0 0
        %3026 = vmatpush1.bf16.xpose.msra.mxu0 %v3007
        %3027 = vmatprep.subr.bf16.mxu0 0
        %3028 = vmatpush1.bf16.xpose.msra.mxu0 %v3010
        %3029 = vmatprep.subr.bf16.mxu0 0
        %3030 = vmatpush1.bf16.xpose.msra.mxu0 %v3013
        %3031 = vmatprep.subr.bf16.mxu0 0
        %3032 = vmatpush1.bf16.xpose.msra.mxu0 0
        %3033 = vmatprep.subr.bf16.mxu0 0
        %3034 = vmatpush1.bf16.xpose.msra.mxu0 0
        %3035 = vmatprep.subr.bf16.mxu0 0
        %3036 = vmatpush1.bf16.xpose.msra.mxu0 0
        %3037 = vmatprep.subr.bf16.mxu0 0
        %3038 = vmatpush1.bf16.xpose.msra.mxu0 0
        %3039 = vmatprep.subr.bf16.mxu0 0
        %3040 = vmatpush1.bf16.xpose.msra.mxu0 0
        %3041 = vmatprep.subr.bf16.mxu0 0
        %3042 = vmatpush1.bf16.xpose.msra.mxu0 0
        %3043 = vmatprep.subr.bf16.mxu0 0
        %3044 = vmatpush1.bf16.xpose.msra.mxu0 0
        %3045 = vmatprep.subr.bf16.mxu0 0
        %3046 = vmatpush1.bf16.xpose.msra.mxu0 0
        %3047 = vmatprep.mubr.bf16.mxu0 0
        %3048 = vmatmul.mubr.bf16.gmra.mrb[0].mxu0 %v2968
        %v3049 = vpop.f32.mrb[0].mxu0
        %v3050 = vadd.f32 0.0, %v3049
        %v3051 = vpop.f32.mrb[0].mxu0
        %v3052 = vpop.f32.mrb[0].mxu0
        %v3053 = vadd.f32 0.0, %v3052
        %v3054 = vpop.f32.mrb[0].mxu0
        %3055 = vmatprep.mubr.bf16.mxu0 0
        %3056 = vmatmul.mubr.bf16.gmra.mrb[0].mxu0 %v2971
        %v3057 = vpop.f32.mrb[0].mxu0
        %v3058 = vadd.f32 0.0, %v3057
        %v3059 = vpop.f32.mrb[0].mxu0
        %v3060 = vpop.f32.mrb[0].mxu0
        %v3061 = vadd.f32 0.0, %v3060
        %v3062 = vpop.f32.mrb[0].mxu0
        %3063 = vmatprep.mubr.bf16.mxu0 0
        %3064 = vmatmul.mubr.bf16.gmra.mrb[0].mxu0 %v2974
        %v3065 = vpop.f32.mrb[0].mxu0
        %v3066 = vadd.f32 0.0, %v3065
        %v3067 = vpop.f32.mrb[0].mxu0
        %v3068 = vpop.f32.mrb[0].mxu0
        %v3069 = vadd.f32 0.0, %v3068
        %v3070 = vpop.f32.mrb[0].mxu0
        %3071 = vmatprep.mubr.bf16.mxu0 0
        %3072 = vmatmul.mubr.bf16.gmra.mrb[0].mxu0 %v2977
        %v3073 = vpop.f32.mrb[0].mxu0
        %v3074 = vadd.f32 0.0, %v3073
        %v3075 = vpop.f32.mrb[0].mxu0
        %v3076 = vpop.f32.mrb[0].mxu0
        %v3077 = vadd.f32 0.0, %v3076
        %v3078 = vpop.f32.mrb[0].mxu0
        %3079 = vmatprep.mubr.bf16.mxu0 0
        %3080 = vmatmul.mubr.bf16.gmra.mrb[0].mxu0 %v2980
        %v3081 = vpop.f32.mrb[0].mxu0
        %v3082 = vadd.f32 0.0, %v3081
        %v3083 = vpop.f32.mrb[0].mxu0
        %v3084 = vpop.f32.mrb[0].mxu0
        %v3085 = vadd.f32 0.0, %v3084
        %v3086 = vpop.f32.mrb[0].mxu0
        %3087 = vmatprep.mubr.bf16.mxu0 0
        %3088 = vmatmul.mubr.bf16.gmra.mrb[0].mxu0 %v2983
        %v3089 = vpop.f32.mrb[0].mxu0
        %v3090 = vadd.f32 0.0, %v3089
        %v3091 = vpop.f32.mrb[0].mxu0
        %v3092 = vpop.f32.mrb[0].mxu0
        %v3093 = vadd.f32 0.0, %v3092
        %v3094 = vpop.f32.mrb[0].mxu0
        %3095 = vmatprep.mubr.bf16.mxu0 0
        %3096 = vmatmul.mubr.bf16.gmra.mrb[0].mxu0 %v2986
        %v3097 = vpop.f32.mrb[0].mxu0
        %v3098 = vadd.f32 0.0, %v3097
        %v3099 = vpop.f32.mrb[0].mxu0
        %v3100 = vpop.f32.mrb[0].mxu0
        %v3101 = vadd.f32 0.0, %v3100
        %v3102 = vpop.f32.mrb[0].mxu0
        %3103 = vmatprep.mubr.bf16.mxu0 0
        %3104 = vmatmul.mubr.bf16.gmra.mrb[0].mxu0 %v2989
        %v3105 = vpop.f32.mrb[0].mxu0
        %v3106 = vadd.f32 0.0, %v3105
        %v3107 = vpop.f32.mrb[0].mxu0
        %v3108 = vpop.f32.mrb[0].mxu0
        %v3109 = vadd.f32 0.0, %v3108
        %v3110 = vpop.f32.mrb[0].mxu0
        %3111 = vdwg.mxu0
        %v3112 = vsel %vm2926, %v3050, -1e+30
        %v3113 = vsel %vm2927, %v3053, -1e+30
        %v3114 = vsel %vm2928, %v3058, -1e+30
        %v3115 = vsel %vm2929, %v3061, -1e+30
        %v3116 = vsel %vm2930, %v3066, -1e+30
        %v3117 = vsel %vm2931, %v3069, -1e+30
        %v3118 = vsel %vm2932, %v3074, -1e+30
        %v3119 = vsel %vm2933, %v3077, -1e+30
        %v3120 = vsel %vm2934, %v3082, -1e+30
        %v3121 = vsel %vm2935, %v3085, -1e+30
        %v3122 = vsel %vm2936, %v3090, -1e+30
        %v3123 = vsel %vm2937, %v3093, -1e+30
        %v3124 = vsel %vm2938, %v3098, -1e+30
        %v3125 = vsel %vm2939, %v3101, -1e+30
        %v3126 = vsel %vm2940, %v3106, -1e+30
        %v3127 = vsel %vm2941, %v3109, -1e+30
        %3128 = vmax.xlane.f32.xlu0 %v3112
        %v3129 = vpop.xlane.xlu0 %3128
        %3130 = vmax.xlane.f32.xlu0 %v3113
        %v3131 = vpop.xlane.xlu0 %3130
        %3132 = vmax.xlane.f32.xlu0 %v3114
        %v3133 = vpop.xlane.xlu0 %3132
        %3134 = vmax.xlane.f32.xlu0 %v3115
        %v3135 = vpop.xlane.xlu0 %3134
        %3136 = vmax.xlane.f32.xlu0 %v3116
        %v3137 = vpop.xlane.xlu0 %3136
        %3138 = vmax.xlane.f32.xlu0 %v3117
        %v3139 = vpop.xlane.xlu0 %3138
        %3140 = vmax.xlane.f32.xlu0 %v3118
        %v3141 = vpop.xlane.xlu0 %3140
        %3142 = vmax.xlane.f32.xlu0 %v3119
        %v3143 = vpop.xlane.xlu0 %3142
        %3144 = vmax.xlane.f32.xlu0 %v3120
        %v3145 = vpop.xlane.xlu0 %3144
        %3146 = vmax.xlane.f32.xlu0 %v3121
        %v3147 = vpop.xlane.xlu0 %3146
        %3148 = vmax.xlane.f32.xlu0 %v3122
        %v3149 = vpop.xlane.xlu0 %3148
        %3150 = vmax.xlane.f32.xlu0 %v3123
        %v3151 = vpop.xlane.xlu0 %3150
        %3152 = vmax.xlane.f32.xlu0 %v3124
        %v3153 = vpop.xlane.xlu0 %3152
        %3154 = vmax.xlane.f32.xlu0 %v3125
        %v3155 = vpop.xlane.xlu0 %3154
        %3156 = vmax.xlane.f32.xlu0 %v3126
        %v3157 = vpop.xlane.xlu0 %3156
        %3158 = vmax.xlane.f32.xlu0 %v3127
        %v3159 = vpop.xlane.xlu0 %3158
        %v3160 = vsub.f32 %v3112, %v3129
        %v3161 = vsub.f32 %v3113, %v3131
        %v3162 = vsub.f32 %v3114, %v3133
        %v3163 = vsub.f32 %v3115, %v3135
        %v3164 = vsub.f32 %v3116, %v3137
        %v3165 = vsub.f32 %v3117, %v3139
        %v3166 = vsub.f32 %v3118, %v3141
        %v3167 = vsub.f32 %v3119, %v3143
        %v3168 = vsub.f32 %v3120, %v3145
        %v3169 = vsub.f32 %v3121, %v3147
        %v3170 = vsub.f32 %v3122, %v3149
        %v3171 = vsub.f32 %v3123, %v3151
        %v3172 = vsub.f32 %v3124, %v3153
        %v3173 = vsub.f32 %v3125, %v3155
        %v3174 = vsub.f32 %v3126, %v3157
        %v3175 = vsub.f32 %v3127, %v3159
        %v3176 = vmul.f32 %v3160, 1.442695
        %v3177 = vpow.pop %v3176
        %v3178 = vmul.f32 %v3161, 1.442695
        %v3179 = vpow.pop %v3178
        %v3180 = vmul.f32 %v3162, 1.442695
        %v3181 = vpow.pop %v3180
        %v3182 = vmul.f32 %v3163, 1.442695
        %v3183 = vpow.pop %v3182
        %v3184 = vmul.f32 %v3164, 1.442695
        %v3185 = vpow.pop %v3184
        %v3186 = vmul.f32 %v3165, 1.442695
        %v3187 = vpow.pop %v3186
        %v3188 = vmul.f32 %v3166, 1.442695
        %v3189 = vpow.pop %v3188
        %v3190 = vmul.f32 %v3167, 1.442695
        %v3191 = vpow.pop %v3190
        %v3192 = vmul.f32 %v3168, 1.442695
        %v3193 = vpow.pop %v3192
        %v3194 = vmul.f32 %v3169, 1.442695
        %v3195 = vpow.pop %v3194
        %v3196 = vmul.f32 %v3170, 1.442695
        %v3197 = vpow.pop %v3196
        %v3198 = vmul.f32 %v3171, 1.442695
        %v3199 = vpow.pop %v3198
        %v3200 = vmul.f32 %v3172, 1.442695
        %v3201 = vpow.pop %v3200
        %v3202 = vmul.f32 %v3173, 1.442695
        %v3203 = vpow.pop %v3202
        %v3204 = vmul.f32 %v3174, 1.442695
        %v3205 = vpow.pop %v3204
        %v3206 = vmul.f32 %v3175, 1.442695
        %v3207 = vpow.pop %v3206
        %3208 = vadd.xlane.f32.xlu0 %v3177
        %v3209 = vpop.xlane.xlu0 %3208
        %3210 = vadd.xlane.f32.xlu0 %v3179
        %v3211 = vpop.xlane.xlu0 %3210
        %3212 = vadd.xlane.f32.xlu0 %v3181
        %v3213 = vpop.xlane.xlu0 %3212
        %3214 = vadd.xlane.f32.xlu0 %v3183
        %v3215 = vpop.xlane.xlu0 %3214
        %3216 = vadd.xlane.f32.xlu0 %v3185
        %v3217 = vpop.xlane.xlu0 %3216
        %3218 = vadd.xlane.f32.xlu0 %v3187
        %v3219 = vpop.xlane.xlu0 %3218
        %3220 = vadd.xlane.f32.xlu0 %v3189
        %v3221 = vpop.xlane.xlu0 %3220
        %3222 = vadd.xlane.f32.xlu0 %v3191
        %v3223 = vpop.xlane.xlu0 %3222
        %3224 = vadd.xlane.f32.xlu0 %v3193
        %v3225 = vpop.xlane.xlu0 %3224
        %3226 = vadd.xlane.f32.xlu0 %v3195
        %v3227 = vpop.xlane.xlu0 %3226
        %3228 = vadd.xlane.f32.xlu0 %v3197
        %v3229 = vpop.xlane.xlu0 %3228
        %3230 = vadd.xlane.f32.xlu0 %v3199
        %v3231 = vpop.xlane.xlu0 %3230
        %3232 = vadd.xlane.f32.xlu0 %v3201
        %v3233 = vpop.xlane.xlu0 %3232
        %3234 = vadd.xlane.f32.xlu0 %v3203
        %v3235 = vpop.xlane.xlu0 %3234
        %3236 = vadd.xlane.f32.xlu0 %v3205
        %v3237 = vpop.xlane.xlu0 %3236
        %3238 = vadd.xlane.f32.xlu0 %v3207
        %v3239 = vpop.xlane.xlu0 %3238
        %v3240 = vrcp.pop %v3209
        %v3241 = vrcp.pop %v3211
        %v3242 = vrcp.pop %v3213
        %v3243 = vrcp.pop %v3215
        %v3244 = vrcp.pop %v3217
        %v3245 = vrcp.pop %v3219
        %v3246 = vrcp.pop %v3221
        %v3247 = vrcp.pop %v3223
        %v3248 = vrcp.pop %v3225
        %v3249 = vrcp.pop %v3227
        %v3250 = vrcp.pop %v3229
        %v3251 = vrcp.pop %v3231
        %v3252 = vrcp.pop %v3233
        %v3253 = vrcp.pop %v3235
        %v3254 = vrcp.pop %v3237
        %v3255 = vrcp.pop %v3239
        %v3256 = vmul.f32 %v3177, %v3240
        %v3257 = vmul.f32 %v3179, %v3241
        %v3258 = vmul.f32 %v3181, %v3242
        %v3259 = vmul.f32 %v3183, %v3243
        %v3260 = vmul.f32 %v3185, %v3244
        %v3261 = vmul.f32 %v3187, %v3245
        %v3262 = vmul.f32 %v3189, %v3246
        %v3263 = vmul.f32 %v3191, %v3247
        %v3264 = vmul.f32 %v3193, %v3248
        %v3265 = vmul.f32 %v3195, %v3249
        %v3266 = vmul.f32 %v3197, %v3250
        %v3267 = vmul.f32 %v3199, %v3251
        %v3268 = vmul.f32 %v3201, %v3252
        %v3269 = vmul.f32 %v3203, %v3253
        %v3270 = vmul.f32 %v3205, %v3254
        %v3271 = vmul.f32 %v3207, %v3255
        %v3272 = vpack.c.bf16 %v3257, %v3256
        %v3273 = vpack.c.bf16 %v3259, %v3258
        %v3274 = vpack.c.bf16 %v3261, %v3260
        %v3275 = vpack.c.bf16 %v3263, %v3262
        %v3276 = vpack.c.bf16 %v3265, %v3264
        %v3277 = vpack.c.bf16 %v3267, %v3266
        %v3278 = vpack.c.bf16 %v3269, %v3268
        %v3279 = vpack.c.bf16 %v3271, %v3270
        %3280 = vmatprep.subr.bf16.mxu0 0
        %3281 = vmatpush1.bf16.msra.mxu0 %v2958
        %3282 = vmatprep.subr.bf16.mxu0 0
        %3283 = vmatpush1.bf16.msra.mxu0 %v2959
        %3284 = vmatprep.subr.bf16.mxu0 0
        %3285 = vmatpush1.bf16.msra.mxu0 %v2960
        %3286 = vmatprep.subr.bf16.mxu0 0
        %3287 = vmatpush1.bf16.msra.mxu0 %v2961
        %3288 = vmatprep.subr.bf16.mxu0 0
        %3289 = vmatpush1.bf16.msra.mxu0 %v2962
        %3290 = vmatprep.subr.bf16.mxu0 0
        %3291 = vmatpush1.bf16.msra.mxu0 %v2963
        %3292 = vmatprep.subr.bf16.mxu0 0
        %3293 = vmatpush1.bf16.msra.mxu0 %v2964
        %3294 = vmatprep.subr.bf16.mxu0 0
        %3295 = vmatpush1.bf16.msra.mxu0 %v2965
        %3296 = vmatprep.subr.bf16.mxu0 0
        %3297 = vmatpush1.bf16.msra.mxu0 0
        %3298 = vmatprep.subr.bf16.mxu0 0
        %3299 = vmatpush1.bf16.msra.mxu0 0
        %3300 = vmatprep.subr.bf16.mxu0 0
        %3301 = vmatpush1.bf16.msra.mxu0 0
        %3302 = vmatprep.subr.bf16.mxu0 0
        %3303 = vmatpush1.bf16.msra.mxu0 0
        %3304 = vmatprep.subr.bf16.mxu0 0
        %3305 = vmatpush1.bf16.msra.mxu0 0
        %3306 = vmatprep.subr.bf16.mxu0 0
        %3307 = vmatpush1.bf16.msra.mxu0 0
        %3308 = vmatprep.subr.bf16.mxu0 0
        %3309 = vmatpush1.bf16.msra.mxu0 0
        %3310 = vmatprep.subr.bf16.mxu0 0
        %3311 = vmatpush1.bf16.msra.mxu0 0
        %3312 = vmatprep.mubr.bf16.mxu0 0
        %3313 = vmatmul.mubr.bf16.gmra.mrb[0].mxu0 %v3272
        %v3314 = vpop.f32.mrb[0].mxu0
        %v3315 = vadd.f32 0.0, %v3314
        %v3316 = vpop.f32.mrb[0].mxu0
        %v3317 = vpop.f32.mrb[0].mxu0
        %v3318 = vadd.f32 0.0, %v3317
        %v3319 = vpop.f32.mrb[0].mxu0
        %3320 = vmatprep.mubr.bf16.mxu0 0
        %3321 = vmatmul.mubr.bf16.gmra.mrb[0].mxu0 %v3273
        %v3322 = vpop.f32.mrb[0].mxu0
        %v3323 = vadd.f32 0.0, %v3322
        %v3324 = vpop.f32.mrb[0].mxu0
        %v3325 = vpop.f32.mrb[0].mxu0
        %v3326 = vadd.f32 0.0, %v3325
        %v3327 = vpop.f32.mrb[0].mxu0
        %3328 = vmatprep.mubr.bf16.mxu0 0
        %3329 = vmatmul.mubr.bf16.gmra.mrb[0].mxu0 %v3274
        %v3330 = vpop.f32.mrb[0].mxu0
        %v3331 = vadd.f32 0.0, %v3330
        %v3332 = vpop.f32.mrb[0].mxu0
        %v3333 = vpop.f32.mrb[0].mxu0
        %v3334 = vadd.f32 0.0, %v3333
        %v3335 = vpop.f32.mrb[0].mxu0
        %3336 = vmatprep.mubr.bf16.mxu0 0
        %3337 = vmatmul.mubr.bf16.gmra.mrb[0].mxu0 %v3275
        %v3338 = vpop.f32.mrb[0].mxu0
        %v3339 = vadd.f32 0.0, %v3338
        %v3340 = vpop.f32.mrb[0].mxu0
        %v3341 = vpop.f32.mrb[0].mxu0
        %v3342 = vadd.f32 0.0, %v3341
        %v3343 = vpop.f32.mrb[0].mxu0
        %3344 = vmatprep.mubr.bf16.mxu0 0
        %3345 = vmatmul.mubr.bf16.gmra.mrb[0].mxu0 %v3276
        %v3346 = vpop.f32.mrb[0].mxu0
        %v3347 = vadd.f32 0.0, %v3346
        %v3348 = vpop.f32.mrb[0].mxu0
        %v3349 = vpop.f32.mrb[0].mxu0
        %v3350 = vadd.f32 0.0, %v3349
        %v3351 = vpop.f32.mrb[0].mxu0
        %3352 = vmatprep.mubr.bf16.mxu0 0
        %3353 = vmatmul.mubr.bf16.gmra.mrb[0].mxu0 %v3277
        %v3354 = vpop.f32.mrb[0].mxu0
        %v3355 = vadd.f32 0.0, %v3354
        %v3356 = vpop.f32.mrb[0].mxu0
        %v3357 = vpop.f32.mrb[0].mxu0
        %v3358 = vadd.f32 0.0, %v3357
        %v3359 = vpop.f32.mrb[0].mxu0
        %3360 = vmatprep.mubr.bf16.mxu0 0
        %3361 = vmatmul.mubr.bf16.gmra.mrb[0].mxu0 %v3278
        %v3362 = vpop.f32.mrb[0].mxu0
        %v3363 = vadd.f32 0.0, %v3362
        %v3364 = vpop.f32.mrb[0].mxu0
        %v3365 = vpop.f32.mrb[0].mxu0
        %v3366 = vadd.f32 0.0, %v3365
        %v3367 = vpop.f32.mrb[0].mxu0
        %3368 = vmatprep.mubr.bf16.mxu0 0
        %3369 = vmatmul.mubr.bf16.gmra.mrb[0].mxu0 %v3279
        %v3370 = vpop.f32.mrb[0].mxu0
        %v3371 = vadd.f32 0.0, %v3370
        %v3372 = vpop.f32.mrb[0].mxu0
        %v3373 = vpop.f32.mrb[0].mxu0
        %v3374 = vadd.f32 0.0, %v3373
        %v3375 = vpop.f32.mrb[0].mxu0
        %3376 = vdwg.mxu0
        %v3377 = vpack.c.bf16 %v3318, %v3315
        %v3378 = vpack.c.bf16 %v3326, %v3323
        %v3379 = vpack.c.bf16 %v3334, %v3331
        %v3380 = vpack.c.bf16 %v3342, %v3339
        %v3381 = vpack.c.bf16 %v3350, %v3347
        %v3382 = vpack.c.bf16 %v3358, %v3355
        %v3383 = vpack.c.bf16 %v3366, %v3363
        %v3384 = vpack.c.bf16 %v3374, %v3371
        %v3385 = vld [vmem:[#allocation9] sm:$0xff]
        %v3386 = vld [vmem:[#allocation9 + $0x8] sm:$0xf]
        %v3387 = vld [vmem:[#allocation9 + $0xc] sm:$0xff]
        %v3388 = vld [vmem:[#allocation9 + $0x14] sm:$0xf]
        %v3389 = vld [vmem:[#allocation9 + $0x18] sm:$0xff]
        %v3390 = vld [vmem:[#allocation9 + $0x20] sm:$0xf]
        %v3391 = vld [vmem:[#allocation9 + $0x24] sm:$0xff]
        %v3392 = vld [vmem:[#allocation9 + $0x2c] sm:$0xf]
        %v3393 = vld [vmem:[#allocation9 + $0x30] sm:$0xff]
        %v3394 = vld [vmem:[#allocation9 + $0x38] sm:$0xf]
        %v3395 = vld [vmem:[#allocation9 + $0x3c] sm:$0xff]
        %v3396 = vld [vmem:[#allocation9 + $0x44] sm:$0xf]
        %v3397 = vld [vmem:[#allocation9 + $0x48] sm:$0xff]
        %v3398 = vld [vmem:[#allocation9 + $0x50] sm:$0xf]
        %v3399 = vld [vmem:[#allocation9 + $0x54] sm:$0xff]
        %v3400 = vld [vmem:[#allocation9 + $0x5c] sm:$0xf]
        %v3417 = vunpack.c.l.b16 %v3385
        %v3418 = vunpack.c.h.b16 %v3385
        %v3419 = vunpack.c.l.b16 %v3386
        %v3420 = vunpack.c.l.b16 %v3387
        %v3421 = vunpack.c.h.b16 %v3387
        %v3422 = vunpack.c.l.b16 %v3388
        %v3423 = vunpack.c.l.b16 %v3389
        %v3424 = vunpack.c.h.b16 %v3389
        %v3425 = vunpack.c.l.b16 %v3390
        %v3426 = vunpack.c.l.b16 %v3391
        %v3427 = vunpack.c.h.b16 %v3391
        %v3428 = vunpack.c.l.b16 %v3392
        %v3429 = vunpack.c.l.b16 %v3393
        %v3430 = vunpack.c.h.b16 %v3393
        %v3431 = vunpack.c.l.b16 %v3394
        %v3432 = vunpack.c.l.b16 %v3395
        %v3433 = vunpack.c.h.b16 %v3395
        %v3434 = vunpack.c.l.b16 %v3396
        %v3435 = vunpack.c.l.b16 %v3397
        %v3436 = vunpack.c.h.b16 %v3397
        %v3437 = vunpack.c.l.b16 %v3398
        %v3438 = vunpack.c.l.b16 %v3399
        %v3439 = vunpack.c.h.b16 %v3399
        %v3440 = vunpack.c.l.b16 %v3400
        %v3441 = vpack.c.b16 %v3420, %v3417
        %v3442 = vpack.c.b16 %v3421, %v3418
        %v3443 = vpack.c.b16 %v3422, %v3419
        %v3444 = vpack.c.b16 %v3426, %v3423
        %v3445 = vpack.c.b16 %v3427, %v3424
        %v3446 = vpack.c.b16 %v3428, %v3425
        %v3447 = vpack.c.b16 %v3432, %v3429
        %v3448 = vpack.c.b16 %v3433, %v3430
        %v3449 = vpack.c.b16 %v3434, %v3431
        %v3450 = vpack.c.b16 %v3438, %v3435
        %v3451 = vpack.c.b16 %v3439, %v3436
        %v3452 = vpack.c.b16 %v3440, %v3437
        %v3466 = vsel %vm2966, %v3377, 0
        %v3469 = vsel %vm2966, %v3378, 0
        %v3472 = vsel %vm2966, %v3379, 0
        %v3475 = vsel %vm2966, %v3380, 0
        %v3478 = vsel %vm2966, %v3381, 0
        %v3481 = vsel %vm2966, %v3382, 0
        %v3484 = vsel %vm2966, %v3383, 0
        %v3487 = vsel %vm2966, %v3384, 0
        %3489 = vmatprep.subr.bf16.mxu0 %v3442
        %3490 = vmatpush1.bf16.msra.mxu0 %v3441
        %3491 = vmatprep.subr.bf16.mxu0 %v3445
        %3492 = vmatpush1.bf16.msra.mxu0 %v3444
        %3493 = vmatprep.subr.bf16.mxu0 %v3448
        %3494 = vmatpush1.bf16.msra.mxu0 %v3447
        %3495 = vmatprep.subr.bf16.mxu0 %v3451
        %3496 = vmatpush1.bf16.msra.mxu0 %v3450
        %3497 = vmatprep.subr.bf16.mxu0 0
        %3498 = vmatpush1.bf16.msra.mxu0 0
        %3499 = vmatprep.subr.bf16.mxu0 0
        %3500 = vmatpush1.bf16.msra.mxu0 0
        %3501 = vmatprep.subr.bf16.mxu0 0
        %3502 = vmatpush1.bf16.msra.mxu0 0
        %3503 = vmatprep.subr.bf16.mxu0 0
        %3504 = vmatpush1.bf16.msra.mxu0 0
        %3505 = vmatprep.subr.bf16.mxu0 0
        %3506 = vmatpush1.bf16.msra.mxu0 0
        %3507 = vmatprep.subr.bf16.mxu0 0
        %3508 = vmatpush1.bf16.msra.mxu0 0
        %3509 = vmatprep.subr.bf16.mxu0 0
        %3510 = vmatpush1.bf16.msra.mxu0 0
        %3511 = vmatprep.subr.bf16.mxu0 0
        %3512 = vmatpush1.bf16.msra.mxu0 0
        %3513 = vmatprep.subr.bf16.mxu0 0
        %3514 = vmatpush1.bf16.msra.mxu0 0
        %3515 = vmatprep.subr.bf16.mxu0 0
        %3516 = vmatpush1.bf16.msra.mxu0 0
        %3517 = vmatprep.subr.bf16.mxu0 0
        %3518 = vmatpush1.bf16.msra.mxu0 0
        %3519 = vmatprep.subr.bf16.mxu0 0
        %3520 = vmatpush1.bf16.msra.mxu0 0
        %3521 = vmatprep.mubr.bf16.mxu0 0
        %3522 = vmatmul.mubr.bf16.gmra.mrb[0].mxu0 %v3466
        %v3523 = vpop.f32.mrb[0].mxu0
        %v3524 = vadd.f32 0.0, %v3523
        %v3525 = vpop.f32.mrb[0].mxu0
        %v3526 = vadd.f32 0.0, %v3525
        %v3527 = vpop.f32.mrb[0].mxu0
        %v3528 = vadd.f32 0.0, %v3527
        %v3529 = vpop.f32.mrb[0].mxu0
        %v3530 = vadd.f32 0.0, %v3529
        %3531 = vmatprep.mubr.bf16.mxu0 0
        %3532 = vmatmul.mubr.bf16.gmra.mrb[0].mxu0 %v3469
        %v3533 = vpop.f32.mrb[0].mxu0
        %v3534 = vadd.f32 0.0, %v3533
        %v3535 = vpop.f32.mrb[0].mxu0
        %v3536 = vadd.f32 0.0, %v3535
        %v3537 = vpop.f32.mrb[0].mxu0
        %v3538 = vadd.f32 0.0, %v3537
        %v3539 = vpop.f32.mrb[0].mxu0
        %v3540 = vadd.f32 0.0, %v3539
        %3541 = vmatprep.mubr.bf16.mxu0 0
        %3542 = vmatmul.mubr.bf16.gmra.mrb[0].mxu0 %v3472
        %v3543 = vpop.f32.mrb[0].mxu0
        %v3544 = vadd.f32 0.0, %v3543
        %v3545 = vpop.f32.mrb[0].mxu0
        %v3546 = vadd.f32 0.0, %v3545
        %v3547 = vpop.f32.mrb[0].mxu0
        %v3548 = vadd.f32 0.0, %v3547
        %v3549 = vpop.f32.mrb[0].mxu0
        %v3550 = vadd.f32 0.0, %v3549
        %3551 = vmatprep.mubr.bf16.mxu0 0
        %3552 = vmatmul.mubr.bf16.gmra.mrb[0].mxu0 %v3475
        %v3553 = vpop.f32.mrb[0].mxu0
        %v3554 = vadd.f32 0.0, %v3553
        %v3555 = vpop.f32.mrb[0].mxu0
        %v3556 = vadd.f32 0.0, %v3555
        %v3557 = vpop.f32.mrb[0].mxu0
        %v3558 = vadd.f32 0.0, %v3557
        %v3559 = vpop.f32.mrb[0].mxu0
        %v3560 = vadd.f32 0.0, %v3559
        %3561 = vmatprep.mubr.bf16.mxu0 0
        %3562 = vmatmul.mubr.bf16.gmra.mrb[0].mxu0 %v3478
        %v3563 = vpop.f32.mrb[0].mxu0
        %v3564 = vadd.f32 0.0, %v3563
        %v3565 = vpop.f32.mrb[0].mxu0
        %v3566 = vadd.f32 0.0, %v3565
        %v3567 = vpop.f32.mrb[0].mxu0
        %v3568 = vadd.f32 0.0, %v3567
        %v3569 = vpop.f32.mrb[0].mxu0
        %v3570 = vadd.f32 0.0, %v3569
        %3571 = vmatprep.mubr.bf16.mxu0 0
        %3572 = vmatmul.mubr.bf16.gmra.mrb[0].mxu0 %v3481
        %v3573 = vpop.f32.mrb[0].mxu0
        %v3574 = vadd.f32 0.0, %v3573
        %v3575 = vpop.f32.mrb[0].mxu0
        %v3576 = vadd.f32 0.0, %v3575
        %v3577 = vpop.f32.mrb[0].mxu0
        %v3578 = vadd.f32 0.0, %v3577
        %v3579 = vpop.f32.mrb[0].mxu0
        %v3580 = vadd.f32 0.0, %v3579
        %3581 = vmatprep.mubr.bf16.mxu0 0
        %3582 = vmatmul.mubr.bf16.gmra.mrb[0].mxu0 %v3484
        %v3583 = vpop.f32.mrb[0].mxu0
        %v3584 = vadd.f32 0.0, %v3583
        %v3585 = vpop.f32.mrb[0].mxu0
        %v3586 = vadd.f32 0.0, %v3585
        %v3587 = vpop.f32.mrb[0].mxu0
        %v3588 = vadd.f32 0.0, %v3587
        %v3589 = vpop.f32.mrb[0].mxu0
        %v3590 = vadd.f32 0.0, %v3589
        %3591 = vmatprep.mubr.bf16.mxu0 0
        %3592 = vmatmul.mubr.bf16.gmra.mrb[0].mxu0 %v3487
        %v3593 = vpop.f32.mrb[0].mxu0
        %v3594 = vadd.f32 0.0, %v3593
        %v3595 = vpop.f32.mrb[0].mxu0
        %v3596 = vadd.f32 0.0, %v3595
        %v3597 = vpop.f32.mrb[0].mxu0
        %v3598 = vadd.f32 0.0, %v3597
        %v3599 = vpop.f32.mrb[0].mxu0
        %v3600 = vadd.f32 0.0, %v3599
        %3601 = vdwg.mxu0
        %3602 = vmatprep.subr.bf16.mxu0 0
        %3603 = vmatpush1.bf16.msra.mxu0 %v3443
        %3604 = vmatprep.subr.bf16.mxu0 0
        %3605 = vmatpush1.bf16.msra.mxu0 %v3446
        %3606 = vmatprep.subr.bf16.mxu0 0
        %3607 = vmatpush1.bf16.msra.mxu0 %v3449
        %3608 = vmatprep.subr.bf16.mxu0 0
        %3609 = vmatpush1.bf16.msra.mxu0 %v3452
        %3610 = vmatprep.subr.bf16.mxu0 0
        %3611 = vmatpush1.bf16.msra.mxu0 0
        %3612 = vmatprep.subr.bf16.mxu0 0
        %3613 = vmatpush1.bf16.msra.mxu0 0
        %3614 = vmatprep.subr.bf16.mxu0 0
        %3615 = vmatpush1.bf16.msra.mxu0 0
        %3616 = vmatprep.subr.bf16.mxu0 0
        %3617 = vmatpush1.bf16.msra.mxu0 0
        %3618 = vmatprep.subr.bf16.mxu0 0
        %3619 = vmatpush1.bf16.msra.mxu0 0
        %3620 = vmatprep.subr.bf16.mxu0 0
        %3621 = vmatpush1.bf16.msra.mxu0 0
        %3622 = vmatprep.subr.bf16.mxu0 0
        %3623 = vmatpush1.bf16.msra.mxu0 0
        %3624 = vmatprep.subr.bf16.mxu0 0
        %3625 = vmatpush1.bf16.msra.mxu0 0
        %3626 = vmatprep.subr.bf16.mxu0 0
        %3627 = vmatpush1.bf16.msra.mxu0 0
        %3628 = vmatprep.subr.bf16.mxu0 0
        %3629 = vmatpush1.bf16.msra.mxu0 0
        %3630 = vmatprep.subr.bf16.mxu0 0
        %3631 = vmatpush1.bf16.msra.mxu0 0
        %3632 = vmatprep.subr.bf16.mxu0 0
        %3633 = vmatpush1.bf16.msra.mxu0 0
        %3634 = vmatprep.mubr.bf16.mxu0 0
        %3635 = vmatmul.mubr.bf16.gmra.mrb[0].mxu0 %v3466
        %v3636 = vpop.f32.mrb[0].mxu0
        %v3637 = vadd.f32 0.0, %v3636
        %v3638 = vpop.f32.mrb[0].mxu0
        %v3639 = vpop.f32.mrb[0].mxu0
        %v3640 = vadd.f32 0.0, %v3639
        %v3641 = vpop.f32.mrb[0].mxu0
        %3642 = vmatprep.mubr.bf16.mxu0 0
        %3643 = vmatmul.mubr.bf16.gmra.mrb[0].mxu0 %v3469
        %v3644 = vpop.f32.mrb[0].mxu0
        %v3645 = vadd.f32 0.0, %v3644
        %v3646 = vpop.f32.mrb[0].mxu0
        %v3647 = vpop.f32.mrb[0].mxu0
        %v3648 = vadd.f32 0.0, %v3647
        %v3649 = vpop.f32.mrb[0].mxu0
        %3650 = vmatprep.mubr.bf16.mxu0 0
        %3651 = vmatmul.mubr.bf16.gmra.mrb[0].mxu0 %v3472
        %v3652 = vpop.f32.mrb[0].mxu0
        %v3653 = vadd.f32 0.0, %v3652
        %v3654 = vpop.f32.mrb[0].mxu0
        %v3655 = vpop.f32.mrb[0].mxu0
        %v3656 = vadd.f32 0.0, %v3655
        %v3657 = vpop.f32.mrb[0].mxu0
        %3658 = vmatprep.mubr.bf16.mxu0 0
        %3659 = vmatmul.mubr.bf16.gmra.mrb[0].mxu0 %v3475
        %v3660 = vpop.f32.mrb[0].mxu0
        %v3661 = vadd.f32 0.0, %v3660
        %v3662 = vpop.f32.mrb[0].mxu0
        %v3663 = vpop.f32.mrb[0].mxu0
        %v3664 = vadd.f32 0.0, %v3663
        %v3665 = vpop.f32.mrb[0].mxu0
        %3666 = vmatprep.mubr.bf16.mxu0 0
        %3667 = vmatmul.mubr.bf16.gmra.mrb[0].mxu0 %v3478
        %v3668 = vpop.f32.mrb[0].mxu0
        %v3669 = vadd.f32 0.0, %v3668
        %v3670 = vpop.f32.mrb[0].mxu0
        %v3671 = vpop.f32.mrb[0].mxu0
        %v3672 = vadd.f32 0.0, %v3671
        %v3673 = vpop.f32.mrb[0].mxu0
        %3674 = vmatprep.mubr.bf16.mxu0 0
        %3675 = vmatmul.mubr.bf16.gmra.mrb[0].mxu0 %v3481
        %v3676 = vpop.f32.mrb[0].mxu0
        %v3677 = vadd.f32 0.0, %v3676
        %v3678 = vpop.f32.mrb[0].mxu0
        %v3679 = vpop.f32.mrb[0].mxu0
        %v3680 = vadd.f32 0.0, %v3679
        %v3681 = vpop.f32.mrb[0].mxu0
        %3682 = vmatprep.mubr.bf16.mxu0 0
        %3683 = vmatmul.mubr.bf16.gmra.mrb[0].mxu0 %v3484
        %v3684 = vpop.f32.mrb[0].mxu0
        %v3685 = vadd.f32 0.0, %v3684
        %v3686 = vpop.f32.mrb[0].mxu0
        %v3687 = vpop.f32.mrb[0].mxu0
        %v3688 = vadd.f32 0.0, %v3687
        %v3689 = vpop.f32.mrb[0].mxu0
        %3690 = vmatprep.mubr.bf16.mxu0 0
        %3691 = vmatmul.mubr.bf16.gmra.mrb[0].mxu0 %v3487
        %v3692 = vpop.f32.mrb[0].mxu0
        %v3693 = vadd.f32 0.0, %v3692
        %v3694 = vpop.f32.mrb[0].mxu0
        %v3695 = vpop.f32.mrb[0].mxu0
        %v3696 = vadd.f32 0.0, %v3695
        %v3697 = vpop.f32.mrb[0].mxu0
        %3698 = vdwg.mxu0
        %3699 = vst [vmem:[#allocation3] sm:$0xff] %v3524
        %3700 = vst [vmem:[#allocation3 + $0x8] sm:$0xff] %v3526
        %3701 = vst [vmem:[#allocation3 + $0x10] sm:$0xff] %v3637
        %3702 = vst [vmem:[#allocation3 + $0x18] sm:$0xff] %v3528
        %3703 = vst [vmem:[#allocation3 + $0x20] sm:$0xff] %v3530
        %3704 = vst [vmem:[#allocation3 + $0x28] sm:$0xff] %v3640
        %3705 = vst [vmem:[#allocation3 + $0x30] sm:$0xff] %v3534
        %3706 = vst [vmem:[#allocation3 + $0x38] sm:$0xff] %v3536
        %3707 = vst [vmem:[#allocation3 + $0x40] sm:$0xff] %v3645
        %3708 = vst [vmem:[#allocation3 + $0x48] sm:$0xff] %v3538
        %3709 = vst [vmem:[#allocation3 + $0x50] sm:$0xff] %v3540
        %3710 = vst [vmem:[#allocation3 + $0x58] sm:$0xff] %v3648
        %3711 = vst [vmem:[#allocation3 + $0x60] sm:$0xff] %v3544
        %3712 = vst [vmem:[#allocation3 + $0x68] sm:$0xff] %v3546
        %3713 = vst [vmem:[#allocation3 + $0x70] sm:$0xff] %v3653
        %3714 = vst [vmem:[#allocation3 + $0x78] sm:$0xff] %v3548
        %3715 = vst [vmem:[#allocation3 + $0x80] sm:$0xff] %v3550
        %3716 = vst [vmem:[#allocation3 + $0x88] sm:$0xff] %v3656
        %3717 = vst [vmem:[#allocation3 + $0x90] sm:$0xff] %v3554
        %3718 = vst [vmem:[#allocation3 + $0x98] sm:$0xff] %v3556
        %3719 = vst [vmem:[#allocation3 + $0xa0] sm:$0xff] %v3661
        %3720 = vst [vmem:[#allocation3 + $0xa8] sm:$0xff] %v3558
        %3721 = vst [vmem:[#allocation3 + $0xb0] sm:$0xff] %v3560
        %3722 = vst [vmem:[#allocation3 + $0xb8] sm:$0xff] %v3664
        %3723 = vst [vmem:[#allocation3 + $0xc0] sm:$0xff] %v3564
        %3724 = vst [vmem:[#allocation3 + $0xc8] sm:$0xff] %v3566
        %3725 = vst [vmem:[#allocation3 + $0xd0] sm:$0xff] %v3669
        %3726 = vst [vmem:[#allocation3 + $0xd8] sm:$0xff] %v3568
        %3727 = vst [vmem:[#allocation3 + $0xe0] sm:$0xff] %v3570
        %3728 = vst [vmem:[#allocation3 + $0xe8] sm:$0xff] %v3672
        %3729 = vst [vmem:[#allocation3 + $0xf0] sm:$0xff] %v3574
        %3730 = vst [vmem:[#allocation3 + $0xf8] sm:$0xff] %v3576
        %3731 = vst [vmem:[#allocation3 + $0x100] sm:$0xff] %v3677
        %3732 = vst [vmem:[#allocation3 + $0x108] sm:$0xff] %v3578
        %3733 = vst [vmem:[#allocation3 + $0x110] sm:$0xff] %v3580
        %3734 = vst [vmem:[#allocation3 + $0x118] sm:$0xff] %v3680
        %3735 = vst [vmem:[#allocation3 + $0x120] sm:$0xff] %v3584
        %3736 = vst [vmem:[#allocation3 + $0x128] sm:$0xff] %v3586
        %3737 = vst [vmem:[#allocation3 + $0x130] sm:$0xff] %v3685
        %3738 = vst [vmem:[#allocation3 + $0x138] sm:$0xff] %v3588
        %3739 = vst [vmem:[#allocation3 + $0x140] sm:$0xff] %v3590
        %3740 = vst [vmem:[#allocation3 + $0x148] sm:$0xff] %v3688
        %3741 = vst [vmem:[#allocation3 + $0x150] sm:$0xff] %v3594
        %3742 = vst [vmem:[#allocation3 + $0x158] sm:$0xff] %v3596
        %3743 = vst [vmem:[#allocation3 + $0x160] sm:$0xff] %v3693
        %3744 = vst [vmem:[#allocation3 + $0x168] sm:$0xff] %v3598
        %3745 = vst [vmem:[#allocation3 + $0x170] sm:$0xff] %v3600
        %3746 = vst [vmem:[#allocation3 + $0x178] sm:$0xff] %v3696
        %v3747 = vld [vmem:[#allocation2] sm:$0xff]
        %v3748 = vld [vmem:[#allocation2 + $0x48] sm:$0xff]
        %v3749 = vld [vmem:[#allocation2 + $0x90] sm:$0xff]
        %v3750 = vld [vmem:[#allocation2 + $0xd8] sm:$0xff]
        %v3751 = vld [vmem:[#allocation2 + $0x120] sm:$0xff]
        %v3752 = vld [vmem:[#allocation2 + $0x168] sm:$0xff]
        %v3753 = vld [vmem:[#allocation2 + $0x1b0] sm:$0xff]
        %v3754 = vld [vmem:[#allocation2 + $0x1f8] sm:$0xff]
        %v3755 = vld [vmem:[#allocation2 + $0x18] sm:$0xff]
        %v3756 = vld [vmem:[#allocation2 + $0x60] sm:$0xff]
        %v3757 = vld [vmem:[#allocation2 + $0xa8] sm:$0xff]
        %v3758 = vld [vmem:[#allocation2 + $0xf0] sm:$0xff]
        %v3759 = vld [vmem:[#allocation2 + $0x138] sm:$0xff]
        %v3760 = vld [vmem:[#allocation2 + $0x180] sm:$0xff]
        %v3761 = vld [vmem:[#allocation2 + $0x1c8] sm:$0xff]
        %v3762 = vld [vmem:[#allocation2 + $0x210] sm:$0xff]
        %v3763 = vld [vmem:[#allocation2 + $0x30] sm:$0xff]
        %v3764 = vld [vmem:[#allocation2 + $0x78] sm:$0xff]
        %v3765 = vld [vmem:[#allocation2 + $0xc0] sm:$0xff]
        %v3766 = vld [vmem:[#allocation2 + $0x108] sm:$0xff]
        %v3767 = vld [vmem:[#allocation2 + $0x150] sm:$0xff]
        %v3768 = vld [vmem:[#allocation2 + $0x198] sm:$0xff]
        %v3769 = vld [vmem:[#allocation2 + $0x1e0] sm:$0xff]
        %v3770 = vld [vmem:[#allocation2 + $0x228] sm:$0xff]
        %3779 = vrot.lane.b32.xlu0 %v3747, 64
        %v3780 = vpop.permute.xlu0 %3779
        %3781 = vrot.lane.b32.xlu0 %v3748, 64
        %v3782 = vpop.permute.xlu0 %3781
        %3783 = vrot.lane.b32.xlu0 %v3749, 64
        %v3784 = vpop.permute.xlu0 %3783
        %3785 = vrot.lane.b32.xlu0 %v3750, 64
        %v3786 = vpop.permute.xlu0 %3785
        %3787 = vrot.lane.b32.xlu0 %v3751, 64
        %v3788 = vpop.permute.xlu0 %3787
        %3789 = vrot.lane.b32.xlu0 %v3752, 64
        %v3790 = vpop.permute.xlu0 %3789
        %3791 = vrot.lane.b32.xlu0 %v3753, 64
        %v3792 = vpop.permute.xlu0 %3791
        %3793 = vrot.lane.b32.xlu0 %v3754, 64
        %v3794 = vpop.permute.xlu0 %3793
        %3803 = vrot.lane.b32.xlu0 %v3755, 64
        %v3804 = vpop.permute.xlu0 %3803
        %3805 = vrot.lane.b32.xlu0 %v3756, 64
        %v3806 = vpop.permute.xlu0 %3805
        %3807 = vrot.lane.b32.xlu0 %v3757, 64
        %v3808 = vpop.permute.xlu0 %3807
        %3809 = vrot.lane.b32.xlu0 %v3758, 64
        %v3810 = vpop.permute.xlu0 %3809
        %3811 = vrot.lane.b32.xlu0 %v3759, 64
        %v3812 = vpop.permute.xlu0 %3811
        %3813 = vrot.lane.b32.xlu0 %v3760, 64
        %v3814 = vpop.permute.xlu0 %3813
        %3815 = vrot.lane.b32.xlu0 %v3761, 64
        %v3816 = vpop.permute.xlu0 %3815
        %3817 = vrot.lane.b32.xlu0 %v3762, 64
        %v3818 = vpop.permute.xlu0 %3817
        %v3820 = vsel %vm2966, %v3780, 0
        %v3823 = vsel %vm2966, %v3782, 0
        %v3826 = vsel %vm2966, %v3784, 0
        %v3829 = vsel %vm2966, %v3786, 0
        %v3832 = vsel %vm2966, %v3788, 0
        %v3835 = vsel %vm2966, %v3790, 0
        %v3838 = vsel %vm2966, %v3792, 0
        %v3841 = vsel %vm2966, %v3794, 0
        %v3844 = vsel %vm2966, %v3804, 0
        %v3847 = vsel %vm2966, %v3806, 0
        %v3850 = vsel %vm2966, %v3808, 0
        %v3853 = vsel %vm2966, %v3810, 0
        %v3856 = vsel %vm2966, %v3812, 0
        %v3859 = vsel %vm2966, %v3814, 0
        %v3862 = vsel %vm2966, %v3816, 0
        %v3865 = vsel %vm2966, %v3818, 0
        %3867 = vmatprep.subr.bf16.mxu0 0
        %3868 = vmatpush1.bf16.xpose.msra.mxu0 %v3844
        %3869 = vmatprep.subr.bf16.mxu0 0
        %3870 = vmatpush1.bf16.xpose.msra.mxu0 %v3847
        %3871 = vmatprep.subr.bf16.mxu0 0
        %3872 = vmatpush1.bf16.xpose.msra.mxu0 %v3850
        %3873 = vmatprep.subr.bf16.mxu0 0
        %3874 = vmatpush1.bf16.xpose.msra.mxu0 %v3853
        %3875 = vmatprep.subr.bf16.mxu0 0
        %3876 = vmatpush1.bf16.xpose.msra.mxu0 %v3856
        %3877 = vmatprep.subr.bf16.mxu0 0
        %3878 = vmatpush1.bf16.xpose.msra.mxu0 %v3859
        %3879 = vmatprep.subr.bf16.mxu0 0
        %3880 = vmatpush1.bf16.xpose.msra.mxu0 %v3862
        %3881 = vmatprep.subr.bf16.mxu0 0
        %3882 = vmatpush1.bf16.xpose.msra.mxu0 %v3865
        %3883 = vmatprep.subr.bf16.mxu0 0
        %3884 = vmatpush1.bf16.xpose.msra.mxu0 0
        %3885 = vmatprep.subr.bf16.mxu0 0
        %3886 = vmatpush1.bf16.xpose.msra.mxu0 0
        %3887 = vmatprep.subr.bf16.mxu0 0
        %3888 = vmatpush1.bf16.xpose.msra.mxu0 0
        %3889 = vmatprep.subr.bf16.mxu0 0
        %3890 = vmatpush1.bf16.xpose.msra.mxu0 0
        %3891 = vmatprep.subr.bf16.mxu0 0
        %3892 = vmatpush1.bf16.xpose.msra.mxu0 0
        %3893 = vmatprep.subr.bf16.mxu0 0
        %3894 = vmatpush1.bf16.xpose.msra.mxu0 0
        %3895 = vmatprep.subr.bf16.mxu0 0
        %3896 = vmatpush1.bf16.xpose.msra.mxu0 0
        %3897 = vmatprep.subr.bf16.mxu0 0
        %3898 = vmatpush1.bf16.xpose.msra.mxu0 0
        %3899 = vmatprep.mubr.bf16.mxu0 0
        %3900 = vmatmul.mubr.bf16.gmra.mrb[0].mxu0 %v3820
        %v3901 = vpop.f32.mrb[0].mxu0
        %v3902 = vadd.f32 0.0, %v3901
        %v3903 = vpop.f32.mrb[0].mxu0
        %v3904 = vpop.f32.mrb[0].mxu0
        %v3905 = vadd.f32 0.0, %v3904
        %v3906 = vpop.f32.mrb[0].mxu0
        %3907 = vmatprep.mubr.bf16.mxu0 0
        %3908 = vmatmul.mubr.bf16.gmra.mrb[0].mxu0 %v3823
        %v3909 = vpop.f32.mrb[0].mxu0
        %v3910 = vadd.f32 0.0, %v3909
        %v3911 = vpop.f32.mrb[0].mxu0
        %v3912 = vpop.f32.mrb[0].mxu0
        %v3913 = vadd.f32 0.0, %v3912
        %v3914 = vpop.f32.mrb[0].mxu0
        %3915 = vmatprep.mubr.bf16.mxu0 0
        %3916 = vmatmul.mubr.bf16.gmra.mrb[0].mxu0 %v3826
        %v3917 = vpop.f32.mrb[0].mxu0
        %v3918 = vadd.f32 0.0, %v3917
        %v3919 = vpop.f32.mrb[0].mxu0
        %v3920 = vpop.f32.mrb[0].mxu0
        %v3921 = vadd.f32 0.0, %v3920
        %v3922 = vpop.f32.mrb[0].mxu0
        %3923 = vmatprep.mubr.bf16.mxu0 0
        %3924 = vmatmul.mubr.bf16.gmra.mrb[0].mxu0 %v3829
        %v3925 = vpop.f32.mrb[0].mxu0
        %v3926 = vadd.f32 0.0, %v3925
        %v3927 = vpop.f32.mrb[0].mxu0
        %v3928 = vpop.f32.mrb[0].mxu0
        %v3929 = vadd.f32 0.0, %v3928
        %v3930 = vpop.f32.mrb[0].mxu0
        %3931 = vmatprep.mubr.bf16.mxu0 0
        %3932 = vmatmul.mubr.bf16.gmra.mrb[0].mxu0 %v3832
        %v3933 = vpop.f32.mrb[0].mxu0
        %v3934 = vadd.f32 0.0, %v3933
        %v3935 = vpop.f32.mrb[0].mxu0
        %v3936 = vpop.f32.mrb[0].mxu0
        %v3937 = vadd.f32 0.0, %v3936
        %v3938 = vpop.f32.mrb[0].mxu0
        %3939 = vmatprep.mubr.bf16.mxu0 0
        %3940 = vmatmul.mubr.bf16.gmra.mrb[0].mxu0 %v3835
        %v3941 = vpop.f32.mrb[0].mxu0
        %v3942 = vadd.f32 0.0, %v3941
        %v3943 = vpop.f32.mrb[0].mxu0
        %v3944 = vpop.f32.mrb[0].mxu0
        %v3945 = vadd.f32 0.0, %v3944
        %v3946 = vpop.f32.mrb[0].mxu0
        %3947 = vmatprep.mubr.bf16.mxu0 0
        %3948 = vmatmul.mubr.bf16.gmra.mrb[0].mxu0 %v3838
        %v3949 = vpop.f32.mrb[0].mxu0
        %v3950 = vadd.f32 0.0, %v3949
        %v3951 = vpop.f32.mrb[0].mxu0
        %v3952 = vpop.f32.mrb[0].mxu0
        %v3953 = vadd.f32 0.0, %v3952
        %v3954 = vpop.f32.mrb[0].mxu0
        %3955 = vmatprep.mubr.bf16.mxu0 0
        %3956 = vmatmul.mubr.bf16.gmra.mrb[0].mxu0 %v3841
        %v3957 = vpop.f32.mrb[0].mxu0
        %v3958 = vadd.f32 0.0, %v3957
        %v3959 = vpop.f32.mrb[0].mxu0
        %v3960 = vpop.f32.mrb[0].mxu0
        %v3961 = vadd.f32 0.0, %v3960
        %v3962 = vpop.f32.mrb[0].mxu0
        %3963 = vdwg.mxu0
        %v3964 = vsel %vm2926, %v3902, -1e+30
        %v3965 = vsel %vm2927, %v3905, -1e+30
        %v3966 = vsel %vm2928, %v3910, -1e+30
        %v3967 = vsel %vm2929, %v3913, -1e+30
        %v3968 = vsel %vm2930, %v3918, -1e+30
        %v3969 = vsel %vm2931, %v3921, -1e+30
        %v3970 = vsel %vm2932, %v3926, -1e+30
        %v3971 = vsel %vm2933, %v3929, -1e+30
        %v3972 = vsel %vm2934, %v3934, -1e+30
        %v3973 = vsel %vm2935, %v3937, -1e+30
        %v3974 = vsel %vm2936, %v3942, -1e+30
        %v3975 = vsel %vm2937, %v3945, -1e+30
        %v3976 = vsel %vm2938, %v3950, -1e+30
        %v3977 = vsel %vm2939, %v3953, -1e+30
        %v3978 = vsel %vm2940, %v3958, -1e+30
        %v3979 = vsel %vm2941, %v3961, -1e+30
        %3980 = vmax.xlane.f32.xlu0 %v3964
        %v3981 = vpop.xlane.xlu0 %3980
        %3982 = vmax.xlane.f32.xlu0 %v3965
        %v3983 = vpop.xlane.xlu0 %3982
        %3984 = vmax.xlane.f32.xlu0 %v3966
        %v3985 = vpop.xlane.xlu0 %3984
        %3986 = vmax.xlane.f32.xlu0 %v3967
        %v3987 = vpop.xlane.xlu0 %3986
        %3988 = vmax.xlane.f32.xlu0 %v3968
        %v3989 = vpop.xlane.xlu0 %3988
        %3990 = vmax.xlane.f32.xlu0 %v3969
        %v3991 = vpop.xlane.xlu0 %3990
        %3992 = vmax.xlane.f32.xlu0 %v3970
        %v3993 = vpop.xlane.xlu0 %3992
        %3994 = vmax.xlane.f32.xlu0 %v3971
        %v3995 = vpop.xlane.xlu0 %3994
        %3996 = vmax.xlane.f32.xlu0 %v3972
        %v3997 = vpop.xlane.xlu0 %3996
        %3998 = vmax.xlane.f32.xlu0 %v3973
        %v3999 = vpop.xlane.xlu0 %3998
        %4000 = vmax.xlane.f32.xlu0 %v3974
        %v4001 = vpop.xlane.xlu0 %4000
        %4002 = vmax.xlane.f32.xlu0 %v3975
        %v4003 = vpop.xlane.xlu0 %4002
        %4004 = vmax.xlane.f32.xlu0 %v3976
        %v4005 = vpop.xlane.xlu0 %4004
        %4006 = vmax.xlane.f32.xlu0 %v3977
        %v4007 = vpop.xlane.xlu0 %4006
        %4008 = vmax.xlane.f32.xlu0 %v3978
        %v4009 = vpop.xlane.xlu0 %4008
        %4010 = vmax.xlane.f32.xlu0 %v3979
        %v4011 = vpop.xlane.xlu0 %4010
        %v4012 = vsub.f32 %v3964, %v3981
        %v4013 = vsub.f32 %v3965, %v3983
        %v4014 = vsub.f32 %v3966, %v3985
        %v4015 = vsub.f32 %v3967, %v3987
        %v4016 = vsub.f32 %v3968, %v3989
        %v4017 = vsub.f32 %v3969, %v3991
        %v4018 = vsub.f32 %v3970, %v3993
        %v4019 = vsub.f32 %v3971, %v3995
        %v4020 = vsub.f32 %v3972, %v3997
        %v4021 = vsub.f32 %v3973, %v3999
        %v4022 = vsub.f32 %v3974, %v4001
        %v4023 = vsub.f32 %v3975, %v4003
        %v4024 = vsub.f32 %v3976, %v4005
        %v4025 = vsub.f32 %v3977, %v4007
        %v4026 = vsub.f32 %v3978, %v4009
        %v4027 = vsub.f32 %v3979, %v4011
        %v4028 = vmul.f32 %v4012, 1.442695
        %v4029 = vpow.pop %v4028
        %v4030 = vmul.f32 %v4013, 1.442695
        %v4031 = vpow.pop %v4030
        %v4032 = vmul.f32 %v4014, 1.442695
        %v4033 = vpow.pop %v4032
        %v4034 = vmul.f32 %v4015, 1.442695
        %v4035 = vpow.pop %v4034
        %v4036 = vmul.f32 %v4016, 1.442695
        %v4037 = vpow.pop %v4036
        %v4038 = vmul.f32 %v4017, 1.442695
        %v4039 = vpow.pop %v4038
        %v4040 = vmul.f32 %v4018, 1.442695
        %v4041 = vpow.pop %v4040
        %v4042 = vmul.f32 %v4019, 1.442695
        %v4043 = vpow.pop %v4042
        %v4044 = vmul.f32 %v4020, 1.442695
        %v4045 = vpow.pop %v4044
        %v4046 = vmul.f32 %v4021, 1.442695
        %v4047 = vpow.pop %v4046
        %v4048 = vmul.f32 %v4022, 1.442695
        %v4049 = vpow.pop %v4048
        %v4050 = vmul.f32 %v4023, 1.442695
        %v4051 = vpow.pop %v4050
        %v4052 = vmul.f32 %v4024, 1.442695
        %v4053 = vpow.pop %v4052
        %v4054 = vmul.f32 %v4025, 1.442695
        %v4055 = vpow.pop %v4054
        %v4056 = vmul.f32 %v4026, 1.442695
        %v4057 = vpow.pop %v4056
        %v4058 = vmul.f32 %v4027, 1.442695
        %v4059 = vpow.pop %v4058
        %4060 = vadd.xlane.f32.xlu0 %v4029
        %v4061 = vpop.xlane.xlu0 %4060
        %4062 = vadd.xlane.f32.xlu0 %v4031
        %v4063 = vpop.xlane.xlu0 %4062
        %4064 = vadd.xlane.f32.xlu0 %v4033
        %v4065 = vpop.xlane.xlu0 %4064
        %4066 = vadd.xlane.f32.xlu0 %v4035
        %v4067 = vpop.xlane.xlu0 %4066
        %4068 = vadd.xlane.f32.xlu0 %v4037
        %v4069 = vpop.xlane.xlu0 %4068
        %4070 = vadd.xlane.f32.xlu0 %v4039
        %v4071 = vpop.xlane.xlu0 %4070
        %4072 = vadd.xlane.f32.xlu0 %v4041
        %v4073 = vpop.xlane.xlu0 %4072
        %4074 = vadd.xlane.f32.xlu0 %v4043
        %v4075 = vpop.xlane.xlu0 %4074
        %4076 = vadd.xlane.f32.xlu0 %v4045
        %v4077 = vpop.xlane.xlu0 %4076
        %4078 = vadd.xlane.f32.xlu0 %v4047
        %v4079 = vpop.xlane.xlu0 %4078
        %4080 = vadd.xlane.f32.xlu0 %v4049
        %v4081 = vpop.xlane.xlu0 %4080
        %4082 = vadd.xlane.f32.xlu0 %v4051
        %v4083 = vpop.xlane.xlu0 %4082
        %4084 = vadd.xlane.f32.xlu0 %v4053
        %v4085 = vpop.xlane.xlu0 %4084
        %4086 = vadd.xlane.f32.xlu0 %v4055
        %v4087 = vpop.xlane.xlu0 %4086
        %4088 = vadd.xlane.f32.xlu0 %v4057
        %v4089 = vpop.xlane.xlu0 %4088
        %4090 = vadd.xlane.f32.xlu0 %v4059
        %v4091 = vpop.xlane.xlu0 %4090
        %v4092 = vrcp.pop %v4061
        %v4093 = vrcp.pop %v4063
        %v4094 = vrcp.pop %v4065
        %v4095 = vrcp.pop %v4067
        %v4096 = vrcp.pop %v4069
        %v4097 = vrcp.pop %v4071
        %v4098 = vrcp.pop %v4073
        %v4099 = vrcp.pop %v4075
        %v4100 = vrcp.pop %v4077
        %v4101 = vrcp.pop %v4079
        %v4102 = vrcp.pop %v4081
        %v4103 = vrcp.pop %v4083
        %v4104 = vrcp.pop %v4085
        %v4105 = vrcp.pop %v4087
        %v4106 = vrcp.pop %v4089
        %v4107 = vrcp.pop %v4091
        %v4108 = vmul.f32 %v4029, %v4092
        %v4109 = vmul.f32 %v4031, %v4093
        %v4110 = vmul.f32 %v4033, %v4094
        %v4111 = vmul.f32 %v4035, %v4095
        %v4112 = vmul.f32 %v4037, %v4096
        %v4113 = vmul.f32 %v4039, %v4097
        %v4114 = vmul.f32 %v4041, %v4098
        %v4115 = vmul.f32 %v4043, %v4099
        %v4116 = vmul.f32 %v4045, %v4100
        %v4117 = vmul.f32 %v4047, %v4101
        %v4118 = vmul.f32 %v4049, %v4102
        %v4119 = vmul.f32 %v4051, %v4103
        %v4120 = vmul.f32 %v4053, %v4104
        %v4121 = vmul.f32 %v4055, %v4105
        %v4122 = vmul.f32 %v4057, %v4106
        %v4123 = vmul.f32 %v4059, %v4107
        %v4124 = vpack.c.bf16 %v4109, %v4108
        %v4125 = vpack.c.bf16 %v4111, %v4110
        %v4126 = vpack.c.bf16 %v4113, %v4112
        %v4127 = vpack.c.bf16 %v4115, %v4114
        %v4128 = vpack.c.bf16 %v4117, %v4116
        %v4129 = vpack.c.bf16 %v4119, %v4118
        %v4130 = vpack.c.bf16 %v4121, %v4120
        %v4131 = vpack.c.bf16 %v4123, %v4122
        %4140 = vrot.lane.b32.xlu0 %v3763, 64
        %v4141 = vpop.permute.xlu0 %4140
        %4142 = vrot.lane.b32.xlu0 %v3764, 64
        %v4143 = vpop.permute.xlu0 %4142
        %4144 = vrot.lane.b32.xlu0 %v3765, 64
        %v4145 = vpop.permute.xlu0 %4144
        %4146 = vrot.lane.b32.xlu0 %v3766, 64
        %v4147 = vpop.permute.xlu0 %4146
        %4148 = vrot.lane.b32.xlu0 %v3767, 64
        %v4149 = vpop.permute.xlu0 %4148
        %4150 = vrot.lane.b32.xlu0 %v3768, 64
        %v4151 = vpop.permute.xlu0 %4150
        %4152 = vrot.lane.b32.xlu0 %v3769, 64
        %v4153 = vpop.permute.xlu0 %4152
        %4154 = vrot.lane.b32.xlu0 %v3770, 64
        %v4155 = vpop.permute.xlu0 %4154
        %4164 = vmatprep.subr.bf16.mxu0 0
        %4165 = vmatpush1.bf16.msra.mxu0 %v4141
        %4166 = vmatprep.subr.bf16.mxu0 0
        %4167 = vmatpush1.bf16.msra.mxu0 %v4143
        %4168 = vmatprep.subr.bf16.mxu0 0
        %4169 = vmatpush1.bf16.msra.mxu0 %v4145
        %4170 = vmatprep.subr.bf16.mxu0 0
        %4171 = vmatpush1.bf16.msra.mxu0 %v4147
        %4172 = vmatprep.subr.bf16.mxu0 0
        %4173 = vmatpush1.bf16.msra.mxu0 %v4149
        %4174 = vmatprep.subr.bf16.mxu0 0
        %4175 = vmatpush1.bf16.msra.mxu0 %v4151
        %4176 = vmatprep.subr.bf16.mxu0 0
        %4177 = vmatpush1.bf16.msra.mxu0 %v4153
        %4178 = vmatprep.subr.bf16.mxu0 0
        %4179 = vmatpush1.bf16.msra.mxu0 %v4155
        %4180 = vmatprep.subr.bf16.mxu0 0
        %4181 = vmatpush1.bf16.msra.mxu0 0
        %4182 = vmatprep.subr.bf16.mxu0 0
        %4183 = vmatpush1.bf16.msra.mxu0 0
        %4184 = vmatprep.subr.bf16.mxu0 0
        %4185 = vmatpush1.bf16.msra.mxu0 0
        %4186 = vmatprep.subr.bf16.mxu0 0
        %4187 = vmatpush1.bf16.msra.mxu0 0
        %4188 = vmatprep.subr.bf16.mxu0 0
        %4189 = vmatpush1.bf16.msra.mxu0 0
        %4190 = vmatprep.subr.bf16.mxu0 0
        %4191 = vmatpush1.bf16.msra.mxu0 0
        %4192 = vmatprep.subr.bf16.mxu0 0
        %4193 = vmatpush1.bf16.msra.mxu0 0
        %4194 = vmatprep.subr.bf16.mxu0 0
        %4195 = vmatpush1.bf16.msra.mxu0 0
        %4196 = vmatprep.mubr.bf16.mxu0 0
        %4197 = vmatmul.mubr.bf16.gmra.mrb[0].mxu0 %v4124
        %v4198 = vpop.f32.mrb[0].mxu0
        %v4199 = vadd.f32 0.0, %v4198
        %v4200 = vpop.f32.mrb[0].mxu0
        %v4201 = vpop.f32.mrb[0].mxu0
        %v4202 = vadd.f32 0.0, %v4201
        %v4203 = vpop.f32.mrb[0].mxu0
        %4204 = vmatprep.mubr.bf16.mxu0 0
        %4205 = vmatmul.mubr.bf16.gmra.mrb[0].mxu0 %v4125
        %v4206 = vpop.f32.mrb[0].mxu0
        %v4207 = vadd.f32 0.0, %v4206
        %v4208 = vpop.f32.mrb[0].mxu0
        %v4209 = vpop.f32.mrb[0].mxu0
        %v4210 = vadd.f32 0.0, %v4209
        %v4211 = vpop.f32.mrb[0].mxu0
        %4212 = vmatprep.mubr.bf16.mxu0 0
        %4213 = vmatmul.mubr.bf16.gmra.mrb[0].mxu0 %v4126
        %v4214 = vpop.f32.mrb[0].mxu0
        %v4215 = vadd.f32 0.0, %v4214
        %v4216 = vpop.f32.mrb[0].mxu0
        %v4217 = vpop.f32.mrb[0].mxu0
        %v4218 = vadd.f32 0.0, %v4217
        %v4219 = vpop.f32.mrb[0].mxu0
        %4220 = vmatprep.mubr.bf16.mxu0 0
        %4221 = vmatmul.mubr.bf16.gmra.mrb[0].mxu0 %v4127
        %v4222 = vpop.f32.mrb[0].mxu0
        %v4223 = vadd.f32 0.0, %v4222
        %v4224 = vpop.f32.mrb[0].mxu0
        %v4225 = vpop.f32.mrb[0].mxu0
        %v4226 = vadd.f32 0.0, %v4225
        %v4227 = vpop.f32.mrb[0].mxu0
        %4228 = vmatprep.mubr.bf16.mxu0 0
        %4229 = vmatmul.mubr.bf16.gmra.mrb[0].mxu0 %v4128
        %v4230 = vpop.f32.mrb[0].mxu0
        %v4231 = vadd.f32 0.0, %v4230
        %v4232 = vpop.f32.mrb[0].mxu0
        %v4233 = vpop.f32.mrb[0].mxu0
        %v4234 = vadd.f32 0.0, %v4233
        %v4235 = vpop.f32.mrb[0].mxu0
        %4236 = vmatprep.mubr.bf16.mxu0 0
        %4237 = vmatmul.mubr.bf16.gmra.mrb[0].mxu0 %v4129
        %v4238 = vpop.f32.mrb[0].mxu0
        %v4239 = vadd.f32 0.0, %v4238
        %v4240 = vpop.f32.mrb[0].mxu0
        %v4241 = vpop.f32.mrb[0].mxu0
        %v4242 = vadd.f32 0.0, %v4241
        %v4243 = vpop.f32.mrb[0].mxu0
        %4244 = vmatprep.mubr.bf16.mxu0 0
        %4245 = vmatmul.mubr.bf16.gmra.mrb[0].mxu0 %v4130
        %v4246 = vpop.f32.mrb[0].mxu0
        %v4247 = vadd.f32 0.0, %v4246
        %v4248 = vpop.f32.mrb[0].mxu0
        %v4249 = vpop.f32.mrb[0].mxu0
        %v4250 = vadd.f32 0.0, %v4249
        %v4251 = vpop.f32.mrb[0].mxu0
        %4252 = vmatprep.mubr.bf16.mxu0 0
        %4253 = vmatmul.mubr.bf16.gmra.mrb[0].mxu0 %v4131
        %v4254 = vpop.f32.mrb[0].mxu0
        %v4255 = vadd.f32 0.0, %v4254
        %v4256 = vpop.f32.mrb[0].mxu0
        %v4257 = vpop.f32.mrb[0].mxu0
        %v4258 = vadd.f32 0.0, %v4257
        %v4259 = vpop.f32.mrb[0].mxu0
        %4260 = vdwg.mxu0
        %v4261 = vpack.c.bf16 %v4202, %v4199
        %v4262 = vpack.c.bf16 %v4210, %v4207
        %v4263 = vpack.c.bf16 %v4218, %v4215
        %v4264 = vpack.c.bf16 %v4226, %v4223
        %v4265 = vpack.c.bf16 %v4234, %v4231
        %v4266 = vpack.c.bf16 %v4242, %v4239
        %v4267 = vpack.c.bf16 %v4250, %v4247
        %v4268 = vpack.c.bf16 %v4258, %v4255
        %v4269 = vld [vmem:[#allocation9 + $0x60] sm:$0xff]
        %v4270 = vld [vmem:[#allocation9 + $0x68] sm:$0xf]
        %v4271 = vld [vmem:[#allocation9 + $0x6c] sm:$0xff]
        %v4272 = vld [vmem:[#allocation9 + $0x74] sm:$0xf]
        %v4273 = vld [vmem:[#allocation9 + $0x78] sm:$0xff]
        %v4274 = vld [vmem:[#allocation9 + $0x80] sm:$0xf]
        %v4275 = vld [vmem:[#allocation9 + $0x84] sm:$0xff]
        %v4276 = vld [vmem:[#allocation9 + $0x8c] sm:$0xf]
        %v4277 = vld [vmem:[#allocation9 + $0x90] sm:$0xff]
        %v4278 = vld [vmem:[#allocation9 + $0x98] sm:$0xf]
        %v4279 = vld [vmem:[#allocation9 + $0x9c] sm:$0xff]
        %v4280 = vld [vmem:[#allocation9 + $0xa4] sm:$0xf]
        %v4281 = vld [vmem:[#allocation9 + $0xa8] sm:$0xff]
        %v4282 = vld [vmem:[#allocation9 + $0xb0] sm:$0xf]
        %v4283 = vld [vmem:[#allocation9 + $0xb4] sm:$0xff]
        %v4284 = vld [vmem:[#allocation9 + $0xbc] sm:$0xf]
        %v4301 = vunpack.c.l.b16 %v4269
        %v4302 = vunpack.c.h.b16 %v4269
        %v4303 = vunpack.c.l.b16 %v4270
        %v4304 = vunpack.c.l.b16 %v4271
        %v4305 = vunpack.c.h.b16 %v4271
        %v4306 = vunpack.c.l.b16 %v4272
        %v4307 = vunpack.c.l.b16 %v4273
        %v4308 = vunpack.c.h.b16 %v4273
        %v4309 = vunpack.c.l.b16 %v4274
        %v4310 = vunpack.c.l.b16 %v4275
        %v4311 = vunpack.c.h.b16 %v4275
        %v4312 = vunpack.c.l.b16 %v4276
        %v4313 = vunpack.c.l.b16 %v4277
        %v4314 = vunpack.c.h.b16 %v4277
        %v4315 = vunpack.c.l.b16 %v4278
        %v4316 = vunpack.c.l.b16 %v4279
        %v4317 = vunpack.c.h.b16 %v4279
        %v4318 = vunpack.c.l.b16 %v4280
        %v4319 = vunpack.c.l.b16 %v4281
        %v4320 = vunpack.c.h.b16 %v4281
        %v4321 = vunpack.c.l.b16 %v4282
        %v4322 = vunpack.c.l.b16 %v4283
        %v4323 = vunpack.c.h.b16 %v4283
        %v4324 = vunpack.c.l.b16 %v4284
        %v4325 = vpack.c.b16 %v4304, %v4301
        %v4326 = vpack.c.b16 %v4305, %v4302
        %v4327 = vpack.c.b16 %v4306, %v4303
        %v4328 = vpack.c.b16 %v4310, %v4307
        %v4329 = vpack.c.b16 %v4311, %v4308
        %v4330 = vpack.c.b16 %v4312, %v4309
        %v4331 = vpack.c.b16 %v4316, %v4313
        %v4332 = vpack.c.b16 %v4317, %v4314
        %v4333 = vpack.c.b16 %v4318, %v4315
        %v4334 = vpack.c.b16 %v4322, %v4319
        %v4335 = vpack.c.b16 %v4323, %v4320
        %v4336 = vpack.c.b16 %v4324, %v4321
        %v4350 = vsel %vm2966, %v4261, 0
        %v4353 = vsel %vm2966, %v4262, 0
        %v4356 = vsel %vm2966, %v4263, 0
        %v4359 = vsel %vm2966, %v4264, 0
        %v4362 = vsel %vm2966, %v4265, 0
        %v4365 = vsel %vm2966, %v4266, 0
        %v4368 = vsel %vm2966, %v4267, 0
        %v4371 = vsel %vm2966, %v4268, 0
        %4373 = vmatprep.subr.bf16.mxu0 %v4326
        %4374 = vmatpush1.bf16.msra.mxu0 %v4325
        %4375 = vmatprep.subr.bf16.mxu0 %v4329
        %4376 = vmatpush1.bf16.msra.mxu0 %v4328
        %4377 = vmatprep.subr.bf16.mxu0 %v4332
        %4378 = vmatpush1.bf16.msra.mxu0 %v4331
        %4379 = vmatprep.subr.bf16.mxu0 %v4335
        %4380 = vmatpush1.bf16.msra.mxu0 %v4334
        %4381 = vmatprep.subr.bf16.mxu0 0
        %4382 = vmatpush1.bf16.msra.mxu0 0
        %4383 = vmatprep.subr.bf16.mxu0 0
        %4384 = vmatpush1.bf16.msra.mxu0 0
        %4385 = vmatprep.subr.bf16.mxu0 0
        %4386 = vmatpush1.bf16.msra.mxu0 0
        %4387 = vmatprep.subr.bf16.mxu0 0
        %4388 = vmatpush1.bf16.msra.mxu0 0
        %4389 = vmatprep.subr.bf16.mxu0 0
        %4390 = vmatpush1.bf16.msra.mxu0 0
        %4391 = vmatprep.subr.bf16.mxu0 0
        %4392 = vmatpush1.bf16.msra.mxu0 0
        %4393 = vmatprep.subr.bf16.mxu0 0
        %4394 = vmatpush1.bf16.msra.mxu0 0
        %4395 = vmatprep.subr.bf16.mxu0 0
        %4396 = vmatpush1.bf16.msra.mxu0 0
        %4397 = vmatprep.subr.bf16.mxu0 0
        %4398 = vmatpush1.bf16.msra.mxu0 0
        %4399 = vmatprep.subr.bf16.mxu0 0
        %4400 = vmatpush1.bf16.msra.mxu0 0
        %4401 = vmatprep.subr.bf16.mxu0 0
        %4402 = vmatpush1.bf16.msra.mxu0 0
        %4403 = vmatprep.subr.bf16.mxu0 0
        %4404 = vmatpush1.bf16.msra.mxu0 0
        %4405 = vmatprep.mubr.bf16.mxu0 0
        %4406 = vmatmul.mubr.bf16.gmra.mrb[0].mxu0 %v4350
        %v4407 = vpop.f32.mrb[0].mxu0
        %v4408 = vadd.f32 0.0, %v4407
        %v4409 = vpop.f32.mrb[0].mxu0
        %v4410 = vadd.f32 0.0, %v4409
        %v4411 = vpop.f32.mrb[0].mxu0
        %v4412 = vadd.f32 0.0, %v4411
        %v4413 = vpop.f32.mrb[0].mxu0
        %v4414 = vadd.f32 0.0, %v4413
        %4415 = vmatprep.mubr.bf16.mxu0 0
        %4416 = vmatmul.mubr.bf16.gmra.mrb[0].mxu0 %v4353
        %v4417 = vpop.f32.mrb[0].mxu0
        %v4418 = vadd.f32 0.0, %v4417
        %v4419 = vpop.f32.mrb[0].mxu0
        %v4420 = vadd.f32 0.0, %v4419
        %v4421 = vpop.f32.mrb[0].mxu0
        %v4422 = vadd.f32 0.0, %v4421
        %v4423 = vpop.f32.mrb[0].mxu0
        %v4424 = vadd.f32 0.0, %v4423
        %4425 = vmatprep.mubr.bf16.mxu0 0
        %4426 = vmatmul.mubr.bf16.gmra.mrb[0].mxu0 %v4356
        %v4427 = vpop.f32.mrb[0].mxu0
        %v4428 = vadd.f32 0.0, %v4427
        %v4429 = vpop.f32.mrb[0].mxu0
        %v4430 = vadd.f32 0.0, %v4429
        %v4431 = vpop.f32.mrb[0].mxu0
        %v4432 = vadd.f32 0.0, %v4431
        %v4433 = vpop.f32.mrb[0].mxu0
        %v4434 = vadd.f32 0.0, %v4433
        %4435 = vmatprep.mubr.bf16.mxu0 0
        %4436 = vmatmul.mubr.bf16.gmra.mrb[0].mxu0 %v4359
        %v4437 = vpop.f32.mrb[0].mxu0
        %v4438 = vadd.f32 0.0, %v4437
        %v4439 = vpop.f32.mrb[0].mxu0
        %v4440 = vadd.f32 0.0, %v4439
        %v4441 = vpop.f32.mrb[0].mxu0
        %v4442 = vadd.f32 0.0, %v4441
        %v4443 = vpop.f32.mrb[0].mxu0
        %v4444 = vadd.f32 0.0, %v4443
        %4445 = vmatprep.mubr.bf16.mxu0 0
        %4446 = vmatmul.mubr.bf16.gmra.mrb[0].mxu0 %v4362
        %v4447 = vpop.f32.mrb[0].mxu0
        %v4448 = vadd.f32 0.0, %v4447
        %v4449 = vpop.f32.mrb[0].mxu0
        %v4450 = vadd.f32 0.0, %v4449
        %v4451 = vpop.f32.mrb[0].mxu0
        %v4452 = vadd.f32 0.0, %v4451
        %v4453 = vpop.f32.mrb[0].mxu0
        %v4454 = vadd.f32 0.0, %v4453
        %4455 = vmatprep.mubr.bf16.mxu0 0
        %4456 = vmatmul.mubr.bf16.gmra.mrb[0].mxu0 %v4365
        %v4457 = vpop.f32.mrb[0].mxu0
        %v4458 = vadd.f32 0.0, %v4457
        %v4459 = vpop.f32.mrb[0].mxu0
        %v4460 = vadd.f32 0.0, %v4459
        %v4461 = vpop.f32.mrb[0].mxu0
        %v4462 = vadd.f32 0.0, %v4461
        %v4463 = vpop.f32.mrb[0].mxu0
        %v4464 = vadd.f32 0.0, %v4463
        %4465 = vmatprep.mubr.bf16.mxu0 0
        %4466 = vmatmul.mubr.bf16.gmra.mrb[0].mxu0 %v4368
        %v4467 = vpop.f32.mrb[0].mxu0
        %v4468 = vadd.f32 0.0, %v4467
        %v4469 = vpop.f32.mrb[0].mxu0
        %v4470 = vadd.f32 0.0, %v4469
        %v4471 = vpop.f32.mrb[0].mxu0
        %v4472 = vadd.f32 0.0, %v4471
        %v4473 = vpop.f32.mrb[0].mxu0
        %v4474 = vadd.f32 0.0, %v4473
        %4475 = vmatprep.mubr.bf16.mxu0 0
        %4476 = vmatmul.mubr.bf16.gmra.mrb[0].mxu0 %v4371
        %v4477 = vpop.f32.mrb[0].mxu0
        %v4478 = vadd.f32 0.0, %v4477
        %v4479 = vpop.f32.mrb[0].mxu0
        %v4480 = vadd.f32 0.0, %v4479
        %v4481 = vpop.f32.mrb[0].mxu0
        %v4482 = vadd.f32 0.0, %v4481
        %v4483 = vpop.f32.mrb[0].mxu0
        %v4484 = vadd.f32 0.0, %v4483
        %4485 = vdwg.mxu0
        %4486 = vmatprep.subr.bf16.mxu0 0
        %4487 = vmatpush1.bf16.msra.mxu0 %v4327
        %4488 = vmatprep.subr.bf16.mxu0 0
        %4489 = vmatpush1.bf16.msra.mxu0 %v4330
        %4490 = vmatprep.subr.bf16.mxu0 0
        %4491 = vmatpush1.bf16.msra.mxu0 %v4333
        %4492 = vmatprep.subr.bf16.mxu0 0
        %4493 = vmatpush1.bf16.msra.mxu0 %v4336
        %4494 = vmatprep.subr.bf16.mxu0 0
        %4495 = vmatpush1.bf16.msra.mxu0 0
        %4496 = vmatprep.subr.bf16.mxu0 0
        %4497 = vmatpush1.bf16.msra.mxu0 0
        %4498 = vmatprep.subr.bf16.mxu0 0
        %4499 = vmatpush1.bf16.msra.mxu0 0
        %4500 = vmatprep.subr.bf16.mxu0 0
        %4501 = vmatpush1.bf16.msra.mxu0 0
        %4502 = vmatprep.subr.bf16.mxu0 0
        %4503 = vmatpush1.bf16.msra.mxu0 0
        %4504 = vmatprep.subr.bf16.mxu0 0
        %4505 = vmatpush1.bf16.msra.mxu0 0
        %4506 = vmatprep.subr.bf16.mxu0 0
        %4507 = vmatpush1.bf16.msra.mxu0 0
        %4508 = vmatprep.subr.bf16.mxu0 0
        %4509 = vmatpush1.bf16.msra.mxu0 0
        %4510 = vmatprep.subr.bf16.mxu0 0
        %4511 = vmatpush1.bf16.msra.mxu0 0
        %4512 = vmatprep.subr.bf16.mxu0 0
        %4513 = vmatpush1.bf16.msra.mxu0 0
        %4514 = vmatprep.subr.bf16.mxu0 0
        %4515 = vmatpush1.bf16.msra.mxu0 0
        %4516 = vmatprep.subr.bf16.mxu0 0
        %4517 = vmatpush1.bf16.msra.mxu0 0
        %4518 = vmatprep.mubr.bf16.mxu0 0
        %4519 = vmatmul.mubr.bf16.gmra.mrb[0].mxu0 %v4350
        %v4520 = vpop.f32.mrb[0].mxu0
        %v4521 = vadd.f32 0.0, %v4520
        %v4522 = vpop.f32.mrb[0].mxu0
        %v4523 = vpop.f32.mrb[0].mxu0
        %v4524 = vadd.f32 0.0, %v4523
        %v4525 = vpop.f32.mrb[0].mxu0
        %4526 = vmatprep.mubr.bf16.mxu0 0
        %4527 = vmatmul.mubr.bf16.gmra.mrb[0].mxu0 %v4353
        %v4528 = vpop.f32.mrb[0].mxu0
        %v4529 = vadd.f32 0.0, %v4528
        %v4530 = vpop.f32.mrb[0].mxu0
        %v4531 = vpop.f32.mrb[0].mxu0
        %v4532 = vadd.f32 0.0, %v4531
        %v4533 = vpop.f32.mrb[0].mxu0
        %4534 = vmatprep.mubr.bf16.mxu0 0
        %4535 = vmatmul.mubr.bf16.gmra.mrb[0].mxu0 %v4356
        %v4536 = vpop.f32.mrb[0].mxu0
        %v4537 = vadd.f32 0.0, %v4536
        %v4538 = vpop.f32.mrb[0].mxu0
        %v4539 = vpop.f32.mrb[0].mxu0
        %v4540 = vadd.f32 0.0, %v4539
        %v4541 = vpop.f32.mrb[0].mxu0
        %4542 = vmatprep.mubr.bf16.mxu0 0
        %4543 = vmatmul.mubr.bf16.gmra.mrb[0].mxu0 %v4359
        %v4544 = vpop.f32.mrb[0].mxu0
        %v4545 = vadd.f32 0.0, %v4544
        %v4546 = vpop.f32.mrb[0].mxu0
        %v4547 = vpop.f32.mrb[0].mxu0
        %v4548 = vadd.f32 0.0, %v4547
        %v4549 = vpop.f32.mrb[0].mxu0
        %4550 = vmatprep.mubr.bf16.mxu0 0
        %4551 = vmatmul.mubr.bf16.gmra.mrb[0].mxu0 %v4362
        %v4552 = vpop.f32.mrb[0].mxu0
        %v4553 = vadd.f32 0.0, %v4552
        %v4554 = vpop.f32.mrb[0].mxu0
        %v4555 = vpop.f32.mrb[0].mxu0
        %v4556 = vadd.f32 0.0, %v4555
        %v4557 = vpop.f32.mrb[0].mxu0
        %4558 = vmatprep.mubr.bf16.mxu0 0
        %4559 = vmatmul.mubr.bf16.gmra.mrb[0].mxu0 %v4365
        %v4560 = vpop.f32.mrb[0].mxu0
        %v4561 = vadd.f32 0.0, %v4560
        %v4562 = vpop.f32.mrb[0].mxu0
        %v4563 = vpop.f32.mrb[0].mxu0
        %v4564 = vadd.f32 0.0, %v4563
        %v4565 = vpop.f32.mrb[0].mxu0
        %4566 = vmatprep.mubr.bf16.mxu0 0
        %4567 = vmatmul.mubr.bf16.gmra.mrb[0].mxu0 %v4368
        %v4568 = vpop.f32.mrb[0].mxu0
        %v4569 = vadd.f32 0.0, %v4568
        %v4570 = vpop.f32.mrb[0].mxu0
        %v4571 = vpop.f32.mrb[0].mxu0
        %v4572 = vadd.f32 0.0, %v4571
        %v4573 = vpop.f32.mrb[0].mxu0
        %4574 = vmatprep.mubr.bf16.mxu0 0
        %4575 = vmatmul.mubr.bf16.gmra.mrb[0].mxu0 %v4371
        %v4576 = vpop.f32.mrb[0].mxu0
        %v4577 = vadd.f32 0.0, %v4576
        %v4578 = vpop.f32.mrb[0].mxu0
        %v4579 = vpop.f32.mrb[0].mxu0
        %v4580 = vadd.f32 0.0, %v4579
        %v4581 = vpop.f32.mrb[0].mxu0
        %4582 = vdwg.mxu0
        %v4583 = vld [vmem:[#allocation3] sm:$0xff]
        %v4584 = vld [vmem:[#allocation3 + $0x8] sm:$0xff]
        %v4585 = vld [vmem:[#allocation3 + $0x10] sm:$0xff]
        %v4586 = vld [vmem:[#allocation3 + $0x18] sm:$0xff]
        %v4587 = vld [vmem:[#allocation3 + $0x20] sm:$0xff]
        %v4588 = vld [vmem:[#allocation3 + $0x28] sm:$0xff]
        %v4589 = vld [vmem:[#allocation3 + $0x30] sm:$0xff]
        %v4590 = vld [vmem:[#allocation3 + $0x38] sm:$0xff]
        %v4591 = vld [vmem:[#allocation3 + $0x40] sm:$0xff]
        %v4592 = vld [vmem:[#allocation3 + $0x48] sm:$0xff]
        %v4593 = vld [vmem:[#allocation3 + $0x50] sm:$0xff]
        %v4594 = vld [vmem:[#allocation3 + $0x58] sm:$0xff]
        %v4595 = vld [vmem:[#allocation3 + $0x60] sm:$0xff]
        %v4596 = vld [vmem:[#allocation3 + $0x68] sm:$0xff]
        %v4597 = vld [vmem:[#allocation3 + $0x70] sm:$0xff]
        %v4598 = vld [vmem:[#allocation3 + $0x78] sm:$0xff]
        %v4599 = vld [vmem:[#allocation3 + $0x80] sm:$0xff]
        %v4600 = vld [vmem:[#allocation3 + $0x88] sm:$0xff]
        %v4601 = vld [vmem:[#allocation3 + $0x90] sm:$0xff]
        %v4602 = vld [vmem:[#allocation3 + $0x98] sm:$0xff]
        %v4603 = vld [vmem:[#allocation3 + $0xa0] sm:$0xff]
        %v4604 = vld [vmem:[#allocation3 + $0xa8] sm:$0xff]
        %v4605 = vld [vmem:[#allocation3 + $0xb0] sm:$0xff]
        %v4606 = vld [vmem:[#allocation3 + $0xb8] sm:$0xff]
        %v4607 = vld [vmem:[#allocation3 + $0xc0] sm:$0xff]
        %v4608 = vld [vmem:[#allocation3 + $0xc8] sm:$0xff]
        %v4609 = vld [vmem:[#allocation3 + $0xd0] sm:$0xff]
        %v4610 = vld [vmem:[#allocation3 + $0xd8] sm:$0xff]
        %v4611 = vld [vmem:[#allocation3 + $0xe0] sm:$0xff]
        %v4612 = vld [vmem:[#allocation3 + $0xe8] sm:$0xff]
        %v4613 = vld [vmem:[#allocation3 + $0xf0] sm:$0xff]
        %v4614 = vld [vmem:[#allocation3 + $0xf8] sm:$0xff]
        %v4615 = vld [vmem:[#allocation3 + $0x100] sm:$0xff]
        %v4616 = vld [vmem:[#allocation3 + $0x108] sm:$0xff]
        %v4617 = vld [vmem:[#allocation3 + $0x110] sm:$0xff]
        %v4618 = vld [vmem:[#allocation3 + $0x118] sm:$0xff]
        %v4619 = vld [vmem:[#allocation3 + $0x120] sm:$0xff]
        %v4620 = vld [vmem:[#allocation3 + $0x128] sm:$0xff]
        %v4621 = vld [vmem:[#allocation3 + $0x130] sm:$0xff]
        %v4622 = vld [vmem:[#allocation3 + $0x138] sm:$0xff]
        %v4623 = vld [vmem:[#allocation3 + $0x140] sm:$0xff]
        %v4624 = vld [vmem:[#allocation3 + $0x148] sm:$0xff]
        %v4625 = vld [vmem:[#allocation3 + $0x150] sm:$0xff]
        %v4626 = vld [vmem:[#allocation3 + $0x158] sm:$0xff]
        %v4627 = vld [vmem:[#allocation3 + $0x160] sm:$0xff]
        %v4628 = vld [vmem:[#allocation3 + $0x168] sm:$0xff]
        %v4629 = vld [vmem:[#allocation3 + $0x170] sm:$0xff]
        %v4630 = vld [vmem:[#allocation3 + $0x178] sm:$0xff]
        %v4631 = vadd.f32 %v4583, %v4408
        %v4632 = vadd.f32 %v4584, %v4410
        %v4633 = vadd.f32 %v4585, %v4521
        %v4634 = vadd.f32 %v4586, %v4412
        %v4635 = vadd.f32 %v4587, %v4414
        %v4636 = vadd.f32 %v4588, %v4524
        %v4637 = vadd.f32 %v4589, %v4418
        %v4638 = vadd.f32 %v4590, %v4420
        %v4639 = vadd.f32 %v4591, %v4529
        %v4640 = vadd.f32 %v4592, %v4422
        %v4641 = vadd.f32 %v4593, %v4424
        %v4642 = vadd.f32 %v4594, %v4532
        %v4643 = vadd.f32 %v4595, %v4428
        %v4644 = vadd.f32 %v4596, %v4430
        %v4645 = vadd.f32 %v4597, %v4537
        %v4646 = vadd.f32 %v4598, %v4432
        %v4647 = vadd.f32 %v4599, %v4434
        %v4648 = vadd.f32 %v4600, %v4540
        %v4649 = vadd.f32 %v4601, %v4438
        %v4650 = vadd.f32 %v4602, %v4440
        %v4651 = vadd.f32 %v4603, %v4545
        %v4652 = vadd.f32 %v4604, %v4442
        %v4653 = vadd.f32 %v4605, %v4444
        %v4654 = vadd.f32 %v4606, %v4548
        %v4655 = vadd.f32 %v4607, %v4448
        %v4656 = vadd.f32 %v4608, %v4450
        %v4657 = vadd.f32 %v4609, %v4553
        %v4658 = vadd.f32 %v4610, %v4452
        %v4659 = vadd.f32 %v4611, %v4454
        %v4660 = vadd.f32 %v4612, %v4556
        %v4661 = vadd.f32 %v4613, %v4458
        %v4662 = vadd.f32 %v4614, %v4460
        %v4663 = vadd.f32 %v4615, %v4561
        %v4664 = vadd.f32 %v4616, %v4462
        %v4665 = vadd.f32 %v4617, %v4464
        %v4666 = vadd.f32 %v4618, %v4564
        %v4667 = vadd.f32 %v4619, %v4468
        %v4668 = vadd.f32 %v4620, %v4470
        %v4669 = vadd.f32 %v4621, %v4569
        %v4670 = vadd.f32 %v4622, %v4472
        %v4671 = vadd.f32 %v4623, %v4474
        %v4672 = vadd.f32 %v4624, %v4572
        %v4673 = vadd.f32 %v4625, %v4478
        %v4674 = vadd.f32 %v4626, %v4480
        %v4675 = vadd.f32 %v4627, %v4577
        %v4676 = vadd.f32 %v4628, %v4482
        %v4677 = vadd.f32 %v4629, %v4484
        %v4678 = vadd.f32 %v4630, %v4580
        %4679 = vst [vmem:[#allocation3] sm:$0xff] %v4631
        %4680 = vst [vmem:[#allocation3 + $0x8] sm:$0xff] %v4632
        %4681 = vst [vmem:[#allocation3 + $0x10] sm:$0xff] %v4633
        %4682 = vst [vmem:[#allocation3 + $0x18] sm:$0xff] %v4634
        %4683 = vst [vmem:[#allocation3 + $0x20] sm:$0xff] %v4635
        %4684 = vst [vmem:[#allocation3 + $0x28] sm:$0xff] %v4636
        %4685 = vst [vmem:[#allocation3 + $0x30] sm:$0xff] %v4637
        %4686 = vst [vmem:[#allocation3 + $0x38] sm:$0xff] %v4638
        %4687 = vst [vmem:[#allocation3 + $0x40] sm:$0xff] %v4639
        %4688 = vst [vmem:[#allocation3 + $0x48] sm:$0xff] %v4640
        %4689 = vst [vmem:[#allocation3 + $0x50] sm:$0xff] %v4641
        %4690 = vst [vmem:[#allocation3 + $0x58] sm:$0xff] %v4642
        %4691 = vst [vmem:[#allocation3 + $0x60] sm:$0xff] %v4643
        %4692 = vst [vmem:[#allocation3 + $0x68] sm:$0xff] %v4644
        %4693 = vst [vmem:[#allocation3 + $0x70] sm:$0xff] %v4645
        %4694 = vst [vmem:[#allocation3 + $0x78] sm:$0xff] %v4646
        %4695 = vst [vmem:[#allocation3 + $0x80] sm:$0xff] %v4647
        %4696 = vst [vmem:[#allocation3 + $0x88] sm:$0xff] %v4648
        %4697 = vst [vmem:[#allocation3 + $0x90] sm:$0xff] %v4649
        %4698 = vst [vmem:[#allocation3 + $0x98] sm:$0xff] %v4650
        %4699 = vst [vmem:[#allocation3 + $0xa0] sm:$0xff] %v4651
        %4700 = vst [vmem:[#allocation3 + $0xa8] sm:$0xff] %v4652
        %4701 = vst [vmem:[#allocation3 + $0xb0] sm:$0xff] %v4653
        %4702 = vst [vmem:[#allocation3 + $0xb8] sm:$0xff] %v4654
        %4703 = vst [vmem:[#allocation3 + $0xc0] sm:$0xff] %v4655
        %4704 = vst [vmem:[#allocation3 + $0xc8] sm:$0xff] %v4656
        %4705 = vst [vmem:[#allocation3 + $0xd0] sm:$0xff] %v4657
        %4706 = vst [vmem:[#allocation3 + $0xd8] sm:$0xff] %v4658
        %4707 = vst [vmem:[#allocation3 + $0xe0] sm:$0xff] %v4659
        %4708 = vst [vmem:[#allocation3 + $0xe8] sm:$0xff] %v4660
        %4709 = vst [vmem:[#allocation3 + $0xf0] sm:$0xff] %v4661
        %4710 = vst [vmem:[#allocation3 + $0xf8] sm:$0xff] %v4662
        %4711 = vst [vmem:[#allocation3 + $0x100] sm:$0xff] %v4663
        %4712 = vst [vmem:[#allocation3 + $0x108] sm:$0xff] %v4664
        %4713 = vst [vmem:[#allocation3 + $0x110] sm:$0xff] %v4665
        %4714 = vst [vmem:[#allocation3 + $0x118] sm:$0xff] %v4666
        %4715 = vst [vmem:[#allocation3 + $0x120] sm:$0xff] %v4667
        %4716 = vst [vmem:[#allocation3 + $0x128] sm:$0xff] %v4668
        %4717 = vst [vmem:[#allocation3 + $0x130] sm:$0xff] %v4669
        %4718 = vst [vmem:[#allocation3 + $0x138] sm:$0xff] %v4670
        %4719 = vst [vmem:[#allocation3 + $0x140] sm:$0xff] %v4671
        %4720 = vst [vmem:[#allocation3 + $0x148] sm:$0xff] %v4672
        %4721 = vst [vmem:[#allocation3 + $0x150] sm:$0xff] %v4673
        %4722 = vst [vmem:[#allocation3 + $0x158] sm:$0xff] %v4674
        %4723 = vst [vmem:[#allocation3 + $0x160] sm:$0xff] %v4675
        %4724 = vst [vmem:[#allocation3 + $0x168] sm:$0xff] %v4676
        %4725 = vst [vmem:[#allocation3 + $0x170] sm:$0xff] %v4677
        %4726 = vst [vmem:[#allocation3 + $0x178] sm:$0xff] %v4678
        %v4727 = vld [vmem:[#allocation2 + $0x8] sm:$0xff]
        %v4728 = vld [vmem:[#allocation2 + $0x50] sm:$0xff]
        %v4729 = vld [vmem:[#allocation2 + $0x98] sm:$0xff]
        %v4730 = vld [vmem:[#allocation2 + $0xe0] sm:$0xff]
        %v4731 = vld [vmem:[#allocation2 + $0x128] sm:$0xff]
        %v4732 = vld [vmem:[#allocation2 + $0x170] sm:$0xff]
        %v4733 = vld [vmem:[#allocation2 + $0x1b8] sm:$0xff]
        %v4734 = vld [vmem:[#allocation2 + $0x200] sm:$0xff]
        %v4735 = vld [vmem:[#allocation2 + $0x20] sm:$0xff]
        %v4736 = vld [vmem:[#allocation2 + $0x68] sm:$0xff]
        %v4737 = vld [vmem:[#allocation2 + $0xb0] sm:$0xff]
        %v4738 = vld [vmem:[#allocation2 + $0xf8] sm:$0xff]
        %v4739 = vld [vmem:[#allocation2 + $0x140] sm:$0xff]
        %v4740 = vld [vmem:[#allocation2 + $0x188] sm:$0xff]
        %v4741 = vld [vmem:[#allocation2 + $0x1d0] sm:$0xff]
        %v4742 = vld [vmem:[#allocation2 + $0x218] sm:$0xff]
        %v4743 = vld [vmem:[#allocation2 + $0x38] sm:$0xff]
        %v4744 = vld [vmem:[#allocation2 + $0x80] sm:$0xff]
        %v4745 = vld [vmem:[#allocation2 + $0xc8] sm:$0xff]
        %v4746 = vld [vmem:[#allocation2 + $0x110] sm:$0xff]
        %v4747 = vld [vmem:[#allocation2 + $0x158] sm:$0xff]
        %v4748 = vld [vmem:[#allocation2 + $0x1a0] sm:$0xff]
        %v4749 = vld [vmem:[#allocation2 + $0x1e8] sm:$0xff]
        %v4750 = vld [vmem:[#allocation2 + $0x230] sm:$0xff]
        %v4752 = vsel %vm2966, %v4727, 0
        %v4755 = vsel %vm2966, %v4728, 0
        %v4758 = vsel %vm2966, %v4729, 0
        %v4761 = vsel %vm2966, %v4730, 0
        %v4764 = vsel %vm2966, %v4731, 0
        %v4767 = vsel %vm2966, %v4732, 0
        %v4770 = vsel %vm2966, %v4733, 0
        %v4773 = vsel %vm2966, %v4734, 0
        %v4776 = vsel %vm2966, %v4735, 0
        %v4779 = vsel %vm2966, %v4736, 0
        %v4782 = vsel %vm2966, %v4737, 0
        %v4785 = vsel %vm2966, %v4738, 0
        %v4788 = vsel %vm2966, %v4739, 0
        %v4791 = vsel %vm2966, %v4740, 0
        %v4794 = vsel %vm2966, %v4741, 0
        %v4797 = vsel %vm2966, %v4742, 0
        %4799 = vmatprep.subr.bf16.mxu0 0
        %4800 = vmatpush1.bf16.xpose.msra.mxu0 %v4776
        %4801 = vmatprep.subr.bf16.mxu0 0
        %4802 = vmatpush1.bf16.xpose.msra.mxu0 %v4779
        %4803 = vmatprep.subr.bf16.mxu0 0
        %4804 = vmatpush1.bf16.xpose.msra.mxu0 %v4782
        %4805 = vmatprep.subr.bf16.mxu0 0
        %4806 = vmatpush1.bf16.xpose.msra.mxu0 %v4785
        %4807 = vmatprep.subr.bf16.mxu0 0
        %4808 = vmatpush1.bf16.xpose.msra.mxu0 %v4788
        %4809 = vmatprep.subr.bf16.mxu0 0
        %4810 = vmatpush1.bf16.xpose.msra.mxu0 %v4791
        %4811 = vmatprep.subr.bf16.mxu0 0
        %4812 = vmatpush1.bf16.xpose.msra.mxu0 %v4794
        %4813 = vmatprep.subr.bf16.mxu0 0
        %4814 = vmatpush1.bf16.xpose.msra.mxu0 %v4797
        %4815 = vmatprep.subr.bf16.mxu0 0
        %4816 = vmatpush1.bf16.xpose.msra.mxu0 0
        %4817 = vmatprep.subr.bf16.mxu0 0
        %4818 = vmatpush1.bf16.xpose.msra.mxu0 0
        %4819 = vmatprep.subr.bf16.mxu0 0
        %4820 = vmatpush1.bf16.xpose.msra.mxu0 0
        %4821 = vmatprep.subr.bf16.mxu0 0
        %4822 = vmatpush1.bf16.xpose.msra.mxu0 0
        %4823 = vmatprep.subr.bf16.mxu0 0
        %4824 = vmatpush1.bf16.xpose.msra.mxu0 0
        %4825 = vmatprep.subr.bf16.mxu0 0
        %4826 = vmatpush1.bf16.xpose.msra.mxu0 0
        %4827 = vmatprep.subr.bf16.mxu0 0
        %4828 = vmatpush1.bf16.xpose.msra.mxu0 0
        %4829 = vmatprep.subr.bf16.mxu0 0
        %4830 = vmatpush1.bf16.xpose.msra.mxu0 0
        %4831 = vmatprep.mubr.bf16.mxu0 0
        %4832 = vmatmul.mubr.bf16.gmra.mrb[0].mxu0 %v4752
        %v4833 = vpop.f32.mrb[0].mxu0
        %v4834 = vadd.f32 0.0, %v4833
        %v4835 = vpop.f32.mrb[0].mxu0
        %v4836 = vpop.f32.mrb[0].mxu0
        %v4837 = vadd.f32 0.0, %v4836
        %v4838 = vpop.f32.mrb[0].mxu0
        %4839 = vmatprep.mubr.bf16.mxu0 0
        %4840 = vmatmul.mubr.bf16.gmra.mrb[0].mxu0 %v4755
        %v4841 = vpop.f32.mrb[0].mxu0
        %v4842 = vadd.f32 0.0, %v4841
        %v4843 = vpop.f32.mrb[0].mxu0
        %v4844 = vpop.f32.mrb[0].mxu0
        %v4845 = vadd.f32 0.0, %v4844
        %v4846 = vpop.f32.mrb[0].mxu0
        %4847 = vmatprep.mubr.bf16.mxu0 0
        %4848 = vmatmul.mubr.bf16.gmra.mrb[0].mxu0 %v4758
        %v4849 = vpop.f32.mrb[0].mxu0
        %v4850 = vadd.f32 0.0, %v4849
        %v4851 = vpop.f32.mrb[0].mxu0
        %v4852 = vpop.f32.mrb[0].mxu0
        %v4853 = vadd.f32 0.0, %v4852
        %v4854 = vpop.f32.mrb[0].mxu0
        %4855 = vmatprep.mubr.bf16.mxu0 0
        %4856 = vmatmul.mubr.bf16.gmra.mrb[0].mxu0 %v4761
        %v4857 = vpop.f32.mrb[0].mxu0
        %v4858 = vadd.f32 0.0, %v4857
        %v4859 = vpop.f32.mrb[0].mxu0
        %v4860 = vpop.f32.mrb[0].mxu0
        %v4861 = vadd.f32 0.0, %v4860
        %v4862 = vpop.f32.mrb[0].mxu0
        %4863 = vmatprep.mubr.bf16.mxu0 0
        %4864 = vmatmul.mubr.bf16.gmra.mrb[0].mxu0 %v4764
        %v4865 = vpop.f32.mrb[0].mxu0
        %v4866 = vadd.f32 0.0, %v4865
        %v4867 = vpop.f32.mrb[0].mxu0
        %v4868 = vpop.f32.mrb[0].mxu0
        %v4869 = vadd.f32 0.0, %v4868
        %v4870 = vpop.f32.mrb[0].mxu0
        %4871 = vmatprep.mubr.bf16.mxu0 0
        %4872 = vmatmul.mubr.bf16.gmra.mrb[0].mxu0 %v4767
        %v4873 = vpop.f32.mrb[0].mxu0
        %v4874 = vadd.f32 0.0, %v4873
        %v4875 = vpop.f32.mrb[0].mxu0
        %v4876 = vpop.f32.mrb[0].mxu0
        %v4877 = vadd.f32 0.0, %v4876
        %v4878 = vpop.f32.mrb[0].mxu0
        %4879 = vmatprep.mubr.bf16.mxu0 0
        %4880 = vmatmul.mubr.bf16.gmra.mrb[0].mxu0 %v4770
        %v4881 = vpop.f32.mrb[0].mxu0
        %v4882 = vadd.f32 0.0, %v4881
        %v4883 = vpop.f32.mrb[0].mxu0
        %v4884 = vpop.f32.mrb[0].mxu0
        %v4885 = vadd.f32 0.0, %v4884
        %v4886 = vpop.f32.mrb[0].mxu0
        %4887 = vmatprep.mubr.bf16.mxu0 0
        %4888 = vmatmul.mubr.bf16.gmra.mrb[0].mxu0 %v4773
        %v4889 = vpop.f32.mrb[0].mxu0
        %v4890 = vadd.f32 0.0, %v4889
        %v4891 = vpop.f32.mrb[0].mxu0
        %v4892 = vpop.f32.mrb[0].mxu0
        %v4893 = vadd.f32 0.0, %v4892
        %v4894 = vpop.f32.mrb[0].mxu0
        %4895 = vdwg.mxu0
        %v4896 = vsel %vm2926, %v4834, -1e+30
        %v4897 = vsel %vm2927, %v4837, -1e+30
        %v4898 = vsel %vm2928, %v4842, -1e+30
        %v4899 = vsel %vm2929, %v4845, -1e+30
        %v4900 = vsel %vm2930, %v4850, -1e+30
        %v4901 = vsel %vm2931, %v4853, -1e+30
        %v4902 = vsel %vm2932, %v4858, -1e+30
        %v4903 = vsel %vm2933, %v4861, -1e+30
        %v4904 = vsel %vm2934, %v4866, -1e+30
        %v4905 = vsel %vm2935, %v4869, -1e+30
        %v4906 = vsel %vm2936, %v4874, -1e+30
        %v4907 = vsel %vm2937, %v4877, -1e+30
        %v4908 = vsel %vm2938, %v4882, -1e+30
        %v4909 = vsel %vm2939, %v4885, -1e+30
        %v4910 = vsel %vm2940, %v4890, -1e+30
        %v4911 = vsel %vm2941, %v4893, -1e+30
        %4912 = vmax.xlane.f32.xlu0 %v4896
        %v4913 = vpop.xlane.xlu0 %4912
        %4914 = vmax.xlane.f32.xlu0 %v4897
        %v4915 = vpop.xlane.xlu0 %4914
        %4916 = vmax.xlane.f32.xlu0 %v4898
        %v4917 = vpop.xlane.xlu0 %4916
        %4918 = vmax.xlane.f32.xlu0 %v4899
        %v4919 = vpop.xlane.xlu0 %4918
        %4920 = vmax.xlane.f32.xlu0 %v4900
        %v4921 = vpop.xlane.xlu0 %4920
        %4922 = vmax.xlane.f32.xlu0 %v4901
        %v4923 = vpop.xlane.xlu0 %4922
        %4924 = vmax.xlane.f32.xlu0 %v4902
        %v4925 = vpop.xlane.xlu0 %4924
        %4926 = vmax.xlane.f32.xlu0 %v4903
        %v4927 = vpop.xlane.xlu0 %4926
        %4928 = vmax.xlane.f32.xlu0 %v4904
        %v4929 = vpop.xlane.xlu0 %4928
        %4930 = vmax.xlane.f32.xlu0 %v4905
        %v4931 = vpop.xlane.xlu0 %4930
        %4932 = vmax.xlane.f32.xlu0 %v4906
        %v4933 = vpop.xlane.xlu0 %4932
        %4934 = vmax.xlane.f32.xlu0 %v4907
        %v4935 = vpop.xlane.xlu0 %4934
        %4936 = vmax.xlane.f32.xlu0 %v4908
        %v4937 = vpop.xlane.xlu0 %4936
        %4938 = vmax.xlane.f32.xlu0 %v4909
        %v4939 = vpop.xlane.xlu0 %4938
        %4940 = vmax.xlane.f32.xlu0 %v4910
        %v4941 = vpop.xlane.xlu0 %4940
        %4942 = vmax.xlane.f32.xlu0 %v4911
        %v4943 = vpop.xlane.xlu0 %4942
        %v4944 = vsub.f32 %v4896, %v4913
        %v4945 = vsub.f32 %v4897, %v4915
        %v4946 = vsub.f32 %v4898, %v4917
        %v4947 = vsub.f32 %v4899, %v4919
        %v4948 = vsub.f32 %v4900, %v4921
        %v4949 = vsub.f32 %v4901, %v4923
        %v4950 = vsub.f32 %v4902, %v4925
        %v4951 = vsub.f32 %v4903, %v4927
        %v4952 = vsub.f32 %v4904, %v4929
        %v4953 = vsub.f32 %v4905, %v4931
        %v4954 = vsub.f32 %v4906, %v4933
        %v4955 = vsub.f32 %v4907, %v4935
        %v4956 = vsub.f32 %v4908, %v4937
        %v4957 = vsub.f32 %v4909, %v4939
        %v4958 = vsub.f32 %v4910, %v4941
        %v4959 = vsub.f32 %v4911, %v4943
        %v4960 = vmul.f32 %v4944, 1.442695
        %v4961 = vpow.pop %v4960
        %v4962 = vmul.f32 %v4945, 1.442695
        %v4963 = vpow.pop %v4962
        %v4964 = vmul.f32 %v4946, 1.442695
        %v4965 = vpow.pop %v4964
        %v4966 = vmul.f32 %v4947, 1.442695
        %v4967 = vpow.pop %v4966
        %v4968 = vmul.f32 %v4948, 1.442695
        %v4969 = vpow.pop %v4968
        %v4970 = vmul.f32 %v4949, 1.442695
        %v4971 = vpow.pop %v4970
        %v4972 = vmul.f32 %v4950, 1.442695
        %v4973 = vpow.pop %v4972
        %v4974 = vmul.f32 %v4951, 1.442695
        %v4975 = vpow.pop %v4974
        %v4976 = vmul.f32 %v4952, 1.442695
        %v4977 = vpow.pop %v4976
        %v4978 = vmul.f32 %v4953, 1.442695
        %v4979 = vpow.pop %v4978
        %v4980 = vmul.f32 %v4954, 1.442695
        %v4981 = vpow.pop %v4980
        %v4982 = vmul.f32 %v4955, 1.442695
        %v4983 = vpow.pop %v4982
        %v4984 = vmul.f32 %v4956, 1.442695
        %v4985 = vpow.pop %v4984
        %v4986 = vmul.f32 %v4957, 1.442695
        %v4987 = vpow.pop %v4986
        %v4988 = vmul.f32 %v4958, 1.442695
        %v4989 = vpow.pop %v4988
        %v4990 = vmul.f32 %v4959, 1.442695
        %v4991 = vpow.pop %v4990
        %4992 = vadd.xlane.f32.xlu0 %v4961
        %v4993 = vpop.xlane.xlu0 %4992
        %4994 = vadd.xlane.f32.xlu0 %v4963
        %v4995 = vpop.xlane.xlu0 %4994
        %4996 = vadd.xlane.f32.xlu0 %v4965
        %v4997 = vpop.xlane.xlu0 %4996
        %4998 = vadd.xlane.f32.xlu0 %v4967
        %v4999 = vpop.xlane.xlu0 %4998
        %5000 = vadd.xlane.f32.xlu0 %v4969
        %v5001 = vpop.xlane.xlu0 %5000
        %5002 = vadd.xlane.f32.xlu0 %v4971
        %v5003 = vpop.xlane.xlu0 %5002
        %5004 = vadd.xlane.f32.xlu0 %v4973
        %v5005 = vpop.xlane.xlu0 %5004
        %5006 = vadd.xlane.f32.xlu0 %v4975
        %v5007 = vpop.xlane.xlu0 %5006
        %5008 = vadd.xlane.f32.xlu0 %v4977
        %v5009 = vpop.xlane.xlu0 %5008
        %5010 = vadd.xlane.f32.xlu0 %v4979
        %v5011 = vpop.xlane.xlu0 %5010
        %5012 = vadd.xlane.f32.xlu0 %v4981
        %v5013 = vpop.xlane.xlu0 %5012
        %5014 = vadd.xlane.f32.xlu0 %v4983
        %v5015 = vpop.xlane.xlu0 %5014
        %5016 = vadd.xlane.f32.xlu0 %v4985
        %v5017 = vpop.xlane.xlu0 %5016
        %5018 = vadd.xlane.f32.xlu0 %v4987
        %v5019 = vpop.xlane.xlu0 %5018
        %5020 = vadd.xlane.f32.xlu0 %v4989
        %v5021 = vpop.xlane.xlu0 %5020
        %5022 = vadd.xlane.f32.xlu0 %v4991
        %v5023 = vpop.xlane.xlu0 %5022
        %v5024 = vrcp.pop %v4993
        %v5025 = vrcp.pop %v4995
        %v5026 = vrcp.pop %v4997
        %v5027 = vrcp.pop %v4999
        %v5028 = vrcp.pop %v5001
        %v5029 = vrcp.pop %v5003
        %v5030 = vrcp.pop %v5005
        %v5031 = vrcp.pop %v5007
        %v5032 = vrcp.pop %v5009
        %v5033 = vrcp.pop %v5011
        %v5034 = vrcp.pop %v5013
        %v5035 = vrcp.pop %v5015
        %v5036 = vrcp.pop %v5017
        %v5037 = vrcp.pop %v5019
        %v5038 = vrcp.pop %v5021
        %v5039 = vrcp.pop %v5023
        %v5040 = vmul.f32 %v4961, %v5024
        %v5041 = vmul.f32 %v4963, %v5025
        %v5042 = vmul.f32 %v4965, %v5026
        %v5043 = vmul.f32 %v4967, %v5027
        %v5044 = vmul.f32 %v4969, %v5028
        %v5045 = vmul.f32 %v4971, %v5029
        %v5046 = vmul.f32 %v4973, %v5030
        %v5047 = vmul.f32 %v4975, %v5031
        %v5048 = vmul.f32 %v4977, %v5032
        %v5049 = vmul.f32 %v4979, %v5033
        %v5050 = vmul.f32 %v4981, %v5034
        %v5051 = vmul.f32 %v4983, %v5035
        %v5052 = vmul.f32 %v4985, %v5036
        %v5053 = vmul.f32 %v4987, %v5037
        %v5054 = vmul.f32 %v4989, %v5038
        %v5055 = vmul.f32 %v4991, %v5039
        %v5056 = vpack.c.bf16 %v5041, %v5040
        %v5057 = vpack.c.bf16 %v5043, %v5042
        %v5058 = vpack.c.bf16 %v5045, %v5044
        %v5059 = vpack.c.bf16 %v5047, %v5046
        %v5060 = vpack.c.bf16 %v5049, %v5048
        %v5061 = vpack.c.bf16 %v5051, %v5050
        %v5062 = vpack.c.bf16 %v5053, %v5052
        %v5063 = vpack.c.bf16 %v5055, %v5054
        %5064 = vmatprep.subr.bf16.mxu0 0
        %5065 = vmatpush1.bf16.msra.mxu0 %v4743
        %5066 = vmatprep.subr.bf16.mxu0 0
        %5067 = vmatpush1.bf16.msra.mxu0 %v4744
        %5068 = vmatprep.subr.bf16.mxu0 0
        %5069 = vmatpush1.bf16.msra.mxu0 %v4745
        %5070 = vmatprep.subr.bf16.mxu0 0
        %5071 = vmatpush1.bf16.msra.mxu0 %v4746
        %5072 = vmatprep.subr.bf16.mxu0 0
        %5073 = vmatpush1.bf16.msra.mxu0 %v4747
        %5074 = vmatprep.subr.bf16.mxu0 0
        %5075 = vmatpush1.bf16.msra.mxu0 %v4748
        %5076 = vmatprep.subr.bf16.mxu0 0
        %5077 = vmatpush1.bf16.msra.mxu0 %v4749
        %5078 = vmatprep.subr.bf16.mxu0 0
        %5079 = vmatpush1.bf16.msra.mxu0 %v4750
        %5080 = vmatprep.subr.bf16.mxu0 0
        %5081 = vmatpush1.bf16.msra.mxu0 0
        %5082 = vmatprep.subr.bf16.mxu0 0
        %5083 = vmatpush1.bf16.msra.mxu0 0
        %5084 = vmatprep.subr.bf16.mxu0 0
        %5085 = vmatpush1.bf16.msra.mxu0 0
        %5086 = vmatprep.subr.bf16.mxu0 0
        %5087 = vmatpush1.bf16.msra.mxu0 0
        %5088 = vmatprep.subr.bf16.mxu0 0
        %5089 = vmatpush1.bf16.msra.mxu0 0
        %5090 = vmatprep.subr.bf16.mxu0 0
        %5091 = vmatpush1.bf16.msra.mxu0 0
        %5092 = vmatprep.subr.bf16.mxu0 0
        %5093 = vmatpush1.bf16.msra.mxu0 0
        %5094 = vmatprep.subr.bf16.mxu0 0
        %5095 = vmatpush1.bf16.msra.mxu0 0
        %5096 = vmatprep.mubr.bf16.mxu0 0
        %5097 = vmatmul.mubr.bf16.gmra.mrb[0].mxu0 %v5056
        %v5098 = vpop.f32.mrb[0].mxu0
        %v5099 = vadd.f32 0.0, %v5098
        %v5100 = vpop.f32.mrb[0].mxu0
        %v5101 = vpop.f32.mrb[0].mxu0
        %v5102 = vadd.f32 0.0, %v5101
        %v5103 = vpop.f32.mrb[0].mxu0
        %5104 = vmatprep.mubr.bf16.mxu0 0
        %5105 = vmatmul.mubr.bf16.gmra.mrb[0].mxu0 %v5057
        %v5106 = vpop.f32.mrb[0].mxu0
        %v5107 = vadd.f32 0.0, %v5106
        %v5108 = vpop.f32.mrb[0].mxu0
        %v5109 = vpop.f32.mrb[0].mxu0
        %v5110 = vadd.f32 0.0, %v5109
        %v5111 = vpop.f32.mrb[0].mxu0
        %5112 = vmatprep.mubr.bf16.mxu0 0
        %5113 = vmatmul.mubr.bf16.gmra.mrb[0].mxu0 %v5058
        %v5114 = vpop.f32.mrb[0].mxu0
        %v5115 = vadd.f32 0.0, %v5114
        %v5116 = vpop.f32.mrb[0].mxu0
        %v5117 = vpop.f32.mrb[0].mxu0
        %v5118 = vadd.f32 0.0, %v5117
        %v5119 = vpop.f32.mrb[0].mxu0
        %5120 = vmatprep.mubr.bf16.mxu0 0
        %5121 = vmatmul.mubr.bf16.gmra.mrb[0].mxu0 %v5059
        %v5122 = vpop.f32.mrb[0].mxu0
        %v5123 = vadd.f32 0.0, %v5122
        %v5124 = vpop.f32.mrb[0].mxu0
        %v5125 = vpop.f32.mrb[0].mxu0
        %v5126 = vadd.f32 0.0, %v5125
        %v5127 = vpop.f32.mrb[0].mxu0
        %5128 = vmatprep.mubr.bf16.mxu0 0
        %5129 = vmatmul.mubr.bf16.gmra.mrb[0].mxu0 %v5060
        %v5130 = vpop.f32.mrb[0].mxu0
        %v5131 = vadd.f32 0.0, %v5130
        %v5132 = vpop.f32.mrb[0].mxu0
        %v5133 = vpop.f32.mrb[0].mxu0
        %v5134 = vadd.f32 0.0, %v5133
        %v5135 = vpop.f32.mrb[0].mxu0
        %5136 = vmatprep.mubr.bf16.mxu0 0
        %5137 = vmatmul.mubr.bf16.gmra.mrb[0].mxu0 %v5061
        %v5138 = vpop.f32.mrb[0].mxu0
        %v5139 = vadd.f32 0.0, %v5138
        %v5140 = vpop.f32.mrb[0].mxu0
        %v5141 = vpop.f32.mrb[0].mxu0
        %v5142 = vadd.f32 0.0, %v5141
        %v5143 = vpop.f32.mrb[0].mxu0
        %5144 = vmatprep.mubr.bf16.mxu0 0
        %5145 = vmatmul.mubr.bf16.gmra.mrb[0].mxu0 %v5062
        %v5146 = vpop.f32.mrb[0].mxu0
        %v5147 = vadd.f32 0.0, %v5146
        %v5148 = vpop.f32.mrb[0].mxu0
        %v5149 = vpop.f32.mrb[0].mxu0
        %v5150 = vadd.f32 0.0, %v5149
        %v5151 = vpop.f32.mrb[0].mxu0
        %5152 = vmatprep.mubr.bf16.mxu0 0
        %5153 = vmatmul.mubr.bf16.gmra.mrb[0].mxu0 %v5063
        %v5154 = vpop.f32.mrb[0].mxu0
        %v5155 = vadd.f32 0.0, %v5154
        %v5156 = vpop.f32.mrb[0].mxu0
        %v5157 = vpop.f32.mrb[0].mxu0
        %v5158 = vadd.f32 0.0, %v5157
        %v5159 = vpop.f32.mrb[0].mxu0
        %5160 = vdwg.mxu0
        %v5161 = vpack.c.bf16 %v5102, %v5099
        %v5162 = vpack.c.bf16 %v5110, %v5107
        %v5163 = vpack.c.bf16 %v5118, %v5115
        %v5164 = vpack.c.bf16 %v5126, %v5123
        %v5165 = vpack.c.bf16 %v5134, %v5131
        %v5166 = vpack.c.bf16 %v5142, %v5139
        %v5167 = vpack.c.bf16 %v5150, %v5147
        %v5168 = vpack.c.bf16 %v5158, %v5155
        %v5169 = vld [vmem:[#allocation9 + $0xc0] sm:$0xff]
        %v5170 = vld [vmem:[#allocation9 + $0xc8] sm:$0xf]
        %v5171 = vld [vmem:[#allocation9 + $0xcc] sm:$0xff]
        %v5172 = vld [vmem:[#allocation9 + $0xd4] sm:$0xf]
        %v5173 = vld [vmem:[#allocation9 + $0xd8] sm:$0xff]
        %v5174 = vld [vmem:[#allocation9 + $0xe0] sm:$0xf]
        %v5175 = vld [vmem:[#allocation9 + $0xe4] sm:$0xff]
        %v5176 = vld [vmem:[#allocation9 + $0xec] sm:$0xf]
        %v5177 = vld [vmem:[#allocation9 + $0xf0] sm:$0xff]
        %v5178 = vld [vmem:[#allocation9 + $0xf8] sm:$0xf]
        %v5179 = vld [vmem:[#allocation9 + $0xfc] sm:$0xff]
        %v5180 = vld [vmem:[#allocation9 + $0x104] sm:$0xf]
        %v5181 = vld [vmem:[#allocation9 + $0x108] sm:$0xff]
        %v5182 = vld [vmem:[#allocation9 + $0x110] sm:$0xf]
        %v5183 = vld [vmem:[#allocation9 + $0x114] sm:$0xff]
        %v5184 = vld [vmem:[#allocation9 + $0x11c] sm:$0xf]
        %v5201 = vunpack.c.l.b16 %v5169
        %v5202 = vunpack.c.h.b16 %v5169
        %v5203 = vunpack.c.l.b16 %v5170
        %v5204 = vunpack.c.l.b16 %v5171
        %v5205 = vunpack.c.h.b16 %v5171
        %v5206 = vunpack.c.l.b16 %v5172
        %v5207 = vunpack.c.l.b16 %v5173
        %v5208 = vunpack.c.h.b16 %v5173
        %v5209 = vunpack.c.l.b16 %v5174
        %v5210 = vunpack.c.l.b16 %v5175
        %v5211 = vunpack.c.h.b16 %v5175
        %v5212 = vunpack.c.l.b16 %v5176
        %v5213 = vunpack.c.l.b16 %v5177
        %v5214 = vunpack.c.h.b16 %v5177
        %v5215 = vunpack.c.l.b16 %v5178
        %v5216 = vunpack.c.l.b16 %v5179
        %v5217 = vunpack.c.h.b16 %v5179
        %v5218 = vunpack.c.l.b16 %v5180
        %v5219 = vunpack.c.l.b16 %v5181
        %v5220 = vunpack.c.h.b16 %v5181
        %v5221 = vunpack.c.l.b16 %v5182
        %v5222 = vunpack.c.l.b16 %v5183
        %v5223 = vunpack.c.h.b16 %v5183
        %v5224 = vunpack.c.l.b16 %v5184
        %v5225 = vpack.c.b16 %v5204, %v5201
        %v5226 = vpack.c.b16 %v5205, %v5202
        %v5227 = vpack.c.b16 %v5206, %v5203
        %v5228 = vpack.c.b16 %v5210, %v5207
        %v5229 = vpack.c.b16 %v5211, %v5208
        %v5230 = vpack.c.b16 %v5212, %v5209
        %v5231 = vpack.c.b16 %v5216, %v5213
        %v5232 = vpack.c.b16 %v5217, %v5214
        %v5233 = vpack.c.b16 %v5218, %v5215
        %v5234 = vpack.c.b16 %v5222, %v5219
        %v5235 = vpack.c.b16 %v5223, %v5220
        %v5236 = vpack.c.b16 %v5224, %v5221
        %v5250 = vsel %vm2966, %v5161, 0
        %v5253 = vsel %vm2966, %v5162, 0
        %v5256 = vsel %vm2966, %v5163, 0
        %v5259 = vsel %vm2966, %v5164, 0
        %v5262 = vsel %vm2966, %v5165, 0
        %v5265 = vsel %vm2966, %v5166, 0
        %v5268 = vsel %vm2966, %v5167, 0
        %v5271 = vsel %vm2966, %v5168, 0
        %5273 = vmatprep.subr.bf16.mxu0 %v5226
        %5274 = vmatpush1.bf16.msra.mxu0 %v5225
        %5275 = vmatprep.subr.bf16.mxu0 %v5229
        %5276 = vmatpush1.bf16.msra.mxu0 %v5228
        %5277 = vmatprep.subr.bf16.mxu0 %v5232
        %5278 = vmatpush1.bf16.msra.mxu0 %v5231
        %5279 = vmatprep.subr.bf16.mxu0 %v5235
        %5280 = vmatpush1.bf16.msra.mxu0 %v5234
        %5281 = vmatprep.subr.bf16.mxu0 0
        %5282 = vmatpush1.bf16.msra.mxu0 0
        %5283 = vmatprep.subr.bf16.mxu0 0
        %5284 = vmatpush1.bf16.msra.mxu0 0
        %5285 = vmatprep.subr.bf16.mxu0 0
        %5286 = vmatpush1.bf16.msra.mxu0 0
        %5287 = vmatprep.subr.bf16.mxu0 0
        %5288 = vmatpush1.bf16.msra.mxu0 0
        %5289 = vmatprep.subr.bf16.mxu0 0
        %5290 = vmatpush1.bf16.msra.mxu0 0
        %5291 = vmatprep.subr.bf16.mxu0 0
        %5292 = vmatpush1.bf16.msra.mxu0 0
        %5293 = vmatprep.subr.bf16.mxu0 0
        %5294 = vmatpush1.bf16.msra.mxu0 0
        %5295 = vmatprep.subr.bf16.mxu0 0
        %5296 = vmatpush1.bf16.msra.mxu0 0
        %5297 = vmatprep.subr.bf16.mxu0 0
        %5298 = vmatpush1.bf16.msra.mxu0 0
        %5299 = vmatprep.subr.bf16.mxu0 0
        %5300 = vmatpush1.bf16.msra.mxu0 0
        %5301 = vmatprep.subr.bf16.mxu0 0
        %5302 = vmatpush1.bf16.msra.mxu0 0
        %5303 = vmatprep.subr.bf16.mxu0 0
        %5304 = vmatpush1.bf16.msra.mxu0 0
        %5305 = vmatprep.mubr.bf16.mxu0 0
        %5306 = vmatmul.mubr.bf16.gmra.mrb[0].mxu0 %v5250
        %v5307 = vpop.f32.mrb[0].mxu0
        %v5308 = vadd.f32 0.0, %v5307
        %v5309 = vpop.f32.mrb[0].mxu0
        %v5310 = vadd.f32 0.0, %v5309
        %v5311 = vpop.f32.mrb[0].mxu0
        %v5312 = vadd.f32 0.0, %v5311
        %v5313 = vpop.f32.mrb[0].mxu0
        %v5314 = vadd.f32 0.0, %v5313
        %5315 = vmatprep.mubr.bf16.mxu0 0
        %5316 = vmatmul.mubr.bf16.gmra.mrb[0].mxu0 %v5253
        %v5317 = vpop.f32.mrb[0].mxu0
        %v5318 = vadd.f32 0.0, %v5317
        %v5319 = vpop.f32.mrb[0].mxu0
        %v5320 = vadd.f32 0.0, %v5319
        %v5321 = vpop.f32.mrb[0].mxu0
        %v5322 = vadd.f32 0.0, %v5321
        %v5323 = vpop.f32.mrb[0].mxu0
        %v5324 = vadd.f32 0.0, %v5323
        %5325 = vmatprep.mubr.bf16.mxu0 0
        %5326 = vmatmul.mubr.bf16.gmra.mrb[0].mxu0 %v5256
        %v5327 = vpop.f32.mrb[0].mxu0
        %v5328 = vadd.f32 0.0, %v5327
        %v5329 = vpop.f32.mrb[0].mxu0
        %v5330 = vadd.f32 0.0, %v5329
        %v5331 = vpop.f32.mrb[0].mxu0
        %v5332 = vadd.f32 0.0, %v5331
        %v5333 = vpop.f32.mrb[0].mxu0
        %v5334 = vadd.f32 0.0, %v5333
        %5335 = vmatprep.mubr.bf16.mxu0 0
        %5336 = vmatmul.mubr.bf16.gmra.mrb[0].mxu0 %v5259
        %v5337 = vpop.f32.mrb[0].mxu0
        %v5338 = vadd.f32 0.0, %v5337
        %v5339 = vpop.f32.mrb[0].mxu0
        %v5340 = vadd.f32 0.0, %v5339
        %v5341 = vpop.f32.mrb[0].mxu0
        %v5342 = vadd.f32 0.0, %v5341
        %v5343 = vpop.f32.mrb[0].mxu0
        %v5344 = vadd.f32 0.0, %v5343
        %5345 = vmatprep.mubr.bf16.mxu0 0
        %5346 = vmatmul.mubr.bf16.gmra.mrb[0].mxu0 %v5262
        %v5347 = vpop.f32.mrb[0].mxu0
        %v5348 = vadd.f32 0.0, %v5347
        %v5349 = vpop.f32.mrb[0].mxu0
        %v5350 = vadd.f32 0.0, %v5349
        %v5351 = vpop.f32.mrb[0].mxu0
        %v5352 = vadd.f32 0.0, %v5351
        %v5353 = vpop.f32.mrb[0].mxu0
        %v5354 = vadd.f32 0.0, %v5353
        %5355 = vmatprep.mubr.bf16.mxu0 0
        %5356 = vmatmul.mubr.bf16.gmra.mrb[0].mxu0 %v5265
        %v5357 = vpop.f32.mrb[0].mxu0
        %v5358 = vadd.f32 0.0, %v5357
        %v5359 = vpop.f32.mrb[0].mxu0
        %v5360 = vadd.f32 0.0, %v5359
        %v5361 = vpop.f32.mrb[0].mxu0
        %v5362 = vadd.f32 0.0, %v5361
        %v5363 = vpop.f32.mrb[0].mxu0
        %v5364 = vadd.f32 0.0, %v5363
        %5365 = vmatprep.mubr.bf16.mxu0 0
        %5366 = vmatmul.mubr.bf16.gmra.mrb[0].mxu0 %v5268
        %v5367 = vpop.f32.mrb[0].mxu0
        %v5368 = vadd.f32 0.0, %v5367
        %v5369 = vpop.f32.mrb[0].mxu0
        %v5370 = vadd.f32 0.0, %v5369
        %v5371 = vpop.f32.mrb[0].mxu0
        %v5372 = vadd.f32 0.0, %v5371
        %v5373 = vpop.f32.mrb[0].mxu0
        %v5374 = vadd.f32 0.0, %v5373
        %5375 = vmatprep.mubr.bf16.mxu0 0
        %5376 = vmatmul.mubr.bf16.gmra.mrb[0].mxu0 %v5271
        %v5377 = vpop.f32.mrb[0].mxu0
        %v5378 = vadd.f32 0.0, %v5377
        %v5379 = vpop.f32.mrb[0].mxu0
        %v5380 = vadd.f32 0.0, %v5379
        %v5381 = vpop.f32.mrb[0].mxu0
        %v5382 = vadd.f32 0.0, %v5381
        %v5383 = vpop.f32.mrb[0].mxu0
        %v5384 = vadd.f32 0.0, %v5383
        %5385 = vdwg.mxu0
        %5386 = vmatprep.subr.bf16.mxu0 0
        %5387 = vmatpush1.bf16.msra.mxu0 %v5227
        %5388 = vmatprep.subr.bf16.mxu0 0
        %5389 = vmatpush1.bf16.msra.mxu0 %v5230
        %5390 = vmatprep.subr.bf16.mxu0 0
        %5391 = vmatpush1.bf16.msra.mxu0 %v5233
        %5392 = vmatprep.subr.bf16.mxu0 0
        %5393 = vmatpush1.bf16.msra.mxu0 %v5236
        %5394 = vmatprep.subr.bf16.mxu0 0
        %5395 = vmatpush1.bf16.msra.mxu0 0
        %5396 = vmatprep.subr.bf16.mxu0 0
        %5397 = vmatpush1.bf16.msra.mxu0 0
        %5398 = vmatprep.subr.bf16.mxu0 0
        %5399 = vmatpush1.bf16.msra.mxu0 0
        %5400 = vmatprep.subr.bf16.mxu0 0
        %5401 = vmatpush1.bf16.msra.mxu0 0
        %5402 = vmatprep.subr.bf16.mxu0 0
        %5403 = vmatpush1.bf16.msra.mxu0 0
        %5404 = vmatprep.subr.bf16.mxu0 0
        %5405 = vmatpush1.bf16.msra.mxu0 0
        %5406 = vmatprep.subr.bf16.mxu0 0
        %5407 = vmatpush1.bf16.msra.mxu0 0
        %5408 = vmatprep.subr.bf16.mxu0 0
        %5409 = vmatpush1.bf16.msra.mxu0 0
        %5410 = vmatprep.subr.bf16.mxu0 0
        %5411 = vmatpush1.bf16.msra.mxu0 0
        %5412 = vmatprep.subr.bf16.mxu0 0
        %5413 = vmatpush1.bf16.msra.mxu0 0
        %5414 = vmatprep.subr.bf16.mxu0 0
        %5415 = vmatpush1.bf16.msra.mxu0 0
        %5416 = vmatprep.subr.bf16.mxu0 0
        %5417 = vmatpush1.bf16.msra.mxu0 0
        %5418 = vmatprep.mubr.bf16.mxu0 0
        %5419 = vmatmul.mubr.bf16.gmra.mrb[0].mxu0 %v5250
        %v5420 = vpop.f32.mrb[0].mxu0
        %v5421 = vadd.f32 0.0, %v5420
        %v5422 = vpop.f32.mrb[0].mxu0
        %v5423 = vpop.f32.mrb[0].mxu0
        %v5424 = vadd.f32 0.0, %v5423
        %v5425 = vpop.f32.mrb[0].mxu0
        %5426 = vmatprep.mubr.bf16.mxu0 0
        %5427 = vmatmul.mubr.bf16.gmra.mrb[0].mxu0 %v5253
        %v5428 = vpop.f32.mrb[0].mxu0
        %v5429 = vadd.f32 0.0, %v5428
        %v5430 = vpop.f32.mrb[0].mxu0
        %v5431 = vpop.f32.mrb[0].mxu0
        %v5432 = vadd.f32 0.0, %v5431
        %v5433 = vpop.f32.mrb[0].mxu0
        %5434 = vmatprep.mubr.bf16.mxu0 0
        %5435 = vmatmul.mubr.bf16.gmra.mrb[0].mxu0 %v5256
        %v5436 = vpop.f32.mrb[0].mxu0
        %v5437 = vadd.f32 0.0, %v5436
        %v5438 = vpop.f32.mrb[0].mxu0
        %v5439 = vpop.f32.mrb[0].mxu0
        %v5440 = vadd.f32 0.0, %v5439
        %v5441 = vpop.f32.mrb[0].mxu0
        %5442 = vmatprep.mubr.bf16.mxu0 0
        %5443 = vmatmul.mubr.bf16.gmra.mrb[0].mxu0 %v5259
        %v5444 = vpop.f32.mrb[0].mxu0
        %v5445 = vadd.f32 0.0, %v5444
        %v5446 = vpop.f32.mrb[0].mxu0
        %v5447 = vpop.f32.mrb[0].mxu0
        %v5448 = vadd.f32 0.0, %v5447
        %v5449 = vpop.f32.mrb[0].mxu0
        %5450 = vmatprep.mubr.bf16.mxu0 0
        %5451 = vmatmul.mubr.bf16.gmra.mrb[0].mxu0 %v5262
        %v5452 = vpop.f32.mrb[0].mxu0
        %v5453 = vadd.f32 0.0, %v5452
        %v5454 = vpop.f32.mrb[0].mxu0
        %v5455 = vpop.f32.mrb[0].mxu0
        %v5456 = vadd.f32 0.0, %v5455
        %v5457 = vpop.f32.mrb[0].mxu0
        %5458 = vmatprep.mubr.bf16.mxu0 0
        %5459 = vmatmul.mubr.bf16.gmra.mrb[0].mxu0 %v5265
        %v5460 = vpop.f32.mrb[0].mxu0
        %v5461 = vadd.f32 0.0, %v5460
        %v5462 = vpop.f32.mrb[0].mxu0
        %v5463 = vpop.f32.mrb[0].mxu0
        %v5464 = vadd.f32 0.0, %v5463
        %v5465 = vpop.f32.mrb[0].mxu0
        %5466 = vmatprep.mubr.bf16.mxu0 0
        %5467 = vmatmul.mubr.bf16.gmra.mrb[0].mxu0 %v5268
        %v5468 = vpop.f32.mrb[0].mxu0
        %v5469 = vadd.f32 0.0, %v5468
        %v5470 = vpop.f32.mrb[0].mxu0
        %v5471 = vpop.f32.mrb[0].mxu0
        %v5472 = vadd.f32 0.0, %v5471
        %v5473 = vpop.f32.mrb[0].mxu0
        %5474 = vmatprep.mubr.bf16.mxu0 0
        %5475 = vmatmul.mubr.bf16.gmra.mrb[0].mxu0 %v5271
        %v5476 = vpop.f32.mrb[0].mxu0
        %v5477 = vadd.f32 0.0, %v5476
        %v5478 = vpop.f32.mrb[0].mxu0
        %v5479 = vpop.f32.mrb[0].mxu0
        %v5480 = vadd.f32 0.0, %v5479
        %v5481 = vpop.f32.mrb[0].mxu0
        %5482 = vdwg.mxu0
        %v5483 = vld [vmem:[#allocation3] sm:$0xff]
        %v5484 = vld [vmem:[#allocation3 + $0x8] sm:$0xff]
        %v5485 = vld [vmem:[#allocation3 + $0x10] sm:$0xff]
        %v5486 = vld [vmem:[#allocation3 + $0x18] sm:$0xff]
        %v5487 = vld [vmem:[#allocation3 + $0x20] sm:$0xff]
        %v5488 = vld [vmem:[#allocation3 + $0x28] sm:$0xff]
        %v5489 = vld [vmem:[#allocation3 + $0x30] sm:$0xff]
        %v5490 = vld [vmem:[#allocation3 + $0x38] sm:$0xff]
        %v5491 = vld [vmem:[#allocation3 + $0x40] sm:$0xff]
        %v5492 = vld [vmem:[#allocation3 + $0x48] sm:$0xff]
        %v5493 = vld [vmem:[#allocation3 + $0x50] sm:$0xff]
        %v5494 = vld [vmem:[#allocation3 + $0x58] sm:$0xff]
        %v5495 = vld [vmem:[#allocation3 + $0x60] sm:$0xff]
        %v5496 = vld [vmem:[#allocation3 + $0x68] sm:$0xff]
        %v5497 = vld [vmem:[#allocation3 + $0x70] sm:$0xff]
        %v5498 = vld [vmem:[#allocation3 + $0x78] sm:$0xff]
        %v5499 = vld [vmem:[#allocation3 + $0x80] sm:$0xff]
        %v5500 = vld [vmem:[#allocation3 + $0x88] sm:$0xff]
        %v5501 = vld [vmem:[#allocation3 + $0x90] sm:$0xff]
        %v5502 = vld [vmem:[#allocation3 + $0x98] sm:$0xff]
        %v5503 = vld [vmem:[#allocation3 + $0xa0] sm:$0xff]
        %v5504 = vld [vmem:[#allocation3 + $0xa8] sm:$0xff]
        %v5505 = vld [vmem:[#allocation3 + $0xb0] sm:$0xff]
        %v5506 = vld [vmem:[#allocation3 + $0xb8] sm:$0xff]
        %v5507 = vld [vmem:[#allocation3 + $0xc0] sm:$0xff]
        %v5508 = vld [vmem:[#allocation3 + $0xc8] sm:$0xff]
        %v5509 = vld [vmem:[#allocation3 + $0xd0] sm:$0xff]
        %v5510 = vld [vmem:[#allocation3 + $0xd8] sm:$0xff]
        %v5511 = vld [vmem:[#allocation3 + $0xe0] sm:$0xff]
        %v5512 = vld [vmem:[#allocation3 + $0xe8] sm:$0xff]
        %v5513 = vld [vmem:[#allocation3 + $0xf0] sm:$0xff]
        %v5514 = vld [vmem:[#allocation3 + $0xf8] sm:$0xff]
        %v5515 = vld [vmem:[#allocation3 + $0x100] sm:$0xff]
        %v5516 = vld [vmem:[#allocation3 + $0x108] sm:$0xff]
        %v5517 = vld [vmem:[#allocation3 + $0x110] sm:$0xff]
        %v5518 = vld [vmem:[#allocation3 + $0x118] sm:$0xff]
        %v5519 = vld [vmem:[#allocation3 + $0x120] sm:$0xff]
        %v5520 = vld [vmem:[#allocation3 + $0x128] sm:$0xff]
        %v5521 = vld [vmem:[#allocation3 + $0x130] sm:$0xff]
        %v5522 = vld [vmem:[#allocation3 + $0x138] sm:$0xff]
        %v5523 = vld [vmem:[#allocation3 + $0x140] sm:$0xff]
        %v5524 = vld [vmem:[#allocation3 + $0x148] sm:$0xff]
        %v5525 = vld [vmem:[#allocation3 + $0x150] sm:$0xff]
        %v5526 = vld [vmem:[#allocation3 + $0x158] sm:$0xff]
        %v5527 = vld [vmem:[#allocation3 + $0x160] sm:$0xff]
        %v5528 = vld [vmem:[#allocation3 + $0x168] sm:$0xff]
        %v5529 = vld [vmem:[#allocation3 + $0x170] sm:$0xff]
        %v5530 = vld [vmem:[#allocation3 + $0x178] sm:$0xff]
        %v5531 = vadd.f32 %v5483, %v5308
        %v5532 = vadd.f32 %v5484, %v5310
        %v5533 = vadd.f32 %v5485, %v5421
        %v5534 = vadd.f32 %v5486, %v5312
        %v5535 = vadd.f32 %v5487, %v5314
        %v5536 = vadd.f32 %v5488, %v5424
        %v5537 = vadd.f32 %v5489, %v5318
        %v5538 = vadd.f32 %v5490, %v5320
        %v5539 = vadd.f32 %v5491, %v5429
        %v5540 = vadd.f32 %v5492, %v5322
        %v5541 = vadd.f32 %v5493, %v5324
        %v5542 = vadd.f32 %v5494, %v5432
        %v5543 = vadd.f32 %v5495, %v5328
        %v5544 = vadd.f32 %v5496, %v5330
        %v5545 = vadd.f32 %v5497, %v5437
        %v5546 = vadd.f32 %v5498, %v5332
        %v5547 = vadd.f32 %v5499, %v5334
        %v5548 = vadd.f32 %v5500, %v5440
        %v5549 = vadd.f32 %v5501, %v5338
        %v5550 = vadd.f32 %v5502, %v5340
        %v5551 = vadd.f32 %v5503, %v5445
        %v5552 = vadd.f32 %v5504, %v5342
        %v5553 = vadd.f32 %v5505, %v5344
        %v5554 = vadd.f32 %v5506, %v5448
        %v5555 = vadd.f32 %v5507, %v5348
        %v5556 = vadd.f32 %v5508, %v5350
        %v5557 = vadd.f32 %v5509, %v5453
        %v5558 = vadd.f32 %v5510, %v5352
        %v5559 = vadd.f32 %v5511, %v5354
        %v5560 = vadd.f32 %v5512, %v5456
        %v5561 = vadd.f32 %v5513, %v5358
        %v5562 = vadd.f32 %v5514, %v5360
        %v5563 = vadd.f32 %v5515, %v5461
        %v5564 = vadd.f32 %v5516, %v5362
        %v5565 = vadd.f32 %v5517, %v5364
        %v5566 = vadd.f32 %v5518, %v5464
        %v5567 = vadd.f32 %v5519, %v5368
        %v5568 = vadd.f32 %v5520, %v5370
        %v5569 = vadd.f32 %v5521, %v5469
        %v5570 = vadd.f32 %v5522, %v5372
        %v5571 = vadd.f32 %v5523, %v5374
        %v5572 = vadd.f32 %v5524, %v5472
        %v5573 = vadd.f32 %v5525, %v5378
        %v5574 = vadd.f32 %v5526, %v5380
        %v5575 = vadd.f32 %v5527, %v5477
        %v5576 = vadd.f32 %v5528, %v5382
        %v5577 = vadd.f32 %v5529, %v5384
        %v5578 = vadd.f32 %v5530, %v5480
        %5579 = vst [vmem:[#allocation3] sm:$0xff] %v5531
        %5580 = vst [vmem:[#allocation3 + $0x8] sm:$0xff] %v5532
        %5581 = vst [vmem:[#allocation3 + $0x10] sm:$0xff] %v5533
        %5582 = vst [vmem:[#allocation3 + $0x18] sm:$0xff] %v5534
        %5583 = vst [vmem:[#allocation3 + $0x20] sm:$0xff] %v5535
        %5584 = vst [vmem:[#allocation3 + $0x28] sm:$0xff] %v5536
        %5585 = vst [vmem:[#allocation3 + $0x30] sm:$0xff] %v5537
        %5586 = vst [vmem:[#allocation3 + $0x38] sm:$0xff] %v5538
        %5587 = vst [vmem:[#allocation3 + $0x40] sm:$0xff] %v5539
        %5588 = vst [vmem:[#allocation3 + $0x48] sm:$0xff] %v5540
        %5589 = vst [vmem:[#allocation3 + $0x50] sm:$0xff] %v5541
        %5590 = vst [vmem:[#allocation3 + $0x58] sm:$0xff] %v5542
        %5591 = vst [vmem:[#allocation3 + $0x60] sm:$0xff] %v5543
        %5592 = vst [vmem:[#allocation3 + $0x68] sm:$0xff] %v5544
        %5593 = vst [vmem:[#allocation3 + $0x70] sm:$0xff] %v5545
        %5594 = vst [vmem:[#allocation3 + $0x78] sm:$0xff] %v5546
        %5595 = vst [vmem:[#allocation3 + $0x80] sm:$0xff] %v5547
        %5596 = vst [vmem:[#allocation3 + $0x88] sm:$0xff] %v5548
        %5597 = vst [vmem:[#allocation3 + $0x90] sm:$0xff] %v5549
        %5598 = vst [vmem:[#allocation3 + $0x98] sm:$0xff] %v5550
        %5599 = vst [vmem:[#allocation3 + $0xa0] sm:$0xff] %v5551
        %5600 = vst [vmem:[#allocation3 + $0xa8] sm:$0xff] %v5552
        %5601 = vst [vmem:[#allocation3 + $0xb0] sm:$0xff] %v5553
        %5602 = vst [vmem:[#allocation3 + $0xb8] sm:$0xff] %v5554
        %5603 = vst [vmem:[#allocation3 + $0xc0] sm:$0xff] %v5555
        %5604 = vst [vmem:[#allocation3 + $0xc8] sm:$0xff] %v5556
        %5605 = vst [vmem:[#allocation3 + $0xd0] sm:$0xff] %v5557
        %5606 = vst [vmem:[#allocation3 + $0xd8] sm:$0xff] %v5558
        %5607 = vst [vmem:[#allocation3 + $0xe0] sm:$0xff] %v5559
        %5608 = vst [vmem:[#allocation3 + $0xe8] sm:$0xff] %v5560
        %5609 = vst [vmem:[#allocation3 + $0xf0] sm:$0xff] %v5561
        %5610 = vst [vmem:[#allocation3 + $0xf8] sm:$0xff] %v5562
        %5611 = vst [vmem:[#allocation3 + $0x100] sm:$0xff] %v5563
        %5612 = vst [vmem:[#allocation3 + $0x108] sm:$0xff] %v5564
        %5613 = vst [vmem:[#allocation3 + $0x110] sm:$0xff] %v5565
        %5614 = vst [vmem:[#allocation3 + $0x118] sm:$0xff] %v5566
        %5615 = vst [vmem:[#allocation3 + $0x120] sm:$0xff] %v5567
        %5616 = vst [vmem:[#allocation3 + $0x128] sm:$0xff] %v5568
        %5617 = vst [vmem:[#allocation3 + $0x130] sm:$0xff] %v5569
        %5618 = vst [vmem:[#allocation3 + $0x138] sm:$0xff] %v5570
        %5619 = vst [vmem:[#allocation3 + $0x140] sm:$0xff] %v5571
        %5620 = vst [vmem:[#allocation3 + $0x148] sm:$0xff] %v5572
        %5621 = vst [vmem:[#allocation3 + $0x150] sm:$0xff] %v5573
        %5622 = vst [vmem:[#allocation3 + $0x158] sm:$0xff] %v5574
        %5623 = vst [vmem:[#allocation3 + $0x160] sm:$0xff] %v5575
        %5624 = vst [vmem:[#allocation3 + $0x168] sm:$0xff] %v5576
        %5625 = vst [vmem:[#allocation3 + $0x170] sm:$0xff] %v5577
        %5626 = vst [vmem:[#allocation3 + $0x178] sm:$0xff] %v5578
        %v5627 = vld [vmem:[#allocation2 + $0x8] sm:$0xff]
        %v5628 = vld [vmem:[#allocation2 + $0x50] sm:$0xff]
        %v5629 = vld [vmem:[#allocation2 + $0x98] sm:$0xff]
        %v5630 = vld [vmem:[#allocation2 + $0xe0] sm:$0xff]
        %v5631 = vld [vmem:[#allocation2 + $0x128] sm:$0xff]
        %v5632 = vld [vmem:[#allocation2 + $0x170] sm:$0xff]
        %v5633 = vld [vmem:[#allocation2 + $0x1b8] sm:$0xff]
        %v5634 = vld [vmem:[#allocation2 + $0x200] sm:$0xff]
        %v5635 = vld [vmem:[#allocation2 + $0x20] sm:$0xff]
        %v5636 = vld [vmem:[#allocation2 + $0x68] sm:$0xff]
        %v5637 = vld [vmem:[#allocation2 + $0xb0] sm:$0xff]
        %v5638 = vld [vmem:[#allocation2 + $0xf8] sm:$0xff]
        %v5639 = vld [vmem:[#allocation2 + $0x140] sm:$0xff]
        %v5640 = vld [vmem:[#allocation2 + $0x188] sm:$0xff]
        %v5641 = vld [vmem:[#allocation2 + $0x1d0] sm:$0xff]
        %v5642 = vld [vmem:[#allocation2 + $0x218] sm:$0xff]
        %v5643 = vld [vmem:[#allocation2 + $0x38] sm:$0xff]
        %v5644 = vld [vmem:[#allocation2 + $0x80] sm:$0xff]
        %v5645 = vld [vmem:[#allocation2 + $0xc8] sm:$0xff]
        %v5646 = vld [vmem:[#allocation2 + $0x110] sm:$0xff]
        %v5647 = vld [vmem:[#allocation2 + $0x158] sm:$0xff]
        %v5648 = vld [vmem:[#allocation2 + $0x1a0] sm:$0xff]
        %v5649 = vld [vmem:[#allocation2 + $0x1e8] sm:$0xff]
        %v5650 = vld [vmem:[#allocation2 + $0x230] sm:$0xff]
        %5659 = vrot.lane.b32.xlu0 %v5627, 64
        %v5660 = vpop.permute.xlu0 %5659
        %5661 = vrot.lane.b32.xlu0 %v5628, 64
        %v5662 = vpop.permute.xlu0 %5661
        %5663 = vrot.lane.b32.xlu0 %v5629, 64
        %v5664 = vpop.permute.xlu0 %5663
        %5665 = vrot.lane.b32.xlu0 %v5630, 64
        %v5666 = vpop.permute.xlu0 %5665
        %5667 = vrot.lane.b32.xlu0 %v5631, 64
        %v5668 = vpop.permute.xlu0 %5667
        %5669 = vrot.lane.b32.xlu0 %v5632, 64
        %v5670 = vpop.permute.xlu0 %5669
        %5671 = vrot.lane.b32.xlu0 %v5633, 64
        %v5672 = vpop.permute.xlu0 %5671
        %5673 = vrot.lane.b32.xlu0 %v5634, 64
        %v5674 = vpop.permute.xlu0 %5673
        %5683 = vrot.lane.b32.xlu0 %v5635, 64
        %v5684 = vpop.permute.xlu0 %5683
        %5685 = vrot.lane.b32.xlu0 %v5636, 64
        %v5686 = vpop.permute.xlu0 %5685
        %5687 = vrot.lane.b32.xlu0 %v5637, 64
        %v5688 = vpop.permute.xlu0 %5687
        %5689 = vrot.lane.b32.xlu0 %v5638, 64
        %v5690 = vpop.permute.xlu0 %5689
        %5691 = vrot.lane.b32.xlu0 %v5639, 64
        %v5692 = vpop.permute.xlu0 %5691
        %5693 = vrot.lane.b32.xlu0 %v5640, 64
        %v5694 = vpop.permute.xlu0 %5693
        %5695 = vrot.lane.b32.xlu0 %v5641, 64
        %v5696 = vpop.permute.xlu0 %5695
        %5697 = vrot.lane.b32.xlu0 %v5642, 64
        %v5698 = vpop.permute.xlu0 %5697
        %v5700 = vsel %vm2966, %v5660, 0
        %v5703 = vsel %vm2966, %v5662, 0
        %v5706 = vsel %vm2966, %v5664, 0
        %v5709 = vsel %vm2966, %v5666, 0
        %v5712 = vsel %vm2966, %v5668, 0
        %v5715 = vsel %vm2966, %v5670, 0
        %v5718 = vsel %vm2966, %v5672, 0
        %v5721 = vsel %vm2966, %v5674, 0
        %v5724 = vsel %vm2966, %v5684, 0
        %v5727 = vsel %vm2966, %v5686, 0
        %v5730 = vsel %vm2966, %v5688, 0
        %v5733 = vsel %vm2966, %v5690, 0
        %v5736 = vsel %vm2966, %v5692, 0
        %v5739 = vsel %vm2966, %v5694, 0
        %v5742 = vsel %vm2966, %v5696, 0
        %v5745 = vsel %vm2966, %v5698, 0
        %5747 = vmatprep.subr.bf16.mxu0 0
        %5748 = vmatpush1.bf16.xpose.msra.mxu0 %v5724
        %5749 = vmatprep.subr.bf16.mxu0 0
        %5750 = vmatpush1.bf16.xpose.msra.mxu0 %v5727
        %5751 = vmatprep.subr.bf16.mxu0 0
        %5752 = vmatpush1.bf16.xpose.msra.mxu0 %v5730
        %5753 = vmatprep.subr.bf16.mxu0 0
        %5754 = vmatpush1.bf16.xpose.msra.mxu0 %v5733
        %5755 = vmatprep.subr.bf16.mxu0 0
        %5756 = vmatpush1.bf16.xpose.msra.mxu0 %v5736
        %5757 = vmatprep.subr.bf16.mxu0 0
        %5758 = vmatpush1.bf16.xpose.msra.mxu0 %v5739
        %5759 = vmatprep.subr.bf16.mxu0 0
        %5760 = vmatpush1.bf16.xpose.msra.mxu0 %v5742
        %5761 = vmatprep.subr.bf16.mxu0 0
        %5762 = vmatpush1.bf16.xpose.msra.mxu0 %v5745
        %5763 = vmatprep.subr.bf16.mxu0 0
        %5764 = vmatpush1.bf16.xpose.msra.mxu0 0
        %5765 = vmatprep.subr.bf16.mxu0 0
        %5766 = vmatpush1.bf16.xpose.msra.mxu0 0
        %5767 = vmatprep.subr.bf16.mxu0 0
        %5768 = vmatpush1.bf16.xpose.msra.mxu0 0
        %5769 = vmatprep.subr.bf16.mxu0 0
        %5770 = vmatpush1.bf16.xpose.msra.mxu0 0
        %5771 = vmatprep.subr.bf16.mxu0 0
        %5772 = vmatpush1.bf16.xpose.msra.mxu0 0
        %5773 = vmatprep.subr.bf16.mxu0 0
        %5774 = vmatpush1.bf16.xpose.msra.mxu0 0
        %5775 = vmatprep.subr.bf16.mxu0 0
        %5776 = vmatpush1.bf16.xpose.msra.mxu0 0
        %5777 = vmatprep.subr.bf16.mxu0 0
        %5778 = vmatpush1.bf16.xpose.msra.mxu0 0
        %5779 = vmatprep.mubr.bf16.mxu0 0
        %5780 = vmatmul.mubr.bf16.gmra.mrb[0].mxu0 %v5700
        %v5781 = vpop.f32.mrb[0].mxu0
        %v5782 = vadd.f32 0.0, %v5781
        %v5783 = vpop.f32.mrb[0].mxu0
        %v5784 = vpop.f32.mrb[0].mxu0
        %v5785 = vadd.f32 0.0, %v5784
        %v5786 = vpop.f32.mrb[0].mxu0
        %5787 = vmatprep.mubr.bf16.mxu0 0
        %5788 = vmatmul.mubr.bf16.gmra.mrb[0].mxu0 %v5703
        %v5789 = vpop.f32.mrb[0].mxu0
        %v5790 = vadd.f32 0.0, %v5789
        %v5791 = vpop.f32.mrb[0].mxu0
        %v5792 = vpop.f32.mrb[0].mxu0
        %v5793 = vadd.f32 0.0, %v5792
        %v5794 = vpop.f32.mrb[0].mxu0
        %5795 = vmatprep.mubr.bf16.mxu0 0
        %5796 = vmatmul.mubr.bf16.gmra.mrb[0].mxu0 %v5706
        %v5797 = vpop.f32.mrb[0].mxu0
        %v5798 = vadd.f32 0.0, %v5797
        %v5799 = vpop.f32.mrb[0].mxu0
        %v5800 = vpop.f32.mrb[0].mxu0
        %v5801 = vadd.f32 0.0, %v5800
        %v5802 = vpop.f32.mrb[0].mxu0
        %5803 = vmatprep.mubr.bf16.mxu0 0
        %5804 = vmatmul.mubr.bf16.gmra.mrb[0].mxu0 %v5709
        %v5805 = vpop.f32.mrb[0].mxu0
        %v5806 = vadd.f32 0.0, %v5805
        %v5807 = vpop.f32.mrb[0].mxu0
        %v5808 = vpop.f32.mrb[0].mxu0
        %v5809 = vadd.f32 0.0, %v5808
        %v5810 = vpop.f32.mrb[0].mxu0
        %5811 = vmatprep.mubr.bf16.mxu0 0
        %5812 = vmatmul.mubr.bf16.gmra.mrb[0].mxu0 %v5712
        %v5813 = vpop.f32.mrb[0].mxu0
        %v5814 = vadd.f32 0.0, %v5813
        %v5815 = vpop.f32.mrb[0].mxu0
        %v5816 = vpop.f32.mrb[0].mxu0
        %v5817 = vadd.f32 0.0, %v5816
        %v5818 = vpop.f32.mrb[0].mxu0
        %5819 = vmatprep.mubr.bf16.mxu0 0
        %5820 = vmatmul.mubr.bf16.gmra.mrb[0].mxu0 %v5715
        %v5821 = vpop.f32.mrb[0].mxu0
        %v5822 = vadd.f32 0.0, %v5821
        %v5823 = vpop.f32.mrb[0].mxu0
        %v5824 = vpop.f32.mrb[0].mxu0
        %v5825 = vadd.f32 0.0, %v5824
        %v5826 = vpop.f32.mrb[0].mxu0
        %5827 = vmatprep.mubr.bf16.mxu0 0
        %5828 = vmatmul.mubr.bf16.gmra.mrb[0].mxu0 %v5718
        %v5829 = vpop.f32.mrb[0].mxu0
        %v5830 = vadd.f32 0.0, %v5829
        %v5831 = vpop.f32.mrb[0].mxu0
        %v5832 = vpop.f32.mrb[0].mxu0
        %v5833 = vadd.f32 0.0, %v5832
        %v5834 = vpop.f32.mrb[0].mxu0
        %5835 = vmatprep.mubr.bf16.mxu0 0
        %5836 = vmatmul.mubr.bf16.gmra.mrb[0].mxu0 %v5721
        %v5837 = vpop.f32.mrb[0].mxu0
        %v5838 = vadd.f32 0.0, %v5837
        %v5839 = vpop.f32.mrb[0].mxu0
        %v5840 = vpop.f32.mrb[0].mxu0
        %v5841 = vadd.f32 0.0, %v5840
        %v5842 = vpop.f32.mrb[0].mxu0
        %5843 = vdwg.mxu0
        %v5844 = vsel %vm2926, %v5782, -1e+30
        %v5845 = vsel %vm2927, %v5785, -1e+30
        %v5846 = vsel %vm2928, %v5790, -1e+30
        %v5847 = vsel %vm2929, %v5793, -1e+30
        %v5848 = vsel %vm2930, %v5798, -1e+30
        %v5849 = vsel %vm2931, %v5801, -1e+30
        %v5850 = vsel %vm2932, %v5806, -1e+30
        %v5851 = vsel %vm2933, %v5809, -1e+30
        %v5852 = vsel %vm2934, %v5814, -1e+30
        %v5853 = vsel %vm2935, %v5817, -1e+30
        %v5854 = vsel %vm2936, %v5822, -1e+30
        %v5855 = vsel %vm2937, %v5825, -1e+30
        %v5856 = vsel %vm2938, %v5830, -1e+30
        %v5857 = vsel %vm2939, %v5833, -1e+30
        %v5858 = vsel %vm2940, %v5838, -1e+30
        %v5859 = vsel %vm2941, %v5841, -1e+30
        %5860 = vmax.xlane.f32.xlu0 %v5844
        %v5861 = vpop.xlane.xlu0 %5860
        %5862 = vmax.xlane.f32.xlu0 %v5845
        %v5863 = vpop.xlane.xlu0 %5862
        %5864 = vmax.xlane.f32.xlu0 %v5846
        %v5865 = vpop.xlane.xlu0 %5864
        %5866 = vmax.xlane.f32.xlu0 %v5847
        %v5867 = vpop.xlane.xlu0 %5866
        %5868 = vmax.xlane.f32.xlu0 %v5848
        %v5869 = vpop.xlane.xlu0 %5868
        %5870 = vmax.xlane.f32.xlu0 %v5849
        %v5871 = vpop.xlane.xlu0 %5870
        %5872 = vmax.xlane.f32.xlu0 %v5850
        %v5873 = vpop.xlane.xlu0 %5872
        %5874 = vmax.xlane.f32.xlu0 %v5851
        %v5875 = vpop.xlane.xlu0 %5874
        %5876 = vmax.xlane.f32.xlu0 %v5852
        %v5877 = vpop.xlane.xlu0 %5876
        %5878 = vmax.xlane.f32.xlu0 %v5853
        %v5879 = vpop.xlane.xlu0 %5878
        %5880 = vmax.xlane.f32.xlu0 %v5854
        %v5881 = vpop.xlane.xlu0 %5880
        %5882 = vmax.xlane.f32.xlu0 %v5855
        %v5883 = vpop.xlane.xlu0 %5882
        %5884 = vmax.xlane.f32.xlu0 %v5856
        %v5885 = vpop.xlane.xlu0 %5884
        %5886 = vmax.xlane.f32.xlu0 %v5857
        %v5887 = vpop.xlane.xlu0 %5886
        %5888 = vmax.xlane.f32.xlu0 %v5858
        %v5889 = vpop.xlane.xlu0 %5888
        %5890 = vmax.xlane.f32.xlu0 %v5859
        %v5891 = vpop.xlane.xlu0 %5890
        %v5892 = vsub.f32 %v5844, %v5861
        %v5893 = vsub.f32 %v5845, %v5863
        %v5894 = vsub.f32 %v5846, %v5865
        %v5895 = vsub.f32 %v5847, %v5867
        %v5896 = vsub.f32 %v5848, %v5869
        %v5897 = vsub.f32 %v5849, %v5871
        %v5898 = vsub.f32 %v5850, %v5873
        %v5899 = vsub.f32 %v5851, %v5875
        %v5900 = vsub.f32 %v5852, %v5877
        %v5901 = vsub.f32 %v5853, %v5879
        %v5902 = vsub.f32 %v5854, %v5881
        %v5903 = vsub.f32 %v5855, %v5883
        %v5904 = vsub.f32 %v5856, %v5885
        %v5905 = vsub.f32 %v5857, %v5887
        %v5906 = vsub.f32 %v5858, %v5889
        %v5907 = vsub.f32 %v5859, %v5891
        %v5908 = vmul.f32 %v5892, 1.442695
        %v5909 = vpow.pop %v5908
        %v5910 = vmul.f32 %v5893, 1.442695
        %v5911 = vpow.pop %v5910
        %v5912 = vmul.f32 %v5894, 1.442695
        %v5913 = vpow.pop %v5912
        %v5914 = vmul.f32 %v5895, 1.442695
        %v5915 = vpow.pop %v5914
        %v5916 = vmul.f32 %v5896, 1.442695
        %v5917 = vpow.pop %v5916
        %v5918 = vmul.f32 %v5897, 1.442695
        %v5919 = vpow.pop %v5918
        %v5920 = vmul.f32 %v5898, 1.442695
        %v5921 = vpow.pop %v5920
        %v5922 = vmul.f32 %v5899, 1.442695
        %v5923 = vpow.pop %v5922
        %v5924 = vmul.f32 %v5900, 1.442695
        %v5925 = vpow.pop %v5924
        %v5926 = vmul.f32 %v5901, 1.442695
        %v5927 = vpow.pop %v5926
        %v5928 = vmul.f32 %v5902, 1.442695
        %v5929 = vpow.pop %v5928
        %v5930 = vmul.f32 %v5903, 1.442695
        %v5931 = vpow.pop %v5930
        %v5932 = vmul.f32 %v5904, 1.442695
        %v5933 = vpow.pop %v5932
        %v5934 = vmul.f32 %v5905, 1.442695
        %v5935 = vpow.pop %v5934
        %v5936 = vmul.f32 %v5906, 1.442695
        %v5937 = vpow.pop %v5936
        %v5938 = vmul.f32 %v5907, 1.442695
        %v5939 = vpow.pop %v5938
        %5940 = vadd.xlane.f32.xlu0 %v5909
        %v5941 = vpop.xlane.xlu0 %5940
        %5942 = vadd.xlane.f32.xlu0 %v5911
        %v5943 = vpop.xlane.xlu0 %5942
        %5944 = vadd.xlane.f32.xlu0 %v5913
        %v5945 = vpop.xlane.xlu0 %5944
        %5946 = vadd.xlane.f32.xlu0 %v5915
        %v5947 = vpop.xlane.xlu0 %5946
        %5948 = vadd.xlane.f32.xlu0 %v5917
        %v5949 = vpop.xlane.xlu0 %5948
        %5950 = vadd.xlane.f32.xlu0 %v5919
        %v5951 = vpop.xlane.xlu0 %5950
        %5952 = vadd.xlane.f32.xlu0 %v5921
        %v5953 = vpop.xlane.xlu0 %5952
        %5954 = vadd.xlane.f32.xlu0 %v5923
        %v5955 = vpop.xlane.xlu0 %5954
        %5956 = vadd.xlane.f32.xlu0 %v5925
        %v5957 = vpop.xlane.xlu0 %5956
        %5958 = vadd.xlane.f32.xlu0 %v5927
        %v5959 = vpop.xlane.xlu0 %5958
        %5960 = vadd.xlane.f32.xlu0 %v5929
        %v5961 = vpop.xlane.xlu0 %5960
        %5962 = vadd.xlane.f32.xlu0 %v5931
        %v5963 = vpop.xlane.xlu0 %5962
        %5964 = vadd.xlane.f32.xlu0 %v5933
        %v5965 = vpop.xlane.xlu0 %5964
        %5966 = vadd.xlane.f32.xlu0 %v5935
        %v5967 = vpop.xlane.xlu0 %5966
        %5968 = vadd.xlane.f32.xlu0 %v5937
        %v5969 = vpop.xlane.xlu0 %5968
        %5970 = vadd.xlane.f32.xlu0 %v5939
        %v5971 = vpop.xlane.xlu0 %5970
        %v5972 = vrcp.pop %v5941
        %v5973 = vrcp.pop %v5943
        %v5974 = vrcp.pop %v5945
        %v5975 = vrcp.pop %v5947
        %v5976 = vrcp.pop %v5949
        %v5977 = vrcp.pop %v5951
        %v5978 = vrcp.pop %v5953
        %v5979 = vrcp.pop %v5955
        %v5980 = vrcp.pop %v5957
        %v5981 = vrcp.pop %v5959
        %v5982 = vrcp.pop %v5961
        %v5983 = vrcp.pop %v5963
        %v5984 = vrcp.pop %v5965
        %v5985 = vrcp.pop %v5967
        %v5986 = vrcp.pop %v5969
        %v5987 = vrcp.pop %v5971
        %v5988 = vmul.f32 %v5909, %v5972
        %v5989 = vmul.f32 %v5911, %v5973
        %v5990 = vmul.f32 %v5913, %v5974
        %v5991 = vmul.f32 %v5915, %v5975
        %v5992 = vmul.f32 %v5917, %v5976
        %v5993 = vmul.f32 %v5919, %v5977
        %v5994 = vmul.f32 %v5921, %v5978
        %v5995 = vmul.f32 %v5923, %v5979
        %v5996 = vmul.f32 %v5925, %v5980
        %v5997 = vmul.f32 %v5927, %v5981
        %v5998 = vmul.f32 %v5929, %v5982
        %v5999 = vmul.f32 %v5931, %v5983
        %v6000 = vmul.f32 %v5933, %v5984
        %v6001 = vmul.f32 %v5935, %v5985
        %v6002 = vmul.f32 %v5937, %v5986
        %v6003 = vmul.f32 %v5939, %v5987
        %v6004 = vpack.c.bf16 %v5989, %v5988
        %v6005 = vpack.c.bf16 %v5991, %v5990
        %v6006 = vpack.c.bf16 %v5993, %v5992
        %v6007 = vpack.c.bf16 %v5995, %v5994
        %v6008 = vpack.c.bf16 %v5997, %v5996
        %v6009 = vpack.c.bf16 %v5999, %v5998
        %v6010 = vpack.c.bf16 %v6001, %v6000
        %v6011 = vpack.c.bf16 %v6003, %v6002
        %6020 = vrot.lane.b32.xlu0 %v5643, 64
        %v6021 = vpop.permute.xlu0 %6020
        %6022 = vrot.lane.b32.xlu0 %v5644, 64
        %v6023 = vpop.permute.xlu0 %6022
        %6024 = vrot.lane.b32.xlu0 %v5645, 64
        %v6025 = vpop.permute.xlu0 %6024
        %6026 = vrot.lane.b32.xlu0 %v5646, 64
        %v6027 = vpop.permute.xlu0 %6026
        %6028 = vrot.lane.b32.xlu0 %v5647, 64
        %v6029 = vpop.permute.xlu0 %6028
        %6030 = vrot.lane.b32.xlu0 %v5648, 64
        %v6031 = vpop.permute.xlu0 %6030
        %6032 = vrot.lane.b32.xlu0 %v5649, 64
        %v6033 = vpop.permute.xlu0 %6032
        %6034 = vrot.lane.b32.xlu0 %v5650, 64
        %v6035 = vpop.permute.xlu0 %6034
        %6044 = vmatprep.subr.bf16.mxu0 0
        %6045 = vmatpush1.bf16.msra.mxu0 %v6021
        %6046 = vmatprep.subr.bf16.mxu0 0
        %6047 = vmatpush1.bf16.msra.mxu0 %v6023
        %6048 = vmatprep.subr.bf16.mxu0 0
        %6049 = vmatpush1.bf16.msra.mxu0 %v6025
        %6050 = vmatprep.subr.bf16.mxu0 0
        %6051 = vmatpush1.bf16.msra.mxu0 %v6027
        %6052 = vmatprep.subr.bf16.mxu0 0
        %6053 = vmatpush1.bf16.msra.mxu0 %v6029
        %6054 = vmatprep.subr.bf16.mxu0 0
        %6055 = vmatpush1.bf16.msra.mxu0 %v6031
        %6056 = vmatprep.subr.bf16.mxu0 0
        %6057 = vmatpush1.bf16.msra.mxu0 %v6033
        %6058 = vmatprep.subr.bf16.mxu0 0
        %6059 = vmatpush1.bf16.msra.mxu0 %v6035
        %6060 = vmatprep.subr.bf16.mxu0 0
        %6061 = vmatpush1.bf16.msra.mxu0 0
        %6062 = vmatprep.subr.bf16.mxu0 0
        %6063 = vmatpush1.bf16.msra.mxu0 0
        %6064 = vmatprep.subr.bf16.mxu0 0
        %6065 = vmatpush1.bf16.msra.mxu0 0
        %6066 = vmatprep.subr.bf16.mxu0 0
        %6067 = vmatpush1.bf16.msra.mxu0 0
        %6068 = vmatprep.subr.bf16.mxu0 0
        %6069 = vmatpush1.bf16.msra.mxu0 0
        %6070 = vmatprep.subr.bf16.mxu0 0
        %6071 = vmatpush1.bf16.msra.mxu0 0
        %6072 = vmatprep.subr.bf16.mxu0 0
        %6073 = vmatpush1.bf16.msra.mxu0 0
        %6074 = vmatprep.subr.bf16.mxu0 0
        %6075 = vmatpush1.bf16.msra.mxu0 0
        %6076 = vmatprep.mubr.bf16.mxu0 0
        %6077 = vmatmul.mubr.bf16.gmra.mrb[0].mxu0 %v6004
        %v6078 = vpop.f32.mrb[0].mxu0
        %v6079 = vadd.f32 0.0, %v6078
        %v6080 = vpop.f32.mrb[0].mxu0
        %v6081 = vpop.f32.mrb[0].mxu0
        %v6082 = vadd.f32 0.0, %v6081
        %v6083 = vpop.f32.mrb[0].mxu0
        %6084 = vmatprep.mubr.bf16.mxu0 0
        %6085 = vmatmul.mubr.bf16.gmra.mrb[0].mxu0 %v6005
        %v6086 = vpop.f32.mrb[0].mxu0
        %v6087 = vadd.f32 0.0, %v6086
        %v6088 = vpop.f32.mrb[0].mxu0
        %v6089 = vpop.f32.mrb[0].mxu0
        %v6090 = vadd.f32 0.0, %v6089
        %v6091 = vpop.f32.mrb[0].mxu0
        %6092 = vmatprep.mubr.bf16.mxu0 0
        %6093 = vmatmul.mubr.bf16.gmra.mrb[0].mxu0 %v6006
        %v6094 = vpop.f32.mrb[0].mxu0
        %v6095 = vadd.f32 0.0, %v6094
        %v6096 = vpop.f32.mrb[0].mxu0
        %v6097 = vpop.f32.mrb[0].mxu0
        %v6098 = vadd.f32 0.0, %v6097
        %v6099 = vpop.f32.mrb[0].mxu0
        %6100 = vmatprep.mubr.bf16.mxu0 0
        %6101 = vmatmul.mubr.bf16.gmra.mrb[0].mxu0 %v6007
        %v6102 = vpop.f32.mrb[0].mxu0
        %v6103 = vadd.f32 0.0, %v6102
        %v6104 = vpop.f32.mrb[0].mxu0
        %v6105 = vpop.f32.mrb[0].mxu0
        %v6106 = vadd.f32 0.0, %v6105
        %v6107 = vpop.f32.mrb[0].mxu0
        %6108 = vmatprep.mubr.bf16.mxu0 0
        %6109 = vmatmul.mubr.bf16.gmra.mrb[0].mxu0 %v6008
        %v6110 = vpop.f32.mrb[0].mxu0
        %v6111 = vadd.f32 0.0, %v6110
        %v6112 = vpop.f32.mrb[0].mxu0
        %v6113 = vpop.f32.mrb[0].mxu0
        %v6114 = vadd.f32 0.0, %v6113
        %v6115 = vpop.f32.mrb[0].mxu0
        %6116 = vmatprep.mubr.bf16.mxu0 0
        %6117 = vmatmul.mubr.bf16.gmra.mrb[0].mxu0 %v6009
        %v6118 = vpop.f32.mrb[0].mxu0
        %v6119 = vadd.f32 0.0, %v6118
        %v6120 = vpop.f32.mrb[0].mxu0
        %v6121 = vpop.f32.mrb[0].mxu0
        %v6122 = vadd.f32 0.0, %v6121
        %v6123 = vpop.f32.mrb[0].mxu0
        %6124 = vmatprep.mubr.bf16.mxu0 0
        %6125 = vmatmul.mubr.bf16.gmra.mrb[0].mxu0 %v6010
        %v6126 = vpop.f32.mrb[0].mxu0
        %v6127 = vadd.f32 0.0, %v6126
        %v6128 = vpop.f32.mrb[0].mxu0
        %v6129 = vpop.f32.mrb[0].mxu0
        %v6130 = vadd.f32 0.0, %v6129
        %v6131 = vpop.f32.mrb[0].mxu0
        %6132 = vmatprep.mubr.bf16.mxu0 0
        %6133 = vmatmul.mubr.bf16.gmra.mrb[0].mxu0 %v6011
        %v6134 = vpop.f32.mrb[0].mxu0
        %v6135 = vadd.f32 0.0, %v6134
        %v6136 = vpop.f32.mrb[0].mxu0
        %v6137 = vpop.f32.mrb[0].mxu0
        %v6138 = vadd.f32 0.0, %v6137
        %v6139 = vpop.f32.mrb[0].mxu0
        %6140 = vdwg.mxu0
        %v6141 = vpack.c.bf16 %v6082, %v6079
        %v6142 = vpack.c.bf16 %v6090, %v6087
        %v6143 = vpack.c.bf16 %v6098, %v6095
        %v6144 = vpack.c.bf16 %v6106, %v6103
        %v6145 = vpack.c.bf16 %v6114, %v6111
        %v6146 = vpack.c.bf16 %v6122, %v6119
        %v6147 = vpack.c.bf16 %v6130, %v6127
        %v6148 = vpack.c.bf16 %v6138, %v6135
        %v6149 = vld [vmem:[#allocation9 + $0x120] sm:$0xff]
        %v6150 = vld [vmem:[#allocation9 + $0x128] sm:$0xf]
        %v6151 = vld [vmem:[#allocation9 + $0x12c] sm:$0xff]
        %v6152 = vld [vmem:[#allocation9 + $0x134] sm:$0xf]
        %v6153 = vld [vmem:[#allocation9 + $0x138] sm:$0xff]
        %v6154 = vld [vmem:[#allocation9 + $0x140] sm:$0xf]
        %v6155 = vld [vmem:[#allocation9 + $0x144] sm:$0xff]
        %v6156 = vld [vmem:[#allocation9 + $0x14c] sm:$0xf]
        %v6157 = vld [vmem:[#allocation9 + $0x150] sm:$0xff]
        %v6158 = vld [vmem:[#allocation9 + $0x158] sm:$0xf]
        %v6159 = vld [vmem:[#allocation9 + $0x15c] sm:$0xff]
        %v6160 = vld [vmem:[#allocation9 + $0x164] sm:$0xf]
        %v6161 = vld [vmem:[#allocation9 + $0x168] sm:$0xff]
        %v6162 = vld [vmem:[#allocation9 + $0x170] sm:$0xf]
        %v6163 = vld [vmem:[#allocation9 + $0x174] sm:$0xff]
        %v6164 = vld [vmem:[#allocation9 + $0x17c] sm:$0xf]
        %v6181 = vunpack.c.l.b16 %v6149
        %v6182 = vunpack.c.h.b16 %v6149
        %v6183 = vunpack.c.l.b16 %v6150
        %v6184 = vunpack.c.l.b16 %v6151
        %v6185 = vunpack.c.h.b16 %v6151
        %v6186 = vunpack.c.l.b16 %v6152
        %v6187 = vunpack.c.l.b16 %v6153
        %v6188 = vunpack.c.h.b16 %v6153
        %v6189 = vunpack.c.l.b16 %v6154
        %v6190 = vunpack.c.l.b16 %v6155
        %v6191 = vunpack.c.h.b16 %v6155
        %v6192 = vunpack.c.l.b16 %v6156
        %v6193 = vunpack.c.l.b16 %v6157
        %v6194 = vunpack.c.h.b16 %v6157
        %v6195 = vunpack.c.l.b16 %v6158
        %v6196 = vunpack.c.l.b16 %v6159
        %v6197 = vunpack.c.h.b16 %v6159
        %v6198 = vunpack.c.l.b16 %v6160
        %v6199 = vunpack.c.l.b16 %v6161
        %v6200 = vunpack.c.h.b16 %v6161
        %v6201 = vunpack.c.l.b16 %v6162
        %v6202 = vunpack.c.l.b16 %v6163
        %v6203 = vunpack.c.h.b16 %v6163
        %v6204 = vunpack.c.l.b16 %v6164
        %v6205 = vpack.c.b16 %v6184, %v6181
        %v6206 = vpack.c.b16 %v6185, %v6182
        %v6207 = vpack.c.b16 %v6186, %v6183
        %v6208 = vpack.c.b16 %v6190, %v6187
        %v6209 = vpack.c.b16 %v6191, %v6188
        %v6210 = vpack.c.b16 %v6192, %v6189
        %v6211 = vpack.c.b16 %v6196, %v6193
        %v6212 = vpack.c.b16 %v6197, %v6194
        %v6213 = vpack.c.b16 %v6198, %v6195
        %v6214 = vpack.c.b16 %v6202, %v6199
        %v6215 = vpack.c.b16 %v6203, %v6200
        %v6216 = vpack.c.b16 %v6204, %v6201
        %v6230 = vsel %vm2966, %v6141, 0
        %v6233 = vsel %vm2966, %v6142, 0
        %v6236 = vsel %vm2966, %v6143, 0
        %v6239 = vsel %vm2966, %v6144, 0
        %v6242 = vsel %vm2966, %v6145, 0
        %v6245 = vsel %vm2966, %v6146, 0
        %v6248 = vsel %vm2966, %v6147, 0
        %v6251 = vsel %vm2966, %v6148, 0
        %6253 = vmatprep.subr.bf16.mxu0 %v6206
        %6254 = vmatpush1.bf16.msra.mxu0 %v6205
        %6255 = vmatprep.subr.bf16.mxu0 %v6209
        %6256 = vmatpush1.bf16.msra.mxu0 %v6208
        %6257 = vmatprep.subr.bf16.mxu0 %v6212
        %6258 = vmatpush1.bf16.msra.mxu0 %v6211
        %6259 = vmatprep.subr.bf16.mxu0 %v6215
        %6260 = vmatpush1.bf16.msra.mxu0 %v6214
        %6261 = vmatprep.subr.bf16.mxu0 0
        %6262 = vmatpush1.bf16.msra.mxu0 0
        %6263 = vmatprep.subr.bf16.mxu0 0
        %6264 = vmatpush1.bf16.msra.mxu0 0
        %6265 = vmatprep.subr.bf16.mxu0 0
        %6266 = vmatpush1.bf16.msra.mxu0 0
        %6267 = vmatprep.subr.bf16.mxu0 0
        %6268 = vmatpush1.bf16.msra.mxu0 0
        %6269 = vmatprep.subr.bf16.mxu0 0
        %6270 = vmatpush1.bf16.msra.mxu0 0
        %6271 = vmatprep.subr.bf16.mxu0 0
        %6272 = vmatpush1.bf16.msra.mxu0 0
        %6273 = vmatprep.subr.bf16.mxu0 0
        %6274 = vmatpush1.bf16.msra.mxu0 0
        %6275 = vmatprep.subr.bf16.mxu0 0
        %6276 = vmatpush1.bf16.msra.mxu0 0
        %6277 = vmatprep.subr.bf16.mxu0 0
        %6278 = vmatpush1.bf16.msra.mxu0 0
        %6279 = vmatprep.subr.bf16.mxu0 0
        %6280 = vmatpush1.bf16.msra.mxu0 0
        %6281 = vmatprep.subr.bf16.mxu0 0
        %6282 = vmatpush1.bf16.msra.mxu0 0
        %6283 = vmatprep.subr.bf16.mxu0 0
        %6284 = vmatpush1.bf16.msra.mxu0 0
        %6285 = vmatprep.mubr.bf16.mxu0 0
        %6286 = vmatmul.mubr.bf16.gmra.mrb[0].mxu0 %v6230
        %v6287 = vpop.f32.mrb[0].mxu0
        %v6288 = vadd.f32 0.0, %v6287
        %v6289 = vpop.f32.mrb[0].mxu0
        %v6290 = vadd.f32 0.0, %v6289
        %v6291 = vpop.f32.mrb[0].mxu0
        %v6292 = vadd.f32 0.0, %v6291
        %v6293 = vpop.f32.mrb[0].mxu0
        %v6294 = vadd.f32 0.0, %v6293
        %6295 = vmatprep.mubr.bf16.mxu0 0
        %6296 = vmatmul.mubr.bf16.gmra.mrb[0].mxu0 %v6233
        %v6297 = vpop.f32.mrb[0].mxu0
        %v6298 = vadd.f32 0.0, %v6297
        %v6299 = vpop.f32.mrb[0].mxu0
        %v6300 = vadd.f32 0.0, %v6299
        %v6301 = vpop.f32.mrb[0].mxu0
        %v6302 = vadd.f32 0.0, %v6301
        %v6303 = vpop.f32.mrb[0].mxu0
        %v6304 = vadd.f32 0.0, %v6303
        %6305 = vmatprep.mubr.bf16.mxu0 0
        %6306 = vmatmul.mubr.bf16.gmra.mrb[0].mxu0 %v6236
        %v6307 = vpop.f32.mrb[0].mxu0
        %v6308 = vadd.f32 0.0, %v6307
        %v6309 = vpop.f32.mrb[0].mxu0
        %v6310 = vadd.f32 0.0, %v6309
        %v6311 = vpop.f32.mrb[0].mxu0
        %v6312 = vadd.f32 0.0, %v6311
        %v6313 = vpop.f32.mrb[0].mxu0
        %v6314 = vadd.f32 0.0, %v6313
        %6315 = vmatprep.mubr.bf16.mxu0 0
        %6316 = vmatmul.mubr.bf16.gmra.mrb[0].mxu0 %v6239
        %v6317 = vpop.f32.mrb[0].mxu0
        %v6318 = vadd.f32 0.0, %v6317
        %v6319 = vpop.f32.mrb[0].mxu0
        %v6320 = vadd.f32 0.0, %v6319
        %v6321 = vpop.f32.mrb[0].mxu0
        %v6322 = vadd.f32 0.0, %v6321
        %v6323 = vpop.f32.mrb[0].mxu0
        %v6324 = vadd.f32 0.0, %v6323
        %6325 = vmatprep.mubr.bf16.mxu0 0
        %6326 = vmatmul.mubr.bf16.gmra.mrb[0].mxu0 %v6242
        %v6327 = vpop.f32.mrb[0].mxu0
        %v6328 = vadd.f32 0.0, %v6327
        %v6329 = vpop.f32.mrb[0].mxu0
        %v6330 = vadd.f32 0.0, %v6329
        %v6331 = vpop.f32.mrb[0].mxu0
        %v6332 = vadd.f32 0.0, %v6331
        %v6333 = vpop.f32.mrb[0].mxu0
        %v6334 = vadd.f32 0.0, %v6333
        %6335 = vmatprep.mubr.bf16.mxu0 0
        %6336 = vmatmul.mubr.bf16.gmra.mrb[0].mxu0 %v6245
        %v6337 = vpop.f32.mrb[0].mxu0
        %v6338 = vadd.f32 0.0, %v6337
        %v6339 = vpop.f32.mrb[0].mxu0
        %v6340 = vadd.f32 0.0, %v6339
        %v6341 = vpop.f32.mrb[0].mxu0
        %v6342 = vadd.f32 0.0, %v6341
        %v6343 = vpop.f32.mrb[0].mxu0
        %v6344 = vadd.f32 0.0, %v6343
        %6345 = vmatprep.mubr.bf16.mxu0 0
        %6346 = vmatmul.mubr.bf16.gmra.mrb[0].mxu0 %v6248
        %v6347 = vpop.f32.mrb[0].mxu0
        %v6348 = vadd.f32 0.0, %v6347
        %v6349 = vpop.f32.mrb[0].mxu0
        %v6350 = vadd.f32 0.0, %v6349
        %v6351 = vpop.f32.mrb[0].mxu0
        %v6352 = vadd.f32 0.0, %v6351
        %v6353 = vpop.f32.mrb[0].mxu0
        %v6354 = vadd.f32 0.0, %v6353
        %6355 = vmatprep.mubr.bf16.mxu0 0
        %6356 = vmatmul.mubr.bf16.gmra.mrb[0].mxu0 %v6251
        %v6357 = vpop.f32.mrb[0].mxu0
        %v6358 = vadd.f32 0.0, %v6357
        %v6359 = vpop.f32.mrb[0].mxu0
        %v6360 = vadd.f32 0.0, %v6359
        %v6361 = vpop.f32.mrb[0].mxu0
        %v6362 = vadd.f32 0.0, %v6361
        %v6363 = vpop.f32.mrb[0].mxu0
        %v6364 = vadd.f32 0.0, %v6363
        %6365 = vdwg.mxu0
        %6366 = vmatprep.subr.bf16.mxu0 0
        %6367 = vmatpush1.bf16.msra.mxu0 %v6207
        %6368 = vmatprep.subr.bf16.mxu0 0
        %6369 = vmatpush1.bf16.msra.mxu0 %v6210
        %6370 = vmatprep.subr.bf16.mxu0 0
        %6371 = vmatpush1.bf16.msra.mxu0 %v6213
        %6372 = vmatprep.subr.bf16.mxu0 0
        %6373 = vmatpush1.bf16.msra.mxu0 %v6216
        %6374 = vmatprep.subr.bf16.mxu0 0
        %6375 = vmatpush1.bf16.msra.mxu0 0
        %6376 = vmatprep.subr.bf16.mxu0 0
        %6377 = vmatpush1.bf16.msra.mxu0 0
        %6378 = vmatprep.subr.bf16.mxu0 0
        %6379 = vmatpush1.bf16.msra.mxu0 0
        %6380 = vmatprep.subr.bf16.mxu0 0
        %6381 = vmatpush1.bf16.msra.mxu0 0
        %6382 = vmatprep.subr.bf16.mxu0 0
        %6383 = vmatpush1.bf16.msra.mxu0 0
        %6384 = vmatprep.subr.bf16.mxu0 0
        %6385 = vmatpush1.bf16.msra.mxu0 0
        %6386 = vmatprep.subr.bf16.mxu0 0
        %6387 = vmatpush1.bf16.msra.mxu0 0
        %6388 = vmatprep.subr.bf16.mxu0 0
        %6389 = vmatpush1.bf16.msra.mxu0 0
        %6390 = vmatprep.subr.bf16.mxu0 0
        %6391 = vmatpush1.bf16.msra.mxu0 0
        %6392 = vmatprep.subr.bf16.mxu0 0
        %6393 = vmatpush1.bf16.msra.mxu0 0
        %6394 = vmatprep.subr.bf16.mxu0 0
        %6395 = vmatpush1.bf16.msra.mxu0 0
        %6396 = vmatprep.subr.bf16.mxu0 0
        %6397 = vmatpush1.bf16.msra.mxu0 0
        %6398 = vmatprep.mubr.bf16.mxu0 0
        %6399 = vmatmul.mubr.bf16.gmra.mrb[0].mxu0 %v6230
        %v6400 = vpop.f32.mrb[0].mxu0
        %v6401 = vadd.f32 0.0, %v6400
        %v6402 = vpop.f32.mrb[0].mxu0
        %v6403 = vpop.f32.mrb[0].mxu0
        %v6404 = vadd.f32 0.0, %v6403
        %v6405 = vpop.f32.mrb[0].mxu0
        %6406 = vmatprep.mubr.bf16.mxu0 0
        %6407 = vmatmul.mubr.bf16.gmra.mrb[0].mxu0 %v6233
        %v6408 = vpop.f32.mrb[0].mxu0
        %v6409 = vadd.f32 0.0, %v6408
        %v6410 = vpop.f32.mrb[0].mxu0
        %v6411 = vpop.f32.mrb[0].mxu0
        %v6412 = vadd.f32 0.0, %v6411
        %v6413 = vpop.f32.mrb[0].mxu0
        %6414 = vmatprep.mubr.bf16.mxu0 0
        %6415 = vmatmul.mubr.bf16.gmra.mrb[0].mxu0 %v6236
        %v6416 = vpop.f32.mrb[0].mxu0
        %v6417 = vadd.f32 0.0, %v6416
        %v6418 = vpop.f32.mrb[0].mxu0
        %v6419 = vpop.f32.mrb[0].mxu0
        %v6420 = vadd.f32 0.0, %v6419
        %v6421 = vpop.f32.mrb[0].mxu0
        %6422 = vmatprep.mubr.bf16.mxu0 0
        %6423 = vmatmul.mubr.bf16.gmra.mrb[0].mxu0 %v6239
        %v6424 = vpop.f32.mrb[0].mxu0
        %v6425 = vadd.f32 0.0, %v6424
        %v6426 = vpop.f32.mrb[0].mxu0
        %v6427 = vpop.f32.mrb[0].mxu0
        %v6428 = vadd.f32 0.0, %v6427
        %v6429 = vpop.f32.mrb[0].mxu0
        %6430 = vmatprep.mubr.bf16.mxu0 0
        %6431 = vmatmul.mubr.bf16.gmra.mrb[0].mxu0 %v6242
        %v6432 = vpop.f32.mrb[0].mxu0
        %v6433 = vadd.f32 0.0, %v6432
        %v6434 = vpop.f32.mrb[0].mxu0
        %v6435 = vpop.f32.mrb[0].mxu0
        %v6436 = vadd.f32 0.0, %v6435
        %v6437 = vpop.f32.mrb[0].mxu0
        %6438 = vmatprep.mubr.bf16.mxu0 0
        %6439 = vmatmul.mubr.bf16.gmra.mrb[0].mxu0 %v6245
        %v6440 = vpop.f32.mrb[0].mxu0
        %v6441 = vadd.f32 0.0, %v6440
        %v6442 = vpop.f32.mrb[0].mxu0
        %v6443 = vpop.f32.mrb[0].mxu0
        %v6444 = vadd.f32 0.0, %v6443
        %v6445 = vpop.f32.mrb[0].mxu0
        %6446 = vmatprep.mubr.bf16.mxu0 0
        %6447 = vmatmul.mubr.bf16.gmra.mrb[0].mxu0 %v6248
        %v6448 = vpop.f32.mrb[0].mxu0
        %v6449 = vadd.f32 0.0, %v6448
        %v6450 = vpop.f32.mrb[0].mxu0
        %v6451 = vpop.f32.mrb[0].mxu0
        %v6452 = vadd.f32 0.0, %v6451
        %v6453 = vpop.f32.mrb[0].mxu0
        %6454 = vmatprep.mubr.bf16.mxu0 0
        %6455 = vmatmul.mubr.bf16.gmra.mrb[0].mxu0 %v6251
        %v6456 = vpop.f32.mrb[0].mxu0
        %v6457 = vadd.f32 0.0, %v6456
        %v6458 = vpop.f32.mrb[0].mxu0
        %v6459 = vpop.f32.mrb[0].mxu0
        %v6460 = vadd.f32 0.0, %v6459
        %v6461 = vpop.f32.mrb[0].mxu0
        %6462 = vdwg.mxu0
        %v6463 = vld [vmem:[#allocation3] sm:$0xff]
        %v6464 = vld [vmem:[#allocation3 + $0x8] sm:$0xff]
        %v6465 = vld [vmem:[#allocation3 + $0x10] sm:$0xff]
        %v6466 = vld [vmem:[#allocation3 + $0x18] sm:$0xff]
        %v6467 = vld [vmem:[#allocation3 + $0x20] sm:$0xff]
        %v6468 = vld [vmem:[#allocation3 + $0x28] sm:$0xff]
        %v6469 = vld [vmem:[#allocation3 + $0x30] sm:$0xff]
        %v6470 = vld [vmem:[#allocation3 + $0x38] sm:$0xff]
        %v6471 = vld [vmem:[#allocation3 + $0x40] sm:$0xff]
        %v6472 = vld [vmem:[#allocation3 + $0x48] sm:$0xff]
        %v6473 = vld [vmem:[#allocation3 + $0x50] sm:$0xff]
        %v6474 = vld [vmem:[#allocation3 + $0x58] sm:$0xff]
        %v6475 = vld [vmem:[#allocation3 + $0x60] sm:$0xff]
        %v6476 = vld [vmem:[#allocation3 + $0x68] sm:$0xff]
        %v6477 = vld [vmem:[#allocation3 + $0x70] sm:$0xff]
        %v6478 = vld [vmem:[#allocation3 + $0x78] sm:$0xff]
        %v6479 = vld [vmem:[#allocation3 + $0x80] sm:$0xff]
        %v6480 = vld [vmem:[#allocation3 + $0x88] sm:$0xff]
        %v6481 = vld [vmem:[#allocation3 + $0x90] sm:$0xff]
        %v6482 = vld [vmem:[#allocation3 + $0x98] sm:$0xff]
        %v6483 = vld [vmem:[#allocation3 + $0xa0] sm:$0xff]
        %v6484 = vld [vmem:[#allocation3 + $0xa8] sm:$0xff]
        %v6485 = vld [vmem:[#allocation3 + $0xb0] sm:$0xff]
        %v6486 = vld [vmem:[#allocation3 + $0xb8] sm:$0xff]
        %v6487 = vld [vmem:[#allocation3 + $0xc0] sm:$0xff]
        %v6488 = vld [vmem:[#allocation3 + $0xc8] sm:$0xff]
        %v6489 = vld [vmem:[#allocation3 + $0xd0] sm:$0xff]
        %v6490 = vld [vmem:[#allocation3 + $0xd8] sm:$0xff]
        %v6491 = vld [vmem:[#allocation3 + $0xe0] sm:$0xff]
        %v6492 = vld [vmem:[#allocation3 + $0xe8] sm:$0xff]
        %v6493 = vld [vmem:[#allocation3 + $0xf0] sm:$0xff]
        %v6494 = vld [vmem:[#allocation3 + $0xf8] sm:$0xff]
        %v6495 = vld [vmem:[#allocation3 + $0x100] sm:$0xff]
        %v6496 = vld [vmem:[#allocation3 + $0x108] sm:$0xff]
        %v6497 = vld [vmem:[#allocation3 + $0x110] sm:$0xff]
        %v6498 = vld [vmem:[#allocation3 + $0x118] sm:$0xff]
        %v6499 = vld [vmem:[#allocation3 + $0x120] sm:$0xff]
        %v6500 = vld [vmem:[#allocation3 + $0x128] sm:$0xff]
        %v6501 = vld [vmem:[#allocation3 + $0x130] sm:$0xff]
        %v6502 = vld [vmem:[#allocation3 + $0x138] sm:$0xff]
        %v6503 = vld [vmem:[#allocation3 + $0x140] sm:$0xff]
        %v6504 = vld [vmem:[#allocation3 + $0x148] sm:$0xff]
        %v6505 = vld [vmem:[#allocation3 + $0x150] sm:$0xff]
        %v6506 = vld [vmem:[#allocation3 + $0x158] sm:$0xff]
        %v6507 = vld [vmem:[#allocation3 + $0x160] sm:$0xff]
        %v6508 = vld [vmem:[#allocation3 + $0x168] sm:$0xff]
        %v6509 = vld [vmem:[#allocation3 + $0x170] sm:$0xff]
        %v6510 = vld [vmem:[#allocation3 + $0x178] sm:$0xff]
        %v6511 = vadd.f32 %v6463, %v6288
        %v6512 = vadd.f32 %v6464, %v6290
        %v6513 = vadd.f32 %v6465, %v6401
        %v6514 = vadd.f32 %v6466, %v6292
        %v6515 = vadd.f32 %v6467, %v6294
        %v6516 = vadd.f32 %v6468, %v6404
        %v6517 = vadd.f32 %v6469, %v6298
        %v6518 = vadd.f32 %v6470, %v6300
        %v6519 = vadd.f32 %v6471, %v6409
        %v6520 = vadd.f32 %v6472, %v6302
        %v6521 = vadd.f32 %v6473, %v6304
        %v6522 = vadd.f32 %v6474, %v6412
        %v6523 = vadd.f32 %v6475, %v6308
        %v6524 = vadd.f32 %v6476, %v6310
        %v6525 = vadd.f32 %v6477, %v6417
        %v6526 = vadd.f32 %v6478, %v6312
        %v6527 = vadd.f32 %v6479, %v6314
        %v6528 = vadd.f32 %v6480, %v6420
        %v6529 = vadd.f32 %v6481, %v6318
        %v6530 = vadd.f32 %v6482, %v6320
        %v6531 = vadd.f32 %v6483, %v6425
        %v6532 = vadd.f32 %v6484, %v6322
        %v6533 = vadd.f32 %v6485, %v6324
        %v6534 = vadd.f32 %v6486, %v6428
        %v6535 = vadd.f32 %v6487, %v6328
        %v6536 = vadd.f32 %v6488, %v6330
        %v6537 = vadd.f32 %v6489, %v6433
        %v6538 = vadd.f32 %v6490, %v6332
        %v6539 = vadd.f32 %v6491, %v6334
        %v6540 = vadd.f32 %v6492, %v6436
        %v6541 = vadd.f32 %v6493, %v6338
        %v6542 = vadd.f32 %v6494, %v6340
        %v6543 = vadd.f32 %v6495, %v6441
        %v6544 = vadd.f32 %v6496, %v6342
        %v6545 = vadd.f32 %v6497, %v6344
        %v6546 = vadd.f32 %v6498, %v6444
        %v6547 = vadd.f32 %v6499, %v6348
        %v6548 = vadd.f32 %v6500, %v6350
        %v6549 = vadd.f32 %v6501, %v6449
        %v6550 = vadd.f32 %v6502, %v6352
        %v6551 = vadd.f32 %v6503, %v6354
        %v6552 = vadd.f32 %v6504, %v6452
        %v6553 = vadd.f32 %v6505, %v6358
        %v6554 = vadd.f32 %v6506, %v6360
        %v6555 = vadd.f32 %v6507, %v6457
        %v6556 = vadd.f32 %v6508, %v6362
        %v6557 = vadd.f32 %v6509, %v6364
        %v6558 = vadd.f32 %v6510, %v6460
        %6559 = vst [vmem:[#allocation3] sm:$0xff] %v6511
        %6560 = vst [vmem:[#allocation3 + $0x8] sm:$0xff] %v6512
        %6561 = vst [vmem:[#allocation3 + $0x10] sm:$0xff] %v6513
        %6562 = vst [vmem:[#allocation3 + $0x18] sm:$0xff] %v6514
        %6563 = vst [vmem:[#allocation3 + $0x20] sm:$0xff] %v6515
        %6564 = vst [vmem:[#allocation3 + $0x28] sm:$0xff] %v6516
        %6565 = vst [vmem:[#allocation3 + $0x30] sm:$0xff] %v6517
        %6566 = vst [vmem:[#allocation3 + $0x38] sm:$0xff] %v6518
        %6567 = vst [vmem:[#allocation3 + $0x40] sm:$0xff] %v6519
        %6568 = vst [vmem:[#allocation3 + $0x48] sm:$0xff] %v6520
        %6569 = vst [vmem:[#allocation3 + $0x50] sm:$0xff] %v6521
        %6570 = vst [vmem:[#allocation3 + $0x58] sm:$0xff] %v6522
        %6571 = vst [vmem:[#allocation3 + $0x60] sm:$0xff] %v6523
        %6572 = vst [vmem:[#allocation3 + $0x68] sm:$0xff] %v6524
        %6573 = vst [vmem:[#allocation3 + $0x70] sm:$0xff] %v6525
        %6574 = vst [vmem:[#allocation3 + $0x78] sm:$0xff] %v6526
        %6575 = vst [vmem:[#allocation3 + $0x80] sm:$0xff] %v6527
        %6576 = vst [vmem:[#allocation3 + $0x88] sm:$0xff] %v6528
        %6577 = vst [vmem:[#allocation3 + $0x90] sm:$0xff] %v6529
        %6578 = vst [vmem:[#allocation3 + $0x98] sm:$0xff] %v6530
        %6579 = vst [vmem:[#allocation3 + $0xa0] sm:$0xff] %v6531
        %6580 = vst [vmem:[#allocation3 + $0xa8] sm:$0xff] %v6532
        %6581 = vst [vmem:[#allocation3 + $0xb0] sm:$0xff] %v6533
        %6582 = vst [vmem:[#allocation3 + $0xb8] sm:$0xff] %v6534
        %6583 = vst [vmem:[#allocation3 + $0xc0] sm:$0xff] %v6535
        %6584 = vst [vmem:[#allocation3 + $0xc8] sm:$0xff] %v6536
        %6585 = vst [vmem:[#allocation3 + $0xd0] sm:$0xff] %v6537
        %6586 = vst [vmem:[#allocation3 + $0xd8] sm:$0xff] %v6538
        %6587 = vst [vmem:[#allocation3 + $0xe0] sm:$0xff] %v6539
        %6588 = vst [vmem:[#allocation3 + $0xe8] sm:$0xff] %v6540
        %6589 = vst [vmem:[#allocation3 + $0xf0] sm:$0xff] %v6541
        %6590 = vst [vmem:[#allocation3 + $0xf8] sm:$0xff] %v6542
        %6591 = vst [vmem:[#allocation3 + $0x100] sm:$0xff] %v6543
        %6592 = vst [vmem:[#allocation3 + $0x108] sm:$0xff] %v6544
        %6593 = vst [vmem:[#allocation3 + $0x110] sm:$0xff] %v6545
        %6594 = vst [vmem:[#allocation3 + $0x118] sm:$0xff] %v6546
        %6595 = vst [vmem:[#allocation3 + $0x120] sm:$0xff] %v6547
        %6596 = vst [vmem:[#allocation3 + $0x128] sm:$0xff] %v6548
        %6597 = vst [vmem:[#allocation3 + $0x130] sm:$0xff] %v6549
        %6598 = vst [vmem:[#allocation3 + $0x138] sm:$0xff] %v6550
        %6599 = vst [vmem:[#allocation3 + $0x140] sm:$0xff] %v6551
        %6600 = vst [vmem:[#allocation3 + $0x148] sm:$0xff] %v6552
        %6601 = vst [vmem:[#allocation3 + $0x150] sm:$0xff] %v6553
        %6602 = vst [vmem:[#allocation3 + $0x158] sm:$0xff] %v6554
        %6603 = vst [vmem:[#allocation3 + $0x160] sm:$0xff] %v6555
        %6604 = vst [vmem:[#allocation3 + $0x168] sm:$0xff] %v6556
        %6605 = vst [vmem:[#allocation3 + $0x170] sm:$0xff] %v6557
        %6606 = vst [vmem:[#allocation3 + $0x178] sm:$0xff] %v6558
        %v6607 = vld [vmem:[#allocation2 + $0x10] sm:$0xff]
        %v6608 = vld [vmem:[#allocation2 + $0x58] sm:$0xff]
        %v6609 = vld [vmem:[#allocation2 + $0xa0] sm:$0xff]
        %v6610 = vld [vmem:[#allocation2 + $0xe8] sm:$0xff]
        %v6611 = vld [vmem:[#allocation2 + $0x130] sm:$0xff]
        %v6612 = vld [vmem:[#allocation2 + $0x178] sm:$0xff]
        %v6613 = vld [vmem:[#allocation2 + $0x1c0] sm:$0xff]
        %v6614 = vld [vmem:[#allocation2 + $0x208] sm:$0xff]
        %v6615 = vld [vmem:[#allocation2 + $0x28] sm:$0xff]
        %v6616 = vld [vmem:[#allocation2 + $0x70] sm:$0xff]
        %v6617 = vld [vmem:[#allocation2 + $0xb8] sm:$0xff]
        %v6618 = vld [vmem:[#allocation2 + $0x100] sm:$0xff]
        %v6619 = vld [vmem:[#allocation2 + $0x148] sm:$0xff]
        %v6620 = vld [vmem:[#allocation2 + $0x190] sm:$0xff]
        %v6621 = vld [vmem:[#allocation2 + $0x1d8] sm:$0xff]
        %v6622 = vld [vmem:[#allocation2 + $0x220] sm:$0xff]
        %v6623 = vld [vmem:[#allocation2 + $0x40] sm:$0xff]
        %v6624 = vld [vmem:[#allocation2 + $0x88] sm:$0xff]
        %v6625 = vld [vmem:[#allocation2 + $0xd0] sm:$0xff]
        %v6626 = vld [vmem:[#allocation2 + $0x118] sm:$0xff]
        %v6627 = vld [vmem:[#allocation2 + $0x160] sm:$0xff]
        %v6628 = vld [vmem:[#allocation2 + $0x1a8] sm:$0xff]
        %v6629 = vld [vmem:[#allocation2 + $0x1f0] sm:$0xff]
        %v6630 = vld [vmem:[#allocation2 + $0x238] sm:$0xff]
        %v6632 = vsel %vm2966, %v6607, 0
        %v6635 = vsel %vm2966, %v6608, 0
        %v6638 = vsel %vm2966, %v6609, 0
        %v6641 = vsel %vm2966, %v6610, 0
        %v6644 = vsel %vm2966, %v6611, 0
        %v6647 = vsel %vm2966, %v6612, 0
        %v6650 = vsel %vm2966, %v6613, 0
        %v6653 = vsel %vm2966, %v6614, 0
        %v6656 = vsel %vm2966, %v6615, 0
        %v6659 = vsel %vm2966, %v6616, 0
        %v6662 = vsel %vm2966, %v6617, 0
        %v6665 = vsel %vm2966, %v6618, 0
        %v6668 = vsel %vm2966, %v6619, 0
        %v6671 = vsel %vm2966, %v6620, 0
        %v6674 = vsel %vm2966, %v6621, 0
        %v6677 = vsel %vm2966, %v6622, 0
        %6679 = vmatprep.subr.bf16.mxu0 0
        %6680 = vmatpush1.bf16.xpose.msra.mxu0 %v6656
        %6681 = vmatprep.subr.bf16.mxu0 0
        %6682 = vmatpush1.bf16.xpose.msra.mxu0 %v6659
        %6683 = vmatprep.subr.bf16.mxu0 0
        %6684 = vmatpush1.bf16.xpose.msra.mxu0 %v6662
        %6685 = vmatprep.subr.bf16.mxu0 0
        %6686 = vmatpush1.bf16.xpose.msra.mxu0 %v6665
        %6687 = vmatprep.subr.bf16.mxu0 0
        %6688 = vmatpush1.bf16.xpose.msra.mxu0 %v6668
        %6689 = vmatprep.subr.bf16.mxu0 0
        %6690 = vmatpush1.bf16.xpose.msra.mxu0 %v6671
        %6691 = vmatprep.subr.bf16.mxu0 0
        %6692 = vmatpush1.bf16.xpose.msra.mxu0 %v6674
        %6693 = vmatprep.subr.bf16.mxu0 0
        %6694 = vmatpush1.bf16.xpose.msra.mxu0 %v6677
        %6695 = vmatprep.subr.bf16.mxu0 0
        %6696 = vmatpush1.bf16.xpose.msra.mxu0 0
        %6697 = vmatprep.subr.bf16.mxu0 0
        %6698 = vmatpush1.bf16.xpose.msra.mxu0 0
        %6699 = vmatprep.subr.bf16.mxu0 0
        %6700 = vmatpush1.bf16.xpose.msra.mxu0 0
        %6701 = vmatprep.subr.bf16.mxu0 0
        %6702 = vmatpush1.bf16.xpose.msra.mxu0 0
        %6703 = vmatprep.subr.bf16.mxu0 0
        %6704 = vmatpush1.bf16.xpose.msra.mxu0 0
        %6705 = vmatprep.subr.bf16.mxu0 0
        %6706 = vmatpush1.bf16.xpose.msra.mxu0 0
        %6707 = vmatprep.subr.bf16.mxu0 0
        %6708 = vmatpush1.bf16.xpose.msra.mxu0 0
        %6709 = vmatprep.subr.bf16.mxu0 0
        %6710 = vmatpush1.bf16.xpose.msra.mxu0 0
        %6711 = vmatprep.mubr.bf16.mxu0 0
        %6712 = vmatmul.mubr.bf16.gmra.mrb[0].mxu0 %v6632
        %v6713 = vpop.f32.mrb[0].mxu0
        %v6714 = vadd.f32 0.0, %v6713
        %v6715 = vpop.f32.mrb[0].mxu0
        %v6716 = vpop.f32.mrb[0].mxu0
        %v6717 = vadd.f32 0.0, %v6716
        %v6718 = vpop.f32.mrb[0].mxu0
        %6719 = vmatprep.mubr.bf16.mxu0 0
        %6720 = vmatmul.mubr.bf16.gmra.mrb[0].mxu0 %v6635
        %v6721 = vpop.f32.mrb[0].mxu0
        %v6722 = vadd.f32 0.0, %v6721
        %v6723 = vpop.f32.mrb[0].mxu0
        %v6724 = vpop.f32.mrb[0].mxu0
        %v6725 = vadd.f32 0.0, %v6724
        %v6726 = vpop.f32.mrb[0].mxu0
        %6727 = vmatprep.mubr.bf16.mxu0 0
        %6728 = vmatmul.mubr.bf16.gmra.mrb[0].mxu0 %v6638
        %v6729 = vpop.f32.mrb[0].mxu0
        %v6730 = vadd.f32 0.0, %v6729
        %v6731 = vpop.f32.mrb[0].mxu0
        %v6732 = vpop.f32.mrb[0].mxu0
        %v6733 = vadd.f32 0.0, %v6732
        %v6734 = vpop.f32.mrb[0].mxu0
        %6735 = vmatprep.mubr.bf16.mxu0 0
        %6736 = vmatmul.mubr.bf16.gmra.mrb[0].mxu0 %v6641
        %v6737 = vpop.f32.mrb[0].mxu0
        %v6738 = vadd.f32 0.0, %v6737
        %v6739 = vpop.f32.mrb[0].mxu0
        %v6740 = vpop.f32.mrb[0].mxu0
        %v6741 = vadd.f32 0.0, %v6740
        %v6742 = vpop.f32.mrb[0].mxu0
        %6743 = vmatprep.mubr.bf16.mxu0 0
        %6744 = vmatmul.mubr.bf16.gmra.mrb[0].mxu0 %v6644
        %v6745 = vpop.f32.mrb[0].mxu0
        %v6746 = vadd.f32 0.0, %v6745
        %v6747 = vpop.f32.mrb[0].mxu0
        %v6748 = vpop.f32.mrb[0].mxu0
        %v6749 = vadd.f32 0.0, %v6748
        %v6750 = vpop.f32.mrb[0].mxu0
        %6751 = vmatprep.mubr.bf16.mxu0 0
        %6752 = vmatmul.mubr.bf16.gmra.mrb[0].mxu0 %v6647
        %v6753 = vpop.f32.mrb[0].mxu0
        %v6754 = vadd.f32 0.0, %v6753
        %v6755 = vpop.f32.mrb[0].mxu0
        %v6756 = vpop.f32.mrb[0].mxu0
        %v6757 = vadd.f32 0.0, %v6756
        %v6758 = vpop.f32.mrb[0].mxu0
        %6759 = vmatprep.mubr.bf16.mxu0 0
        %6760 = vmatmul.mubr.bf16.gmra.mrb[0].mxu0 %v6650
        %v6761 = vpop.f32.mrb[0].mxu0
        %v6762 = vadd.f32 0.0, %v6761
        %v6763 = vpop.f32.mrb[0].mxu0
        %v6764 = vpop.f32.mrb[0].mxu0
        %v6765 = vadd.f32 0.0, %v6764
        %v6766 = vpop.f32.mrb[0].mxu0
        %6767 = vmatprep.mubr.bf16.mxu0 0
        %6768 = vmatmul.mubr.bf16.gmra.mrb[0].mxu0 %v6653
        %v6769 = vpop.f32.mrb[0].mxu0
        %v6770 = vadd.f32 0.0, %v6769
        %v6771 = vpop.f32.mrb[0].mxu0
        %v6772 = vpop.f32.mrb[0].mxu0
        %v6773 = vadd.f32 0.0, %v6772
        %v6774 = vpop.f32.mrb[0].mxu0
        %6775 = vdwg.mxu0
        %v6776 = vsel %vm2926, %v6714, -1e+30
        %v6777 = vsel %vm2927, %v6717, -1e+30
        %v6778 = vsel %vm2928, %v6722, -1e+30
        %v6779 = vsel %vm2929, %v6725, -1e+30
        %v6780 = vsel %vm2930, %v6730, -1e+30
        %v6781 = vsel %vm2931, %v6733, -1e+30
        %v6782 = vsel %vm2932, %v6738, -1e+30
        %v6783 = vsel %vm2933, %v6741, -1e+30
        %v6784 = vsel %vm2934, %v6746, -1e+30
        %v6785 = vsel %vm2935, %v6749, -1e+30
        %v6786 = vsel %vm2936, %v6754, -1e+30
        %v6787 = vsel %vm2937, %v6757, -1e+30
        %v6788 = vsel %vm2938, %v6762, -1e+30
        %v6789 = vsel %vm2939, %v6765, -1e+30
        %v6790 = vsel %vm2940, %v6770, -1e+30
        %v6791 = vsel %vm2941, %v6773, -1e+30
        %6792 = vmax.xlane.f32.xlu0 %v6776
        %v6793 = vpop.xlane.xlu0 %6792
        %6794 = vmax.xlane.f32.xlu0 %v6777
        %v6795 = vpop.xlane.xlu0 %6794
        %6796 = vmax.xlane.f32.xlu0 %v6778
        %v6797 = vpop.xlane.xlu0 %6796
        %6798 = vmax.xlane.f32.xlu0 %v6779
        %v6799 = vpop.xlane.xlu0 %6798
        %6800 = vmax.xlane.f32.xlu0 %v6780
        %v6801 = vpop.xlane.xlu0 %6800
        %6802 = vmax.xlane.f32.xlu0 %v6781
        %v6803 = vpop.xlane.xlu0 %6802
        %6804 = vmax.xlane.f32.xlu0 %v6782
        %v6805 = vpop.xlane.xlu0 %6804
        %6806 = vmax.xlane.f32.xlu0 %v6783
        %v6807 = vpop.xlane.xlu0 %6806
        %6808 = vmax.xlane.f32.xlu0 %v6784
        %v6809 = vpop.xlane.xlu0 %6808
        %6810 = vmax.xlane.f32.xlu0 %v6785
        %v6811 = vpop.xlane.xlu0 %6810
        %6812 = vmax.xlane.f32.xlu0 %v6786
        %v6813 = vpop.xlane.xlu0 %6812
        %6814 = vmax.xlane.f32.xlu0 %v6787
        %v6815 = vpop.xlane.xlu0 %6814
        %6816 = vmax.xlane.f32.xlu0 %v6788
        %v6817 = vpop.xlane.xlu0 %6816
        %6818 = vmax.xlane.f32.xlu0 %v6789
        %v6819 = vpop.xlane.xlu0 %6818
        %6820 = vmax.xlane.f32.xlu0 %v6790
        %v6821 = vpop.xlane.xlu0 %6820
        %6822 = vmax.xlane.f32.xlu0 %v6791
        %v6823 = vpop.xlane.xlu0 %6822
        %v6824 = vsub.f32 %v6776, %v6793
        %v6825 = vsub.f32 %v6777, %v6795
        %v6826 = vsub.f32 %v6778, %v6797
        %v6827 = vsub.f32 %v6779, %v6799
        %v6828 = vsub.f32 %v6780, %v6801
        %v6829 = vsub.f32 %v6781, %v6803
        %v6830 = vsub.f32 %v6782, %v6805
        %v6831 = vsub.f32 %v6783, %v6807
        %v6832 = vsub.f32 %v6784, %v6809
        %v6833 = vsub.f32 %v6785, %v6811
        %v6834 = vsub.f32 %v6786, %v6813
        %v6835 = vsub.f32 %v6787, %v6815
        %v6836 = vsub.f32 %v6788, %v6817
        %v6837 = vsub.f32 %v6789, %v6819
        %v6838 = vsub.f32 %v6790, %v6821
        %v6839 = vsub.f32 %v6791, %v6823
        %v6840 = vmul.f32 %v6824, 1.442695
        %v6841 = vpow.pop %v6840
        %v6842 = vmul.f32 %v6825, 1.442695
        %v6843 = vpow.pop %v6842
        %v6844 = vmul.f32 %v6826, 1.442695
        %v6845 = vpow.pop %v6844
        %v6846 = vmul.f32 %v6827, 1.442695
        %v6847 = vpow.pop %v6846
        %v6848 = vmul.f32 %v6828, 1.442695
        %v6849 = vpow.pop %v6848
        %v6850 = vmul.f32 %v6829, 1.442695
        %v6851 = vpow.pop %v6850
        %v6852 = vmul.f32 %v6830, 1.442695
        %v6853 = vpow.pop %v6852
        %v6854 = vmul.f32 %v6831, 1.442695
        %v6855 = vpow.pop %v6854
        %v6856 = vmul.f32 %v6832, 1.442695
        %v6857 = vpow.pop %v6856
        %v6858 = vmul.f32 %v6833, 1.442695
        %v6859 = vpow.pop %v6858
        %v6860 = vmul.f32 %v6834, 1.442695
        %v6861 = vpow.pop %v6860
        %v6862 = vmul.f32 %v6835, 1.442695
        %v6863 = vpow.pop %v6862
        %v6864 = vmul.f32 %v6836, 1.442695
        %v6865 = vpow.pop %v6864
        %v6866 = vmul.f32 %v6837, 1.442695
        %v6867 = vpow.pop %v6866
        %v6868 = vmul.f32 %v6838, 1.442695
        %v6869 = vpow.pop %v6868
        %v6870 = vmul.f32 %v6839, 1.442695
        %v6871 = vpow.pop %v6870
        %6872 = vadd.xlane.f32.xlu0 %v6841
        %v6873 = vpop.xlane.xlu0 %6872
        %6874 = vadd.xlane.f32.xlu0 %v6843
        %v6875 = vpop.xlane.xlu0 %6874
        %6876 = vadd.xlane.f32.xlu0 %v6845
        %v6877 = vpop.xlane.xlu0 %6876
        %6878 = vadd.xlane.f32.xlu0 %v6847
        %v6879 = vpop.xlane.xlu0 %6878
        %6880 = vadd.xlane.f32.xlu0 %v6849
        %v6881 = vpop.xlane.xlu0 %6880
        %6882 = vadd.xlane.f32.xlu0 %v6851
        %v6883 = vpop.xlane.xlu0 %6882
        %6884 = vadd.xlane.f32.xlu0 %v6853
        %v6885 = vpop.xlane.xlu0 %6884
        %6886 = vadd.xlane.f32.xlu0 %v6855
        %v6887 = vpop.xlane.xlu0 %6886
        %6888 = vadd.xlane.f32.xlu0 %v6857
        %v6889 = vpop.xlane.xlu0 %6888
        %6890 = vadd.xlane.f32.xlu0 %v6859
        %v6891 = vpop.xlane.xlu0 %6890
        %6892 = vadd.xlane.f32.xlu0 %v6861
        %v6893 = vpop.xlane.xlu0 %6892
        %6894 = vadd.xlane.f32.xlu0 %v6863
        %v6895 = vpop.xlane.xlu0 %6894
        %6896 = vadd.xlane.f32.xlu0 %v6865
        %v6897 = vpop.xlane.xlu0 %6896
        %6898 = vadd.xlane.f32.xlu0 %v6867
        %v6899 = vpop.xlane.xlu0 %6898
        %6900 = vadd.xlane.f32.xlu0 %v6869
        %v6901 = vpop.xlane.xlu0 %6900
        %6902 = vadd.xlane.f32.xlu0 %v6871
        %v6903 = vpop.xlane.xlu0 %6902
        %v6904 = vrcp.pop %v6873
        %v6905 = vrcp.pop %v6875
        %v6906 = vrcp.pop %v6877
        %v6907 = vrcp.pop %v6879
        %v6908 = vrcp.pop %v6881
        %v6909 = vrcp.pop %v6883
        %v6910 = vrcp.pop %v6885
        %v6911 = vrcp.pop %v6887
        %v6912 = vrcp.pop %v6889
        %v6913 = vrcp.pop %v6891
        %v6914 = vrcp.pop %v6893
        %v6915 = vrcp.pop %v6895
        %v6916 = vrcp.pop %v6897
        %v6917 = vrcp.pop %v6899
        %v6918 = vrcp.pop %v6901
        %v6919 = vrcp.pop %v6903
        %v6920 = vmul.f32 %v6841, %v6904
        %v6921 = vmul.f32 %v6843, %v6905
        %v6922 = vmul.f32 %v6845, %v6906
        %v6923 = vmul.f32 %v6847, %v6907
        %v6924 = vmul.f32 %v6849, %v6908
        %v6925 = vmul.f32 %v6851, %v6909
        %v6926 = vmul.f32 %v6853, %v6910
        %v6927 = vmul.f32 %v6855, %v6911
        %v6928 = vmul.f32 %v6857, %v6912
        %v6929 = vmul.f32 %v6859, %v6913
        %v6930 = vmul.f32 %v6861, %v6914
        %v6931 = vmul.f32 %v6863, %v6915
        %v6932 = vmul.f32 %v6865, %v6916
        %v6933 = vmul.f32 %v6867, %v6917
        %v6934 = vmul.f32 %v6869, %v6918
        %v6935 = vmul.f32 %v6871, %v6919
        %v6936 = vpack.c.bf16 %v6921, %v6920
        %v6937 = vpack.c.bf16 %v6923, %v6922
        %v6938 = vpack.c.bf16 %v6925, %v6924
        %v6939 = vpack.c.bf16 %v6927, %v6926
        %v6940 = vpack.c.bf16 %v6929, %v6928
        %v6941 = vpack.c.bf16 %v6931, %v6930
        %v6942 = vpack.c.bf16 %v6933, %v6932
        %v6943 = vpack.c.bf16 %v6935, %v6934
        %6944 = vmatprep.subr.bf16.mxu0 0
        %6945 = vmatpush1.bf16.msra.mxu0 %v6623
        %6946 = vmatprep.subr.bf16.mxu0 0
        %6947 = vmatpush1.bf16.msra.mxu0 %v6624
        %6948 = vmatprep.subr.bf16.mxu0 0
        %6949 = vmatpush1.bf16.msra.mxu0 %v6625
        %6950 = vmatprep.subr.bf16.mxu0 0
        %6951 = vmatpush1.bf16.msra.mxu0 %v6626
        %6952 = vmatprep.subr.bf16.mxu0 0
        %6953 = vmatpush1.bf16.msra.mxu0 %v6627
        %6954 = vmatprep.subr.bf16.mxu0 0
        %6955 = vmatpush1.bf16.msra.mxu0 %v6628
        %6956 = vmatprep.subr.bf16.mxu0 0
        %6957 = vmatpush1.bf16.msra.mxu0 %v6629
        %6958 = vmatprep.subr.bf16.mxu0 0
        %6959 = vmatpush1.bf16.msra.mxu0 %v6630
        %6960 = vmatprep.subr.bf16.mxu0 0
        %6961 = vmatpush1.bf16.msra.mxu0 0
        %6962 = vmatprep.subr.bf16.mxu0 0
        %6963 = vmatpush1.bf16.msra.mxu0 0
        %6964 = vmatprep.subr.bf16.mxu0 0
        %6965 = vmatpush1.bf16.msra.mxu0 0
        %6966 = vmatprep.subr.bf16.mxu0 0
        %6967 = vmatpush1.bf16.msra.mxu0 0
        %6968 = vmatprep.subr.bf16.mxu0 0
        %6969 = vmatpush1.bf16.msra.mxu0 0
        %6970 = vmatprep.subr.bf16.mxu0 0
        %6971 = vmatpush1.bf16.msra.mxu0 0
        %6972 = vmatprep.subr.bf16.mxu0 0
        %6973 = vmatpush1.bf16.msra.mxu0 0
        %6974 = vmatprep.subr.bf16.mxu0 0
        %6975 = vmatpush1.bf16.msra.mxu0 0
        %6976 = vmatprep.mubr.bf16.mxu0 0
        %6977 = vmatmul.mubr.bf16.gmra.mrb[0].mxu0 %v6936
        %v6978 = vpop.f32.mrb[0].mxu0
        %v6979 = vadd.f32 0.0, %v6978
        %v6980 = vpop.f32.mrb[0].mxu0
        %v6981 = vpop.f32.mrb[0].mxu0
        %v6982 = vadd.f32 0.0, %v6981
        %v6983 = vpop.f32.mrb[0].mxu0
        %6984 = vmatprep.mubr.bf16.mxu0 0
        %6985 = vmatmul.mubr.bf16.gmra.mrb[0].mxu0 %v6937
        %v6986 = vpop.f32.mrb[0].mxu0
        %v6987 = vadd.f32 0.0, %v6986
        %v6988 = vpop.f32.mrb[0].mxu0
        %v6989 = vpop.f32.mrb[0].mxu0
        %v6990 = vadd.f32 0.0, %v6989
        %v6991 = vpop.f32.mrb[0].mxu0
        %6992 = vmatprep.mubr.bf16.mxu0 0
        %6993 = vmatmul.mubr.bf16.gmra.mrb[0].mxu0 %v6938
        %v6994 = vpop.f32.mrb[0].mxu0
        %v6995 = vadd.f32 0.0, %v6994
        %v6996 = vpop.f32.mrb[0].mxu0
        %v6997 = vpop.f32.mrb[0].mxu0
        %v6998 = vadd.f32 0.0, %v6997
        %v6999 = vpop.f32.mrb[0].mxu0
        %7000 = vmatprep.mubr.bf16.mxu0 0
        %7001 = vmatmul.mubr.bf16.gmra.mrb[0].mxu0 %v6939
        %v7002 = vpop.f32.mrb[0].mxu0
        %v7003 = vadd.f32 0.0, %v7002
        %v7004 = vpop.f32.mrb[0].mxu0
        %v7005 = vpop.f32.mrb[0].mxu0
        %v7006 = vadd.f32 0.0, %v7005
        %v7007 = vpop.f32.mrb[0].mxu0
        %7008 = vmatprep.mubr.bf16.mxu0 0
        %7009 = vmatmul.mubr.bf16.gmra.mrb[0].mxu0 %v6940
        %v7010 = vpop.f32.mrb[0].mxu0
        %v7011 = vadd.f32 0.0, %v7010
        %v7012 = vpop.f32.mrb[0].mxu0
        %v7013 = vpop.f32.mrb[0].mxu0
        %v7014 = vadd.f32 0.0, %v7013
        %v7015 = vpop.f32.mrb[0].mxu0
        %7016 = vmatprep.mubr.bf16.mxu0 0
        %7017 = vmatmul.mubr.bf16.gmra.mrb[0].mxu0 %v6941
        %v7018 = vpop.f32.mrb[0].mxu0
        %v7019 = vadd.f32 0.0, %v7018
        %v7020 = vpop.f32.mrb[0].mxu0
        %v7021 = vpop.f32.mrb[0].mxu0
        %v7022 = vadd.f32 0.0, %v7021
        %v7023 = vpop.f32.mrb[0].mxu0
        %7024 = vmatprep.mubr.bf16.mxu0 0
        %7025 = vmatmul.mubr.bf16.gmra.mrb[0].mxu0 %v6942
        %v7026 = vpop.f32.mrb[0].mxu0
        %v7027 = vadd.f32 0.0, %v7026
        %v7028 = vpop.f32.mrb[0].mxu0
        %v7029 = vpop.f32.mrb[0].mxu0
        %v7030 = vadd.f32 0.0, %v7029
        %v7031 = vpop.f32.mrb[0].mxu0
        %7032 = vmatprep.mubr.bf16.mxu0 0
        %7033 = vmatmul.mubr.bf16.gmra.mrb[0].mxu0 %v6943
        %v7034 = vpop.f32.mrb[0].mxu0
        %v7035 = vadd.f32 0.0, %v7034
        %v7036 = vpop.f32.mrb[0].mxu0
        %v7037 = vpop.f32.mrb[0].mxu0
        %v7038 = vadd.f32 0.0, %v7037
        %v7039 = vpop.f32.mrb[0].mxu0
        %7040 = vdwg.mxu0
        %v7041 = vpack.c.bf16 %v6982, %v6979
        %v7042 = vpack.c.bf16 %v6990, %v6987
        %v7043 = vpack.c.bf16 %v6998, %v6995
        %v7044 = vpack.c.bf16 %v7006, %v7003
        %v7045 = vpack.c.bf16 %v7014, %v7011
        %v7046 = vpack.c.bf16 %v7022, %v7019
        %v7047 = vpack.c.bf16 %v7030, %v7027
        %v7048 = vpack.c.bf16 %v7038, %v7035
        %v7049 = vld [vmem:[#allocation9 + $0x180] sm:$0xff]
        %v7050 = vld [vmem:[#allocation9 + $0x188] sm:$0xf]
        %v7051 = vld [vmem:[#allocation9 + $0x18c] sm:$0xff]
        %v7052 = vld [vmem:[#allocation9 + $0x194] sm:$0xf]
        %v7053 = vld [vmem:[#allocation9 + $0x198] sm:$0xff]
        %v7054 = vld [vmem:[#allocation9 + $0x1a0] sm:$0xf]
        %v7055 = vld [vmem:[#allocation9 + $0x1a4] sm:$0xff]
        %v7056 = vld [vmem:[#allocation9 + $0x1ac] sm:$0xf]
        %v7057 = vld [vmem:[#allocation9 + $0x1b0] sm:$0xff]
        %v7058 = vld [vmem:[#allocation9 + $0x1b8] sm:$0xf]
        %v7059 = vld [vmem:[#allocation9 + $0x1bc] sm:$0xff]
        %v7060 = vld [vmem:[#allocation9 + $0x1c4] sm:$0xf]
        %v7061 = vld [vmem:[#allocation9 + $0x1c8] sm:$0xff]
        %v7062 = vld [vmem:[#allocation9 + $0x1d0] sm:$0xf]
        %v7063 = vld [vmem:[#allocation9 + $0x1d4] sm:$0xff]
        %v7064 = vld [vmem:[#allocation9 + $0x1dc] sm:$0xf]
        %v7081 = vunpack.c.l.b16 %v7049
        %v7082 = vunpack.c.h.b16 %v7049
        %v7083 = vunpack.c.l.b16 %v7050
        %v7084 = vunpack.c.l.b16 %v7051
        %v7085 = vunpack.c.h.b16 %v7051
        %v7086 = vunpack.c.l.b16 %v7052
        %v7087 = vunpack.c.l.b16 %v7053
        %v7088 = vunpack.c.h.b16 %v7053
        %v7089 = vunpack.c.l.b16 %v7054
        %v7090 = vunpack.c.l.b16 %v7055
        %v7091 = vunpack.c.h.b16 %v7055
        %v7092 = vunpack.c.l.b16 %v7056
        %v7093 = vunpack.c.l.b16 %v7057
        %v7094 = vunpack.c.h.b16 %v7057
        %v7095 = vunpack.c.l.b16 %v7058
        %v7096 = vunpack.c.l.b16 %v7059
        %v7097 = vunpack.c.h.b16 %v7059
        %v7098 = vunpack.c.l.b16 %v7060
        %v7099 = vunpack.c.l.b16 %v7061
        %v7100 = vunpack.c.h.b16 %v7061
        %v7101 = vunpack.c.l.b16 %v7062
        %v7102 = vunpack.c.l.b16 %v7063
        %v7103 = vunpack.c.h.b16 %v7063
        %v7104 = vunpack.c.l.b16 %v7064
        %v7105 = vpack.c.b16 %v7084, %v7081
        %v7106 = vpack.c.b16 %v7085, %v7082
        %v7107 = vpack.c.b16 %v7086, %v7083
        %v7108 = vpack.c.b16 %v7090, %v7087
        %v7109 = vpack.c.b16 %v7091, %v7088
        %v7110 = vpack.c.b16 %v7092, %v7089
        %v7111 = vpack.c.b16 %v7096, %v7093
        %v7112 = vpack.c.b16 %v7097, %v7094
        %v7113 = vpack.c.b16 %v7098, %v7095
        %v7114 = vpack.c.b16 %v7102, %v7099
        %v7115 = vpack.c.b16 %v7103, %v7100
        %v7116 = vpack.c.b16 %v7104, %v7101
        %v7130 = vsel %vm2966, %v7041, 0
        %v7133 = vsel %vm2966, %v7042, 0
        %v7136 = vsel %vm2966, %v7043, 0
        %v7139 = vsel %vm2966, %v7044, 0
        %v7142 = vsel %vm2966, %v7045, 0
        %v7145 = vsel %vm2966, %v7046, 0
        %v7148 = vsel %vm2966, %v7047, 0
        %v7151 = vsel %vm2966, %v7048, 0
        %7153 = vmatprep.subr.bf16.mxu0 %v7106
        %7154 = vmatpush1.bf16.msra.mxu0 %v7105
        %7155 = vmatprep.subr.bf16.mxu0 %v7109
        %7156 = vmatpush1.bf16.msra.mxu0 %v7108
        %7157 = vmatprep.subr.bf16.mxu0 %v7112
        %7158 = vmatpush1.bf16.msra.mxu0 %v7111
        %7159 = vmatprep.subr.bf16.mxu0 %v7115
        %7160 = vmatpush1.bf16.msra.mxu0 %v7114
        %7161 = vmatprep.subr.bf16.mxu0 0
        %7162 = vmatpush1.bf16.msra.mxu0 0
        %7163 = vmatprep.subr.bf16.mxu0 0
        %7164 = vmatpush1.bf16.msra.mxu0 0
        %7165 = vmatprep.subr.bf16.mxu0 0
        %7166 = vmatpush1.bf16.msra.mxu0 0
        %7167 = vmatprep.subr.bf16.mxu0 0
        %7168 = vmatpush1.bf16.msra.mxu0 0
        %7169 = vmatprep.subr.bf16.mxu0 0
        %7170 = vmatpush1.bf16.msra.mxu0 0
        %7171 = vmatprep.subr.bf16.mxu0 0
        %7172 = vmatpush1.bf16.msra.mxu0 0
        %7173 = vmatprep.subr.bf16.mxu0 0
        %7174 = vmatpush1.bf16.msra.mxu0 0
        %7175 = vmatprep.subr.bf16.mxu0 0
        %7176 = vmatpush1.bf16.msra.mxu0 0
        %7177 = vmatprep.subr.bf16.mxu0 0
        %7178 = vmatpush1.bf16.msra.mxu0 0
        %7179 = vmatprep.subr.bf16.mxu0 0
        %7180 = vmatpush1.bf16.msra.mxu0 0
        %7181 = vmatprep.subr.bf16.mxu0 0
        %7182 = vmatpush1.bf16.msra.mxu0 0
        %7183 = vmatprep.subr.bf16.mxu0 0
        %7184 = vmatpush1.bf16.msra.mxu0 0
        %7185 = vmatprep.mubr.bf16.mxu0 0
        %7186 = vmatmul.mubr.bf16.gmra.mrb[0].mxu0 %v7130
        %v7187 = vpop.f32.mrb[0].mxu0
        %v7188 = vadd.f32 0.0, %v7187
        %v7189 = vpop.f32.mrb[0].mxu0
        %v7190 = vadd.f32 0.0, %v7189
        %v7191 = vpop.f32.mrb[0].mxu0
        %v7192 = vadd.f32 0.0, %v7191
        %v7193 = vpop.f32.mrb[0].mxu0
        %v7194 = vadd.f32 0.0, %v7193
        %7195 = vmatprep.mubr.bf16.mxu0 0
        %7196 = vmatmul.mubr.bf16.gmra.mrb[0].mxu0 %v7133
        %v7197 = vpop.f32.mrb[0].mxu0
        %v7198 = vadd.f32 0.0, %v7197
        %v7199 = vpop.f32.mrb[0].mxu0
        %v7200 = vadd.f32 0.0, %v7199
        %v7201 = vpop.f32.mrb[0].mxu0
        %v7202 = vadd.f32 0.0, %v7201
        %v7203 = vpop.f32.mrb[0].mxu0
        %v7204 = vadd.f32 0.0, %v7203
        %7205 = vmatprep.mubr.bf16.mxu0 0
        %7206 = vmatmul.mubr.bf16.gmra.mrb[0].mxu0 %v7136
        %v7207 = vpop.f32.mrb[0].mxu0
        %v7208 = vadd.f32 0.0, %v7207
        %v7209 = vpop.f32.mrb[0].mxu0
        %v7210 = vadd.f32 0.0, %v7209
        %v7211 = vpop.f32.mrb[0].mxu0
        %v7212 = vadd.f32 0.0, %v7211
        %v7213 = vpop.f32.mrb[0].mxu0
        %v7214 = vadd.f32 0.0, %v7213
        %7215 = vmatprep.mubr.bf16.mxu0 0
        %7216 = vmatmul.mubr.bf16.gmra.mrb[0].mxu0 %v7139
        %v7217 = vpop.f32.mrb[0].mxu0
        %v7218 = vadd.f32 0.0, %v7217
        %v7219 = vpop.f32.mrb[0].mxu0
        %v7220 = vadd.f32 0.0, %v7219
        %v7221 = vpop.f32.mrb[0].mxu0
        %v7222 = vadd.f32 0.0, %v7221
        %v7223 = vpop.f32.mrb[0].mxu0
        %v7224 = vadd.f32 0.0, %v7223
        %7225 = vmatprep.mubr.bf16.mxu0 0
        %7226 = vmatmul.mubr.bf16.gmra.mrb[0].mxu0 %v7142
        %v7227 = vpop.f32.mrb[0].mxu0
        %v7228 = vadd.f32 0.0, %v7227
        %v7229 = vpop.f32.mrb[0].mxu0
        %v7230 = vadd.f32 0.0, %v7229
        %v7231 = vpop.f32.mrb[0].mxu0
        %v7232 = vadd.f32 0.0, %v7231
        %v7233 = vpop.f32.mrb[0].mxu0
        %v7234 = vadd.f32 0.0, %v7233
        %7235 = vmatprep.mubr.bf16.mxu0 0
        %7236 = vmatmul.mubr.bf16.gmra.mrb[0].mxu0 %v7145
        %v7237 = vpop.f32.mrb[0].mxu0
        %v7238 = vadd.f32 0.0, %v7237
        %v7239 = vpop.f32.mrb[0].mxu0
        %v7240 = vadd.f32 0.0, %v7239
        %v7241 = vpop.f32.mrb[0].mxu0
        %v7242 = vadd.f32 0.0, %v7241
        %v7243 = vpop.f32.mrb[0].mxu0
        %v7244 = vadd.f32 0.0, %v7243
        %7245 = vmatprep.mubr.bf16.mxu0 0
        %7246 = vmatmul.mubr.bf16.gmra.mrb[0].mxu0 %v7148
        %v7247 = vpop.f32.mrb[0].mxu0
        %v7248 = vadd.f32 0.0, %v7247
        %v7249 = vpop.f32.mrb[0].mxu0
        %v7250 = vadd.f32 0.0, %v7249
        %v7251 = vpop.f32.mrb[0].mxu0
        %v7252 = vadd.f32 0.0, %v7251
        %v7253 = vpop.f32.mrb[0].mxu0
        %v7254 = vadd.f32 0.0, %v7253
        %7255 = vmatprep.mubr.bf16.mxu0 0
        %7256 = vmatmul.mubr.bf16.gmra.mrb[0].mxu0 %v7151
        %v7257 = vpop.f32.mrb[0].mxu0
        %v7258 = vadd.f32 0.0, %v7257
        %v7259 = vpop.f32.mrb[0].mxu0
        %v7260 = vadd.f32 0.0, %v7259
        %v7261 = vpop.f32.mrb[0].mxu0
        %v7262 = vadd.f32 0.0, %v7261
        %v7263 = vpop.f32.mrb[0].mxu0
        %v7264 = vadd.f32 0.0, %v7263
        %7265 = vdwg.mxu0
        %7266 = vmatprep.subr.bf16.mxu0 0
        %7267 = vmatpush1.bf16.msra.mxu0 %v7107
        %7268 = vmatprep.subr.bf16.mxu0 0
        %7269 = vmatpush1.bf16.msra.mxu0 %v7110
        %7270 = vmatprep.subr.bf16.mxu0 0
        %7271 = vmatpush1.bf16.msra.mxu0 %v7113
        %7272 = vmatprep.subr.bf16.mxu0 0
        %7273 = vmatpush1.bf16.msra.mxu0 %v7116
        %7274 = vmatprep.subr.bf16.mxu0 0
        %7275 = vmatpush1.bf16.msra.mxu0 0
        %7276 = vmatprep.subr.bf16.mxu0 0
        %7277 = vmatpush1.bf16.msra.mxu0 0
        %7278 = vmatprep.subr.bf16.mxu0 0
        %7279 = vmatpush1.bf16.msra.mxu0 0
        %7280 = vmatprep.subr.bf16.mxu0 0
        %7281 = vmatpush1.bf16.msra.mxu0 0
        %7282 = vmatprep.subr.bf16.mxu0 0
        %7283 = vmatpush1.bf16.msra.mxu0 0
        %7284 = vmatprep.subr.bf16.mxu0 0
        %7285 = vmatpush1.bf16.msra.mxu0 0
        %7286 = vmatprep.subr.bf16.mxu0 0
        %7287 = vmatpush1.bf16.msra.mxu0 0
        %7288 = vmatprep.subr.bf16.mxu0 0
        %7289 = vmatpush1.bf16.msra.mxu0 0
        %7290 = vmatprep.subr.bf16.mxu0 0
        %7291 = vmatpush1.bf16.msra.mxu0 0
        %7292 = vmatprep.subr.bf16.mxu0 0
        %7293 = vmatpush1.bf16.msra.mxu0 0
        %7294 = vmatprep.subr.bf16.mxu0 0
        %7295 = vmatpush1.bf16.msra.mxu0 0
        %7296 = vmatprep.subr.bf16.mxu0 0
        %7297 = vmatpush1.bf16.msra.mxu0 0
        %7298 = vmatprep.mubr.bf16.mxu0 0
        %7299 = vmatmul.mubr.bf16.gmra.mrb[0].mxu0 %v7130
        %v7300 = vpop.f32.mrb[0].mxu0
        %v7301 = vadd.f32 0.0, %v7300
        %v7302 = vpop.f32.mrb[0].mxu0
        %v7303 = vpop.f32.mrb[0].mxu0
        %v7304 = vadd.f32 0.0, %v7303
        %v7305 = vpop.f32.mrb[0].mxu0
        %7306 = vmatprep.mubr.bf16.mxu0 0
        %7307 = vmatmul.mubr.bf16.gmra.mrb[0].mxu0 %v7133
        %v7308 = vpop.f32.mrb[0].mxu0
        %v7309 = vadd.f32 0.0, %v7308
        %v7310 = vpop.f32.mrb[0].mxu0
        %v7311 = vpop.f32.mrb[0].mxu0
        %v7312 = vadd.f32 0.0, %v7311
        %v7313 = vpop.f32.mrb[0].mxu0
        %7314 = vmatprep.mubr.bf16.mxu0 0
        %7315 = vmatmul.mubr.bf16.gmra.mrb[0].mxu0 %v7136
        %v7316 = vpop.f32.mrb[0].mxu0
        %v7317 = vadd.f32 0.0, %v7316
        %v7318 = vpop.f32.mrb[0].mxu0
        %v7319 = vpop.f32.mrb[0].mxu0
        %v7320 = vadd.f32 0.0, %v7319
        %v7321 = vpop.f32.mrb[0].mxu0
        %7322 = vmatprep.mubr.bf16.mxu0 0
        %7323 = vmatmul.mubr.bf16.gmra.mrb[0].mxu0 %v7139
        %v7324 = vpop.f32.mrb[0].mxu0
        %v7325 = vadd.f32 0.0, %v7324
        %v7326 = vpop.f32.mrb[0].mxu0
        %v7327 = vpop.f32.mrb[0].mxu0
        %v7328 = vadd.f32 0.0, %v7327
        %v7329 = vpop.f32.mrb[0].mxu0
        %7330 = vmatprep.mubr.bf16.mxu0 0
        %7331 = vmatmul.mubr.bf16.gmra.mrb[0].mxu0 %v7142
        %v7332 = vpop.f32.mrb[0].mxu0
        %v7333 = vadd.f32 0.0, %v7332
        %v7334 = vpop.f32.mrb[0].mxu0
        %v7335 = vpop.f32.mrb[0].mxu0
        %v7336 = vadd.f32 0.0, %v7335
        %v7337 = vpop.f32.mrb[0].mxu0
        %7338 = vmatprep.mubr.bf16.mxu0 0
        %7339 = vmatmul.mubr.bf16.gmra.mrb[0].mxu0 %v7145
        %v7340 = vpop.f32.mrb[0].mxu0
        %v7341 = vadd.f32 0.0, %v7340
        %v7342 = vpop.f32.mrb[0].mxu0
        %v7343 = vpop.f32.mrb[0].mxu0
        %v7344 = vadd.f32 0.0, %v7343
        %v7345 = vpop.f32.mrb[0].mxu0
        %7346 = vmatprep.mubr.bf16.mxu0 0
        %7347 = vmatmul.mubr.bf16.gmra.mrb[0].mxu0 %v7148
        %v7348 = vpop.f32.mrb[0].mxu0
        %v7349 = vadd.f32 0.0, %v7348
        %v7350 = vpop.f32.mrb[0].mxu0
        %v7351 = vpop.f32.mrb[0].mxu0
        %v7352 = vadd.f32 0.0, %v7351
        %v7353 = vpop.f32.mrb[0].mxu0
        %7354 = vmatprep.mubr.bf16.mxu0 0
        %7355 = vmatmul.mubr.bf16.gmra.mrb[0].mxu0 %v7151
        %v7356 = vpop.f32.mrb[0].mxu0
        %v7357 = vadd.f32 0.0, %v7356
        %v7358 = vpop.f32.mrb[0].mxu0
        %v7359 = vpop.f32.mrb[0].mxu0
        %v7360 = vadd.f32 0.0, %v7359
        %v7361 = vpop.f32.mrb[0].mxu0
        %7362 = vdwg.mxu0
        %v7363 = vld [vmem:[#allocation3] sm:$0xff]
        %v7364 = vld [vmem:[#allocation3 + $0x8] sm:$0xff]
        %v7365 = vld [vmem:[#allocation3 + $0x10] sm:$0xff]
        %v7366 = vld [vmem:[#allocation3 + $0x18] sm:$0xff]
        %v7367 = vld [vmem:[#allocation3 + $0x20] sm:$0xff]
        %v7368 = vld [vmem:[#allocation3 + $0x28] sm:$0xff]
        %v7369 = vld [vmem:[#allocation3 + $0x30] sm:$0xff]
        %v7370 = vld [vmem:[#allocation3 + $0x38] sm:$0xff]
        %v7371 = vld [vmem:[#allocation3 + $0x40] sm:$0xff]
        %v7372 = vld [vmem:[#allocation3 + $0x48] sm:$0xff]
        %v7373 = vld [vmem:[#allocation3 + $0x50] sm:$0xff]
        %v7374 = vld [vmem:[#allocation3 + $0x58] sm:$0xff]
        %v7375 = vld [vmem:[#allocation3 + $0x60] sm:$0xff]
        %v7376 = vld [vmem:[#allocation3 + $0x68] sm:$0xff]
        %v7377 = vld [vmem:[#allocation3 + $0x70] sm:$0xff]
        %v7378 = vld [vmem:[#allocation3 + $0x78] sm:$0xff]
        %v7379 = vld [vmem:[#allocation3 + $0x80] sm:$0xff]
        %v7380 = vld [vmem:[#allocation3 + $0x88] sm:$0xff]
        %v7381 = vld [vmem:[#allocation3 + $0x90] sm:$0xff]
        %v7382 = vld [vmem:[#allocation3 + $0x98] sm:$0xff]
        %v7383 = vld [vmem:[#allocation3 + $0xa0] sm:$0xff]
        %v7384 = vld [vmem:[#allocation3 + $0xa8] sm:$0xff]
        %v7385 = vld [vmem:[#allocation3 + $0xb0] sm:$0xff]
        %v7386 = vld [vmem:[#allocation3 + $0xb8] sm:$0xff]
        %v7387 = vld [vmem:[#allocation3 + $0xc0] sm:$0xff]
        %v7388 = vld [vmem:[#allocation3 + $0xc8] sm:$0xff]
        %v7389 = vld [vmem:[#allocation3 + $0xd0] sm:$0xff]
        %v7390 = vld [vmem:[#allocation3 + $0xd8] sm:$0xff]
        %v7391 = vld [vmem:[#allocation3 + $0xe0] sm:$0xff]
        %v7392 = vld [vmem:[#allocation3 + $0xe8] sm:$0xff]
        %v7393 = vld [vmem:[#allocation3 + $0xf0] sm:$0xff]
        %v7394 = vld [vmem:[#allocation3 + $0xf8] sm:$0xff]
        %v7395 = vld [vmem:[#allocation3 + $0x100] sm:$0xff]
        %v7396 = vld [vmem:[#allocation3 + $0x108] sm:$0xff]
        %v7397 = vld [vmem:[#allocation3 + $0x110] sm:$0xff]
        %v7398 = vld [vmem:[#allocation3 + $0x118] sm:$0xff]
        %v7399 = vld [vmem:[#allocation3 + $0x120] sm:$0xff]
        %v7400 = vld [vmem:[#allocation3 + $0x128] sm:$0xff]
        %v7401 = vld [vmem:[#allocation3 + $0x130] sm:$0xff]
        %v7402 = vld [vmem:[#allocation3 + $0x138] sm:$0xff]
        %v7403 = vld [vmem:[#allocation3 + $0x140] sm:$0xff]
        %v7404 = vld [vmem:[#allocation3 + $0x148] sm:$0xff]
        %v7405 = vld [vmem:[#allocation3 + $0x150] sm:$0xff]
        %v7406 = vld [vmem:[#allocation3 + $0x158] sm:$0xff]
        %v7407 = vld [vmem:[#allocation3 + $0x160] sm:$0xff]
        %v7408 = vld [vmem:[#allocation3 + $0x168] sm:$0xff]
        %v7409 = vld [vmem:[#allocation3 + $0x170] sm:$0xff]
        %v7410 = vld [vmem:[#allocation3 + $0x178] sm:$0xff]
        %v7411 = vadd.f32 %v7363, %v7188
        %v7412 = vadd.f32 %v7364, %v7190
        %v7413 = vadd.f32 %v7365, %v7301
        %v7414 = vadd.f32 %v7366, %v7192
        %v7415 = vadd.f32 %v7367, %v7194
        %v7416 = vadd.f32 %v7368, %v7304
        %v7417 = vadd.f32 %v7369, %v7198
        %v7418 = vadd.f32 %v7370, %v7200
        %v7419 = vadd.f32 %v7371, %v7309
        %v7420 = vadd.f32 %v7372, %v7202
        %v7421 = vadd.f32 %v7373, %v7204
        %v7422 = vadd.f32 %v7374, %v7312
        %v7423 = vadd.f32 %v7375, %v7208
        %v7424 = vadd.f32 %v7376, %v7210
        %v7425 = vadd.f32 %v7377, %v7317
        %v7426 = vadd.f32 %v7378, %v7212
        %v7427 = vadd.f32 %v7379, %v7214
        %v7428 = vadd.f32 %v7380, %v7320
        %v7429 = vadd.f32 %v7381, %v7218
        %v7430 = vadd.f32 %v7382, %v7220
        %v7431 = vadd.f32 %v7383, %v7325
        %v7432 = vadd.f32 %v7384, %v7222
        %v7433 = vadd.f32 %v7385, %v7224
        %v7434 = vadd.f32 %v7386, %v7328
        %v7435 = vadd.f32 %v7387, %v7228
        %v7436 = vadd.f32 %v7388, %v7230
        %v7437 = vadd.f32 %v7389, %v7333
        %v7438 = vadd.f32 %v7390, %v7232
        %v7439 = vadd.f32 %v7391, %v7234
        %v7440 = vadd.f32 %v7392, %v7336
        %v7441 = vadd.f32 %v7393, %v7238
        %v7442 = vadd.f32 %v7394, %v7240
        %v7443 = vadd.f32 %v7395, %v7341
        %v7444 = vadd.f32 %v7396, %v7242
        %v7445 = vadd.f32 %v7397, %v7244
        %v7446 = vadd.f32 %v7398, %v7344
        %v7447 = vadd.f32 %v7399, %v7248
        %v7448 = vadd.f32 %v7400, %v7250
        %v7449 = vadd.f32 %v7401, %v7349
        %v7450 = vadd.f32 %v7402, %v7252
        %v7451 = vadd.f32 %v7403, %v7254
        %v7452 = vadd.f32 %v7404, %v7352
        %v7453 = vadd.f32 %v7405, %v7258
        %v7454 = vadd.f32 %v7406, %v7260
        %v7455 = vadd.f32 %v7407, %v7357
        %v7456 = vadd.f32 %v7408, %v7262
        %v7457 = vadd.f32 %v7409, %v7264
        %v7458 = vadd.f32 %v7410, %v7360
        %7459 = vst [vmem:[#allocation3] sm:$0xff] %v7411
        %7460 = vst [vmem:[#allocation3 + $0x8] sm:$0xff] %v7412
        %7461 = vst [vmem:[#allocation3 + $0x10] sm:$0xff] %v7413
        %7462 = vst [vmem:[#allocation3 + $0x18] sm:$0xff] %v7414
        %7463 = vst [vmem:[#allocation3 + $0x20] sm:$0xff] %v7415
        %7464 = vst [vmem:[#allocation3 + $0x28] sm:$0xff] %v7416
        %7465 = vst [vmem:[#allocation3 + $0x30] sm:$0xff] %v7417
        %7466 = vst [vmem:[#allocation3 + $0x38] sm:$0xff] %v7418
        %7467 = vst [vmem:[#allocation3 + $0x40] sm:$0xff] %v7419
        %7468 = vst [vmem:[#allocation3 + $0x48] sm:$0xff] %v7420
        %7469 = vst [vmem:[#allocation3 + $0x50] sm:$0xff] %v7421
        %7470 = vst [vmem:[#allocation3 + $0x58] sm:$0xff] %v7422
        %7471 = vst [vmem:[#allocation3 + $0x60] sm:$0xff] %v7423
        %7472 = vst [vmem:[#allocation3 + $0x68] sm:$0xff] %v7424
        %7473 = vst [vmem:[#allocation3 + $0x70] sm:$0xff] %v7425
        %7474 = vst [vmem:[#allocation3 + $0x78] sm:$0xff] %v7426
        %7475 = vst [vmem:[#allocation3 + $0x80] sm:$0xff] %v7427
        %7476 = vst [vmem:[#allocation3 + $0x88] sm:$0xff] %v7428
        %7477 = vst [vmem:[#allocation3 + $0x90] sm:$0xff] %v7429
        %7478 = vst [vmem:[#allocation3 + $0x98] sm:$0xff] %v7430
        %7479 = vst [vmem:[#allocation3 + $0xa0] sm:$0xff] %v7431
        %7480 = vst [vmem:[#allocation3 + $0xa8] sm:$0xff] %v7432
        %7481 = vst [vmem:[#allocation3 + $0xb0] sm:$0xff] %v7433
        %7482 = vst [vmem:[#allocation3 + $0xb8] sm:$0xff] %v7434
        %7483 = vst [vmem:[#allocation3 + $0xc0] sm:$0xff] %v7435
        %7484 = vst [vmem:[#allocation3 + $0xc8] sm:$0xff] %v7436
        %7485 = vst [vmem:[#allocation3 + $0xd0] sm:$0xff] %v7437
        %7486 = vst [vmem:[#allocation3 + $0xd8] sm:$0xff] %v7438
        %7487 = vst [vmem:[#allocation3 + $0xe0] sm:$0xff] %v7439
        %7488 = vst [vmem:[#allocation3 + $0xe8] sm:$0xff] %v7440
        %7489 = vst [vmem:[#allocation3 + $0xf0] sm:$0xff] %v7441
        %7490 = vst [vmem:[#allocation3 + $0xf8] sm:$0xff] %v7442
        %7491 = vst [vmem:[#allocation3 + $0x100] sm:$0xff] %v7443
        %7492 = vst [vmem:[#allocation3 + $0x108] sm:$0xff] %v7444
        %7493 = vst [vmem:[#allocation3 + $0x110] sm:$0xff] %v7445
        %7494 = vst [vmem:[#allocation3 + $0x118] sm:$0xff] %v7446
        %7495 = vst [vmem:[#allocation3 + $0x120] sm:$0xff] %v7447
        %7496 = vst [vmem:[#allocation3 + $0x128] sm:$0xff] %v7448
        %7497 = vst [vmem:[#allocation3 + $0x130] sm:$0xff] %v7449
        %7498 = vst [vmem:[#allocation3 + $0x138] sm:$0xff] %v7450
        %7499 = vst [vmem:[#allocation3 + $0x140] sm:$0xff] %v7451
        %7500 = vst [vmem:[#allocation3 + $0x148] sm:$0xff] %v7452
        %7501 = vst [vmem:[#allocation3 + $0x150] sm:$0xff] %v7453
        %7502 = vst [vmem:[#allocation3 + $0x158] sm:$0xff] %v7454
        %7503 = vst [vmem:[#allocation3 + $0x160] sm:$0xff] %v7455
        %7504 = vst [vmem:[#allocation3 + $0x168] sm:$0xff] %v7456
        %7505 = vst [vmem:[#allocation3 + $0x170] sm:$0xff] %v7457
        %7506 = vst [vmem:[#allocation3 + $0x178] sm:$0xff] %v7458
        %v7507 = vld [vmem:[#allocation2 + $0x10] sm:$0xff]
        %v7508 = vld [vmem:[#allocation2 + $0x58] sm:$0xff]
        %v7509 = vld [vmem:[#allocation2 + $0xa0] sm:$0xff]
        %v7510 = vld [vmem:[#allocation2 + $0xe8] sm:$0xff]
        %v7511 = vld [vmem:[#allocation2 + $0x130] sm:$0xff]
        %v7512 = vld [vmem:[#allocation2 + $0x178] sm:$0xff]
        %v7513 = vld [vmem:[#allocation2 + $0x1c0] sm:$0xff]
        %v7514 = vld [vmem:[#allocation2 + $0x208] sm:$0xff]
        %v7515 = vld [vmem:[#allocation2 + $0x28] sm:$0xff]
        %v7516 = vld [vmem:[#allocation2 + $0x70] sm:$0xff]
        %v7517 = vld [vmem:[#allocation2 + $0xb8] sm:$0xff]
        %v7518 = vld [vmem:[#allocation2 + $0x100] sm:$0xff]
        %v7519 = vld [vmem:[#allocation2 + $0x148] sm:$0xff]
        %v7520 = vld [vmem:[#allocation2 + $0x190] sm:$0xff]
        %v7521 = vld [vmem:[#allocation2 + $0x1d8] sm:$0xff]
        %v7522 = vld [vmem:[#allocation2 + $0x220] sm:$0xff]
        %v7523 = vld [vmem:[#allocation2 + $0x40] sm:$0xff]
        %v7524 = vld [vmem:[#allocation2 + $0x88] sm:$0xff]
        %v7525 = vld [vmem:[#allocation2 + $0xd0] sm:$0xff]
        %v7526 = vld [vmem:[#allocation2 + $0x118] sm:$0xff]
        %v7527 = vld [vmem:[#allocation2 + $0x160] sm:$0xff]
        %v7528 = vld [vmem:[#allocation2 + $0x1a8] sm:$0xff]
        %v7529 = vld [vmem:[#allocation2 + $0x1f0] sm:$0xff]
        %v7530 = vld [vmem:[#allocation2 + $0x238] sm:$0xff]
        %7539 = vrot.lane.b32.xlu0 %v7507, 64
        %v7540 = vpop.permute.xlu0 %7539
        %7541 = vrot.lane.b32.xlu0 %v7508, 64
        %v7542 = vpop.permute.xlu0 %7541
        %7543 = vrot.lane.b32.xlu0 %v7509, 64
        %v7544 = vpop.permute.xlu0 %7543
        %7545 = vrot.lane.b32.xlu0 %v7510, 64
        %v7546 = vpop.permute.xlu0 %7545
        %7547 = vrot.lane.b32.xlu0 %v7511, 64
        %v7548 = vpop.permute.xlu0 %7547
        %7549 = vrot.lane.b32.xlu0 %v7512, 64
        %v7550 = vpop.permute.xlu0 %7549
        %7551 = vrot.lane.b32.xlu0 %v7513, 64
        %v7552 = vpop.permute.xlu0 %7551
        %7553 = vrot.lane.b32.xlu0 %v7514, 64
        %v7554 = vpop.permute.xlu0 %7553
        %7563 = vrot.lane.b32.xlu0 %v7515, 64
        %v7564 = vpop.permute.xlu0 %7563
        %7565 = vrot.lane.b32.xlu0 %v7516, 64
        %v7566 = vpop.permute.xlu0 %7565
        %7567 = vrot.lane.b32.xlu0 %v7517, 64
        %v7568 = vpop.permute.xlu0 %7567
        %7569 = vrot.lane.b32.xlu0 %v7518, 64
        %v7570 = vpop.permute.xlu0 %7569
        %7571 = vrot.lane.b32.xlu0 %v7519, 64
        %v7572 = vpop.permute.xlu0 %7571
        %7573 = vrot.lane.b32.xlu0 %v7520, 64
        %v7574 = vpop.permute.xlu0 %7573
        %7575 = vrot.lane.b32.xlu0 %v7521, 64
        %v7576 = vpop.permute.xlu0 %7575
        %7577 = vrot.lane.b32.xlu0 %v7522, 64
        %v7578 = vpop.permute.xlu0 %7577
        %v7580 = vsel %vm2966, %v7540, 0
        %v7583 = vsel %vm2966, %v7542, 0
        %v7586 = vsel %vm2966, %v7544, 0
        %v7589 = vsel %vm2966, %v7546, 0
        %v7592 = vsel %vm2966, %v7548, 0
        %v7595 = vsel %vm2966, %v7550, 0
        %v7598 = vsel %vm2966, %v7552, 0
        %v7601 = vsel %vm2966, %v7554, 0
        %v7604 = vsel %vm2966, %v7564, 0
        %v7607 = vsel %vm2966, %v7566, 0
        %v7610 = vsel %vm2966, %v7568, 0
        %v7613 = vsel %vm2966, %v7570, 0
        %v7616 = vsel %vm2966, %v7572, 0
        %v7619 = vsel %vm2966, %v7574, 0
        %v7622 = vsel %vm2966, %v7576, 0
        %v7625 = vsel %vm2966, %v7578, 0
        %7627 = vmatprep.subr.bf16.mxu0 0
        %7628 = vmatpush1.bf16.xpose.msra.mxu0 %v7604
        %7629 = vmatprep.subr.bf16.mxu0 0
        %7630 = vmatpush1.bf16.xpose.msra.mxu0 %v7607
        %7631 = vmatprep.subr.bf16.mxu0 0
        %7632 = vmatpush1.bf16.xpose.msra.mxu0 %v7610
        %7633 = vmatprep.subr.bf16.mxu0 0
        %7634 = vmatpush1.bf16.xpose.msra.mxu0 %v7613
        %7635 = vmatprep.subr.bf16.mxu0 0
        %7636 = vmatpush1.bf16.xpose.msra.mxu0 %v7616
        %7637 = vmatprep.subr.bf16.mxu0 0
        %7638 = vmatpush1.bf16.xpose.msra.mxu0 %v7619
        %7639 = vmatprep.subr.bf16.mxu0 0
        %7640 = vmatpush1.bf16.xpose.msra.mxu0 %v7622
        %7641 = vmatprep.subr.bf16.mxu0 0
        %7642 = vmatpush1.bf16.xpose.msra.mxu0 %v7625
        %7643 = vmatprep.subr.bf16.mxu0 0
        %7644 = vmatpush1.bf16.xpose.msra.mxu0 0
        %7645 = vmatprep.subr.bf16.mxu0 0
        %7646 = vmatpush1.bf16.xpose.msra.mxu0 0
        %7647 = vmatprep.subr.bf16.mxu0 0
        %7648 = vmatpush1.bf16.xpose.msra.mxu0 0
        %7649 = vmatprep.subr.bf16.mxu0 0
        %7650 = vmatpush1.bf16.xpose.msra.mxu0 0
        %7651 = vmatprep.subr.bf16.mxu0 0
        %7652 = vmatpush1.bf16.xpose.msra.mxu0 0
        %7653 = vmatprep.subr.bf16.mxu0 0
        %7654 = vmatpush1.bf16.xpose.msra.mxu0 0
        %7655 = vmatprep.subr.bf16.mxu0 0
        %7656 = vmatpush1.bf16.xpose.msra.mxu0 0
        %7657 = vmatprep.subr.bf16.mxu0 0
        %7658 = vmatpush1.bf16.xpose.msra.mxu0 0
        %7659 = vmatprep.mubr.bf16.mxu0 0
        %7660 = vmatmul.mubr.bf16.gmra.mrb[0].mxu0 %v7580
        %v7661 = vpop.f32.mrb[0].mxu0
        %v7662 = vadd.f32 0.0, %v7661
        %v7663 = vpop.f32.mrb[0].mxu0
        %v7664 = vpop.f32.mrb[0].mxu0
        %v7665 = vadd.f32 0.0, %v7664
        %v7666 = vpop.f32.mrb[0].mxu0
        %7667 = vmatprep.mubr.bf16.mxu0 0
        %7668 = vmatmul.mubr.bf16.gmra.mrb[0].mxu0 %v7583
        %v7669 = vpop.f32.mrb[0].mxu0
        %v7670 = vadd.f32 0.0, %v7669
        %v7671 = vpop.f32.mrb[0].mxu0
        %v7672 = vpop.f32.mrb[0].mxu0
        %v7673 = vadd.f32 0.0, %v7672
        %v7674 = vpop.f32.mrb[0].mxu0
        %7675 = vmatprep.mubr.bf16.mxu0 0
        %7676 = vmatmul.mubr.bf16.gmra.mrb[0].mxu0 %v7586
        %v7677 = vpop.f32.mrb[0].mxu0
        %v7678 = vadd.f32 0.0, %v7677
        %v7679 = vpop.f32.mrb[0].mxu0
        %v7680 = vpop.f32.mrb[0].mxu0
        %v7681 = vadd.f32 0.0, %v7680
        %v7682 = vpop.f32.mrb[0].mxu0
        %7683 = vmatprep.mubr.bf16.mxu0 0
        %7684 = vmatmul.mubr.bf16.gmra.mrb[0].mxu0 %v7589
        %v7685 = vpop.f32.mrb[0].mxu0
        %v7686 = vadd.f32 0.0, %v7685
        %v7687 = vpop.f32.mrb[0].mxu0
        %v7688 = vpop.f32.mrb[0].mxu0
        %v7689 = vadd.f32 0.0, %v7688
        %v7690 = vpop.f32.mrb[0].mxu0
        %7691 = vmatprep.mubr.bf16.mxu0 0
        %7692 = vmatmul.mubr.bf16.gmra.mrb[0].mxu0 %v7592
        %v7693 = vpop.f32.mrb[0].mxu0
        %v7694 = vadd.f32 0.0, %v7693
        %v7695 = vpop.f32.mrb[0].mxu0
        %v7696 = vpop.f32.mrb[0].mxu0
        %v7697 = vadd.f32 0.0, %v7696
        %v7698 = vpop.f32.mrb[0].mxu0
        %7699 = vmatprep.mubr.bf16.mxu0 0
        %7700 = vmatmul.mubr.bf16.gmra.mrb[0].mxu0 %v7595
        %v7701 = vpop.f32.mrb[0].mxu0
        %v7702 = vadd.f32 0.0, %v7701
        %v7703 = vpop.f32.mrb[0].mxu0
        %v7704 = vpop.f32.mrb[0].mxu0
        %v7705 = vadd.f32 0.0, %v7704
        %v7706 = vpop.f32.mrb[0].mxu0
        %7707 = vmatprep.mubr.bf16.mxu0 0
        %7708 = vmatmul.mubr.bf16.gmra.mrb[0].mxu0 %v7598
        %v7709 = vpop.f32.mrb[0].mxu0
        %v7710 = vadd.f32 0.0, %v7709
        %v7711 = vpop.f32.mrb[0].mxu0
        %v7712 = vpop.f32.mrb[0].mxu0
        %v7713 = vadd.f32 0.0, %v7712
        %v7714 = vpop.f32.mrb[0].mxu0
        %7715 = vmatprep.mubr.bf16.mxu0 0
        %7716 = vmatmul.mubr.bf16.gmra.mrb[0].mxu0 %v7601
        %v7717 = vpop.f32.mrb[0].mxu0
        %v7718 = vadd.f32 0.0, %v7717
        %v7719 = vpop.f32.mrb[0].mxu0
        %v7720 = vpop.f32.mrb[0].mxu0
        %v7721 = vadd.f32 0.0, %v7720
        %v7722 = vpop.f32.mrb[0].mxu0
        %7723 = vdwg.mxu0
        %v7724 = vsel %vm2926, %v7662, -1e+30
        %v7725 = vsel %vm2927, %v7665, -1e+30
        %v7726 = vsel %vm2928, %v7670, -1e+30
        %v7727 = vsel %vm2929, %v7673, -1e+30
        %v7728 = vsel %vm2930, %v7678, -1e+30
        %v7729 = vsel %vm2931, %v7681, -1e+30
        %v7730 = vsel %vm2932, %v7686, -1e+30
        %v7731 = vsel %vm2933, %v7689, -1e+30
        %v7732 = vsel %vm2934, %v7694, -1e+30
        %v7733 = vsel %vm2935, %v7697, -1e+30
        %v7734 = vsel %vm2936, %v7702, -1e+30
        %v7735 = vsel %vm2937, %v7705, -1e+30
        %v7736 = vsel %vm2938, %v7710, -1e+30
        %v7737 = vsel %vm2939, %v7713, -1e+30
        %v7738 = vsel %vm2940, %v7718, -1e+30
        %v7739 = vsel %vm2941, %v7721, -1e+30
        %7740 = vmax.xlane.f32.xlu0 %v7724
        %v7741 = vpop.xlane.xlu0 %7740
        %7742 = vmax.xlane.f32.xlu0 %v7725
        %v7743 = vpop.xlane.xlu0 %7742
        %7744 = vmax.xlane.f32.xlu0 %v7726
        %v7745 = vpop.xlane.xlu0 %7744
        %7746 = vmax.xlane.f32.xlu0 %v7727
        %v7747 = vpop.xlane.xlu0 %7746
        %7748 = vmax.xlane.f32.xlu0 %v7728
        %v7749 = vpop.xlane.xlu0 %7748
        %7750 = vmax.xlane.f32.xlu0 %v7729
        %v7751 = vpop.xlane.xlu0 %7750
        %7752 = vmax.xlane.f32.xlu0 %v7730
        %v7753 = vpop.xlane.xlu0 %7752
        %7754 = vmax.xlane.f32.xlu0 %v7731
        %v7755 = vpop.xlane.xlu0 %7754
        %7756 = vmax.xlane.f32.xlu0 %v7732
        %v7757 = vpop.xlane.xlu0 %7756
        %7758 = vmax.xlane.f32.xlu0 %v7733
        %v7759 = vpop.xlane.xlu0 %7758
        %7760 = vmax.xlane.f32.xlu0 %v7734
        %v7761 = vpop.xlane.xlu0 %7760
        %7762 = vmax.xlane.f32.xlu0 %v7735
        %v7763 = vpop.xlane.xlu0 %7762
        %7764 = vmax.xlane.f32.xlu0 %v7736
        %v7765 = vpop.xlane.xlu0 %7764
        %7766 = vmax.xlane.f32.xlu0 %v7737
        %v7767 = vpop.xlane.xlu0 %7766
        %7768 = vmax.xlane.f32.xlu0 %v7738
        %v7769 = vpop.xlane.xlu0 %7768
        %7770 = vmax.xlane.f32.xlu0 %v7739
        %v7771 = vpop.xlane.xlu0 %7770
        %v7772 = vsub.f32 %v7724, %v7741
        %v7773 = vsub.f32 %v7725, %v7743
        %v7774 = vsub.f32 %v7726, %v7745
        %v7775 = vsub.f32 %v7727, %v7747
        %v7776 = vsub.f32 %v7728, %v7749
        %v7777 = vsub.f32 %v7729, %v7751
        %v7778 = vsub.f32 %v7730, %v7753
        %v7779 = vsub.f32 %v7731, %v7755
        %v7780 = vsub.f32 %v7732, %v7757
        %v7781 = vsub.f32 %v7733, %v7759
        %v7782 = vsub.f32 %v7734, %v7761
        %v7783 = vsub.f32 %v7735, %v7763
        %v7784 = vsub.f32 %v7736, %v7765
        %v7785 = vsub.f32 %v7737, %v7767
        %v7786 = vsub.f32 %v7738, %v7769
        %v7787 = vsub.f32 %v7739, %v7771
        %v7788 = vmul.f32 %v7772, 1.442695
        %v7789 = vpow.pop %v7788
        %v7790 = vmul.f32 %v7773, 1.442695
        %v7791 = vpow.pop %v7790
        %v7792 = vmul.f32 %v7774, 1.442695
        %v7793 = vpow.pop %v7792
        %v7794 = vmul.f32 %v7775, 1.442695
        %v7795 = vpow.pop %v7794
        %v7796 = vmul.f32 %v7776, 1.442695
        %v7797 = vpow.pop %v7796
        %v7798 = vmul.f32 %v7777, 1.442695
        %v7799 = vpow.pop %v7798
        %v7800 = vmul.f32 %v7778, 1.442695
        %v7801 = vpow.pop %v7800
        %v7802 = vmul.f32 %v7779, 1.442695
        %v7803 = vpow.pop %v7802
        %v7804 = vmul.f32 %v7780, 1.442695
        %v7805 = vpow.pop %v7804
        %v7806 = vmul.f32 %v7781, 1.442695
        %v7807 = vpow.pop %v7806
        %v7808 = vmul.f32 %v7782, 1.442695
        %v7809 = vpow.pop %v7808
        %v7810 = vmul.f32 %v7783, 1.442695
        %v7811 = vpow.pop %v7810
        %v7812 = vmul.f32 %v7784, 1.442695
        %v7813 = vpow.pop %v7812
        %v7814 = vmul.f32 %v7785, 1.442695
        %v7815 = vpow.pop %v7814
        %v7816 = vmul.f32 %v7786, 1.442695
        %v7817 = vpow.pop %v7816
        %v7818 = vmul.f32 %v7787, 1.442695
        %v7819 = vpow.pop %v7818
        %7820 = vadd.xlane.f32.xlu0 %v7789
        %v7821 = vpop.xlane.xlu0 %7820
        %7822 = vadd.xlane.f32.xlu0 %v7791
        %v7823 = vpop.xlane.xlu0 %7822
        %7824 = vadd.xlane.f32.xlu0 %v7793
        %v7825 = vpop.xlane.xlu0 %7824
        %7826 = vadd.xlane.f32.xlu0 %v7795
        %v7827 = vpop.xlane.xlu0 %7826
        %7828 = vadd.xlane.f32.xlu0 %v7797
        %v7829 = vpop.xlane.xlu0 %7828
        %7830 = vadd.xlane.f32.xlu0 %v7799
        %v7831 = vpop.xlane.xlu0 %7830
        %7832 = vadd.xlane.f32.xlu0 %v7801
        %v7833 = vpop.xlane.xlu0 %7832
        %7834 = vadd.xlane.f32.xlu0 %v7803
        %v7835 = vpop.xlane.xlu0 %7834
        %7836 = vadd.xlane.f32.xlu0 %v7805
        %v7837 = vpop.xlane.xlu0 %7836
        %7838 = vadd.xlane.f32.xlu0 %v7807
        %v7839 = vpop.xlane.xlu0 %7838
        %7840 = vadd.xlane.f32.xlu0 %v7809
        %v7841 = vpop.xlane.xlu0 %7840
        %7842 = vadd.xlane.f32.xlu0 %v7811
        %v7843 = vpop.xlane.xlu0 %7842
        %7844 = vadd.xlane.f32.xlu0 %v7813
        %v7845 = vpop.xlane.xlu0 %7844
        %7846 = vadd.xlane.f32.xlu0 %v7815
        %v7847 = vpop.xlane.xlu0 %7846
        %7848 = vadd.xlane.f32.xlu0 %v7817
        %v7849 = vpop.xlane.xlu0 %7848
        %7850 = vadd.xlane.f32.xlu0 %v7819
        %v7851 = vpop.xlane.xlu0 %7850
        %v7852 = vrcp.pop %v7821
        %v7853 = vrcp.pop %v7823
        %v7854 = vrcp.pop %v7825
        %v7855 = vrcp.pop %v7827
        %v7856 = vrcp.pop %v7829
        %v7857 = vrcp.pop %v7831
        %v7858 = vrcp.pop %v7833
        %v7859 = vrcp.pop %v7835
        %v7860 = vrcp.pop %v7837
        %v7861 = vrcp.pop %v7839
        %v7862 = vrcp.pop %v7841
        %v7863 = vrcp.pop %v7843
        %v7864 = vrcp.pop %v7845
        %v7865 = vrcp.pop %v7847
        %v7866 = vrcp.pop %v7849
        %v7867 = vrcp.pop %v7851
        %v7868 = vmul.f32 %v7789, %v7852
        %v7869 = vmul.f32 %v7791, %v7853
        %v7870 = vmul.f32 %v7793, %v7854
        %v7871 = vmul.f32 %v7795, %v7855
        %v7872 = vmul.f32 %v7797, %v7856
        %v7873 = vmul.f32 %v7799, %v7857
        %v7874 = vmul.f32 %v7801, %v7858
        %v7875 = vmul.f32 %v7803, %v7859
        %v7876 = vmul.f32 %v7805, %v7860
        %v7877 = vmul.f32 %v7807, %v7861
        %v7878 = vmul.f32 %v7809, %v7862
        %v7879 = vmul.f32 %v7811, %v7863
        %v7880 = vmul.f32 %v7813, %v7864
        %v7881 = vmul.f32 %v7815, %v7865
        %v7882 = vmul.f32 %v7817, %v7866
        %v7883 = vmul.f32 %v7819, %v7867
        %v7884 = vpack.c.bf16 %v7869, %v7868
        %v7885 = vpack.c.bf16 %v7871, %v7870
        %v7886 = vpack.c.bf16 %v7873, %v7872
        %v7887 = vpack.c.bf16 %v7875, %v7874
        %v7888 = vpack.c.bf16 %v7877, %v7876
        %v7889 = vpack.c.bf16 %v7879, %v7878
        %v7890 = vpack.c.bf16 %v7881, %v7880
        %v7891 = vpack.c.bf16 %v7883, %v7882
        %7900 = vrot.lane.b32.xlu0 %v7523, 64
        %v7901 = vpop.permute.xlu0 %7900
        %7902 = vrot.lane.b32.xlu0 %v7524, 64
        %v7903 = vpop.permute.xlu0 %7902
        %7904 = vrot.lane.b32.xlu0 %v7525, 64
        %v7905 = vpop.permute.xlu0 %7904
        %7906 = vrot.lane.b32.xlu0 %v7526, 64
        %v7907 = vpop.permute.xlu0 %7906
        %7908 = vrot.lane.b32.xlu0 %v7527, 64
        %v7909 = vpop.permute.xlu0 %7908
        %7910 = vrot.lane.b32.xlu0 %v7528, 64
        %v7911 = vpop.permute.xlu0 %7910
        %7912 = vrot.lane.b32.xlu0 %v7529, 64
        %v7913 = vpop.permute.xlu0 %7912
        %7914 = vrot.lane.b32.xlu0 %v7530, 64
        %v7915 = vpop.permute.xlu0 %7914
        %7924 = vmatprep.subr.bf16.mxu0 0
        %7925 = vmatpush1.bf16.msra.mxu0 %v7901
        %7926 = vmatprep.subr.bf16.mxu0 0
        %7927 = vmatpush1.bf16.msra.mxu0 %v7903
        %7928 = vmatprep.subr.bf16.mxu0 0
        %7929 = vmatpush1.bf16.msra.mxu0 %v7905
        %7930 = vmatprep.subr.bf16.mxu0 0
        %7931 = vmatpush1.bf16.msra.mxu0 %v7907
        %7932 = vmatprep.subr.bf16.mxu0 0
        %7933 = vmatpush1.bf16.msra.mxu0 %v7909
        %7934 = vmatprep.subr.bf16.mxu0 0
        %7935 = vmatpush1.bf16.msra.mxu0 %v7911
        %7936 = vmatprep.subr.bf16.mxu0 0
        %7937 = vmatpush1.bf16.msra.mxu0 %v7913
        %7938 = vmatprep.subr.bf16.mxu0 0
        %7939 = vmatpush1.bf16.msra.mxu0 %v7915
        %7940 = vmatprep.subr.bf16.mxu0 0
        %7941 = vmatpush1.bf16.msra.mxu0 0
        %7942 = vmatprep.subr.bf16.mxu0 0
        %7943 = vmatpush1.bf16.msra.mxu0 0
        %7944 = vmatprep.subr.bf16.mxu0 0
        %7945 = vmatpush1.bf16.msra.mxu0 0
        %7946 = vmatprep.subr.bf16.mxu0 0
        %7947 = vmatpush1.bf16.msra.mxu0 0
        %7948 = vmatprep.subr.bf16.mxu0 0
        %7949 = vmatpush1.bf16.msra.mxu0 0
        %7950 = vmatprep.subr.bf16.mxu0 0
        %7951 = vmatpush1.bf16.msra.mxu0 0
        %7952 = vmatprep.subr.bf16.mxu0 0
        %7953 = vmatpush1.bf16.msra.mxu0 0
        %7954 = vmatprep.subr.bf16.mxu0 0
        %7955 = vmatpush1.bf16.msra.mxu0 0
        %7956 = vmatprep.mubr.bf16.mxu0 0
        %7957 = vmatmul.mubr.bf16.gmra.mrb[0].mxu0 %v7884
        %v7958 = vpop.f32.mrb[0].mxu0
        %v7959 = vadd.f32 0.0, %v7958
        %v7960 = vpop.f32.mrb[0].mxu0
        %v7961 = vpop.f32.mrb[0].mxu0
        %v7962 = vadd.f32 0.0, %v7961
        %v7963 = vpop.f32.mrb[0].mxu0
        %7964 = vmatprep.mubr.bf16.mxu0 0
        %7965 = vmatmul.mubr.bf16.gmra.mrb[0].mxu0 %v7885
        %v7966 = vpop.f32.mrb[0].mxu0
        %v7967 = vadd.f32 0.0, %v7966
        %v7968 = vpop.f32.mrb[0].mxu0
        %v7969 = vpop.f32.mrb[0].mxu0
        %v7970 = vadd.f32 0.0, %v7969
        %v7971 = vpop.f32.mrb[0].mxu0
        %7972 = vmatprep.mubr.bf16.mxu0 0
        %7973 = vmatmul.mubr.bf16.gmra.mrb[0].mxu0 %v7886
        %v7974 = vpop.f32.mrb[0].mxu0
        %v7975 = vadd.f32 0.0, %v7974
        %v7976 = vpop.f32.mrb[0].mxu0
        %v7977 = vpop.f32.mrb[0].mxu0
        %v7978 = vadd.f32 0.0, %v7977
        %v7979 = vpop.f32.mrb[0].mxu0
        %7980 = vmatprep.mubr.bf16.mxu0 0
        %7981 = vmatmul.mubr.bf16.gmra.mrb[0].mxu0 %v7887
        %v7982 = vpop.f32.mrb[0].mxu0
        %v7983 = vadd.f32 0.0, %v7982
        %v7984 = vpop.f32.mrb[0].mxu0
        %v7985 = vpop.f32.mrb[0].mxu0
        %v7986 = vadd.f32 0.0, %v7985
        %v7987 = vpop.f32.mrb[0].mxu0
        %7988 = vmatprep.mubr.bf16.mxu0 0
        %7989 = vmatmul.mubr.bf16.gmra.mrb[0].mxu0 %v7888
        %v7990 = vpop.f32.mrb[0].mxu0
        %v7991 = vadd.f32 0.0, %v7990
        %v7992 = vpop.f32.mrb[0].mxu0
        %v7993 = vpop.f32.mrb[0].mxu0
        %v7994 = vadd.f32 0.0, %v7993
        %v7995 = vpop.f32.mrb[0].mxu0
        %7996 = vmatprep.mubr.bf16.mxu0 0
        %7997 = vmatmul.mubr.bf16.gmra.mrb[0].mxu0 %v7889
        %v7998 = vpop.f32.mrb[0].mxu0
        %v7999 = vadd.f32 0.0, %v7998
        %v8000 = vpop.f32.mrb[0].mxu0
        %v8001 = vpop.f32.mrb[0].mxu0
        %v8002 = vadd.f32 0.0, %v8001
        %v8003 = vpop.f32.mrb[0].mxu0
        %8004 = vmatprep.mubr.bf16.mxu0 0
        %8005 = vmatmul.mubr.bf16.gmra.mrb[0].mxu0 %v7890
        %v8006 = vpop.f32.mrb[0].mxu0
        %v8007 = vadd.f32 0.0, %v8006
        %v8008 = vpop.f32.mrb[0].mxu0
        %v8009 = vpop.f32.mrb[0].mxu0
        %v8010 = vadd.f32 0.0, %v8009
        %v8011 = vpop.f32.mrb[0].mxu0
        %8012 = vmatprep.mubr.bf16.mxu0 0
        %8013 = vmatmul.mubr.bf16.gmra.mrb[0].mxu0 %v7891
        %v8014 = vpop.f32.mrb[0].mxu0
        %v8015 = vadd.f32 0.0, %v8014
        %v8016 = vpop.f32.mrb[0].mxu0
        %v8017 = vpop.f32.mrb[0].mxu0
        %v8018 = vadd.f32 0.0, %v8017
        %v8019 = vpop.f32.mrb[0].mxu0
        %8020 = vdwg.mxu0
        %v8021 = vpack.c.bf16 %v7962, %v7959
        %v8022 = vpack.c.bf16 %v7970, %v7967
        %v8023 = vpack.c.bf16 %v7978, %v7975
        %v8024 = vpack.c.bf16 %v7986, %v7983
        %v8025 = vpack.c.bf16 %v7994, %v7991
        %v8026 = vpack.c.bf16 %v8002, %v7999
        %v8027 = vpack.c.bf16 %v8010, %v8007
        %v8028 = vpack.c.bf16 %v8018, %v8015
        %v8029 = vld [vmem:[#allocation9 + $0x1e0] sm:$0xff]
        %v8030 = vld [vmem:[#allocation9 + $0x1e8] sm:$0xf]
        %v8031 = vld [vmem:[#allocation9 + $0x1ec] sm:$0xff]
        %v8032 = vld [vmem:[#allocation9 + $0x1f4] sm:$0xf]
        %v8033 = vld [vmem:[#allocation9 + $0x1f8] sm:$0xff]
        %v8034 = vld [vmem:[#allocation9 + $0x200] sm:$0xf]
        %v8035 = vld [vmem:[#allocation9 + $0x204] sm:$0xff]
        %v8036 = vld [vmem:[#allocation9 + $0x20c] sm:$0xf]
        %v8037 = vld [vmem:[#allocation9 + $0x210] sm:$0xff]
        %v8038 = vld [vmem:[#allocation9 + $0x218] sm:$0xf]
        %v8039 = vld [vmem:[#allocation9 + $0x21c] sm:$0xff]
        %v8040 = vld [vmem:[#allocation9 + $0x224] sm:$0xf]
        %v8041 = vld [vmem:[#allocation9 + $0x228] sm:$0xff]
        %v8042 = vld [vmem:[#allocation9 + $0x230] sm:$0xf]
        %v8043 = vld [vmem:[#allocation9 + $0x234] sm:$0xff]
        %v8044 = vld [vmem:[#allocation9 + $0x23c] sm:$0xf]
        %v8061 = vunpack.c.l.b16 %v8029
        %v8062 = vunpack.c.h.b16 %v8029
        %v8063 = vunpack.c.l.b16 %v8030
        %v8064 = vunpack.c.l.b16 %v8031
        %v8065 = vunpack.c.h.b16 %v8031
        %v8066 = vunpack.c.l.b16 %v8032
        %v8067 = vunpack.c.l.b16 %v8033
        %v8068 = vunpack.c.h.b16 %v8033
        %v8069 = vunpack.c.l.b16 %v8034
        %v8070 = vunpack.c.l.b16 %v8035
        %v8071 = vunpack.c.h.b16 %v8035
        %v8072 = vunpack.c.l.b16 %v8036
        %v8073 = vunpack.c.l.b16 %v8037
        %v8074 = vunpack.c.h.b16 %v8037
        %v8075 = vunpack.c.l.b16 %v8038
        %v8076 = vunpack.c.l.b16 %v8039
        %v8077 = vunpack.c.h.b16 %v8039
        %v8078 = vunpack.c.l.b16 %v8040
        %v8079 = vunpack.c.l.b16 %v8041
        %v8080 = vunpack.c.h.b16 %v8041
        %v8081 = vunpack.c.l.b16 %v8042
        %v8082 = vunpack.c.l.b16 %v8043
        %v8083 = vunpack.c.h.b16 %v8043
        %v8084 = vunpack.c.l.b16 %v8044
        %v8085 = vpack.c.b16 %v8064, %v8061
        %v8086 = vpack.c.b16 %v8065, %v8062
        %v8087 = vpack.c.b16 %v8066, %v8063
        %v8088 = vpack.c.b16 %v8070, %v8067
        %v8089 = vpack.c.b16 %v8071, %v8068
        %v8090 = vpack.c.b16 %v8072, %v8069
        %v8091 = vpack.c.b16 %v8076, %v8073
        %v8092 = vpack.c.b16 %v8077, %v8074
        %v8093 = vpack.c.b16 %v8078, %v8075
        %v8094 = vpack.c.b16 %v8082, %v8079
        %v8095 = vpack.c.b16 %v8083, %v8080
        %v8096 = vpack.c.b16 %v8084, %v8081
        %v8110 = vsel %vm2966, %v8021, 0
        %v8113 = vsel %vm2966, %v8022, 0
        %v8116 = vsel %vm2966, %v8023, 0
        %v8119 = vsel %vm2966, %v8024, 0
        %v8122 = vsel %vm2966, %v8025, 0
        %v8125 = vsel %vm2966, %v8026, 0
        %v8128 = vsel %vm2966, %v8027, 0
        %v8131 = vsel %vm2966, %v8028, 0
        %8133 = vmatprep.subr.bf16.mxu0 %v8086
        %8134 = vmatpush1.bf16.msra.mxu0 %v8085
        %8135 = vmatprep.subr.bf16.mxu0 %v8089
        %8136 = vmatpush1.bf16.msra.mxu0 %v8088
        %8137 = vmatprep.subr.bf16.mxu0 %v8092
        %8138 = vmatpush1.bf16.msra.mxu0 %v8091
        %8139 = vmatprep.subr.bf16.mxu0 %v8095
        %8140 = vmatpush1.bf16.msra.mxu0 %v8094
        %8141 = vmatprep.subr.bf16.mxu0 0
        %8142 = vmatpush1.bf16.msra.mxu0 0
        %8143 = vmatprep.subr.bf16.mxu0 0
        %8144 = vmatpush1.bf16.msra.mxu0 0
        %8145 = vmatprep.subr.bf16.mxu0 0
        %8146 = vmatpush1.bf16.msra.mxu0 0
        %8147 = vmatprep.subr.bf16.mxu0 0
        %8148 = vmatpush1.bf16.msra.mxu0 0
        %8149 = vmatprep.subr.bf16.mxu0 0
        %8150 = vmatpush1.bf16.msra.mxu0 0
        %8151 = vmatprep.subr.bf16.mxu0 0
        %8152 = vmatpush1.bf16.msra.mxu0 0
        %8153 = vmatprep.subr.bf16.mxu0 0
        %8154 = vmatpush1.bf16.msra.mxu0 0
        %8155 = vmatprep.subr.bf16.mxu0 0
        %8156 = vmatpush1.bf16.msra.mxu0 0
        %8157 = vmatprep.subr.bf16.mxu0 0
        %8158 = vmatpush1.bf16.msra.mxu0 0
        %8159 = vmatprep.subr.bf16.mxu0 0
        %8160 = vmatpush1.bf16.msra.mxu0 0
        %8161 = vmatprep.subr.bf16.mxu0 0
        %8162 = vmatpush1.bf16.msra.mxu0 0
        %8163 = vmatprep.subr.bf16.mxu0 0
        %8164 = vmatpush1.bf16.msra.mxu0 0
        %8165 = vmatprep.mubr.bf16.mxu0 0
        %8166 = vmatmul.mubr.bf16.gmra.mrb[0].mxu0 %v8110
        %v8167 = vpop.f32.mrb[0].mxu0
        %v8168 = vadd.f32 0.0, %v8167
        %v8169 = vpop.f32.mrb[0].mxu0
        %v8170 = vadd.f32 0.0, %v8169
        %v8171 = vpop.f32.mrb[0].mxu0
        %v8172 = vadd.f32 0.0, %v8171
        %v8173 = vpop.f32.mrb[0].mxu0
        %v8174 = vadd.f32 0.0, %v8173
        %8175 = vmatprep.mubr.bf16.mxu0 0
        %8176 = vmatmul.mubr.bf16.gmra.mrb[0].mxu0 %v8113
        %v8177 = vpop.f32.mrb[0].mxu0
        %v8178 = vadd.f32 0.0, %v8177
        %v8179 = vpop.f32.mrb[0].mxu0
        %v8180 = vadd.f32 0.0, %v8179
        %v8181 = vpop.f32.mrb[0].mxu0
        %v8182 = vadd.f32 0.0, %v8181
        %v8183 = vpop.f32.mrb[0].mxu0
        %v8184 = vadd.f32 0.0, %v8183
        %8185 = vmatprep.mubr.bf16.mxu0 0
        %8186 = vmatmul.mubr.bf16.gmra.mrb[0].mxu0 %v8116
        %v8187 = vpop.f32.mrb[0].mxu0
        %v8188 = vadd.f32 0.0, %v8187
        %v8189 = vpop.f32.mrb[0].mxu0
        %v8190 = vadd.f32 0.0, %v8189
        %v8191 = vpop.f32.mrb[0].mxu0
        %v8192 = vadd.f32 0.0, %v8191
        %v8193 = vpop.f32.mrb[0].mxu0
        %v8194 = vadd.f32 0.0, %v8193
        %8195 = vmatprep.mubr.bf16.mxu0 0
        %8196 = vmatmul.mubr.bf16.gmra.mrb[0].mxu0 %v8119
        %v8197 = vpop.f32.mrb[0].mxu0
        %v8198 = vadd.f32 0.0, %v8197
        %v8199 = vpop.f32.mrb[0].mxu0
        %v8200 = vadd.f32 0.0, %v8199
        %v8201 = vpop.f32.mrb[0].mxu0
        %v8202 = vadd.f32 0.0, %v8201
        %v8203 = vpop.f32.mrb[0].mxu0
        %v8204 = vadd.f32 0.0, %v8203
        %8205 = vmatprep.mubr.bf16.mxu0 0
        %8206 = vmatmul.mubr.bf16.gmra.mrb[0].mxu0 %v8122
        %v8207 = vpop.f32.mrb[0].mxu0
        %v8208 = vadd.f32 0.0, %v8207
        %v8209 = vpop.f32.mrb[0].mxu0
        %v8210 = vadd.f32 0.0, %v8209
        %v8211 = vpop.f32.mrb[0].mxu0
        %v8212 = vadd.f32 0.0, %v8211
        %v8213 = vpop.f32.mrb[0].mxu0
        %v8214 = vadd.f32 0.0, %v8213
        %8215 = vmatprep.mubr.bf16.mxu0 0
        %8216 = vmatmul.mubr.bf16.gmra.mrb[0].mxu0 %v8125
        %v8217 = vpop.f32.mrb[0].mxu0
        %v8218 = vadd.f32 0.0, %v8217
        %v8219 = vpop.f32.mrb[0].mxu0
        %v8220 = vadd.f32 0.0, %v8219
        %v8221 = vpop.f32.mrb[0].mxu0
        %v8222 = vadd.f32 0.0, %v8221
        %v8223 = vpop.f32.mrb[0].mxu0
        %v8224 = vadd.f32 0.0, %v8223
        %8225 = vmatprep.mubr.bf16.mxu0 0
        %8226 = vmatmul.mubr.bf16.gmra.mrb[0].mxu0 %v8128
        %v8227 = vpop.f32.mrb[0].mxu0
        %v8228 = vadd.f32 0.0, %v8227
        %v8229 = vpop.f32.mrb[0].mxu0
        %v8230 = vadd.f32 0.0, %v8229
        %v8231 = vpop.f32.mrb[0].mxu0
        %v8232 = vadd.f32 0.0, %v8231
        %v8233 = vpop.f32.mrb[0].mxu0
        %v8234 = vadd.f32 0.0, %v8233
        %8235 = vmatprep.mubr.bf16.mxu0 0
        %8236 = vmatmul.mubr.bf16.gmra.mrb[0].mxu0 %v8131
        %v8237 = vpop.f32.mrb[0].mxu0
        %v8238 = vadd.f32 0.0, %v8237
        %v8239 = vpop.f32.mrb[0].mxu0
        %v8240 = vadd.f32 0.0, %v8239
        %v8241 = vpop.f32.mrb[0].mxu0
        %v8242 = vadd.f32 0.0, %v8241
        %v8243 = vpop.f32.mrb[0].mxu0
        %v8244 = vadd.f32 0.0, %v8243
        %8245 = vdwg.mxu0
        %8246 = vmatprep.subr.bf16.mxu0 0
        %8247 = vmatpush1.bf16.msra.mxu0 %v8087
        %8248 = vmatprep.subr.bf16.mxu0 0
        %8249 = vmatpush1.bf16.msra.mxu0 %v8090
        %8250 = vmatprep.subr.bf16.mxu0 0
        %8251 = vmatpush1.bf16.msra.mxu0 %v8093
        %8252 = vmatprep.subr.bf16.mxu0 0
        %8253 = vmatpush1.bf16.msra.mxu0 %v8096
        %8254 = vmatprep.subr.bf16.mxu0 0
        %8255 = vmatpush1.bf16.msra.mxu0 0
        %8256 = vmatprep.subr.bf16.mxu0 0
        %8257 = vmatpush1.bf16.msra.mxu0 0
        %8258 = vmatprep.subr.bf16.mxu0 0
        %8259 = vmatpush1.bf16.msra.mxu0 0
        %8260 = vmatprep.subr.bf16.mxu0 0
        %8261 = vmatpush1.bf16.msra.mxu0 0
        %8262 = vmatprep.subr.bf16.mxu0 0
        %8263 = vmatpush1.bf16.msra.mxu0 0
        %8264 = vmatprep.subr.bf16.mxu0 0
        %8265 = vmatpush1.bf16.msra.mxu0 0
        %8266 = vmatprep.subr.bf16.mxu0 0
        %8267 = vmatpush1.bf16.msra.mxu0 0
        %8268 = vmatprep.subr.bf16.mxu0 0
        %8269 = vmatpush1.bf16.msra.mxu0 0
        %8270 = vmatprep.subr.bf16.mxu0 0
        %8271 = vmatpush1.bf16.msra.mxu0 0
        %8272 = vmatprep.subr.bf16.mxu0 0
        %8273 = vmatpush1.bf16.msra.mxu0 0
        %8274 = vmatprep.subr.bf16.mxu0 0
        %8275 = vmatpush1.bf16.msra.mxu0 0
        %8276 = vmatprep.subr.bf16.mxu0 0
        %8277 = vmatpush1.bf16.msra.mxu0 0
        %8278 = vmatprep.mubr.bf16.mxu0 0
        %8279 = vmatmul.mubr.bf16.gmra.mrb[0].mxu0 %v8110
        %v8280 = vpop.f32.mrb[0].mxu0
        %v8281 = vadd.f32 0.0, %v8280
        %v8282 = vpop.f32.mrb[0].mxu0
        %v8283 = vpop.f32.mrb[0].mxu0
        %v8284 = vadd.f32 0.0, %v8283
        %v8285 = vpop.f32.mrb[0].mxu0
        %8286 = vmatprep.mubr.bf16.mxu0 0
        %8287 = vmatmul.mubr.bf16.gmra.mrb[0].mxu0 %v8113
        %v8288 = vpop.f32.mrb[0].mxu0
        %v8289 = vadd.f32 0.0, %v8288
        %v8290 = vpop.f32.mrb[0].mxu0
        %v8291 = vpop.f32.mrb[0].mxu0
        %v8292 = vadd.f32 0.0, %v8291
        %v8293 = vpop.f32.mrb[0].mxu0
        %8294 = vmatprep.mubr.bf16.mxu0 0
        %8295 = vmatmul.mubr.bf16.gmra.mrb[0].mxu0 %v8116
        %v8296 = vpop.f32.mrb[0].mxu0
        %v8297 = vadd.f32 0.0, %v8296
        %v8298 = vpop.f32.mrb[0].mxu0
        %v8299 = vpop.f32.mrb[0].mxu0
        %v8300 = vadd.f32 0.0, %v8299
        %v8301 = vpop.f32.mrb[0].mxu0
        %8302 = vmatprep.mubr.bf16.mxu0 0
        %8303 = vmatmul.mubr.bf16.gmra.mrb[0].mxu0 %v8119
        %v8304 = vpop.f32.mrb[0].mxu0
        %v8305 = vadd.f32 0.0, %v8304
        %v8306 = vpop.f32.mrb[0].mxu0
        %v8307 = vpop.f32.mrb[0].mxu0
        %v8308 = vadd.f32 0.0, %v8307
        %v8309 = vpop.f32.mrb[0].mxu0
        %8310 = vmatprep.mubr.bf16.mxu0 0
        %8311 = vmatmul.mubr.bf16.gmra.mrb[0].mxu0 %v8122
        %v8312 = vpop.f32.mrb[0].mxu0
        %v8313 = vadd.f32 0.0, %v8312
        %v8314 = vpop.f32.mrb[0].mxu0
        %v8315 = vpop.f32.mrb[0].mxu0
        %v8316 = vadd.f32 0.0, %v8315
        %v8317 = vpop.f32.mrb[0].mxu0
        %8318 = vmatprep.mubr.bf16.mxu0 0
        %8319 = vmatmul.mubr.bf16.gmra.mrb[0].mxu0 %v8125
        %v8320 = vpop.f32.mrb[0].mxu0
        %v8321 = vadd.f32 0.0, %v8320
        %v8322 = vpop.f32.mrb[0].mxu0
        %v8323 = vpop.f32.mrb[0].mxu0
        %v8324 = vadd.f32 0.0, %v8323
        %v8325 = vpop.f32.mrb[0].mxu0
        %8326 = vmatprep.mubr.bf16.mxu0 0
        %8327 = vmatmul.mubr.bf16.gmra.mrb[0].mxu0 %v8128
        %v8328 = vpop.f32.mrb[0].mxu0
        %v8329 = vadd.f32 0.0, %v8328
        %v8330 = vpop.f32.mrb[0].mxu0
        %v8331 = vpop.f32.mrb[0].mxu0
        %v8332 = vadd.f32 0.0, %v8331
        %v8333 = vpop.f32.mrb[0].mxu0
        %8334 = vmatprep.mubr.bf16.mxu0 0
        %8335 = vmatmul.mubr.bf16.gmra.mrb[0].mxu0 %v8131
        %v8336 = vpop.f32.mrb[0].mxu0
        %v8337 = vadd.f32 0.0, %v8336
        %v8338 = vpop.f32.mrb[0].mxu0
        %v8339 = vpop.f32.mrb[0].mxu0
        %v8340 = vadd.f32 0.0, %v8339
        %v8341 = vpop.f32.mrb[0].mxu0
        %8342 = vdwg.mxu0
        %v8343 = vld [vmem:[#allocation3] sm:$0xff]
        %v8344 = vld [vmem:[#allocation3 + $0x8] sm:$0xff]
        %v8345 = vld [vmem:[#allocation3 + $0x10] sm:$0xff]
        %v8346 = vld [vmem:[#allocation3 + $0x18] sm:$0xff]
        %v8347 = vld [vmem:[#allocation3 + $0x20] sm:$0xff]
        %v8348 = vld [vmem:[#allocation3 + $0x28] sm:$0xff]
        %v8349 = vld [vmem:[#allocation3 + $0x30] sm:$0xff]
        %v8350 = vld [vmem:[#allocation3 + $0x38] sm:$0xff]
        %v8351 = vld [vmem:[#allocation3 + $0x40] sm:$0xff]
        %v8352 = vld [vmem:[#allocation3 + $0x48] sm:$0xff]
        %v8353 = vld [vmem:[#allocation3 + $0x50] sm:$0xff]
        %v8354 = vld [vmem:[#allocation3 + $0x58] sm:$0xff]
        %v8355 = vld [vmem:[#allocation3 + $0x60] sm:$0xff]
        %v8356 = vld [vmem:[#allocation3 + $0x68] sm:$0xff]
        %v8357 = vld [vmem:[#allocation3 + $0x70] sm:$0xff]
        %v8358 = vld [vmem:[#allocation3 + $0x78] sm:$0xff]
        %v8359 = vld [vmem:[#allocation3 + $0x80] sm:$0xff]
        %v8360 = vld [vmem:[#allocation3 + $0x88] sm:$0xff]
        %v8361 = vld [vmem:[#allocation3 + $0x90] sm:$0xff]
        %v8362 = vld [vmem:[#allocation3 + $0x98] sm:$0xff]
        %v8363 = vld [vmem:[#allocation3 + $0xa0] sm:$0xff]
        %v8364 = vld [vmem:[#allocation3 + $0xa8] sm:$0xff]
        %v8365 = vld [vmem:[#allocation3 + $0xb0] sm:$0xff]
        %v8366 = vld [vmem:[#allocation3 + $0xb8] sm:$0xff]
        %v8367 = vld [vmem:[#allocation3 + $0xc0] sm:$0xff]
        %v8368 = vld [vmem:[#allocation3 + $0xc8] sm:$0xff]
        %v8369 = vld [vmem:[#allocation3 + $0xd0] sm:$0xff]
        %v8370 = vld [vmem:[#allocation3 + $0xd8] sm:$0xff]
        %v8371 = vld [vmem:[#allocation3 + $0xe0] sm:$0xff]
        %v8372 = vld [vmem:[#allocation3 + $0xe8] sm:$0xff]
        %v8373 = vld [vmem:[#allocation3 + $0xf0] sm:$0xff]
        %v8374 = vld [vmem:[#allocation3 + $0xf8] sm:$0xff]
        %v8375 = vld [vmem:[#allocation3 + $0x100] sm:$0xff]
        %v8376 = vld [vmem:[#allocation3 + $0x108] sm:$0xff]
        %v8377 = vld [vmem:[#allocation3 + $0x110] sm:$0xff]
        %v8378 = vld [vmem:[#allocation3 + $0x118] sm:$0xff]
        %v8379 = vld [vmem:[#allocation3 + $0x120] sm:$0xff]
        %v8380 = vld [vmem:[#allocation3 + $0x128] sm:$0xff]
        %v8381 = vld [vmem:[#allocation3 + $0x130] sm:$0xff]
        %v8382 = vld [vmem:[#allocation3 + $0x138] sm:$0xff]
        %v8383 = vld [vmem:[#allocation3 + $0x140] sm:$0xff]
        %v8384 = vld [vmem:[#allocation3 + $0x148] sm:$0xff]
        %v8385 = vld [vmem:[#allocation3 + $0x150] sm:$0xff]
        %v8386 = vld [vmem:[#allocation3 + $0x158] sm:$0xff]
        %v8387 = vld [vmem:[#allocation3 + $0x160] sm:$0xff]
        %v8388 = vld [vmem:[#allocation3 + $0x168] sm:$0xff]
        %v8389 = vld [vmem:[#allocation3 + $0x170] sm:$0xff]
        %v8390 = vld [vmem:[#allocation3 + $0x178] sm:$0xff]
        %v8391 = vadd.f32 %v8343, %v8168
        %v8392 = vadd.f32 %v8344, %v8170
        %v8393 = vadd.f32 %v8345, %v8281
        %v8394 = vadd.f32 %v8346, %v8172
        %v8395 = vadd.f32 %v8347, %v8174
        %v8396 = vadd.f32 %v8348, %v8284
        %v8397 = vadd.f32 %v8349, %v8178
        %v8398 = vadd.f32 %v8350, %v8180
        %v8399 = vadd.f32 %v8351, %v8289
        %v8400 = vadd.f32 %v8352, %v8182
        %v8401 = vadd.f32 %v8353, %v8184
        %v8402 = vadd.f32 %v8354, %v8292
        %v8403 = vadd.f32 %v8355, %v8188
        %v8404 = vadd.f32 %v8356, %v8190
        %v8405 = vadd.f32 %v8357, %v8297
        %v8406 = vadd.f32 %v8358, %v8192
        %v8407 = vadd.f32 %v8359, %v8194
        %v8408 = vadd.f32 %v8360, %v8300
        %v8409 = vadd.f32 %v8361, %v8198
        %v8410 = vadd.f32 %v8362, %v8200
        %v8411 = vadd.f32 %v8363, %v8305
        %v8412 = vadd.f32 %v8364, %v8202
        %v8413 = vadd.f32 %v8365, %v8204
        %v8414 = vadd.f32 %v8366, %v8308
        %v8415 = vadd.f32 %v8367, %v8208
        %v8416 = vadd.f32 %v8368, %v8210
        %v8417 = vadd.f32 %v8369, %v8313
        %v8418 = vadd.f32 %v8370, %v8212
        %v8419 = vadd.f32 %v8371, %v8214
        %v8420 = vadd.f32 %v8372, %v8316
        %v8421 = vadd.f32 %v8373, %v8218
        %v8422 = vadd.f32 %v8374, %v8220
        %v8423 = vadd.f32 %v8375, %v8321
        %v8424 = vadd.f32 %v8376, %v8222
        %v8425 = vadd.f32 %v8377, %v8224
        %v8426 = vadd.f32 %v8378, %v8324
        %v8427 = vadd.f32 %v8379, %v8228
        %v8428 = vadd.f32 %v8380, %v8230
        %v8429 = vadd.f32 %v8381, %v8329
        %v8430 = vadd.f32 %v8382, %v8232
        %v8431 = vadd.f32 %v8383, %v8234
        %v8432 = vadd.f32 %v8384, %v8332
        %v8433 = vadd.f32 %v8385, %v8238
        %v8434 = vadd.f32 %v8386, %v8240
        %v8435 = vadd.f32 %v8387, %v8337
        %v8436 = vadd.f32 %v8388, %v8242
        %v8437 = vadd.f32 %v8389, %v8244
        %v8438 = vadd.f32 %v8390, %v8340
        %8439 = vst [vmem:[#allocation3] sm:$0xff] %v8391
        %8440 = vst [vmem:[#allocation3 + $0x8] sm:$0xff] %v8392
        %8441 = vst [vmem:[#allocation3 + $0x10] sm:$0xff] %v8393
        %8442 = vst [vmem:[#allocation3 + $0x18] sm:$0xff] %v8394
        %8443 = vst [vmem:[#allocation3 + $0x20] sm:$0xff] %v8395
        %8444 = vst [vmem:[#allocation3 + $0x28] sm:$0xff] %v8396
        %8445 = vst [vmem:[#allocation3 + $0x30] sm:$0xff] %v8397
        %8446 = vst [vmem:[#allocation3 + $0x38] sm:$0xff] %v8398
        %8447 = vst [vmem:[#allocation3 + $0x40] sm:$0xff] %v8399
        %8448 = vst [vmem:[#allocation3 + $0x48] sm:$0xff] %v8400
        %8449 = vst [vmem:[#allocation3 + $0x50] sm:$0xff] %v8401
        %8450 = vst [vmem:[#allocation3 + $0x58] sm:$0xff] %v8402
        %8451 = vst [vmem:[#allocation3 + $0x60] sm:$0xff] %v8403
        %8452 = vst [vmem:[#allocation3 + $0x68] sm:$0xff] %v8404
        %8453 = vst [vmem:[#allocation3 + $0x70] sm:$0xff] %v8405
        %8454 = vst [vmem:[#allocation3 + $0x78] sm:$0xff] %v8406
        %8455 = vst [vmem:[#allocation3 + $0x80] sm:$0xff] %v8407
        %8456 = vst [vmem:[#allocation3 + $0x88] sm:$0xff] %v8408
        %8457 = vst [vmem:[#allocation3 + $0x90] sm:$0xff] %v8409
        %8458 = vst [vmem:[#allocation3 + $0x98] sm:$0xff] %v8410
        %8459 = vst [vmem:[#allocation3 + $0xa0] sm:$0xff] %v8411
        %8460 = vst [vmem:[#allocation3 + $0xa8] sm:$0xff] %v8412
        %8461 = vst [vmem:[#allocation3 + $0xb0] sm:$0xff] %v8413
        %8462 = vst [vmem:[#allocation3 + $0xb8] sm:$0xff] %v8414
        %8463 = vst [vmem:[#allocation3 + $0xc0] sm:$0xff] %v8415
        %8464 = vst [vmem:[#allocation3 + $0xc8] sm:$0xff] %v8416
        %8465 = vst [vmem:[#allocation3 + $0xd0] sm:$0xff] %v8417
        %8466 = vst [vmem:[#allocation3 + $0xd8] sm:$0xff] %v8418
        %8467 = vst [vmem:[#allocation3 + $0xe0] sm:$0xff] %v8419
        %8468 = vst [vmem:[#allocation3 + $0xe8] sm:$0xff] %v8420
        %8469 = vst [vmem:[#allocation3 + $0xf0] sm:$0xff] %v8421
        %8470 = vst [vmem:[#allocation3 + $0xf8] sm:$0xff] %v8422
        %8471 = vst [vmem:[#allocation3 + $0x100] sm:$0xff] %v8423
        %8472 = vst [vmem:[#allocation3 + $0x108] sm:$0xff] %v8424
        %8473 = vst [vmem:[#allocation3 + $0x110] sm:$0xff] %v8425
        %8474 = vst [vmem:[#allocation3 + $0x118] sm:$0xff] %v8426
        %8475 = vst [vmem:[#allocation3 + $0x120] sm:$0xff] %v8427
        %8476 = vst [vmem:[#allocation3 + $0x128] sm:$0xff] %v8428
        %8477 = vst [vmem:[#allocation3 + $0x130] sm:$0xff] %v8429
        %8478 = vst [vmem:[#allocation3 + $0x138] sm:$0xff] %v8430
        %8479 = vst [vmem:[#allocation3 + $0x140] sm:$0xff] %v8431
        %8480 = vst [vmem:[#allocation3 + $0x148] sm:$0xff] %v8432
        %8481 = vst [vmem:[#allocation3 + $0x150] sm:$0xff] %v8433
        %8482 = vst [vmem:[#allocation3 + $0x158] sm:$0xff] %v8434
        %8483 = vst [vmem:[#allocation3 + $0x160] sm:$0xff] %v8435
        %8484 = vst [vmem:[#allocation3 + $0x168] sm:$0xff] %v8436
        %8485 = vst [vmem:[#allocation3 + $0x170] sm:$0xff] %v8437
        %8486 = vst [vmem:[#allocation3 + $0x178] sm:$0xff] %v8438
        %v8487 = vld [vmem:[#allocation3] sm:$0xff]
        %v8488 = vld [vmem:[#allocation3 + $0x8] sm:$0xff]
        %v8489 = vld [vmem:[#allocation3 + $0x10] sm:$0xff]
        %v8490 = vld [vmem:[#allocation3 + $0x18] sm:$0xff]
        %v8491 = vld [vmem:[#allocation3 + $0x20] sm:$0xff]
        %v8492 = vld [vmem:[#allocation3 + $0x28] sm:$0xff]
        %v8493 = vld [vmem:[#allocation3 + $0x30] sm:$0xff]
        %v8494 = vld [vmem:[#allocation3 + $0x38] sm:$0xff]
        %v8495 = vld [vmem:[#allocation3 + $0x40] sm:$0xff]
        %v8496 = vld [vmem:[#allocation3 + $0x48] sm:$0xff]
        %v8497 = vld [vmem:[#allocation3 + $0x50] sm:$0xff]
        %v8498 = vld [vmem:[#allocation3 + $0x58] sm:$0xff]
        %v8499 = vld [vmem:[#allocation3 + $0x60] sm:$0xff]
        %v8500 = vld [vmem:[#allocation3 + $0x68] sm:$0xff]
        %v8501 = vld [vmem:[#allocation3 + $0x70] sm:$0xff]
        %v8502 = vld [vmem:[#allocation3 + $0x78] sm:$0xff]
        %v8503 = vld [vmem:[#allocation3 + $0x80] sm:$0xff]
        %v8504 = vld [vmem:[#allocation3 + $0x88] sm:$0xff]
        %v8505 = vld [vmem:[#allocation3 + $0x90] sm:$0xff]
        %v8506 = vld [vmem:[#allocation3 + $0x98] sm:$0xff]
        %v8507 = vld [vmem:[#allocation3 + $0xa0] sm:$0xff]
        %v8508 = vld [vmem:[#allocation3 + $0xa8] sm:$0xff]
        %v8509 = vld [vmem:[#allocation3 + $0xb0] sm:$0xff]
        %v8510 = vld [vmem:[#allocation3 + $0xb8] sm:$0xff]
        %v8511 = vld [vmem:[#allocation3 + $0xc0] sm:$0xff]
        %v8512 = vld [vmem:[#allocation3 + $0xc8] sm:$0xff]
        %v8513 = vld [vmem:[#allocation3 + $0xd0] sm:$0xff]
        %v8514 = vld [vmem:[#allocation3 + $0xd8] sm:$0xff]
        %v8515 = vld [vmem:[#allocation3 + $0xe0] sm:$0xff]
        %v8516 = vld [vmem:[#allocation3 + $0xe8] sm:$0xff]
        %v8517 = vld [vmem:[#allocation3 + $0xf0] sm:$0xff]
        %v8518 = vld [vmem:[#allocation3 + $0xf8] sm:$0xff]
        %v8519 = vld [vmem:[#allocation3 + $0x100] sm:$0xff]
        %v8520 = vld [vmem:[#allocation3 + $0x108] sm:$0xff]
        %v8521 = vld [vmem:[#allocation3 + $0x110] sm:$0xff]
        %v8522 = vld [vmem:[#allocation3 + $0x118] sm:$0xff]
        %v8523 = vld [vmem:[#allocation3 + $0x120] sm:$0xff]
        %v8524 = vld [vmem:[#allocation3 + $0x128] sm:$0xff]
        %v8525 = vld [vmem:[#allocation3 + $0x130] sm:$0xff]
        %v8526 = vld [vmem:[#allocation3 + $0x138] sm:$0xff]
        %v8527 = vld [vmem:[#allocation3 + $0x140] sm:$0xff]
        %v8528 = vld [vmem:[#allocation3 + $0x148] sm:$0xff]
        %v8529 = vld [vmem:[#allocation3 + $0x150] sm:$0xff]
        %v8530 = vld [vmem:[#allocation3 + $0x158] sm:$0xff]
        %v8531 = vld [vmem:[#allocation3 + $0x160] sm:$0xff]
        %v8532 = vld [vmem:[#allocation3 + $0x168] sm:$0xff]
        %v8533 = vld [vmem:[#allocation3 + $0x170] sm:$0xff]
        %v8534 = vld [vmem:[#allocation3 + $0x178] sm:$0xff]
        %v8535 = vld [vmem:[%s3] sm:$0x7]
        %v8537 = vlaneseq
        %v8538 = vshrl.u32 %v8537, 7
        %v8539 = vsub.s32 0, %v8538
        %v8540 = vrot.slane %v8535, %v8539
        %v8541 = vlaneseq
        %v8542 = vshrl.u32 %v8541, 7
        %v8543 = vsub.s32 1, %v8542
        %v8544 = vrot.slane %v8535, %v8543
        %v8545 = vlaneseq
        %v8546 = vshrl.u32 %v8545, 7
        %v8547 = vsub.s32 2, %v8546
        %v8548 = vrot.slane %v8535, %v8547
        %v8552 = vadd.f32 %v8487, %v8540
        %v8553 = vadd.f32 %v8488, %v8544
        %v8554 = vadd.f32 %v8489, %v8548
        %v8555 = vadd.f32 %v8490, %v8540
        %v8556 = vadd.f32 %v8491, %v8544
        %v8557 = vadd.f32 %v8492, %v8548
        %v8558 = vadd.f32 %v8493, %v8540
        %v8559 = vadd.f32 %v8494, %v8544
        %v8560 = vadd.f32 %v8495, %v8548
        %v8561 = vadd.f32 %v8496, %v8540
        %v8562 = vadd.f32 %v8497, %v8544
        %v8563 = vadd.f32 %v8498, %v8548
        %v8564 = vadd.f32 %v8499, %v8540
        %v8565 = vadd.f32 %v8500, %v8544
        %v8566 = vadd.f32 %v8501, %v8548
        %v8567 = vadd.f32 %v8502, %v8540
        %v8568 = vadd.f32 %v8503, %v8544
        %v8569 = vadd.f32 %v8504, %v8548
        %v8570 = vadd.f32 %v8505, %v8540
        %v8571 = vadd.f32 %v8506, %v8544
        %v8572 = vadd.f32 %v8507, %v8548
        %v8573 = vadd.f32 %v8508, %v8540
        %v8574 = vadd.f32 %v8509, %v8544
        %v8575 = vadd.f32 %v8510, %v8548
        %v8576 = vadd.f32 %v8511, %v8540
        %v8577 = vadd.f32 %v8512, %v8544
        %v8578 = vadd.f32 %v8513, %v8548
        %v8579 = vadd.f32 %v8514, %v8540
        %v8580 = vadd.f32 %v8515, %v8544
        %v8581 = vadd.f32 %v8516, %v8548
        %v8582 = vadd.f32 %v8517, %v8540
        %v8583 = vadd.f32 %v8518, %v8544
        %v8584 = vadd.f32 %v8519, %v8548
        %v8585 = vadd.f32 %v8520, %v8540
        %v8586 = vadd.f32 %v8521, %v8544
        %v8587 = vadd.f32 %v8522, %v8548
        %v8588 = vadd.f32 %v8523, %v8540
        %v8589 = vadd.f32 %v8524, %v8544
        %v8590 = vadd.f32 %v8525, %v8548
        %v8591 = vadd.f32 %v8526, %v8540
        %v8592 = vadd.f32 %v8527, %v8544
        %v8593 = vadd.f32 %v8528, %v8548
        %v8594 = vadd.f32 %v8529, %v8540
        %v8595 = vadd.f32 %v8530, %v8544
        %v8596 = vadd.f32 %v8531, %v8548
        %v8597 = vadd.f32 %v8532, %v8540
        %v8598 = vadd.f32 %v8533, %v8544
        %v8599 = vadd.f32 %v8534, %v8548
        %8600 = vst [vmem:[%s245] sm:$0xff] %v8552
        %8601 = vst [vmem:[%s245 + $0x8] sm:$0xff] %v8553
        %8602 = vst [vmem:[%s245 + $0x10] sm:$0xff] %v8554
        %8603 = vst [vmem:[%s245 + $0x18] sm:$0xff] %v8555
        %8604 = vst [vmem:[%s245 + $0x20] sm:$0xff] %v8556
        %8605 = vst [vmem:[%s245 + $0x28] sm:$0xff] %v8557
        %8606 = vst [vmem:[%s245 + $0x30] sm:$0xff] %v8558
        %8607 = vst [vmem:[%s245 + $0x38] sm:$0xff] %v8559
        %8608 = vst [vmem:[%s245 + $0x40] sm:$0xff] %v8560
        %8609 = vst [vmem:[%s245 + $0x48] sm:$0xff] %v8561
        %8610 = vst [vmem:[%s245 + $0x50] sm:$0xff] %v8562
        %8611 = vst [vmem:[%s245 + $0x58] sm:$0xff] %v8563
        %8612 = vst [vmem:[%s245 + $0x60] sm:$0xff] %v8564
        %8613 = vst [vmem:[%s245 + $0x68] sm:$0xff] %v8565
        %8614 = vst [vmem:[%s245 + $0x70] sm:$0xff] %v8566
        %8615 = vst [vmem:[%s245 + $0x78] sm:$0xff] %v8567
        %8616 = vst [vmem:[%s245 + $0x80] sm:$0xff] %v8568
        %8617 = vst [vmem:[%s245 + $0x88] sm:$0xff] %v8569
        %8618 = vst [vmem:[%s245 + $0x90] sm:$0xff] %v8570
        %8619 = vst [vmem:[%s245 + $0x98] sm:$0xff] %v8571
        %8620 = vst [vmem:[%s245 + $0xa0] sm:$0xff] %v8572
        %8621 = vst [vmem:[%s245 + $0xa8] sm:$0xff] %v8573
        %8622 = vst [vmem:[%s245 + $0xb0] sm:$0xff] %v8574
        %8623 = vst [vmem:[%s245 + $0xb8] sm:$0xff] %v8575
        %8624 = vst [vmem:[%s245 + $0xc0] sm:$0xff] %v8576
        %8625 = vst [vmem:[%s245 + $0xc8] sm:$0xff] %v8577
        %8626 = vst [vmem:[%s245 + $0xd0] sm:$0xff] %v8578
        %8627 = vst [vmem:[%s245 + $0xd8] sm:$0xff] %v8579
        %8628 = vst [vmem:[%s245 + $0xe0] sm:$0xff] %v8580
        %8629 = vst [vmem:[%s245 + $0xe8] sm:$0xff] %v8581
        %8630 = vst [vmem:[%s245 + $0xf0] sm:$0xff] %v8582
        %8631 = vst [vmem:[%s245 + $0xf8] sm:$0xff] %v8583
        %8632 = vst [vmem:[%s245 + $0x100] sm:$0xff] %v8584
        %8633 = vst [vmem:[%s245 + $0x108] sm:$0xff] %v8585
        %8634 = vst [vmem:[%s245 + $0x110] sm:$0xff] %v8586
        %8635 = vst [vmem:[%s245 + $0x118] sm:$0xff] %v8587
        %8636 = vst [vmem:[%s245 + $0x120] sm:$0xff] %v8588
        %8637 = vst [vmem:[%s245 + $0x128] sm:$0xff] %v8589
        %8638 = vst [vmem:[%s245 + $0x130] sm:$0xff] %v8590
        %8639 = vst [vmem:[%s245 + $0x138] sm:$0xff] %v8591
        %8640 = vst [vmem:[%s245 + $0x140] sm:$0xff] %v8592
        %8641 = vst [vmem:[%s245 + $0x148] sm:$0xff] %v8593
        %8642 = vst [vmem:[%s245 + $0x150] sm:$0xff] %v8594
        %8643 = vst [vmem:[%s245 + $0x158] sm:$0xff] %v8595
        %8644 = vst [vmem:[%s245 + $0x160] sm:$0xff] %v8596
        %8645 = vst [vmem:[%s245 + $0x168] sm:$0xff] %v8597
        %8646 = vst [vmem:[%s245 + $0x170] sm:$0xff] %v8598
        %8647 = vst [vmem:[%s245 + $0x178] sm:$0xff] %v8599
        %s8648 = sand.u32 %s119, 1
        %s8649 = scalar_lea.sflag [#allocation6], %s8648
        %s8650 = sand.u32 %s119, 1
        %s8651 = smul.addr %s8650, 384
        %s8652 = scalar_lea.vmem [#allocation10], %s8651
        // Predicated region
        $region49: #{tpu_custom_call.1} parent=35 // pred_check
          %p8653 = pneg %p129
        $region50: #{tpu_custom_call.1} parent=35 // pred_check_branch
          %8655 = sbr.rel (%p8653) target = $region52
        $region51: #{tpu_custom_call.1} parent=35 // pred_region
          %s8656 = smul.u32 16, %s22
          %s8658 = ssub.s32 6144, 6144
          %8659 = vsyncadd %s8649, %s8658
          %s8660 = smul.addr %s8656, 3
          %s8661 = smul.addr %s8660, 128
          %s8662 = scalar_lea.hbm %s4, %s8661
          %s8663 = sshll.u32 %s8652, 4
          %s8664 = int_to_ptr.vmem [resolvable:$true] %s8663
          %8669 = dma.vmem_to_hbm [thread:$0]  %s8664, 6144, %s8662, %s8649, 384, 384, 24
        $region52: #{tpu_custom_call.1} parent=35 // pred_fallthru
          _
      $region36: #{tpu_custom_call.1} parent=5 // pred_fallthru
        _
      %p8670 = scmp.le.s32.totalorder 2, %s17
      // Predicated region
      $region53: #{tpu_custom_call.1} parent=5 // pred_check
        %p8671 = pneg %p8670
      $region54: #{tpu_custom_call.1} parent=5 // pred_check_branch
        %8673 = sbr.rel (%p8671) target = $region56
      $region55: #{tpu_custom_call.1} parent=5 // pred_region
        %s8674 = ssub.s32 %s17, 2
        // Predicated region
        $region57: #{tpu_custom_call.1} parent=55 // pred_check
          %p8675 = pneg %p135
        $region58: #{tpu_custom_call.1} parent=55 // pred_check_branch
          %8677 = sbr.rel (%p8675) target = $region60
        $region59: #{tpu_custom_call.1} parent=55 // pred_region
          %s8678 = sand.u32 %s120, 1
          %s8679 = scalar_lea.sflag [#allocation6], %s8678
          %s8680 = sand.u32 %s120, 1
          %s8681 = smul.addr %s8680, 384
          %s8682 = scalar_lea.vmem [#allocation10], %s8681
          %8683 = dma.done %s8679, 6144
        $region60: #{tpu_custom_call.1} parent=55 // pred_fallthru
          _
      $region56: #{tpu_custom_call.1} parent=5 // pred_fallthru
        _
    $region6: #{tpu_custom_call.1} parent=1 // loop_footer
      %s21 = sadd.s32 1, %s17
    $region7: #{tpu_custom_call.1} parent=1 // loop_footer_branch
      %16 = sbr.rel target = $region3
    $region8: #{tpu_custom_call.1} parent=1 // loop_exit
      _
    %8684 = vsyncpa [#allocation5], 1
    %s8685 = scalar_lea.sflag [#allocation5], 1
    %8686 = vsyncpa %s8685, 1
    %8687 = vsyncpa [#allocation8], 1
    %8688 = vsyncpa [#allocation6], 1
    %s8689 = scalar_lea.sflag [#allocation6], 1
    %8690 = vsyncpa %s8689, 1

</llo_original>
